<compile_context>
chip_gen: v7x
topology: tpu7x:2x2x1
jax: 0.10.0
libtpu: 0.0.40
codegen_flags: <defaults>
</compile_context>

<pallas_src>
import functools

import numpy as np
import jax
import jax.numpy as jnp
from jax import lax
from jax.experimental import pallas as pl
from jax.experimental.pallas import tpu as pltpu


_PARAM_ORDER = (
    "cur_w", "cur_b", "prev_w", "prev_b",
    "dw5_1", "pw5_1", "b5_1", "dw5_2", "pw5_2", "b5_2",
    "dw3_1", "pw3_1", "b3_1", "dw3_2", "pw3_2", "b3_2",
)


def _make_consts(H, W):
    """(26, H*W) f32 constants.

    Rows 0..24: validity masks for taps (di, dj) in [-2, 2]^2, row index
    (di+2)*5 + (dj+2).  Row 25: reciprocal of the 3x3 avg-pool divisor
    (count_include_pad=False)."""
    hh, ww = np.meshgrid(np.arange(H), np.arange(W), indexing="ij")
    rows = []
    for di in range(-2, 3):
        for dj in range(-2, 3):
            valid = ((hh + di >= 0) & (hh + di < H) &
                     (ww + dj >= 0) & (ww + dj < W))
            rows.append(valid.astype(np.float32).reshape(-1))
    cnt = np.zeros((H, W), np.float32)
    for di in (-1, 0, 1):
        for dj in (-1, 0, 1):
            cnt += ((hh + di >= 0) & (hh + di < H) &
                    (ww + dj >= 0) & (ww + dj < W)).astype(np.float32)
    rows.append((1.0 / cnt).astype(np.float32).reshape(-1))
    return jnp.asarray(np.stack(rows))


# ------------------------------ fused kernel -------------------------------

def _normal_cell_kernel(
        x_ref, xp_ref, consts_ref,
        cur_w_ref, cur_b_ref, prev_w_ref, prev_b_ref,
        dw5_1_ref, pw5_1_ref, b5_1_ref, dw5_2_ref, pw5_2_ref, b5_2_ref,
        dw3_1_ref, pw3_1_ref, b3_1_ref, dw3_2_ref, pw3_2_ref, b3_2_ref,
        o_ref, *, H, W):
    HW = H * W

    def mask(di, dj):
        idx = (di + 2) * 5 + (dj + 2)
        return consts_ref[idx:idx + 1, :]                 # (1, HW)

    def shifted(v, di, dj):
        # out[:, h*W + w] = v[:, (h+di)*W + (w+dj)] where in-bounds, else 0.
        s = (-(di * W + dj)) % HW
        r = v if s == 0 else pltpu.roll(v, shift=s, axis=1)
        if di == 0 and dj == 0:
            return r
        return r * mask(di, dj)

    def conv1x1_bn(xin, w_ref, b_ref):
        # ReLU -> 1x1 conv (BN scale folded into w) -> bias.
        y = jnp.dot(w_ref[...], jnp.maximum(xin, 0.0),
                    preferred_element_type=jnp.float32)
        return y + b_ref[...]

    def dwconv(xin, dw_ref, t, k):
        # Depthwise k x k, stride 1, zero "same" padding via rolls + masks.
        pad = k // 2
        acc = None
        for i in range(k):
            for j in range(k):
                idx = i * k + j
                term = shifted(xin, i - pad, j - pad) * dw_ref[t, :, idx:idx + 1]
                acc = term if acc is None else acc + term
        return acc

    def sepconv_bn(xin, dw_ref, pw_ref, b_ref, t, k):
        # ReLU -> depthwise kxk -> pointwise 1x1 (BN scale folded) -> bias.
        y = dwconv(jnp.maximum(xin, 0.0), dw_ref, t, k)
        y = jnp.dot(pw_ref[t], y, preferred_element_type=jnp.float32)
        return y + b_ref[t]

    def branch5(xin, t):
        y = sepconv_bn(xin, dw5_1_ref, pw5_1_ref, b5_1_ref, t, 5)
        return sepconv_bn(y, dw5_2_ref, pw5_2_ref, b5_2_ref, t, 5)

    def branch3(xin, t):
        y = sepconv_bn(xin, dw3_1_ref, pw3_1_ref, b3_1_ref, t, 3)
        return sepconv_bn(y, dw3_2_ref, pw3_2_ref, b3_2_ref, t, 3)

    def avgpool3(xin):
        # 3x3 avg pool, stride 1, pad 1, count_include_pad=False.
        acc = None
        for di in (-1, 0, 1):
            for dj in (-1, 0, 1):
                v = shifted(xin, di, dj)
                acc = v if acc is None else acc + v
        return acc * consts_ref[25:26, :]                 # precomputed 1/count

    x_right = conv1x1_bn(x_ref[0], cur_w_ref, cur_b_ref)
    x_left = conv1x1_bn(xp_ref[0], prev_w_ref, prev_b_ref)

    # Output channel blocks match torch.cat([x_left, c0, c1, c2, c3, c4], 1);
    # each write is a full lane-dense (C, H*W) slab (unmasked stores).
    o_ref[0, 0] = x_left

    # comb_iter_0: 5x5 branch on x_right + 3x3 branch on x_left
    o_ref[0, 1] = branch5(x_right, 0) + branch3(x_left, 0)
    # comb_iter_1: 5x5 branch on x_left + 3x3 branch on x_left
    o_ref[0, 2] = branch5(x_left, 1) + branch3(x_left, 1)
    # comb_iter_2: avgpool(x_right) + x_left
    o_ref[0, 3] = avgpool3(x_right) + x_left
    # comb_iter_3: avgpool(x_left) + avgpool(x_left)
    ap_left = avgpool3(x_left)
    o_ref[0, 4] = ap_left + ap_left
    # comb_iter_4: 3x3 branch on x_right + x_right
    o_ref[0, 5] = branch3(x_right, 2) + x_right


# ------------------------------ public wrapper ------------------------------

def normal_cell(kparams, x_nchw, x_prev_nchw):
    N, cin_r, H, W = x_nchw.shape
    cin_l = x_prev_nchw.shape[1]
    C = kparams["cur_w"].shape[0]
    HW = H * W

    # Free reshapes (no transposes, no extra HBM traffic).
    x = x_nchw.reshape(N, cin_r, HW)
    xp = x_prev_nchw.reshape(N, cin_l, HW)
    consts = _make_consts(H, W)

    kern = functools.partial(_normal_cell_kernel, H=H, W=W)

    def _const_spec(shape):
        nd = len(shape)
        return pl.BlockSpec(shape, lambda n, _nd=nd: (0,) * _nd)

    in_specs = [
        pl.BlockSpec((1, cin_r, HW), lambda n: (n, 0, 0)),
        pl.BlockSpec((1, cin_l, HW), lambda n: (n, 0, 0)),
        _const_spec((26, HW)),
    ] + [_const_spec(tuple(kparams[name].shape)) for name in _PARAM_ORDER]

    out = pl.pallas_call(
        kern,
        out_shape=jax.ShapeDtypeStruct((N, 6, C, HW), jnp.float32),
        grid=(N,),
        in_specs=in_specs,
        out_specs=pl.BlockSpec((1, 6, C, HW), lambda n: (n, 0, 0, 0)),
        compiler_params=pltpu.CompilerParams(
            dimension_semantics=("parallel",)),
    )(x, xp, consts, *[kparams[name] for name in _PARAM_ORDER])

    # (N, 6, C, H*W) -> (N, 6*C, H, W): free reshape; channel order matches
    # torch.cat([x_left, c0, c1, c2, c3, c4], 1).
    return out.reshape(N, 6 * C, H, W)


# --------------------------- parameter creation -----------------------------

def bn_fold(key, C):
    # Eval-mode BatchNorm folded to per-channel scale/bias (eps = 1e-3).
    k1, k2, k3, k4 = jax.random.split(key, 4)
    gamma = jax.random.uniform(k1, (C,), jnp.float32, 0.5, 1.5)
    beta = 0.1 * jax.random.normal(k2, (C,), jnp.float32)
    mean = 0.1 * jax.random.normal(k3, (C,), jnp.float32)
    var = jax.random.uniform(k4, (C,), jnp.float32, 0.5, 1.5)
    scale = gamma / jnp.sqrt(var + 1e-3)
    bias = beta - mean * scale
    return scale.reshape(1, C), bias.reshape(1, C)


def _sep_stage(key, cin, cout, k):
    kd, kp, kb = jax.random.split(key, 3)
    dw = 0.1 * jax.random.normal(kd, (k, k, cin), jnp.float32)
    pw = 0.1 * jax.random.normal(kp, (cin, cout), jnp.float32)
    s, b = bn_fold(kb, cout)
    return dw, pw, s, b


def init_normal_cell(key, in_left, out_left, in_right, out_right):
    # The cell adds avgpool(x_right) to x_left etc., so branch widths match.
    assert out_left == out_right, "NormalCell requires out_left == out_right"
    C = out_left
    keys = jax.random.split(key, 24)
    ki = iter(range(24))

    params = {}
    params["prev_w"] = 0.1 * jax.random.normal(keys[next(ki)], (in_left, C), jnp.float32)
    params["prev_s"], params["prev_b"] = bn_fold(keys[next(ki)], C)
    params["cur_w"] = 0.1 * jax.random.normal(keys[next(ki)], (in_right, C), jnp.float32)
    params["cur_s"], params["cur_b"] = bn_fold(keys[next(ki)], C)

    def _stack(stages, grp):
        params["dw" + grp] = jnp.stack([st[0] for st in stages])
        params["pw" + grp] = jnp.stack([st[1] for st in stages])
        params["s" + grp] = jnp.stack([st[2] for st in stages])
        params["b" + grp] = jnp.stack([st[3] for st in stages])

    # 5x5 branches: t=0 -> comb_iter_0_left, t=1 -> comb_iter_1_left
    _stack([_sep_stage(keys[next(ki)], C, C, 5) for _ in range(2)], "5_1")
    _stack([_sep_stage(keys[next(ki)], C, C, 5) for _ in range(2)], "5_2")
    # 3x3 branches: t=0 -> comb_iter_0_right, t=1 -> comb_iter_1_right,
    #               t=2 -> comb_iter_4_left
    _stack([_sep_stage(keys[next(ki)], C, C, 3) for _ in range(3)], "3_1")
    _stack([_sep_stage(keys[next(ki)], C, C, 3) for _ in range(3)], "3_2")
    return params


def prep_params(raw):
    """Fold BN scales into conv weights and re-layout for the kernel."""
    C = raw["cur_w"].shape[1]
    p = {}
    p["cur_w"] = (raw["cur_w"] * raw["cur_s"]).T              # (C, in_right)
    p["cur_b"] = raw["cur_b"].reshape(C, 1)
    p["prev_w"] = (raw["prev_w"] * raw["prev_s"]).T           # (C, in_left)
    p["prev_b"] = raw["prev_b"].reshape(C, 1)
    for grp, k in (("5_1", 5), ("5_2", 5), ("3_1", 3), ("3_2", 3)):
        dw = raw["dw" + grp]                                  # (T, k, k, C)
        T = dw.shape[0]
        # (T, C, k*k): per tap a (C, 1) column is sliced in-kernel.
        p["dw" + grp] = jnp.transpose(dw.reshape(T, k * k, C), (0, 2, 1))
        pw = raw["pw" + grp]                                  # (T, Cin, Cout)
        s = raw["s" + grp]                                    # (T, 1, Cout)
        p["pw" + grp] = jnp.transpose(pw * s, (0, 2, 1))      # (T, Cout, Cin)
        p["b" + grp] = jnp.transpose(raw["b" + grp], (0, 2, 1))  # (T, C, 1)
    return p


# --------------------------- pure-JAX reference -----------------------------

def _ref_conv1x1_bn(x, w, s, b):
    y = jnp.einsum("nhwc,cd->nhwd", jnp.maximum(x, 0.0), w,
                   precision=lax.Precision.HIGHEST)
    return y * s.reshape(1, 1, 1, -1) + b.reshape(1, 1, 1, -1)


def _ref_sepconv_bn(x, dw, pw, s, b, k):
    pad = k // 2
    cin = x.shape[-1]
    xr = jnp.maximum(x, 0.0)
    y = lax.conv_general_dilated(
        xr, dw.reshape(k, k, 1, cin), window_strides=(1, 1),
        padding=((pad, pad), (pad, pad)),
        dimension_numbers=("NHWC", "HWIO", "NHWC"),
        feature_group_count=cin, precision=lax.Precision.HIGHEST)
    y = jnp.einsum("nhwc,cd->nhwd", y, pw, precision=lax.Precision.HIGHEST)
    return y * s.reshape(1, 1, 1, -1) + b.reshape(1, 1, 1, -1)


def _ref_branch(x, p, grp, t, k):
    y = _ref_sepconv_bn(x, p[f"dw{grp}_1"][t], p[f"pw{grp}_1"][t],
                        p[f"s{grp}_1"][t], p[f"b{grp}_1"][t], k)
    return _ref_sepconv_bn(y, p[f"dw{grp}_2"][t], p[f"pw{grp}_2"][t],
                           p[f"s{grp}_2"][t], p[f"b{grp}_2"][t], k)


def _ref_avgpool3(x):
    N, H, W, C = x.shape
    xp = jnp.pad(x, ((0, 0), (1, 1), (1, 1), (0, 0)))
    s = sum(xp[:, i:i + H, j:j + W, :] for i in range(3) for j in range(3))
    hs = jnp.arange(H)
    ws = jnp.arange(W)
    ch = (jnp.minimum(hs + 1, H - 1) - jnp.maximum(hs - 1, 0) + 1).astype(jnp.float32)
    cw = (jnp.minimum(ws + 1, W - 1) - jnp.maximum(ws - 1, 0) + 1).astype(jnp.float32)
    cnt = (ch[:, None] * cw[None, :])[None, :, :, None]
    return s / cnt


def ref_normal_cell(params, x_nchw, x_prev_nchw):
    x = jnp.transpose(x_nchw, (0, 2, 3, 1))
    x_prev = jnp.transpose(x_prev_nchw, (0, 2, 3, 1))
    x_left = _ref_conv1x1_bn(x_prev, params["prev_w"], params["prev_s"], params["prev_b"])
    x_right = _ref_conv1x1_bn(x, params["cur_w"], params["cur_s"], params["cur_b"])
    c0 = _ref_branch(x_right, params, 5, 0, 5) + _ref_branch(x_left, params, 3, 0, 3)
    c1 = _ref_branch(x_left, params, 5, 1, 5) + _ref_branch(x_left, params, 3, 1, 3)
    c2 = _ref_avgpool3(x_right) + x_left
    ap_l = _ref_avgpool3(x_left)
    c3 = ap_l + ap_l
    c4 = _ref_branch(x_right, params, 3, 2, 3) + x_right
    out = jnp.concatenate([x_left, c0, c1, c2, c3, c4], axis=-1)
    return jnp.transpose(out, (0, 3, 1, 2))


# ----------------------------------- main ------------------------------------

if __name__ == "__main__":
    key = jax.random.PRNGKey(0)
    k_param, k_x, k_xp = jax.random.split(key, 3)

    N, H, W = 2, 16, 16
    in_left, out_left = 16, 8
    in_right, out_right = 16, 8

    raw_params = init_normal_cell(k_param, in_left, out_left, in_right, out_right)
    kparams = prep_params(raw_params)

    x = jax.random.normal(k_x, (N, in_right, H, W), jnp.float32)       # NCHW
    x_prev = jax.random.normal(k_xp, (N, in_left, H, W), jnp.float32)  # NCHW

    out = jax.jit(normal_cell)(kparams, x, x_prev)
    out = jax.block_until_ready(out)

    assert out.shape == (N, out_left + 5 * out_right, H, W), out.shape

    ref = ref_normal_cell(raw_params, x, x_prev)
    err = float(jnp.max(jnp.abs(out - ref)))
    assert err < 2e-3, f"max abs error {err}"

    print("KERNEL_OK")
</pallas_src>

<mosaic_0001>
module attributes {stable_mosaic.version = 11 : i64} {
  func.func @_normal_cell_kernel(%arg0: i32, %arg1: memref<1x16x256xf32, #tpu.memory_space<vmem>>, %arg2: memref<1x16x256xf32, #tpu.memory_space<vmem>>, %arg3: memref<26x256xf32, #tpu.memory_space<vmem>>, %arg4: memref<8x16xf32, #tpu.memory_space<vmem>>, %arg5: memref<8x1xf32, #tpu.memory_space<vmem>>, %arg6: memref<8x16xf32, #tpu.memory_space<vmem>>, %arg7: memref<8x1xf32, #tpu.memory_space<vmem>>, %arg8: memref<2x8x25xf32, #tpu.memory_space<vmem>>, %arg9: memref<2x8x8xf32, #tpu.memory_space<vmem>>, %arg10: memref<2x8x1xf32, #tpu.memory_space<vmem>>, %arg11: memref<2x8x25xf32, #tpu.memory_space<vmem>>, %arg12: memref<2x8x8xf32, #tpu.memory_space<vmem>>, %arg13: memref<2x8x1xf32, #tpu.memory_space<vmem>>, %arg14: memref<3x8x9xf32, #tpu.memory_space<vmem>>, %arg15: memref<3x8x8xf32, #tpu.memory_space<vmem>>, %arg16: memref<3x8x1xf32, #tpu.memory_space<vmem>>, %arg17: memref<3x8x9xf32, #tpu.memory_space<vmem>>, %arg18: memref<3x8x8xf32, #tpu.memory_space<vmem>>, %arg19: memref<3x8x1xf32, #tpu.memory_space<vmem>>, %arg20: memref<1x6x8x256xf32, #tpu.memory_space<vmem>>) attributes {dimension_semantics = [#tpu.dimension_semantics<parallel>], iteration_bounds = array<i64: 2>, scalar_prefetch = 0 : i64, scratch_operands = 0 : i64, tpu.core_type = #tpu.core_type<tc>, window_params = [{transform_indices = @transform_0, window_bounds = array<i64: 1, 16, 256>}, {transform_indices = @transform_1, window_bounds = array<i64: 1, 16, 256>}, {pipeline_mode = #tpu.pipeline_mode<synchronous>, transform_indices = @transform_2, window_bounds = array<i64: 26, 256>}, {pipeline_mode = #tpu.pipeline_mode<synchronous>, transform_indices = @transform_3, window_bounds = array<i64: 8, 16>}, {pipeline_mode = #tpu.pipeline_mode<synchronous>, transform_indices = @transform_4, window_bounds = array<i64: 8, 1>}, {pipeline_mode = #tpu.pipeline_mode<synchronous>, transform_indices = @transform_5, window_bounds = array<i64: 8, 16>}, {pipeline_mode = #tpu.pipeline_mode<synchronous>, transform_indices = @transform_6, window_bounds = array<i64: 8, 1>}, {pipeline_mode = #tpu.pipeline_mode<synchronous>, transform_indices = @transform_7, window_bounds = array<i64: 2, 8, 25>}, {pipeline_mode = #tpu.pipeline_mode<synchronous>, transform_indices = @transform_8, window_bounds = array<i64: 2, 8, 8>}, {pipeline_mode = #tpu.pipeline_mode<synchronous>, transform_indices = @transform_9, window_bounds = array<i64: 2, 8, 1>}, {pipeline_mode = #tpu.pipeline_mode<synchronous>, transform_indices = @transform_10, window_bounds = array<i64: 2, 8, 25>}, {pipeline_mode = #tpu.pipeline_mode<synchronous>, transform_indices = @transform_11, window_bounds = array<i64: 2, 8, 8>}, {pipeline_mode = #tpu.pipeline_mode<synchronous>, transform_indices = @transform_12, window_bounds = array<i64: 2, 8, 1>}, {pipeline_mode = #tpu.pipeline_mode<synchronous>, transform_indices = @transform_13, window_bounds = array<i64: 3, 8, 9>}, {pipeline_mode = #tpu.pipeline_mode<synchronous>, transform_indices = @transform_14, window_bounds = array<i64: 3, 8, 8>}, {pipeline_mode = #tpu.pipeline_mode<synchronous>, transform_indices = @transform_15, window_bounds = array<i64: 3, 8, 1>}, {pipeline_mode = #tpu.pipeline_mode<synchronous>, transform_indices = @transform_16, window_bounds = array<i64: 3, 8, 9>}, {pipeline_mode = #tpu.pipeline_mode<synchronous>, transform_indices = @transform_17, window_bounds = array<i64: 3, 8, 8>}, {pipeline_mode = #tpu.pipeline_mode<synchronous>, transform_indices = @transform_18, window_bounds = array<i64: 3, 8, 1>}, {transform_indices = @transform_19, window_bounds = array<i64: 1, 6, 8, 256>}]} {
    %c0 = arith.constant 0 : index
    %c0_0 = arith.constant 0 : index
    %c0_1 = arith.constant 0 : index
    %0 = vector.load %arg1[%c0, %c0_0, %c0_1] : memref<1x16x256xf32, #tpu.memory_space<vmem>>, vector<1x16x256xf32>
    %1 = vector.shape_cast %0 : vector<1x16x256xf32> to vector<16x256xf32>
    %c0_2 = arith.constant 0 : index
    %c0_3 = arith.constant 0 : index
    %2 = vector.load %arg4[%c0_2, %c0_3] : memref<8x16xf32, #tpu.memory_space<vmem>>, vector<8x16xf32>
    %cst = arith.constant 0.000000e+00 : f32
    %3 = vector.broadcast %cst : f32 to vector<16x256xf32>
    %4 = arith.maximumf %1, %3 : vector<16x256xf32>
    %cst_4 = arith.constant dense<0.000000e+00> : vector<8x256xf32>
    %5 = tpu.matmul %2, %4, %cst_4 {dimension_numbers = #tpu.dot_dimension_numbers<[1], [0], [0], [1], [0, 0, 1, 1], [], []>} : vector<8x16xf32>, vector<16x256xf32>, vector<8x256xf32> -> vector<8x256xf32>
    %c0_5 = arith.constant 0 : index
    %c0_6 = arith.constant 0 : index
    %6 = vector.load %arg5[%c0_5, %c0_6] : memref<8x1xf32, #tpu.memory_space<vmem>>, vector<8x1xf32>
    %7 = vector.broadcast %6 : vector<8x1xf32> to vector<8x256xf32>
    %8 = arith.addf %5, %7 : vector<8x256xf32>
    %c0_7 = arith.constant 0 : index
    %c0_8 = arith.constant 0 : index
    %c0_9 = arith.constant 0 : index
    %9 = vector.load %arg2[%c0_7, %c0_8, %c0_9] : memref<1x16x256xf32, #tpu.memory_space<vmem>>, vector<1x16x256xf32>
    %10 = vector.shape_cast %9 : vector<1x16x256xf32> to vector<16x256xf32>
    %c0_10 = arith.constant 0 : index
    %c0_11 = arith.constant 0 : index
    %11 = vector.load %arg6[%c0_10, %c0_11] : memref<8x16xf32, #tpu.memory_space<vmem>>, vector<8x16xf32>
    %cst_12 = arith.constant 0.000000e+00 : f32
    %12 = vector.broadcast %cst_12 : f32 to vector<16x256xf32>
    %13 = arith.maximumf %10, %12 : vector<16x256xf32>
    %cst_13 = arith.constant dense<0.000000e+00> : vector<8x256xf32>
    %14 = tpu.matmul %11, %13, %cst_13 {dimension_numbers = #tpu.dot_dimension_numbers<[1], [0], [0], [1], [0, 0, 1, 1], [], []>} : vector<8x16xf32>, vector<16x256xf32>, vector<8x256xf32> -> vector<8x256xf32>
    %c0_14 = arith.constant 0 : index
    %c0_15 = arith.constant 0 : index
    %15 = vector.load %arg7[%c0_14, %c0_15] : memref<8x1xf32, #tpu.memory_space<vmem>>, vector<8x1xf32>
    %16 = vector.broadcast %15 : vector<8x1xf32> to vector<8x256xf32>
    %17 = arith.addf %14, %16 : vector<8x256xf32>
    %c0_16 = arith.constant 0 : index
    %c0_17 = arith.constant 0 : index
    %c0_18 = arith.constant 0 : index
    %c0_19 = arith.constant 0 : index
    %18 = vector.load %arg20[%c0_16, %c0_17, %c0_18, %c0_19] : memref<1x6x8x256xf32, #tpu.memory_space<vmem>>, vector<1x1x8x256xf32>
    %19 = vector.shape_cast %18 : vector<1x1x8x256xf32> to vector<8x256xf32>
    %20 = vector.shape_cast %17 : vector<8x256xf32> to vector<1x1x8x256xf32>
    tpu.vector_store %arg20[%c0_16, %c0_17, %c0_18, %c0_19], %20 {strides = array<i32>} : memref<1x6x8x256xf32, #tpu.memory_space<vmem>>, vector<1x1x8x256xf32>,
    %cst_20 = arith.constant 0.000000e+00 : f32
    %21 = vector.broadcast %cst_20 : f32 to vector<8x256xf32>
    %22 = arith.maximumf %8, %21 : vector<8x256xf32>
    %c34_i32 = arith.constant 34 : i32
    %23 = tpu.dynamic_rotate %22 by %c34_i32 dim 1 : vector<8x256xf32>, i32 -> vector<8x256xf32>
    %c0_21 = arith.constant 0 : index
    %c0_22 = arith.constant 0 : index
    %24 = vector.load %arg3[%c0_21, %c0_22] : memref<26x256xf32, #tpu.memory_space<vmem>>, vector<1x256xf32>
    %25 = vector.broadcast %24 : vector<1x256xf32> to vector<8x256xf32>
    %26 = arith.mulf %23, %25 : vector<8x256xf32>
    %c0_23 = arith.constant 0 : index
    %c0_24 = arith.constant 0 : index
    %c0_25 = arith.constant 0 : index
    %27 = vector.load %arg8[%c0_23, %c0_24, %c0_25] : memref<2x8x25xf32, #tpu.memory_space<vmem>>, vector<1x8x1xf32>
    %28 = vector.shape_cast %27 : vector<1x8x1xf32> to vector<8x1xf32>
    %29 = vector.broadcast %28 : vector<8x1xf32> to vector<8x256xf32>
    %30 = arith.mulf %26, %29 : vector<8x256xf32>
    %c33_i32 = arith.constant 33 : i32
    %31 = tpu.dynamic_rotate %22 by %c33_i32 dim 1 : vector<8x256xf32>, i32 -> vector<8x256xf32>
    %c1 = arith.constant 1 : index
    %c0_26 = arith.constant 0 : index
    %32 = vector.load %arg3[%c1, %c0_26] : memref<26x256xf32, #tpu.memory_space<vmem>>, vector<1x256xf32>
    %33 = vector.broadcast %32 : vector<1x256xf32> to vector<8x256xf32>
    %34 = arith.mulf %31, %33 : vector<8x256xf32>
    %c0_27 = arith.constant 0 : index
    %c0_28 = arith.constant 0 : index
    %c1_29 = arith.constant 1 : index
    %35 = vector.load %arg8[%c0_27, %c0_28, %c1_29] : memref<2x8x25xf32, #tpu.memory_space<vmem>>, vector<1x8x1xf32>
    %36 = vector.shape_cast %35 : vector<1x8x1xf32> to vector<8x1xf32>
    %37 = vector.broadcast %36 : vector<8x1xf32> to vector<8x256xf32>
    %38 = arith.mulf %34, %37 : vector<8x256xf32>
    %39 = arith.addf %30, %38 : vector<8x256xf32>
    %c32_i32 = arith.constant 32 : i32
    %40 = tpu.dynamic_rotate %22 by %c32_i32 dim 1 : vector<8x256xf32>, i32 -> vector<8x256xf32>
    %c2 = arith.constant 2 : index
    %c0_30 = arith.constant 0 : index
    %41 = vector.load %arg3[%c2, %c0_30] : memref<26x256xf32, #tpu.memory_space<vmem>>, vector<1x256xf32>
    %42 = vector.broadcast %41 : vector<1x256xf32> to vector<8x256xf32>
    %43 = arith.mulf %40, %42 : vector<8x256xf32>
    %c0_31 = arith.constant 0 : index
    %c0_32 = arith.constant 0 : index
    %c2_33 = arith.constant 2 : index
    %44 = vector.load %arg8[%c0_31, %c0_32, %c2_33] : memref<2x8x25xf32, #tpu.memory_space<vmem>>, vector<1x8x1xf32>
    %45 = vector.shape_cast %44 : vector<1x8x1xf32> to vector<8x1xf32>
    %46 = vector.broadcast %45 : vector<8x1xf32> to vector<8x256xf32>
    %47 = arith.mulf %43, %46 : vector<8x256xf32>
    %48 = arith.addf %39, %47 : vector<8x256xf32>
    %c31_i32 = arith.constant 31 : i32
    %49 = tpu.dynamic_rotate %22 by %c31_i32 dim 1 : vector<8x256xf32>, i32 -> vector<8x256xf32>
    %c3 = arith.constant 3 : index
    %c0_34 = arith.constant 0 : index
    %50 = vector.load %arg3[%c3, %c0_34] : memref<26x256xf32, #tpu.memory_space<vmem>>, vector<1x256xf32>
    %51 = vector.broadcast %50 : vector<1x256xf32> to vector<8x256xf32>
    %52 = arith.mulf %49, %51 : vector<8x256xf32>
    %c0_35 = arith.constant 0 : index
    %c0_36 = arith.constant 0 : index
    %c3_37 = arith.constant 3 : index
    %53 = vector.load %arg8[%c0_35, %c0_36, %c3_37] : memref<2x8x25xf32, #tpu.memory_space<vmem>>, vector<1x8x1xf32>
    %54 = vector.shape_cast %53 : vector<1x8x1xf32> to vector<8x1xf32>
    %55 = vector.broadcast %54 : vector<8x1xf32> to vector<8x256xf32>
    %56 = arith.mulf %52, %55 : vector<8x256xf32>
    %57 = arith.addf %48, %56 : vector<8x256xf32>
    %c30_i32 = arith.constant 30 : i32
    %58 = tpu.dynamic_rotate %22 by %c30_i32 dim 1 : vector<8x256xf32>, i32 -> vector<8x256xf32>
    %c4 = arith.constant 4 : index
    %c0_38 = arith.constant 0 : index
    %59 = vector.load %arg3[%c4, %c0_38] : memref<26x256xf32, #tpu.memory_space<vmem>>, vector<1x256xf32>
    %60 = vector.broadcast %59 : vector<1x256xf32> to vector<8x256xf32>
    %61 = arith.mulf %58, %60 : vector<8x256xf32>
    %c0_39 = arith.constant 0 : index
    %c0_40 = arith.constant 0 : index
    %c4_41 = arith.constant 4 : index
    %62 = vector.load %arg8[%c0_39, %c0_40, %c4_41] : memref<2x8x25xf32, #tpu.memory_space<vmem>>, vector<1x8x1xf32>
    %63 = vector.shape_cast %62 : vector<1x8x1xf32> to vector<8x1xf32>
    %64 = vector.broadcast %63 : vector<8x1xf32> to vector<8x256xf32>
    %65 = arith.mulf %61, %64 : vector<8x256xf32>
    %66 = arith.addf %57, %65 : vector<8x256xf32>
    %c18_i32 = arith.constant 18 : i32
    %67 = tpu.dynamic_rotate %22 by %c18_i32 dim 1 : vector<8x256xf32>, i32 -> vector<8x256xf32>
    %c5 = arith.constant 5 : index
    %c0_42 = arith.constant 0 : index
    %68 = vector.load %arg3[%c5, %c0_42] : memref<26x256xf32, #tpu.memory_space<vmem>>, vector<1x256xf32>
    %69 = vector.broadcast %68 : vector<1x256xf32> to vector<8x256xf32>
    %70 = arith.mulf %67, %69 : vector<8x256xf32>
    %c0_43 = arith.constant 0 : index
    %c0_44 = arith.constant 0 : index
    %c5_45 = arith.constant 5 : index
    %71 = vector.load %arg8[%c0_43, %c0_44, %c5_45] : memref<2x8x25xf32, #tpu.memory_space<vmem>>, vector<1x8x1xf32>
    %72 = vector.shape_cast %71 : vector<1x8x1xf32> to vector<8x1xf32>
    %73 = vector.broadcast %72 : vector<8x1xf32> to vector<8x256xf32>
    %74 = arith.mulf %70, %73 : vector<8x256xf32>
    %75 = arith.addf %66, %74 : vector<8x256xf32>
    %c17_i32 = arith.constant 17 : i32
    %76 = tpu.dynamic_rotate %22 by %c17_i32 dim 1 : vector<8x256xf32>, i32 -> vector<8x256xf32>
    %c6 = arith.constant 6 : index
    %c0_46 = arith.constant 0 : index
    %77 = vector.load %arg3[%c6, %c0_46] : memref<26x256xf32, #tpu.memory_space<vmem>>, vector<1x256xf32>
    %78 = vector.broadcast %77 : vector<1x256xf32> to vector<8x256xf32>
    %79 = arith.mulf %76, %78 : vector<8x256xf32>
    %c0_47 = arith.constant 0 : index
    %c0_48 = arith.constant 0 : index
    %c6_49 = arith.constant 6 : index
    %80 = vector.load %arg8[%c0_47, %c0_48, %c6_49] : memref<2x8x25xf32, #tpu.memory_space<vmem>>, vector<1x8x1xf32>
    %81 = vector.shape_cast %80 : vector<1x8x1xf32> to vector<8x1xf32>
    %82 = vector.broadcast %81 : vector<8x1xf32> to vector<8x256xf32>
    %83 = arith.mulf %79, %82 : vector<8x256xf32>
    %84 = arith.addf %75, %83 : vector<8x256xf32>
    %c16_i32 = arith.constant 16 : i32
    %85 = tpu.dynamic_rotate %22 by %c16_i32 dim 1 : vector<8x256xf32>, i32 -> vector<8x256xf32>
    %c7 = arith.constant 7 : index
    %c0_50 = arith.constant 0 : index
    %86 = vector.load %arg3[%c7, %c0_50] : memref<26x256xf32, #tpu.memory_space<vmem>>, vector<1x256xf32>
    %87 = vector.broadcast %86 : vector<1x256xf32> to vector<8x256xf32>
    %88 = arith.mulf %85, %87 : vector<8x256xf32>
    %c0_51 = arith.constant 0 : index
    %c0_52 = arith.constant 0 : index
    %c7_53 = arith.constant 7 : index
    %89 = vector.load %arg8[%c0_51, %c0_52, %c7_53] : memref<2x8x25xf32, #tpu.memory_space<vmem>>, vector<1x8x1xf32>
    %90 = vector.shape_cast %89 : vector<1x8x1xf32> to vector<8x1xf32>
    %91 = vector.broadcast %90 : vector<8x1xf32> to vector<8x256xf32>
    %92 = arith.mulf %88, %91 : vector<8x256xf32>
    %93 = arith.addf %84, %92 : vector<8x256xf32>
    %c15_i32 = arith.constant 15 : i32
    %94 = tpu.dynamic_rotate %22 by %c15_i32 dim 1 : vector<8x256xf32>, i32 -> vector<8x256xf32>
    %c8 = arith.constant 8 : index
    %c0_54 = arith.constant 0 : index
    %95 = vector.load %arg3[%c8, %c0_54] : memref<26x256xf32, #tpu.memory_space<vmem>>, vector<1x256xf32>
    %96 = vector.broadcast %95 : vector<1x256xf32> to vector<8x256xf32>
    %97 = arith.mulf %94, %96 : vector<8x256xf32>
    %c0_55 = arith.constant 0 : index
    %c0_56 = arith.constant 0 : index
    %c8_57 = arith.constant 8 : index
    %98 = vector.load %arg8[%c0_55, %c0_56, %c8_57] : memref<2x8x25xf32, #tpu.memory_space<vmem>>, vector<1x8x1xf32>
    %99 = vector.shape_cast %98 : vector<1x8x1xf32> to vector<8x1xf32>
    %100 = vector.broadcast %99 : vector<8x1xf32> to vector<8x256xf32>
    %101 = arith.mulf %97, %100 : vector<8x256xf32>
    %102 = arith.addf %93, %101 : vector<8x256xf32>
    %c14_i32 = arith.constant 14 : i32
    %103 = tpu.dynamic_rotate %22 by %c14_i32 dim 1 : vector<8x256xf32>, i32 -> vector<8x256xf32>
    %c9 = arith.constant 9 : index
    %c0_58 = arith.constant 0 : index
    %104 = vector.load %arg3[%c9, %c0_58] : memref<26x256xf32, #tpu.memory_space<vmem>>, vector<1x256xf32>
    %105 = vector.broadcast %104 : vector<1x256xf32> to vector<8x256xf32>
    %106 = arith.mulf %103, %105 : vector<8x256xf32>
    %c0_59 = arith.constant 0 : index
    %c0_60 = arith.constant 0 : index
    %c9_61 = arith.constant 9 : index
    %107 = vector.load %arg8[%c0_59, %c0_60, %c9_61] : memref<2x8x25xf32, #tpu.memory_space<vmem>>, vector<1x8x1xf32>
    %108 = vector.shape_cast %107 : vector<1x8x1xf32> to vector<8x1xf32>
    %109 = vector.broadcast %108 : vector<8x1xf32> to vector<8x256xf32>
    %110 = arith.mulf %106, %109 : vector<8x256xf32>
    %111 = arith.addf %102, %110 : vector<8x256xf32>
    %c2_i32 = arith.constant 2 : i32
    %112 = tpu.dynamic_rotate %22 by %c2_i32 dim 1 : vector<8x256xf32>, i32 -> vector<8x256xf32>
    %c10 = arith.constant 10 : index
    %c0_62 = arith.constant 0 : index
    %113 = vector.load %arg3[%c10, %c0_62] : memref<26x256xf32, #tpu.memory_space<vmem>>, vector<1x256xf32>
    %114 = vector.broadcast %113 : vector<1x256xf32> to vector<8x256xf32>
    %115 = arith.mulf %112, %114 : vector<8x256xf32>
    %c0_63 = arith.constant 0 : index
    %c0_64 = arith.constant 0 : index
    %c10_65 = arith.constant 10 : index
    %116 = vector.load %arg8[%c0_63, %c0_64, %c10_65] : memref<2x8x25xf32, #tpu.memory_space<vmem>>, vector<1x8x1xf32>
    %117 = vector.shape_cast %116 : vector<1x8x1xf32> to vector<8x1xf32>
    %118 = vector.broadcast %117 : vector<8x1xf32> to vector<8x256xf32>
    %119 = arith.mulf %115, %118 : vector<8x256xf32>
    %120 = arith.addf %111, %119 : vector<8x256xf32>
    %c1_i32 = arith.constant 1 : i32
    %121 = tpu.dynamic_rotate %22 by %c1_i32 dim 1 : vector<8x256xf32>, i32 -> vector<8x256xf32>
    %c11 = arith.constant 11 : index
    %c0_66 = arith.constant 0 : index
    %122 = vector.load %arg3[%c11, %c0_66] : memref<26x256xf32, #tpu.memory_space<vmem>>, vector<1x256xf32>
    %123 = vector.broadcast %122 : vector<1x256xf32> to vector<8x256xf32>
    %124 = arith.mulf %121, %123 : vector<8x256xf32>
    %c0_67 = arith.constant 0 : index
    %c0_68 = arith.constant 0 : index
    %c11_69 = arith.constant 11 : index
    %125 = vector.load %arg8[%c0_67, %c0_68, %c11_69] : memref<2x8x25xf32, #tpu.memory_space<vmem>>, vector<1x8x1xf32>
    %126 = vector.shape_cast %125 : vector<1x8x1xf32> to vector<8x1xf32>
    %127 = vector.broadcast %126 : vector<8x1xf32> to vector<8x256xf32>
    %128 = arith.mulf %124, %127 : vector<8x256xf32>
    %129 = arith.addf %120, %128 : vector<8x256xf32>
    %c0_70 = arith.constant 0 : index
    %c0_71 = arith.constant 0 : index
    %c12 = arith.constant 12 : index
    %130 = vector.load %arg8[%c0_70, %c0_71, %c12] : memref<2x8x25xf32, #tpu.memory_space<vmem>>, vector<1x8x1xf32>
    %131 = vector.shape_cast %130 : vector<1x8x1xf32> to vector<8x1xf32>
    %132 = vector.broadcast %131 : vector<8x1xf32> to vector<8x256xf32>
    %133 = arith.mulf %22, %132 : vector<8x256xf32>
    %134 = arith.addf %129, %133 : vector<8x256xf32>
    %c255_i32 = arith.constant 255 : i32
    %135 = tpu.dynamic_rotate %22 by %c255_i32 dim 1 : vector<8x256xf32>, i32 -> vector<8x256xf32>
    %c13 = arith.constant 13 : index
    %c0_72 = arith.constant 0 : index
    %136 = vector.load %arg3[%c13, %c0_72] : memref<26x256xf32, #tpu.memory_space<vmem>>, vector<1x256xf32>
    %137 = vector.broadcast %136 : vector<1x256xf32> to vector<8x256xf32>
    %138 = arith.mulf %135, %137 : vector<8x256xf32>
    %c0_73 = arith.constant 0 : index
    %c0_74 = arith.constant 0 : index
    %c13_75 = arith.constant 13 : index
    %139 = vector.load %arg8[%c0_73, %c0_74, %c13_75] : memref<2x8x25xf32, #tpu.memory_space<vmem>>, vector<1x8x1xf32>
    %140 = vector.shape_cast %139 : vector<1x8x1xf32> to vector<8x1xf32>
    %141 = vector.broadcast %140 : vector<8x1xf32> to vector<8x256xf32>
    %142 = arith.mulf %138, %141 : vector<8x256xf32>
    %143 = arith.addf %134, %142 : vector<8x256xf32>
    %c254_i32 = arith.constant 254 : i32
    %144 = tpu.dynamic_rotate %22 by %c254_i32 dim 1 : vector<8x256xf32>, i32 -> vector<8x256xf32>
    %c14 = arith.constant 14 : index
    %c0_76 = arith.constant 0 : index
    %145 = vector.load %arg3[%c14, %c0_76] : memref<26x256xf32, #tpu.memory_space<vmem>>, vector<1x256xf32>
    %146 = vector.broadcast %145 : vector<1x256xf32> to vector<8x256xf32>
    %147 = arith.mulf %144, %146 : vector<8x256xf32>
    %c0_77 = arith.constant 0 : index
    %c0_78 = arith.constant 0 : index
    %c14_79 = arith.constant 14 : index
    %148 = vector.load %arg8[%c0_77, %c0_78, %c14_79] : memref<2x8x25xf32, #tpu.memory_space<vmem>>, vector<1x8x1xf32>
    %149 = vector.shape_cast %148 : vector<1x8x1xf32> to vector<8x1xf32>
    %150 = vector.broadcast %149 : vector<8x1xf32> to vector<8x256xf32>
    %151 = arith.mulf %147, %150 : vector<8x256xf32>
    %152 = arith.addf %143, %151 : vector<8x256xf32>
    %c242_i32 = arith.constant 242 : i32
    %153 = tpu.dynamic_rotate %22 by %c242_i32 dim 1 : vector<8x256xf32>, i32 -> vector<8x256xf32>
    %c15 = arith.constant 15 : index
    %c0_80 = arith.constant 0 : index
    %154 = vector.load %arg3[%c15, %c0_80] : memref<26x256xf32, #tpu.memory_space<vmem>>, vector<1x256xf32>
    %155 = vector.broadcast %154 : vector<1x256xf32> to vector<8x256xf32>
    %156 = arith.mulf %153, %155 : vector<8x256xf32>
    %c0_81 = arith.constant 0 : index
    %c0_82 = arith.constant 0 : index
    %c15_83 = arith.constant 15 : index
    %157 = vector.load %arg8[%c0_81, %c0_82, %c15_83] : memref<2x8x25xf32, #tpu.memory_space<vmem>>, vector<1x8x1xf32>
    %158 = vector.shape_cast %157 : vector<1x8x1xf32> to vector<8x1xf32>
    %159 = vector.broadcast %158 : vector<8x1xf32> to vector<8x256xf32>
    %160 = arith.mulf %156, %159 : vector<8x256xf32>
    %161 = arith.addf %152, %160 : vector<8x256xf32>
    %c241_i32 = arith.constant 241 : i32
    %162 = tpu.dynamic_rotate %22 by %c241_i32 dim 1 : vector<8x256xf32>, i32 -> vector<8x256xf32>
    %c16 = arith.constant 16 : index
    %c0_84 = arith.constant 0 : index
    %163 = vector.load %arg3[%c16, %c0_84] : memref<26x256xf32, #tpu.memory_space<vmem>>, vector<1x256xf32>
    %164 = vector.broadcast %163 : vector<1x256xf32> to vector<8x256xf32>
    %165 = arith.mulf %162, %164 : vector<8x256xf32>
    %c0_85 = arith.constant 0 : index
    %c0_86 = arith.constant 0 : index
    %c16_87 = arith.constant 16 : index
    %166 = vector.load %arg8[%c0_85, %c0_86, %c16_87] : memref<2x8x25xf32, #tpu.memory_space<vmem>>, vector<1x8x1xf32>
    %167 = vector.shape_cast %166 : vector<1x8x1xf32> to vector<8x1xf32>
    %168 = vector.broadcast %167 : vector<8x1xf32> to vector<8x256xf32>
    %169 = arith.mulf %165, %168 : vector<8x256xf32>
    %170 = arith.addf %161, %169 : vector<8x256xf32>
    %c240_i32 = arith.constant 240 : i32
    %171 = tpu.dynamic_rotate %22 by %c240_i32 dim 1 : vector<8x256xf32>, i32 -> vector<8x256xf32>
    %c17 = arith.constant 17 : index
    %c0_88 = arith.constant 0 : index
    %172 = vector.load %arg3[%c17, %c0_88] : memref<26x256xf32, #tpu.memory_space<vmem>>, vector<1x256xf32>
    %173 = vector.broadcast %172 : vector<1x256xf32> to vector<8x256xf32>
    %174 = arith.mulf %171, %173 : vector<8x256xf32>
    %c0_89 = arith.constant 0 : index
    %c0_90 = arith.constant 0 : index
    %c17_91 = arith.constant 17 : index
    %175 = vector.load %arg8[%c0_89, %c0_90, %c17_91] : memref<2x8x25xf32, #tpu.memory_space<vmem>>, vector<1x8x1xf32>
    %176 = vector.shape_cast %175 : vector<1x8x1xf32> to vector<8x1xf32>
    %177 = vector.broadcast %176 : vector<8x1xf32> to vector<8x256xf32>
    %178 = arith.mulf %174, %177 : vector<8x256xf32>
    %179 = arith.addf %170, %178 : vector<8x256xf32>
    %c239_i32 = arith.constant 239 : i32
    %180 = tpu.dynamic_rotate %22 by %c239_i32 dim 1 : vector<8x256xf32>, i32 -> vector<8x256xf32>
    %c18 = arith.constant 18 : index
    %c0_92 = arith.constant 0 : index
    %181 = vector.load %arg3[%c18, %c0_92] : memref<26x256xf32, #tpu.memory_space<vmem>>, vector<1x256xf32>
    %182 = vector.broadcast %181 : vector<1x256xf32> to vector<8x256xf32>
    %183 = arith.mulf %180, %182 : vector<8x256xf32>
    %c0_93 = arith.constant 0 : index
    %c0_94 = arith.constant 0 : index
    %c18_95 = arith.constant 18 : index
    %184 = vector.load %arg8[%c0_93, %c0_94, %c18_95] : memref<2x8x25xf32, #tpu.memory_space<vmem>>, vector<1x8x1xf32>
    %185 = vector.shape_cast %184 : vector<1x8x1xf32> to vector<8x1xf32>
    %186 = vector.broadcast %185 : vector<8x1xf32> to vector<8x256xf32>
    %187 = arith.mulf %183, %186 : vector<8x256xf32>
    %188 = arith.addf %179, %187 : vector<8x256xf32>
    %c238_i32 = arith.constant 238 : i32
    %189 = tpu.dynamic_rotate %22 by %c238_i32 dim 1 : vector<8x256xf32>, i32 -> vector<8x256xf32>
    %c19 = arith.constant 19 : index
    %c0_96 = arith.constant 0 : index
    %190 = vector.load %arg3[%c19, %c0_96] : memref<26x256xf32, #tpu.memory_space<vmem>>, vector<1x256xf32>
    %191 = vector.broadcast %190 : vector<1x256xf32> to vector<8x256xf32>
    %192 = arith.mulf %189, %191 : vector<8x256xf32>
    %c0_97 = arith.constant 0 : index
    %c0_98 = arith.constant 0 : index
    %c19_99 = arith.constant 19 : index
    %193 = vector.load %arg8[%c0_97, %c0_98, %c19_99] : memref<2x8x25xf32, #tpu.memory_space<vmem>>, vector<1x8x1xf32>
    %194 = vector.shape_cast %193 : vector<1x8x1xf32> to vector<8x1xf32>
    %195 = vector.broadcast %194 : vector<8x1xf32> to vector<8x256xf32>
    %196 = arith.mulf %192, %195 : vector<8x256xf32>
    %197 = arith.addf %188, %196 : vector<8x256xf32>
    %c226_i32 = arith.constant 226 : i32
    %198 = tpu.dynamic_rotate %22 by %c226_i32 dim 1 : vector<8x256xf32>, i32 -> vector<8x256xf32>
    %c20 = arith.constant 20 : index
    %c0_100 = arith.constant 0 : index
    %199 = vector.load %arg3[%c20, %c0_100] : memref<26x256xf32, #tpu.memory_space<vmem>>, vector<1x256xf32>
    %200 = vector.broadcast %199 : vector<1x256xf32> to vector<8x256xf32>
    %201 = arith.mulf %198, %200 : vector<8x256xf32>
    %c0_101 = arith.constant 0 : index
    %c0_102 = arith.constant 0 : index
    %c20_103 = arith.constant 20 : index
    %202 = vector.load %arg8[%c0_101, %c0_102, %c20_103] : memref<2x8x25xf32, #tpu.memory_space<vmem>>, vector<1x8x1xf32>
    %203 = vector.shape_cast %202 : vector<1x8x1xf32> to vector<8x1xf32>
    %204 = vector.broadcast %203 : vector<8x1xf32> to vector<8x256xf32>
    %205 = arith.mulf %201, %204 : vector<8x256xf32>
    %206 = arith.addf %197, %205 : vector<8x256xf32>
    %c225_i32 = arith.constant 225 : i32
    %207 = tpu.dynamic_rotate %22 by %c225_i32 dim 1 : vector<8x256xf32>, i32 -> vector<8x256xf32>
    %c21 = arith.constant 21 : index
    %c0_104 = arith.constant 0 : index
    %208 = vector.load %arg3[%c21, %c0_104] : memref<26x256xf32, #tpu.memory_space<vmem>>, vector<1x256xf32>
    %209 = vector.broadcast %208 : vector<1x256xf32> to vector<8x256xf32>
    %210 = arith.mulf %207, %209 : vector<8x256xf32>
    %c0_105 = arith.constant 0 : index
    %c0_106 = arith.constant 0 : index
    %c21_107 = arith.constant 21 : index
    %211 = vector.load %arg8[%c0_105, %c0_106, %c21_107] : memref<2x8x25xf32, #tpu.memory_space<vmem>>, vector<1x8x1xf32>
    %212 = vector.shape_cast %211 : vector<1x8x1xf32> to vector<8x1xf32>
    %213 = vector.broadcast %212 : vector<8x1xf32> to vector<8x256xf32>
    %214 = arith.mulf %210, %213 : vector<8x256xf32>
    %215 = arith.addf %206, %214 : vector<8x256xf32>
    %c224_i32 = arith.constant 224 : i32
    %216 = tpu.dynamic_rotate %22 by %c224_i32 dim 1 : vector<8x256xf32>, i32 -> vector<8x256xf32>
    %c22 = arith.constant 22 : index
    %c0_108 = arith.constant 0 : index
    %217 = vector.load %arg3[%c22, %c0_108] : memref<26x256xf32, #tpu.memory_space<vmem>>, vector<1x256xf32>
    %218 = vector.broadcast %217 : vector<1x256xf32> to vector<8x256xf32>
    %219 = arith.mulf %216, %218 : vector<8x256xf32>
    %c0_109 = arith.constant 0 : index
    %c0_110 = arith.constant 0 : index
    %c22_111 = arith.constant 22 : index
    %220 = vector.load %arg8[%c0_109, %c0_110, %c22_111] : memref<2x8x25xf32, #tpu.memory_space<vmem>>, vector<1x8x1xf32>
    %221 = vector.shape_cast %220 : vector<1x8x1xf32> to vector<8x1xf32>
    %222 = vector.broadcast %221 : vector<8x1xf32> to vector<8x256xf32>
    %223 = arith.mulf %219, %222 : vector<8x256xf32>
    %224 = arith.addf %215, %223 : vector<8x256xf32>
    %c223_i32 = arith.constant 223 : i32
    %225 = tpu.dynamic_rotate %22 by %c223_i32 dim 1 : vector<8x256xf32>, i32 -> vector<8x256xf32>
    %c23 = arith.constant 23 : index
    %c0_112 = arith.constant 0 : index
    %226 = vector.load %arg3[%c23, %c0_112] : memref<26x256xf32, #tpu.memory_space<vmem>>, vector<1x256xf32>
    %227 = vector.broadcast %226 : vector<1x256xf32> to vector<8x256xf32>
    %228 = arith.mulf %225, %227 : vector<8x256xf32>
    %c0_113 = arith.constant 0 : index
    %c0_114 = arith.constant 0 : index
    %c23_115 = arith.constant 23 : index
    %229 = vector.load %arg8[%c0_113, %c0_114, %c23_115] : memref<2x8x25xf32, #tpu.memory_space<vmem>>, vector<1x8x1xf32>
    %230 = vector.shape_cast %229 : vector<1x8x1xf32> to vector<8x1xf32>
    %231 = vector.broadcast %230 : vector<8x1xf32> to vector<8x256xf32>
    %232 = arith.mulf %228, %231 : vector<8x256xf32>
    %233 = arith.addf %224, %232 : vector<8x256xf32>
    %c222_i32 = arith.constant 222 : i32
    %234 = tpu.dynamic_rotate %22 by %c222_i32 dim 1 : vector<8x256xf32>, i32 -> vector<8x256xf32>
    %c24 = arith.constant 24 : index
    %c0_116 = arith.constant 0 : index
    %235 = vector.load %arg3[%c24, %c0_116] : memref<26x256xf32, #tpu.memory_space<vmem>>, vector<1x256xf32>
    %236 = vector.broadcast %235 : vector<1x256xf32> to vector<8x256xf32>
    %237 = arith.mulf %234, %236 : vector<8x256xf32>
    %c0_117 = arith.constant 0 : index
    %c0_118 = arith.constant 0 : index
    %c24_119 = arith.constant 24 : index
    %238 = vector.load %arg8[%c0_117, %c0_118, %c24_119] : memref<2x8x25xf32, #tpu.memory_space<vmem>>, vector<1x8x1xf32>
    %239 = vector.shape_cast %238 : vector<1x8x1xf32> to vector<8x1xf32>
    %240 = vector.broadcast %239 : vector<8x1xf32> to vector<8x256xf32>
    %241 = arith.mulf %237, %240 : vector<8x256xf32>
    %242 = arith.addf %233, %241 : vector<8x256xf32>
    %c0_120 = arith.constant 0 : index
    %c0_121 = arith.constant 0 : index
    %c0_122 = arith.constant 0 : index
    %243 = vector.load %arg9[%c0_120, %c0_121, %c0_122] : memref<2x8x8xf32, #tpu.memory_space<vmem>>, vector<1x8x8xf32>
    %244 = vector.shape_cast %243 : vector<1x8x8xf32> to vector<8x8xf32>
    %cst_123 = arith.constant dense<0.000000e+00> : vector<8x256xf32>
    %245 = tpu.matmul %244, %242, %cst_123 {dimension_numbers = #tpu.dot_dimension_numbers<[1], [0], [0], [1], [0, 0, 1, 1], [], []>} : vector<8x8xf32>, vector<8x256xf32>, vector<8x256xf32> -> vector<8x256xf32>
    %c0_124 = arith.constant 0 : index
    %c0_125 = arith.constant 0 : index
    %c0_126 = arith.constant 0 : index
    %246 = vector.load %arg10[%c0_124, %c0_125, %c0_126] : memref<2x8x1xf32, #tpu.memory_space<vmem>>, vector<1x8x1xf32>
    %247 = vector.shape_cast %246 : vector<1x8x1xf32> to vector<8x1xf32>
    %248 = vector.broadcast %247 : vector<8x1xf32> to vector<8x256xf32>
    %249 = arith.addf %245, %248 : vector<8x256xf32>
    %cst_127 = arith.constant 0.000000e+00 : f32
    %250 = vector.broadcast %cst_127 : f32 to vector<8x256xf32>
    %251 = arith.maximumf %249, %250 : vector<8x256xf32>
    %c34_i32_128 = arith.constant 34 : i32
    %252 = tpu.dynamic_rotate %251 by %c34_i32_128 dim 1 : vector<8x256xf32>, i32 -> vector<8x256xf32>
    %c0_129 = arith.constant 0 : index
    %c0_130 = arith.constant 0 : index
    %253 = vector.load %arg3[%c0_129, %c0_130] : memref<26x256xf32, #tpu.memory_space<vmem>>, vector<1x256xf32>
    %254 = vector.broadcast %253 : vector<1x256xf32> to vector<8x256xf32>
    %255 = arith.mulf %252, %254 : vector<8x256xf32>
    %c0_131 = arith.constant 0 : index
    %c0_132 = arith.constant 0 : index
    %c0_133 = arith.constant 0 : index
    %256 = vector.load %arg11[%c0_131, %c0_132, %c0_133] : memref<2x8x25xf32, #tpu.memory_space<vmem>>, vector<1x8x1xf32>
    %257 = vector.shape_cast %256 : vector<1x8x1xf32> to vector<8x1xf32>
    %258 = vector.broadcast %257 : vector<8x1xf32> to vector<8x256xf32>
    %259 = arith.mulf %255, %258 : vector<8x256xf32>
    %c33_i32_134 = arith.constant 33 : i32
    %260 = tpu.dynamic_rotate %251 by %c33_i32_134 dim 1 : vector<8x256xf32>, i32 -> vector<8x256xf32>
    %c1_135 = arith.constant 1 : index
    %c0_136 = arith.constant 0 : index
    %261 = vector.load %arg3[%c1_135, %c0_136] : memref<26x256xf32, #tpu.memory_space<vmem>>, vector<1x256xf32>
    %262 = vector.broadcast %261 : vector<1x256xf32> to vector<8x256xf32>
    %263 = arith.mulf %260, %262 : vector<8x256xf32>
    %c0_137 = arith.constant 0 : index
    %c0_138 = arith.constant 0 : index
    %c1_139 = arith.constant 1 : index
    %264 = vector.load %arg11[%c0_137, %c0_138, %c1_139] : memref<2x8x25xf32, #tpu.memory_space<vmem>>, vector<1x8x1xf32>
    %265 = vector.shape_cast %264 : vector<1x8x1xf32> to vector<8x1xf32>
    %266 = vector.broadcast %265 : vector<8x1xf32> to vector<8x256xf32>
    %267 = arith.mulf %263, %266 : vector<8x256xf32>
    %268 = arith.addf %259, %267 : vector<8x256xf32>
    %c32_i32_140 = arith.constant 32 : i32
    %269 = tpu.dynamic_rotate %251 by %c32_i32_140 dim 1 : vector<8x256xf32>, i32 -> vector<8x256xf32>
    %c2_141 = arith.constant 2 : index
    %c0_142 = arith.constant 0 : index
    %270 = vector.load %arg3[%c2_141, %c0_142] : memref<26x256xf32, #tpu.memory_space<vmem>>, vector<1x256xf32>
    %271 = vector.broadcast %270 : vector<1x256xf32> to vector<8x256xf32>
    %272 = arith.mulf %269, %271 : vector<8x256xf32>
    %c0_143 = arith.constant 0 : index
    %c0_144 = arith.constant 0 : index
    %c2_145 = arith.constant 2 : index
    %273 = vector.load %arg11[%c0_143, %c0_144, %c2_145] : memref<2x8x25xf32, #tpu.memory_space<vmem>>, vector<1x8x1xf32>
    %274 = vector.shape_cast %273 : vector<1x8x1xf32> to vector<8x1xf32>
    %275 = vector.broadcast %274 : vector<8x1xf32> to vector<8x256xf32>
    %276 = arith.mulf %272, %275 : vector<8x256xf32>
    %277 = arith.addf %268, %276 : vector<8x256xf32>
    %c31_i32_146 = arith.constant 31 : i32
    %278 = tpu.dynamic_rotate %251 by %c31_i32_146 dim 1 : vector<8x256xf32>, i32 -> vector<8x256xf32>
    %c3_147 = arith.constant 3 : index
    %c0_148 = arith.constant 0 : index
    %279 = vector.load %arg3[%c3_147, %c0_148] : memref<26x256xf32, #tpu.memory_space<vmem>>, vector<1x256xf32>
    %280 = vector.broadcast %279 : vector<1x256xf32> to vector<8x256xf32>
    %281 = arith.mulf %278, %280 : vector<8x256xf32>
    %c0_149 = arith.constant 0 : index
    %c0_150 = arith.constant 0 : index
    %c3_151 = arith.constant 3 : index
    %282 = vector.load %arg11[%c0_149, %c0_150, %c3_151] : memref<2x8x25xf32, #tpu.memory_space<vmem>>, vector<1x8x1xf32>
    %283 = vector.shape_cast %282 : vector<1x8x1xf32> to vector<8x1xf32>
    %284 = vector.broadcast %283 : vector<8x1xf32> to vector<8x256xf32>
    %285 = arith.mulf %281, %284 : vector<8x256xf32>
    %286 = arith.addf %277, %285 : vector<8x256xf32>
    %c30_i32_152 = arith.constant 30 : i32
    %287 = tpu.dynamic_rotate %251 by %c30_i32_152 dim 1 : vector<8x256xf32>, i32 -> vector<8x256xf32>
    %c4_153 = arith.constant 4 : index
    %c0_154 = arith.constant 0 : index
    %288 = vector.load %arg3[%c4_153, %c0_154] : memref<26x256xf32, #tpu.memory_space<vmem>>, vector<1x256xf32>
    %289 = vector.broadcast %288 : vector<1x256xf32> to vector<8x256xf32>
    %290 = arith.mulf %287, %289 : vector<8x256xf32>
    %c0_155 = arith.constant 0 : index
    %c0_156 = arith.constant 0 : index
    %c4_157 = arith.constant 4 : index
    %291 = vector.load %arg11[%c0_155, %c0_156, %c4_157] : memref<2x8x25xf32, #tpu.memory_space<vmem>>, vector<1x8x1xf32>
    %292 = vector.shape_cast %291 : vector<1x8x1xf32> to vector<8x1xf32>
    %293 = vector.broadcast %292 : vector<8x1xf32> to vector<8x256xf32>
    %294 = arith.mulf %290, %293 : vector<8x256xf32>
    %295 = arith.addf %286, %294 : vector<8x256xf32>
    %c18_i32_158 = arith.constant 18 : i32
    %296 = tpu.dynamic_rotate %251 by %c18_i32_158 dim 1 : vector<8x256xf32>, i32 -> vector<8x256xf32>
    %c5_159 = arith.constant 5 : index
    %c0_160 = arith.constant 0 : index
    %297 = vector.load %arg3[%c5_159, %c0_160] : memref<26x256xf32, #tpu.memory_space<vmem>>, vector<1x256xf32>
    %298 = vector.broadcast %297 : vector<1x256xf32> to vector<8x256xf32>
    %299 = arith.mulf %296, %298 : vector<8x256xf32>
    %c0_161 = arith.constant 0 : index
    %c0_162 = arith.constant 0 : index
    %c5_163 = arith.constant 5 : index
    %300 = vector.load %arg11[%c0_161, %c0_162, %c5_163] : memref<2x8x25xf32, #tpu.memory_space<vmem>>, vector<1x8x1xf32>
    %301 = vector.shape_cast %300 : vector<1x8x1xf32> to vector<8x1xf32>
    %302 = vector.broadcast %301 : vector<8x1xf32> to vector<8x256xf32>
    %303 = arith.mulf %299, %302 : vector<8x256xf32>
    %304 = arith.addf %295, %303 : vector<8x256xf32>
    %c17_i32_164 = arith.constant 17 : i32
    %305 = tpu.dynamic_rotate %251 by %c17_i32_164 dim 1 : vector<8x256xf32>, i32 -> vector<8x256xf32>
    %c6_165 = arith.constant 6 : index
    %c0_166 = arith.constant 0 : index
    %306 = vector.load %arg3[%c6_165, %c0_166] : memref<26x256xf32, #tpu.memory_space<vmem>>, vector<1x256xf32>
    %307 = vector.broadcast %306 : vector<1x256xf32> to vector<8x256xf32>
    %308 = arith.mulf %305, %307 : vector<8x256xf32>
    %c0_167 = arith.constant 0 : index
    %c0_168 = arith.constant 0 : index
    %c6_169 = arith.constant 6 : index
    %309 = vector.load %arg11[%c0_167, %c0_168, %c6_169] : memref<2x8x25xf32, #tpu.memory_space<vmem>>, vector<1x8x1xf32>
    %310 = vector.shape_cast %309 : vector<1x8x1xf32> to vector<8x1xf32>
    %311 = vector.broadcast %310 : vector<8x1xf32> to vector<8x256xf32>
    %312 = arith.mulf %308, %311 : vector<8x256xf32>
    %313 = arith.addf %304, %312 : vector<8x256xf32>
    %c16_i32_170 = arith.constant 16 : i32
    %314 = tpu.dynamic_rotate %251 by %c16_i32_170 dim 1 : vector<8x256xf32>, i32 -> vector<8x256xf32>
    %c7_171 = arith.constant 7 : index
    %c0_172 = arith.constant 0 : index
    %315 = vector.load %arg3[%c7_171, %c0_172] : memref<26x256xf32, #tpu.memory_space<vmem>>, vector<1x256xf32>
    %316 = vector.broadcast %315 : vector<1x256xf32> to vector<8x256xf32>
    %317 = arith.mulf %314, %316 : vector<8x256xf32>
    %c0_173 = arith.constant 0 : index
    %c0_174 = arith.constant 0 : index
    %c7_175 = arith.constant 7 : index
    %318 = vector.load %arg11[%c0_173, %c0_174, %c7_175] : memref<2x8x25xf32, #tpu.memory_space<vmem>>, vector<1x8x1xf32>
    %319 = vector.shape_cast %318 : vector<1x8x1xf32> to vector<8x1xf32>
    %320 = vector.broadcast %319 : vector<8x1xf32> to vector<8x256xf32>
    %321 = arith.mulf %317, %320 : vector<8x256xf32>
    %322 = arith.addf %313, %321 : vector<8x256xf32>
    %c15_i32_176 = arith.constant 15 : i32
    %323 = tpu.dynamic_rotate %251 by %c15_i32_176 dim 1 : vector<8x256xf32>, i32 -> vector<8x256xf32>
    %c8_177 = arith.constant 8 : index
    %c0_178 = arith.constant 0 : index
    %324 = vector.load %arg3[%c8_177, %c0_178] : memref<26x256xf32, #tpu.memory_space<vmem>>, vector<1x256xf32>
    %325 = vector.broadcast %324 : vector<1x256xf32> to vector<8x256xf32>
    %326 = arith.mulf %323, %325 : vector<8x256xf32>
    %c0_179 = arith.constant 0 : index
    %c0_180 = arith.constant 0 : index
    %c8_181 = arith.constant 8 : index
    %327 = vector.load %arg11[%c0_179, %c0_180, %c8_181] : memref<2x8x25xf32, #tpu.memory_space<vmem>>, vector<1x8x1xf32>
    %328 = vector.shape_cast %327 : vector<1x8x1xf32> to vector<8x1xf32>
    %329 = vector.broadcast %328 : vector<8x1xf32> to vector<8x256xf32>
    %330 = arith.mulf %326, %329 : vector<8x256xf32>
    %331 = arith.addf %322, %330 : vector<8x256xf32>
    %c14_i32_182 = arith.constant 14 : i32
    %332 = tpu.dynamic_rotate %251 by %c14_i32_182 dim 1 : vector<8x256xf32>, i32 -> vector<8x256xf32>
    %c9_183 = arith.constant 9 : index
    %c0_184 = arith.constant 0 : index
    %333 = vector.load %arg3[%c9_183, %c0_184] : memref<26x256xf32, #tpu.memory_space<vmem>>, vector<1x256xf32>
    %334 = vector.broadcast %333 : vector<1x256xf32> to vector<8x256xf32>
    %335 = arith.mulf %332, %334 : vector<8x256xf32>
    %c0_185 = arith.constant 0 : index
    %c0_186 = arith.constant 0 : index
    %c9_187 = arith.constant 9 : index
    %336 = vector.load %arg11[%c0_185, %c0_186, %c9_187] : memref<2x8x25xf32, #tpu.memory_space<vmem>>, vector<1x8x1xf32>
    %337 = vector.shape_cast %336 : vector<1x8x1xf32> to vector<8x1xf32>
    %338 = vector.broadcast %337 : vector<8x1xf32> to vector<8x256xf32>
    %339 = arith.mulf %335, %338 : vector<8x256xf32>
    %340 = arith.addf %331, %339 : vector<8x256xf32>
    %c2_i32_188 = arith.constant 2 : i32
    %341 = tpu.dynamic_rotate %251 by %c2_i32_188 dim 1 : vector<8x256xf32>, i32 -> vector<8x256xf32>
    %c10_189 = arith.constant 10 : index
    %c0_190 = arith.constant 0 : index
    %342 = vector.load %arg3[%c10_189, %c0_190] : memref<26x256xf32, #tpu.memory_space<vmem>>, vector<1x256xf32>
    %343 = vector.broadcast %342 : vector<1x256xf32> to vector<8x256xf32>
    %344 = arith.mulf %341, %343 : vector<8x256xf32>
    %c0_191 = arith.constant 0 : index
    %c0_192 = arith.constant 0 : index
    %c10_193 = arith.constant 10 : index
    %345 = vector.load %arg11[%c0_191, %c0_192, %c10_193] : memref<2x8x25xf32, #tpu.memory_space<vmem>>, vector<1x8x1xf32>
    %346 = vector.shape_cast %345 : vector<1x8x1xf32> to vector<8x1xf32>
    %347 = vector.broadcast %346 : vector<8x1xf32> to vector<8x256xf32>
    %348 = arith.mulf %344, %347 : vector<8x256xf32>
    %349 = arith.addf %340, %348 : vector<8x256xf32>
    %c1_i32_194 = arith.constant 1 : i32
    %350 = tpu.dynamic_rotate %251 by %c1_i32_194 dim 1 : vector<8x256xf32>, i32 -> vector<8x256xf32>
    %c11_195 = arith.constant 11 : index
    %c0_196 = arith.constant 0 : index
    %351 = vector.load %arg3[%c11_195, %c0_196] : memref<26x256xf32, #tpu.memory_space<vmem>>, vector<1x256xf32>
    %352 = vector.broadcast %351 : vector<1x256xf32> to vector<8x256xf32>
    %353 = arith.mulf %350, %352 : vector<8x256xf32>
    %c0_197 = arith.constant 0 : index
    %c0_198 = arith.constant 0 : index
    %c11_199 = arith.constant 11 : index
    %354 = vector.load %arg11[%c0_197, %c0_198, %c11_199] : memref<2x8x25xf32, #tpu.memory_space<vmem>>, vector<1x8x1xf32>
    %355 = vector.shape_cast %354 : vector<1x8x1xf32> to vector<8x1xf32>
    %356 = vector.broadcast %355 : vector<8x1xf32> to vector<8x256xf32>
    %357 = arith.mulf %353, %356 : vector<8x256xf32>
    %358 = arith.addf %349, %357 : vector<8x256xf32>
    %c0_200 = arith.constant 0 : index
    %c0_201 = arith.constant 0 : index
    %c12_202 = arith.constant 12 : index
    %359 = vector.load %arg11[%c0_200, %c0_201, %c12_202] : memref<2x8x25xf32, #tpu.memory_space<vmem>>, vector<1x8x1xf32>
    %360 = vector.shape_cast %359 : vector<1x8x1xf32> to vector<8x1xf32>
    %361 = vector.broadcast %360 : vector<8x1xf32> to vector<8x256xf32>
    %362 = arith.mulf %251, %361 : vector<8x256xf32>
    %363 = arith.addf %358, %362 : vector<8x256xf32>
    %c255_i32_203 = arith.constant 255 : i32
    %364 = tpu.dynamic_rotate %251 by %c255_i32_203 dim 1 : vector<8x256xf32>, i32 -> vector<8x256xf32>
    %c13_204 = arith.constant 13 : index
    %c0_205 = arith.constant 0 : index
    %365 = vector.load %arg3[%c13_204, %c0_205] : memref<26x256xf32, #tpu.memory_space<vmem>>, vector<1x256xf32>
    %366 = vector.broadcast %365 : vector<1x256xf32> to vector<8x256xf32>
    %367 = arith.mulf %364, %366 : vector<8x256xf32>
    %c0_206 = arith.constant 0 : index
    %c0_207 = arith.constant 0 : index
    %c13_208 = arith.constant 13 : index
    %368 = vector.load %arg11[%c0_206, %c0_207, %c13_208] : memref<2x8x25xf32, #tpu.memory_space<vmem>>, vector<1x8x1xf32>
    %369 = vector.shape_cast %368 : vector<1x8x1xf32> to vector<8x1xf32>
    %370 = vector.broadcast %369 : vector<8x1xf32> to vector<8x256xf32>
    %371 = arith.mulf %367, %370 : vector<8x256xf32>
    %372 = arith.addf %363, %371 : vector<8x256xf32>
    %c254_i32_209 = arith.constant 254 : i32
    %373 = tpu.dynamic_rotate %251 by %c254_i32_209 dim 1 : vector<8x256xf32>, i32 -> vector<8x256xf32>
    %c14_210 = arith.constant 14 : index
    %c0_211 = arith.constant 0 : index
    %374 = vector.load %arg3[%c14_210, %c0_211] : memref<26x256xf32, #tpu.memory_space<vmem>>, vector<1x256xf32>
    %375 = vector.broadcast %374 : vector<1x256xf32> to vector<8x256xf32>
    %376 = arith.mulf %373, %375 : vector<8x256xf32>
    %c0_212 = arith.constant 0 : index
    %c0_213 = arith.constant 0 : index
    %c14_214 = arith.constant 14 : index
    %377 = vector.load %arg11[%c0_212, %c0_213, %c14_214] : memref<2x8x25xf32, #tpu.memory_space<vmem>>, vector<1x8x1xf32>
    %378 = vector.shape_cast %377 : vector<1x8x1xf32> to vector<8x1xf32>
    %379 = vector.broadcast %378 : vector<8x1xf32> to vector<8x256xf32>
    %380 = arith.mulf %376, %379 : vector<8x256xf32>
    %381 = arith.addf %372, %380 : vector<8x256xf32>
    %c242_i32_215 = arith.constant 242 : i32
    %382 = tpu.dynamic_rotate %251 by %c242_i32_215 dim 1 : vector<8x256xf32>, i32 -> vector<8x256xf32>
    %c15_216 = arith.constant 15 : index
    %c0_217 = arith.constant 0 : index
    %383 = vector.load %arg3[%c15_216, %c0_217] : memref<26x256xf32, #tpu.memory_space<vmem>>, vector<1x256xf32>
    %384 = vector.broadcast %383 : vector<1x256xf32> to vector<8x256xf32>
    %385 = arith.mulf %382, %384 : vector<8x256xf32>
    %c0_218 = arith.constant 0 : index
    %c0_219 = arith.constant 0 : index
    %c15_220 = arith.constant 15 : index
    %386 = vector.load %arg11[%c0_218, %c0_219, %c15_220] : memref<2x8x25xf32, #tpu.memory_space<vmem>>, vector<1x8x1xf32>
    %387 = vector.shape_cast %386 : vector<1x8x1xf32> to vector<8x1xf32>
    %388 = vector.broadcast %387 : vector<8x1xf32> to vector<8x256xf32>
    %389 = arith.mulf %385, %388 : vector<8x256xf32>
    %390 = arith.addf %381, %389 : vector<8x256xf32>
    %c241_i32_221 = arith.constant 241 : i32
    %391 = tpu.dynamic_rotate %251 by %c241_i32_221 dim 1 : vector<8x256xf32>, i32 -> vector<8x256xf32>
    %c16_222 = arith.constant 16 : index
    %c0_223 = arith.constant 0 : index
    %392 = vector.load %arg3[%c16_222, %c0_223] : memref<26x256xf32, #tpu.memory_space<vmem>>, vector<1x256xf32>
    %393 = vector.broadcast %392 : vector<1x256xf32> to vector<8x256xf32>
    %394 = arith.mulf %391, %393 : vector<8x256xf32>
    %c0_224 = arith.constant 0 : index
    %c0_225 = arith.constant 0 : index
    %c16_226 = arith.constant 16 : index
    %395 = vector.load %arg11[%c0_224, %c0_225, %c16_226] : memref<2x8x25xf32, #tpu.memory_space<vmem>>, vector<1x8x1xf32>
    %396 = vector.shape_cast %395 : vector<1x8x1xf32> to vector<8x1xf32>
    %397 = vector.broadcast %396 : vector<8x1xf32> to vector<8x256xf32>
    %398 = arith.mulf %394, %397 : vector<8x256xf32>
    %399 = arith.addf %390, %398 : vector<8x256xf32>
    %c240_i32_227 = arith.constant 240 : i32
    %400 = tpu.dynamic_rotate %251 by %c240_i32_227 dim 1 : vector<8x256xf32>, i32 -> vector<8x256xf32>
    %c17_228 = arith.constant 17 : index
    %c0_229 = arith.constant 0 : index
    %401 = vector.load %arg3[%c17_228, %c0_229] : memref<26x256xf32, #tpu.memory_space<vmem>>, vector<1x256xf32>
    %402 = vector.broadcast %401 : vector<1x256xf32> to vector<8x256xf32>
    %403 = arith.mulf %400, %402 : vector<8x256xf32>
    %c0_230 = arith.constant 0 : index
    %c0_231 = arith.constant 0 : index
    %c17_232 = arith.constant 17 : index
    %404 = vector.load %arg11[%c0_230, %c0_231, %c17_232] : memref<2x8x25xf32, #tpu.memory_space<vmem>>, vector<1x8x1xf32>
    %405 = vector.shape_cast %404 : vector<1x8x1xf32> to vector<8x1xf32>
    %406 = vector.broadcast %405 : vector<8x1xf32> to vector<8x256xf32>
    %407 = arith.mulf %403, %406 : vector<8x256xf32>
    %408 = arith.addf %399, %407 : vector<8x256xf32>
    %c239_i32_233 = arith.constant 239 : i32
    %409 = tpu.dynamic_rotate %251 by %c239_i32_233 dim 1 : vector<8x256xf32>, i32 -> vector<8x256xf32>
    %c18_234 = arith.constant 18 : index
    %c0_235 = arith.constant 0 : index
    %410 = vector.load %arg3[%c18_234, %c0_235] : memref<26x256xf32, #tpu.memory_space<vmem>>, vector<1x256xf32>
    %411 = vector.broadcast %410 : vector<1x256xf32> to vector<8x256xf32>
    %412 = arith.mulf %409, %411 : vector<8x256xf32>
    %c0_236 = arith.constant 0 : index
    %c0_237 = arith.constant 0 : index
    %c18_238 = arith.constant 18 : index
    %413 = vector.load %arg11[%c0_236, %c0_237, %c18_238] : memref<2x8x25xf32, #tpu.memory_space<vmem>>, vector<1x8x1xf32>
    %414 = vector.shape_cast %413 : vector<1x8x1xf32> to vector<8x1xf32>
    %415 = vector.broadcast %414 : vector<8x1xf32> to vector<8x256xf32>
    %416 = arith.mulf %412, %415 : vector<8x256xf32>
    %417 = arith.addf %408, %416 : vector<8x256xf32>
    %c238_i32_239 = arith.constant 238 : i32
    %418 = tpu.dynamic_rotate %251 by %c238_i32_239 dim 1 : vector<8x256xf32>, i32 -> vector<8x256xf32>
    %c19_240 = arith.constant 19 : index
    %c0_241 = arith.constant 0 : index
    %419 = vector.load %arg3[%c19_240, %c0_241] : memref<26x256xf32, #tpu.memory_space<vmem>>, vector<1x256xf32>
    %420 = vector.broadcast %419 : vector<1x256xf32> to vector<8x256xf32>
    %421 = arith.mulf %418, %420 : vector<8x256xf32>
    %c0_242 = arith.constant 0 : index
    %c0_243 = arith.constant 0 : index
    %c19_244 = arith.constant 19 : index
    %422 = vector.load %arg11[%c0_242, %c0_243, %c19_244] : memref<2x8x25xf32, #tpu.memory_space<vmem>>, vector<1x8x1xf32>
    %423 = vector.shape_cast %422 : vector<1x8x1xf32> to vector<8x1xf32>
    %424 = vector.broadcast %423 : vector<8x1xf32> to vector<8x256xf32>
    %425 = arith.mulf %421, %424 : vector<8x256xf32>
    %426 = arith.addf %417, %425 : vector<8x256xf32>
    %c226_i32_245 = arith.constant 226 : i32
    %427 = tpu.dynamic_rotate %251 by %c226_i32_245 dim 1 : vector<8x256xf32>, i32 -> vector<8x256xf32>
    %c20_246 = arith.constant 20 : index
    %c0_247 = arith.constant 0 : index
    %428 = vector.load %arg3[%c20_246, %c0_247] : memref<26x256xf32, #tpu.memory_space<vmem>>, vector<1x256xf32>
    %429 = vector.broadcast %428 : vector<1x256xf32> to vector<8x256xf32>
    %430 = arith.mulf %427, %429 : vector<8x256xf32>
    %c0_248 = arith.constant 0 : index
    %c0_249 = arith.constant 0 : index
    %c20_250 = arith.constant 20 : index
    %431 = vector.load %arg11[%c0_248, %c0_249, %c20_250] : memref<2x8x25xf32, #tpu.memory_space<vmem>>, vector<1x8x1xf32>
    %432 = vector.shape_cast %431 : vector<1x8x1xf32> to vector<8x1xf32>
    %433 = vector.broadcast %432 : vector<8x1xf32> to vector<8x256xf32>
    %434 = arith.mulf %430, %433 : vector<8x256xf32>
    %435 = arith.addf %426, %434 : vector<8x256xf32>
    %c225_i32_251 = arith.constant 225 : i32
    %436 = tpu.dynamic_rotate %251 by %c225_i32_251 dim 1 : vector<8x256xf32>, i32 -> vector<8x256xf32>
    %c21_252 = arith.constant 21 : index
    %c0_253 = arith.constant 0 : index
    %437 = vector.load %arg3[%c21_252, %c0_253] : memref<26x256xf32, #tpu.memory_space<vmem>>, vector<1x256xf32>
    %438 = vector.broadcast %437 : vector<1x256xf32> to vector<8x256xf32>
    %439 = arith.mulf %436, %438 : vector<8x256xf32>
    %c0_254 = arith.constant 0 : index
    %c0_255 = arith.constant 0 : index
    %c21_256 = arith.constant 21 : index
    %440 = vector.load %arg11[%c0_254, %c0_255, %c21_256] : memref<2x8x25xf32, #tpu.memory_space<vmem>>, vector<1x8x1xf32>
    %441 = vector.shape_cast %440 : vector<1x8x1xf32> to vector<8x1xf32>
    %442 = vector.broadcast %441 : vector<8x1xf32> to vector<8x256xf32>
    %443 = arith.mulf %439, %442 : vector<8x256xf32>
    %444 = arith.addf %435, %443 : vector<8x256xf32>
    %c224_i32_257 = arith.constant 224 : i32
    %445 = tpu.dynamic_rotate %251 by %c224_i32_257 dim 1 : vector<8x256xf32>, i32 -> vector<8x256xf32>
    %c22_258 = arith.constant 22 : index
    %c0_259 = arith.constant 0 : index
    %446 = vector.load %arg3[%c22_258, %c0_259] : memref<26x256xf32, #tpu.memory_space<vmem>>, vector<1x256xf32>
    %447 = vector.broadcast %446 : vector<1x256xf32> to vector<8x256xf32>
    %448 = arith.mulf %445, %447 : vector<8x256xf32>
    %c0_260 = arith.constant 0 : index
    %c0_261 = arith.constant 0 : index
    %c22_262 = arith.constant 22 : index
    %449 = vector.load %arg11[%c0_260, %c0_261, %c22_262] : memref<2x8x25xf32, #tpu.memory_space<vmem>>, vector<1x8x1xf32>
    %450 = vector.shape_cast %449 : vector<1x8x1xf32> to vector<8x1xf32>
    %451 = vector.broadcast %450 : vector<8x1xf32> to vector<8x256xf32>
    %452 = arith.mulf %448, %451 : vector<8x256xf32>
    %453 = arith.addf %444, %452 : vector<8x256xf32>
    %c223_i32_263 = arith.constant 223 : i32
    %454 = tpu.dynamic_rotate %251 by %c223_i32_263 dim 1 : vector<8x256xf32>, i32 -> vector<8x256xf32>
    %c23_264 = arith.constant 23 : index
    %c0_265 = arith.constant 0 : index
    %455 = vector.load %arg3[%c23_264, %c0_265] : memref<26x256xf32, #tpu.memory_space<vmem>>, vector<1x256xf32>
    %456 = vector.broadcast %455 : vector<1x256xf32> to vector<8x256xf32>
    %457 = arith.mulf %454, %456 : vector<8x256xf32>
    %c0_266 = arith.constant 0 : index
    %c0_267 = arith.constant 0 : index
    %c23_268 = arith.constant 23 : index
    %458 = vector.load %arg11[%c0_266, %c0_267, %c23_268] : memref<2x8x25xf32, #tpu.memory_space<vmem>>, vector<1x8x1xf32>
    %459 = vector.shape_cast %458 : vector<1x8x1xf32> to vector<8x1xf32>
    %460 = vector.broadcast %459 : vector<8x1xf32> to vector<8x256xf32>
    %461 = arith.mulf %457, %460 : vector<8x256xf32>
    %462 = arith.addf %453, %461 : vector<8x256xf32>
    %c222_i32_269 = arith.constant 222 : i32
    %463 = tpu.dynamic_rotate %251 by %c222_i32_269 dim 1 : vector<8x256xf32>, i32 -> vector<8x256xf32>
    %c24_270 = arith.constant 24 : index
    %c0_271 = arith.constant 0 : index
    %464 = vector.load %arg3[%c24_270, %c0_271] : memref<26x256xf32, #tpu.memory_space<vmem>>, vector<1x256xf32>
    %465 = vector.broadcast %464 : vector<1x256xf32> to vector<8x256xf32>
    %466 = arith.mulf %463, %465 : vector<8x256xf32>
    %c0_272 = arith.constant 0 : index
    %c0_273 = arith.constant 0 : index
    %c24_274 = arith.constant 24 : index
    %467 = vector.load %arg11[%c0_272, %c0_273, %c24_274] : memref<2x8x25xf32, #tpu.memory_space<vmem>>, vector<1x8x1xf32>
    %468 = vector.shape_cast %467 : vector<1x8x1xf32> to vector<8x1xf32>
    %469 = vector.broadcast %468 : vector<8x1xf32> to vector<8x256xf32>
    %470 = arith.mulf %466, %469 : vector<8x256xf32>
    %471 = arith.addf %462, %470 : vector<8x256xf32>
    %c0_275 = arith.constant 0 : index
    %c0_276 = arith.constant 0 : index
    %c0_277 = arith.constant 0 : index
    %472 = vector.load %arg12[%c0_275, %c0_276, %c0_277] : memref<2x8x8xf32, #tpu.memory_space<vmem>>, vector<1x8x8xf32>
    %473 = vector.shape_cast %472 : vector<1x8x8xf32> to vector<8x8xf32>
    %cst_278 = arith.constant dense<0.000000e+00> : vector<8x256xf32>
    %474 = tpu.matmul %473, %471, %cst_278 {dimension_numbers = #tpu.dot_dimension_numbers<[1], [0], [0], [1], [0, 0, 1, 1], [], []>} : vector<8x8xf32>, vector<8x256xf32>, vector<8x256xf32> -> vector<8x256xf32>
    %c0_279 = arith.constant 0 : index
    %c0_280 = arith.constant 0 : index
    %c0_281 = arith.constant 0 : index
    %475 = vector.load %arg13[%c0_279, %c0_280, %c0_281] : memref<2x8x1xf32, #tpu.memory_space<vmem>>, vector<1x8x1xf32>
    %476 = vector.shape_cast %475 : vector<1x8x1xf32> to vector<8x1xf32>
    %477 = vector.broadcast %476 : vector<8x1xf32> to vector<8x256xf32>
    %478 = arith.addf %474, %477 : vector<8x256xf32>
    %cst_282 = arith.constant 0.000000e+00 : f32
    %479 = vector.broadcast %cst_282 : f32 to vector<8x256xf32>
    %480 = arith.maximumf %17, %479 : vector<8x256xf32>
    %c17_i32_283 = arith.constant 17 : i32
    %481 = tpu.dynamic_rotate %480 by %c17_i32_283 dim 1 : vector<8x256xf32>, i32 -> vector<8x256xf32>
    %c6_284 = arith.constant 6 : index
    %c0_285 = arith.constant 0 : index
    %482 = vector.load %arg3[%c6_284, %c0_285] : memref<26x256xf32, #tpu.memory_space<vmem>>, vector<1x256xf32>
    %483 = vector.broadcast %482 : vector<1x256xf32> to vector<8x256xf32>
    %484 = arith.mulf %481, %483 : vector<8x256xf32>
    %c0_286 = arith.constant 0 : index
    %c0_287 = arith.constant 0 : index
    %c0_288 = arith.constant 0 : index
    %485 = vector.load %arg14[%c0_286, %c0_287, %c0_288] : memref<3x8x9xf32, #tpu.memory_space<vmem>>, vector<1x8x1xf32>
    %486 = vector.shape_cast %485 : vector<1x8x1xf32> to vector<8x1xf32>
    %487 = vector.broadcast %486 : vector<8x1xf32> to vector<8x256xf32>
    %488 = arith.mulf %484, %487 : vector<8x256xf32>
    %c16_i32_289 = arith.constant 16 : i32
    %489 = tpu.dynamic_rotate %480 by %c16_i32_289 dim 1 : vector<8x256xf32>, i32 -> vector<8x256xf32>
    %c7_290 = arith.constant 7 : index
    %c0_291 = arith.constant 0 : index
    %490 = vector.load %arg3[%c7_290, %c0_291] : memref<26x256xf32, #tpu.memory_space<vmem>>, vector<1x256xf32>
    %491 = vector.broadcast %490 : vector<1x256xf32> to vector<8x256xf32>
    %492 = arith.mulf %489, %491 : vector<8x256xf32>
    %c0_292 = arith.constant 0 : index
    %c0_293 = arith.constant 0 : index
    %c1_294 = arith.constant 1 : index
    %493 = vector.load %arg14[%c0_292, %c0_293, %c1_294] : memref<3x8x9xf32, #tpu.memory_space<vmem>>, vector<1x8x1xf32>
    %494 = vector.shape_cast %493 : vector<1x8x1xf32> to vector<8x1xf32>
    %495 = vector.broadcast %494 : vector<8x1xf32> to vector<8x256xf32>
    %496 = arith.mulf %492, %495 : vector<8x256xf32>
    %497 = arith.addf %488, %496 : vector<8x256xf32>
    %c15_i32_295 = arith.constant 15 : i32
    %498 = tpu.dynamic_rotate %480 by %c15_i32_295 dim 1 : vector<8x256xf32>, i32 -> vector<8x256xf32>
    %c8_296 = arith.constant 8 : index
    %c0_297 = arith.constant 0 : index
    %499 = vector.load %arg3[%c8_296, %c0_297] : memref<26x256xf32, #tpu.memory_space<vmem>>, vector<1x256xf32>
    %500 = vector.broadcast %499 : vector<1x256xf32> to vector<8x256xf32>
    %501 = arith.mulf %498, %500 : vector<8x256xf32>
    %c0_298 = arith.constant 0 : index
    %c0_299 = arith.constant 0 : index
    %c2_300 = arith.constant 2 : index
    %502 = vector.load %arg14[%c0_298, %c0_299, %c2_300] : memref<3x8x9xf32, #tpu.memory_space<vmem>>, vector<1x8x1xf32>
    %503 = vector.shape_cast %502 : vector<1x8x1xf32> to vector<8x1xf32>
    %504 = vector.broadcast %503 : vector<8x1xf32> to vector<8x256xf32>
    %505 = arith.mulf %501, %504 : vector<8x256xf32>
    %506 = arith.addf %497, %505 : vector<8x256xf32>
    %c1_i32_301 = arith.constant 1 : i32
    %507 = tpu.dynamic_rotate %480 by %c1_i32_301 dim 1 : vector<8x256xf32>, i32 -> vector<8x256xf32>
    %c11_302 = arith.constant 11 : index
    %c0_303 = arith.constant 0 : index
    %508 = vector.load %arg3[%c11_302, %c0_303] : memref<26x256xf32, #tpu.memory_space<vmem>>, vector<1x256xf32>
    %509 = vector.broadcast %508 : vector<1x256xf32> to vector<8x256xf32>
    %510 = arith.mulf %507, %509 : vector<8x256xf32>
    %c0_304 = arith.constant 0 : index
    %c0_305 = arith.constant 0 : index
    %c3_306 = arith.constant 3 : index
    %511 = vector.load %arg14[%c0_304, %c0_305, %c3_306] : memref<3x8x9xf32, #tpu.memory_space<vmem>>, vector<1x8x1xf32>
    %512 = vector.shape_cast %511 : vector<1x8x1xf32> to vector<8x1xf32>
    %513 = vector.broadcast %512 : vector<8x1xf32> to vector<8x256xf32>
    %514 = arith.mulf %510, %513 : vector<8x256xf32>
    %515 = arith.addf %506, %514 : vector<8x256xf32>
    %c0_307 = arith.constant 0 : index
    %c0_308 = arith.constant 0 : index
    %c4_309 = arith.constant 4 : index
    %516 = vector.load %arg14[%c0_307, %c0_308, %c4_309] : memref<3x8x9xf32, #tpu.memory_space<vmem>>, vector<1x8x1xf32>
    %517 = vector.shape_cast %516 : vector<1x8x1xf32> to vector<8x1xf32>
    %518 = vector.broadcast %517 : vector<8x1xf32> to vector<8x256xf32>
    %519 = arith.mulf %480, %518 : vector<8x256xf32>
    %520 = arith.addf %515, %519 : vector<8x256xf32>
    %c255_i32_310 = arith.constant 255 : i32
    %521 = tpu.dynamic_rotate %480 by %c255_i32_310 dim 1 : vector<8x256xf32>, i32 -> vector<8x256xf32>
    %c13_311 = arith.constant 13 : index
    %c0_312 = arith.constant 0 : index
    %522 = vector.load %arg3[%c13_311, %c0_312] : memref<26x256xf32, #tpu.memory_space<vmem>>, vector<1x256xf32>
    %523 = vector.broadcast %522 : vector<1x256xf32> to vector<8x256xf32>
    %524 = arith.mulf %521, %523 : vector<8x256xf32>
    %c0_313 = arith.constant 0 : index
    %c0_314 = arith.constant 0 : index
    %c5_315 = arith.constant 5 : index
    %525 = vector.load %arg14[%c0_313, %c0_314, %c5_315] : memref<3x8x9xf32, #tpu.memory_space<vmem>>, vector<1x8x1xf32>
    %526 = vector.shape_cast %525 : vector<1x8x1xf32> to vector<8x1xf32>
    %527 = vector.broadcast %526 : vector<8x1xf32> to vector<8x256xf32>
    %528 = arith.mulf %524, %527 : vector<8x256xf32>
    %529 = arith.addf %520, %528 : vector<8x256xf32>
    %c241_i32_316 = arith.constant 241 : i32
    %530 = tpu.dynamic_rotate %480 by %c241_i32_316 dim 1 : vector<8x256xf32>, i32 -> vector<8x256xf32>
    %c16_317 = arith.constant 16 : index
    %c0_318 = arith.constant 0 : index
    %531 = vector.load %arg3[%c16_317, %c0_318] : memref<26x256xf32, #tpu.memory_space<vmem>>, vector<1x256xf32>
    %532 = vector.broadcast %531 : vector<1x256xf32> to vector<8x256xf32>
    %533 = arith.mulf %530, %532 : vector<8x256xf32>
    %c0_319 = arith.constant 0 : index
    %c0_320 = arith.constant 0 : index
    %c6_321 = arith.constant 6 : index
    %534 = vector.load %arg14[%c0_319, %c0_320, %c6_321] : memref<3x8x9xf32, #tpu.memory_space<vmem>>, vector<1x8x1xf32>
    %535 = vector.shape_cast %534 : vector<1x8x1xf32> to vector<8x1xf32>
    %536 = vector.broadcast %535 : vector<8x1xf32> to vector<8x256xf32>
    %537 = arith.mulf %533, %536 : vector<8x256xf32>
    %538 = arith.addf %529, %537 : vector<8x256xf32>
    %c240_i32_322 = arith.constant 240 : i32
    %539 = tpu.dynamic_rotate %480 by %c240_i32_322 dim 1 : vector<8x256xf32>, i32 -> vector<8x256xf32>
    %c17_323 = arith.constant 17 : index
    %c0_324 = arith.constant 0 : index
    %540 = vector.load %arg3[%c17_323, %c0_324] : memref<26x256xf32, #tpu.memory_space<vmem>>, vector<1x256xf32>
    %541 = vector.broadcast %540 : vector<1x256xf32> to vector<8x256xf32>
    %542 = arith.mulf %539, %541 : vector<8x256xf32>
    %c0_325 = arith.constant 0 : index
    %c0_326 = arith.constant 0 : index
    %c7_327 = arith.constant 7 : index
    %543 = vector.load %arg14[%c0_325, %c0_326, %c7_327] : memref<3x8x9xf32, #tpu.memory_space<vmem>>, vector<1x8x1xf32>
    %544 = vector.shape_cast %543 : vector<1x8x1xf32> to vector<8x1xf32>
    %545 = vector.broadcast %544 : vector<8x1xf32> to vector<8x256xf32>
    %546 = arith.mulf %542, %545 : vector<8x256xf32>
    %547 = arith.addf %538, %546 : vector<8x256xf32>
    %c239_i32_328 = arith.constant 239 : i32
    %548 = tpu.dynamic_rotate %480 by %c239_i32_328 dim 1 : vector<8x256xf32>, i32 -> vector<8x256xf32>
    %c18_329 = arith.constant 18 : index
    %c0_330 = arith.constant 0 : index
    %549 = vector.load %arg3[%c18_329, %c0_330] : memref<26x256xf32, #tpu.memory_space<vmem>>, vector<1x256xf32>
    %550 = vector.broadcast %549 : vector<1x256xf32> to vector<8x256xf32>
    %551 = arith.mulf %548, %550 : vector<8x256xf32>
    %c0_331 = arith.constant 0 : index
    %c0_332 = arith.constant 0 : index
    %c8_333 = arith.constant 8 : index
    %552 = vector.load %arg14[%c0_331, %c0_332, %c8_333] : memref<3x8x9xf32, #tpu.memory_space<vmem>>, vector<1x8x1xf32>
    %553 = vector.shape_cast %552 : vector<1x8x1xf32> to vector<8x1xf32>
    %554 = vector.broadcast %553 : vector<8x1xf32> to vector<8x256xf32>
    %555 = arith.mulf %551, %554 : vector<8x256xf32>
    %556 = arith.addf %547, %555 : vector<8x256xf32>
    %c0_334 = arith.constant 0 : index
    %c0_335 = arith.constant 0 : index
    %c0_336 = arith.constant 0 : index
    %557 = vector.load %arg15[%c0_334, %c0_335, %c0_336] : memref<3x8x8xf32, #tpu.memory_space<vmem>>, vector<1x8x8xf32>
    %558 = vector.shape_cast %557 : vector<1x8x8xf32> to vector<8x8xf32>
    %cst_337 = arith.constant dense<0.000000e+00> : vector<8x256xf32>
    %559 = tpu.matmul %558, %556, %cst_337 {dimension_numbers = #tpu.dot_dimension_numbers<[1], [0], [0], [1], [0, 0, 1, 1], [], []>} : vector<8x8xf32>, vector<8x256xf32>, vector<8x256xf32> -> vector<8x256xf32>
    %c0_338 = arith.constant 0 : index
    %c0_339 = arith.constant 0 : index
    %c0_340 = arith.constant 0 : index
    %560 = vector.load %arg16[%c0_338, %c0_339, %c0_340] : memref<3x8x1xf32, #tpu.memory_space<vmem>>, vector<1x8x1xf32>
    %561 = vector.shape_cast %560 : vector<1x8x1xf32> to vector<8x1xf32>
    %562 = vector.broadcast %561 : vector<8x1xf32> to vector<8x256xf32>
    %563 = arith.addf %559, %562 : vector<8x256xf32>
    %cst_341 = arith.constant 0.000000e+00 : f32
    %564 = vector.broadcast %cst_341 : f32 to vector<8x256xf32>
    %565 = arith.maximumf %563, %564 : vector<8x256xf32>
    %c17_i32_342 = arith.constant 17 : i32
    %566 = tpu.dynamic_rotate %565 by %c17_i32_342 dim 1 : vector<8x256xf32>, i32 -> vector<8x256xf32>
    %c6_343 = arith.constant 6 : index
    %c0_344 = arith.constant 0 : index
    %567 = vector.load %arg3[%c6_343, %c0_344] : memref<26x256xf32, #tpu.memory_space<vmem>>, vector<1x256xf32>
    %568 = vector.broadcast %567 : vector<1x256xf32> to vector<8x256xf32>
    %569 = arith.mulf %566, %568 : vector<8x256xf32>
    %c0_345 = arith.constant 0 : index
    %c0_346 = arith.constant 0 : index
    %c0_347 = arith.constant 0 : index
    %570 = vector.load %arg17[%c0_345, %c0_346, %c0_347] : memref<3x8x9xf32, #tpu.memory_space<vmem>>, vector<1x8x1xf32>
    %571 = vector.shape_cast %570 : vector<1x8x1xf32> to vector<8x1xf32>
    %572 = vector.broadcast %571 : vector<8x1xf32> to vector<8x256xf32>
    %573 = arith.mulf %569, %572 : vector<8x256xf32>
    %c16_i32_348 = arith.constant 16 : i32
    %574 = tpu.dynamic_rotate %565 by %c16_i32_348 dim 1 : vector<8x256xf32>, i32 -> vector<8x256xf32>
    %c7_349 = arith.constant 7 : index
    %c0_350 = arith.constant 0 : index
    %575 = vector.load %arg3[%c7_349, %c0_350] : memref<26x256xf32, #tpu.memory_space<vmem>>, vector<1x256xf32>
    %576 = vector.broadcast %575 : vector<1x256xf32> to vector<8x256xf32>
    %577 = arith.mulf %574, %576 : vector<8x256xf32>
    %c0_351 = arith.constant 0 : index
    %c0_352 = arith.constant 0 : index
    %c1_353 = arith.constant 1 : index
    %578 = vector.load %arg17[%c0_351, %c0_352, %c1_353] : memref<3x8x9xf32, #tpu.memory_space<vmem>>, vector<1x8x1xf32>
    %579 = vector.shape_cast %578 : vector<1x8x1xf32> to vector<8x1xf32>
    %580 = vector.broadcast %579 : vector<8x1xf32> to vector<8x256xf32>
    %581 = arith.mulf %577, %580 : vector<8x256xf32>
    %582 = arith.addf %573, %581 : vector<8x256xf32>
    %c15_i32_354 = arith.constant 15 : i32
    %583 = tpu.dynamic_rotate %565 by %c15_i32_354 dim 1 : vector<8x256xf32>, i32 -> vector<8x256xf32>
    %c8_355 = arith.constant 8 : index
    %c0_356 = arith.constant 0 : index
    %584 = vector.load %arg3[%c8_355, %c0_356] : memref<26x256xf32, #tpu.memory_space<vmem>>, vector<1x256xf32>
    %585 = vector.broadcast %584 : vector<1x256xf32> to vector<8x256xf32>
    %586 = arith.mulf %583, %585 : vector<8x256xf32>
    %c0_357 = arith.constant 0 : index
    %c0_358 = arith.constant 0 : index
    %c2_359 = arith.constant 2 : index
    %587 = vector.load %arg17[%c0_357, %c0_358, %c2_359] : memref<3x8x9xf32, #tpu.memory_space<vmem>>, vector<1x8x1xf32>
    %588 = vector.shape_cast %587 : vector<1x8x1xf32> to vector<8x1xf32>
    %589 = vector.broadcast %588 : vector<8x1xf32> to vector<8x256xf32>
    %590 = arith.mulf %586, %589 : vector<8x256xf32>
    %591 = arith.addf %582, %590 : vector<8x256xf32>
    %c1_i32_360 = arith.constant 1 : i32
    %592 = tpu.dynamic_rotate %565 by %c1_i32_360 dim 1 : vector<8x256xf32>, i32 -> vector<8x256xf32>
    %c11_361 = arith.constant 11 : index
    %c0_362 = arith.constant 0 : index
    %593 = vector.load %arg3[%c11_361, %c0_362] : memref<26x256xf32, #tpu.memory_space<vmem>>, vector<1x256xf32>
    %594 = vector.broadcast %593 : vector<1x256xf32> to vector<8x256xf32>
    %595 = arith.mulf %592, %594 : vector<8x256xf32>
    %c0_363 = arith.constant 0 : index
    %c0_364 = arith.constant 0 : index
    %c3_365 = arith.constant 3 : index
    %596 = vector.load %arg17[%c0_363, %c0_364, %c3_365] : memref<3x8x9xf32, #tpu.memory_space<vmem>>, vector<1x8x1xf32>
    %597 = vector.shape_cast %596 : vector<1x8x1xf32> to vector<8x1xf32>
    %598 = vector.broadcast %597 : vector<8x1xf32> to vector<8x256xf32>
    %599 = arith.mulf %595, %598 : vector<8x256xf32>
    %600 = arith.addf %591, %599 : vector<8x256xf32>
    %c0_366 = arith.constant 0 : index
    %c0_367 = arith.constant 0 : index
    %c4_368 = arith.constant 4 : index
    %601 = vector.load %arg17[%c0_366, %c0_367, %c4_368] : memref<3x8x9xf32, #tpu.memory_space<vmem>>, vector<1x8x1xf32>
    %602 = vector.shape_cast %601 : vector<1x8x1xf32> to vector<8x1xf32>
    %603 = vector.broadcast %602 : vector<8x1xf32> to vector<8x256xf32>
    %604 = arith.mulf %565, %603 : vector<8x256xf32>
    %605 = arith.addf %600, %604 : vector<8x256xf32>
    %c255_i32_369 = arith.constant 255 : i32
    %606 = tpu.dynamic_rotate %565 by %c255_i32_369 dim 1 : vector<8x256xf32>, i32 -> vector<8x256xf32>
    %c13_370 = arith.constant 13 : index
    %c0_371 = arith.constant 0 : index
    %607 = vector.load %arg3[%c13_370, %c0_371] : memref<26x256xf32, #tpu.memory_space<vmem>>, vector<1x256xf32>
    %608 = vector.broadcast %607 : vector<1x256xf32> to vector<8x256xf32>
    %609 = arith.mulf %606, %608 : vector<8x256xf32>
    %c0_372 = arith.constant 0 : index
    %c0_373 = arith.constant 0 : index
    %c5_374 = arith.constant 5 : index
    %610 = vector.load %arg17[%c0_372, %c0_373, %c5_374] : memref<3x8x9xf32, #tpu.memory_space<vmem>>, vector<1x8x1xf32>
    %611 = vector.shape_cast %610 : vector<1x8x1xf32> to vector<8x1xf32>
    %612 = vector.broadcast %611 : vector<8x1xf32> to vector<8x256xf32>
    %613 = arith.mulf %609, %612 : vector<8x256xf32>
    %614 = arith.addf %605, %613 : vector<8x256xf32>
    %c241_i32_375 = arith.constant 241 : i32
    %615 = tpu.dynamic_rotate %565 by %c241_i32_375 dim 1 : vector<8x256xf32>, i32 -> vector<8x256xf32>
    %c16_376 = arith.constant 16 : index
    %c0_377 = arith.constant 0 : index
    %616 = vector.load %arg3[%c16_376, %c0_377] : memref<26x256xf32, #tpu.memory_space<vmem>>, vector<1x256xf32>
    %617 = vector.broadcast %616 : vector<1x256xf32> to vector<8x256xf32>
    %618 = arith.mulf %615, %617 : vector<8x256xf32>
    %c0_378 = arith.constant 0 : index
    %c0_379 = arith.constant 0 : index
    %c6_380 = arith.constant 6 : index
    %619 = vector.load %arg17[%c0_378, %c0_379, %c6_380] : memref<3x8x9xf32, #tpu.memory_space<vmem>>, vector<1x8x1xf32>
    %620 = vector.shape_cast %619 : vector<1x8x1xf32> to vector<8x1xf32>
    %621 = vector.broadcast %620 : vector<8x1xf32> to vector<8x256xf32>
    %622 = arith.mulf %618, %621 : vector<8x256xf32>
    %623 = arith.addf %614, %622 : vector<8x256xf32>
    %c240_i32_381 = arith.constant 240 : i32
    %624 = tpu.dynamic_rotate %565 by %c240_i32_381 dim 1 : vector<8x256xf32>, i32 -> vector<8x256xf32>
    %c17_382 = arith.constant 17 : index
    %c0_383 = arith.constant 0 : index
    %625 = vector.load %arg3[%c17_382, %c0_383] : memref<26x256xf32, #tpu.memory_space<vmem>>, vector<1x256xf32>
    %626 = vector.broadcast %625 : vector<1x256xf32> to vector<8x256xf32>
    %627 = arith.mulf %624, %626 : vector<8x256xf32>
    %c0_384 = arith.constant 0 : index
    %c0_385 = arith.constant 0 : index
    %c7_386 = arith.constant 7 : index
    %628 = vector.load %arg17[%c0_384, %c0_385, %c7_386] : memref<3x8x9xf32, #tpu.memory_space<vmem>>, vector<1x8x1xf32>
    %629 = vector.shape_cast %628 : vector<1x8x1xf32> to vector<8x1xf32>
    %630 = vector.broadcast %629 : vector<8x1xf32> to vector<8x256xf32>
    %631 = arith.mulf %627, %630 : vector<8x256xf32>
    %632 = arith.addf %623, %631 : vector<8x256xf32>
    %c239_i32_387 = arith.constant 239 : i32
    %633 = tpu.dynamic_rotate %565 by %c239_i32_387 dim 1 : vector<8x256xf32>, i32 -> vector<8x256xf32>
    %c18_388 = arith.constant 18 : index
    %c0_389 = arith.constant 0 : index
    %634 = vector.load %arg3[%c18_388, %c0_389] : memref<26x256xf32, #tpu.memory_space<vmem>>, vector<1x256xf32>
    %635 = vector.broadcast %634 : vector<1x256xf32> to vector<8x256xf32>
    %636 = arith.mulf %633, %635 : vector<8x256xf32>
    %c0_390 = arith.constant 0 : index
    %c0_391 = arith.constant 0 : index
    %c8_392 = arith.constant 8 : index
    %637 = vector.load %arg17[%c0_390, %c0_391, %c8_392] : memref<3x8x9xf32, #tpu.memory_space<vmem>>, vector<1x8x1xf32>
    %638 = vector.shape_cast %637 : vector<1x8x1xf32> to vector<8x1xf32>
    %639 = vector.broadcast %638 : vector<8x1xf32> to vector<8x256xf32>
    %640 = arith.mulf %636, %639 : vector<8x256xf32>
    %641 = arith.addf %632, %640 : vector<8x256xf32>
    %c0_393 = arith.constant 0 : index
    %c0_394 = arith.constant 0 : index
    %c0_395 = arith.constant 0 : index
    %642 = vector.load %arg18[%c0_393, %c0_394, %c0_395] : memref<3x8x8xf32, #tpu.memory_space<vmem>>, vector<1x8x8xf32>
    %643 = vector.shape_cast %642 : vector<1x8x8xf32> to vector<8x8xf32>
    %cst_396 = arith.constant dense<0.000000e+00> : vector<8x256xf32>
    %644 = tpu.matmul %643, %641, %cst_396 {dimension_numbers = #tpu.dot_dimension_numbers<[1], [0], [0], [1], [0, 0, 1, 1], [], []>} : vector<8x8xf32>, vector<8x256xf32>, vector<8x256xf32> -> vector<8x256xf32>
    %c0_397 = arith.constant 0 : index
    %c0_398 = arith.constant 0 : index
    %c0_399 = arith.constant 0 : index
    %645 = vector.load %arg19[%c0_397, %c0_398, %c0_399] : memref<3x8x1xf32, #tpu.memory_space<vmem>>, vector<1x8x1xf32>
    %646 = vector.shape_cast %645 : vector<1x8x1xf32> to vector<8x1xf32>
    %647 = vector.broadcast %646 : vector<8x1xf32> to vector<8x256xf32>
    %648 = arith.addf %644, %647 : vector<8x256xf32>
    %649 = arith.addf %478, %648 : vector<8x256xf32>
    %c0_400 = arith.constant 0 : index
    %c1_401 = arith.constant 1 : index
    %c0_402 = arith.constant 0 : index
    %c0_403 = arith.constant 0 : index
    %650 = vector.load %arg20[%c0_400, %c1_401, %c0_402, %c0_403] : memref<1x6x8x256xf32, #tpu.memory_space<vmem>>, vector<1x1x8x256xf32>
    %651 = vector.shape_cast %650 : vector<1x1x8x256xf32> to vector<8x256xf32>
    %652 = vector.shape_cast %649 : vector<8x256xf32> to vector<1x1x8x256xf32>
    tpu.vector_store %arg20[%c0_400, %c1_401, %c0_402, %c0_403], %652 {strides = array<i32>} : memref<1x6x8x256xf32, #tpu.memory_space<vmem>>, vector<1x1x8x256xf32>,
    %cst_404 = arith.constant 0.000000e+00 : f32
    %653 = vector.broadcast %cst_404 : f32 to vector<8x256xf32>
    %654 = arith.maximumf %17, %653 : vector<8x256xf32>
    %c34_i32_405 = arith.constant 34 : i32
    %655 = tpu.dynamic_rotate %654 by %c34_i32_405 dim 1 : vector<8x256xf32>, i32 -> vector<8x256xf32>
    %c0_406 = arith.constant 0 : index
    %c0_407 = arith.constant 0 : index
    %656 = vector.load %arg3[%c0_406, %c0_407] : memref<26x256xf32, #tpu.memory_space<vmem>>, vector<1x256xf32>
    %657 = vector.broadcast %656 : vector<1x256xf32> to vector<8x256xf32>
    %658 = arith.mulf %655, %657 : vector<8x256xf32>
    %c1_408 = arith.constant 1 : index
    %c0_409 = arith.constant 0 : index
    %c0_410 = arith.constant 0 : index
    %659 = vector.load %arg8[%c1_408, %c0_409, %c0_410] : memref<2x8x25xf32, #tpu.memory_space<vmem>>, vector<1x8x1xf32>
    %660 = vector.shape_cast %659 : vector<1x8x1xf32> to vector<8x1xf32>
    %661 = vector.broadcast %660 : vector<8x1xf32> to vector<8x256xf32>
    %662 = arith.mulf %658, %661 : vector<8x256xf32>
    %c33_i32_411 = arith.constant 33 : i32
    %663 = tpu.dynamic_rotate %654 by %c33_i32_411 dim 1 : vector<8x256xf32>, i32 -> vector<8x256xf32>
    %c1_412 = arith.constant 1 : index
    %c0_413 = arith.constant 0 : index
    %664 = vector.load %arg3[%c1_412, %c0_413] : memref<26x256xf32, #tpu.memory_space<vmem>>, vector<1x256xf32>
    %665 = vector.broadcast %664 : vector<1x256xf32> to vector<8x256xf32>
    %666 = arith.mulf %663, %665 : vector<8x256xf32>
    %c1_414 = arith.constant 1 : index
    %c0_415 = arith.constant 0 : index
    %c1_416 = arith.constant 1 : index
    %667 = vector.load %arg8[%c1_414, %c0_415, %c1_416] : memref<2x8x25xf32, #tpu.memory_space<vmem>>, vector<1x8x1xf32>
    %668 = vector.shape_cast %667 : vector<1x8x1xf32> to vector<8x1xf32>
    %669 = vector.broadcast %668 : vector<8x1xf32> to vector<8x256xf32>
    %670 = arith.mulf %666, %669 : vector<8x256xf32>
    %671 = arith.addf %662, %670 : vector<8x256xf32>
    %c32_i32_417 = arith.constant 32 : i32
    %672 = tpu.dynamic_rotate %654 by %c32_i32_417 dim 1 : vector<8x256xf32>, i32 -> vector<8x256xf32>
    %c2_418 = arith.constant 2 : index
    %c0_419 = arith.constant 0 : index
    %673 = vector.load %arg3[%c2_418, %c0_419] : memref<26x256xf32, #tpu.memory_space<vmem>>, vector<1x256xf32>
    %674 = vector.broadcast %673 : vector<1x256xf32> to vector<8x256xf32>
    %675 = arith.mulf %672, %674 : vector<8x256xf32>
    %c1_420 = arith.constant 1 : index
    %c0_421 = arith.constant 0 : index
    %c2_422 = arith.constant 2 : index
    %676 = vector.load %arg8[%c1_420, %c0_421, %c2_422] : memref<2x8x25xf32, #tpu.memory_space<vmem>>, vector<1x8x1xf32>
    %677 = vector.shape_cast %676 : vector<1x8x1xf32> to vector<8x1xf32>
    %678 = vector.broadcast %677 : vector<8x1xf32> to vector<8x256xf32>
    %679 = arith.mulf %675, %678 : vector<8x256xf32>
    %680 = arith.addf %671, %679 : vector<8x256xf32>
    %c31_i32_423 = arith.constant 31 : i32
    %681 = tpu.dynamic_rotate %654 by %c31_i32_423 dim 1 : vector<8x256xf32>, i32 -> vector<8x256xf32>
    %c3_424 = arith.constant 3 : index
    %c0_425 = arith.constant 0 : index
    %682 = vector.load %arg3[%c3_424, %c0_425] : memref<26x256xf32, #tpu.memory_space<vmem>>, vector<1x256xf32>
    %683 = vector.broadcast %682 : vector<1x256xf32> to vector<8x256xf32>
    %684 = arith.mulf %681, %683 : vector<8x256xf32>
    %c1_426 = arith.constant 1 : index
    %c0_427 = arith.constant 0 : index
    %c3_428 = arith.constant 3 : index
    %685 = vector.load %arg8[%c1_426, %c0_427, %c3_428] : memref<2x8x25xf32, #tpu.memory_space<vmem>>, vector<1x8x1xf32>
    %686 = vector.shape_cast %685 : vector<1x8x1xf32> to vector<8x1xf32>
    %687 = vector.broadcast %686 : vector<8x1xf32> to vector<8x256xf32>
    %688 = arith.mulf %684, %687 : vector<8x256xf32>
    %689 = arith.addf %680, %688 : vector<8x256xf32>
    %c30_i32_429 = arith.constant 30 : i32
    %690 = tpu.dynamic_rotate %654 by %c30_i32_429 dim 1 : vector<8x256xf32>, i32 -> vector<8x256xf32>
    %c4_430 = arith.constant 4 : index
    %c0_431 = arith.constant 0 : index
    %691 = vector.load %arg3[%c4_430, %c0_431] : memref<26x256xf32, #tpu.memory_space<vmem>>, vector<1x256xf32>
    %692 = vector.broadcast %691 : vector<1x256xf32> to vector<8x256xf32>
    %693 = arith.mulf %690, %692 : vector<8x256xf32>
    %c1_432 = arith.constant 1 : index
    %c0_433 = arith.constant 0 : index
    %c4_434 = arith.constant 4 : index
    %694 = vector.load %arg8[%c1_432, %c0_433, %c4_434] : memref<2x8x25xf32, #tpu.memory_space<vmem>>, vector<1x8x1xf32>
    %695 = vector.shape_cast %694 : vector<1x8x1xf32> to vector<8x1xf32>
    %696 = vector.broadcast %695 : vector<8x1xf32> to vector<8x256xf32>
    %697 = arith.mulf %693, %696 : vector<8x256xf32>
    %698 = arith.addf %689, %697 : vector<8x256xf32>
    %c18_i32_435 = arith.constant 18 : i32
    %699 = tpu.dynamic_rotate %654 by %c18_i32_435 dim 1 : vector<8x256xf32>, i32 -> vector<8x256xf32>
    %c5_436 = arith.constant 5 : index
    %c0_437 = arith.constant 0 : index
    %700 = vector.load %arg3[%c5_436, %c0_437] : memref<26x256xf32, #tpu.memory_space<vmem>>, vector<1x256xf32>
    %701 = vector.broadcast %700 : vector<1x256xf32> to vector<8x256xf32>
    %702 = arith.mulf %699, %701 : vector<8x256xf32>
    %c1_438 = arith.constant 1 : index
    %c0_439 = arith.constant 0 : index
    %c5_440 = arith.constant 5 : index
    %703 = vector.load %arg8[%c1_438, %c0_439, %c5_440] : memref<2x8x25xf32, #tpu.memory_space<vmem>>, vector<1x8x1xf32>
    %704 = vector.shape_cast %703 : vector<1x8x1xf32> to vector<8x1xf32>
    %705 = vector.broadcast %704 : vector<8x1xf32> to vector<8x256xf32>
    %706 = arith.mulf %702, %705 : vector<8x256xf32>
    %707 = arith.addf %698, %706 : vector<8x256xf32>
    %c17_i32_441 = arith.constant 17 : i32
    %708 = tpu.dynamic_rotate %654 by %c17_i32_441 dim 1 : vector<8x256xf32>, i32 -> vector<8x256xf32>
    %c6_442 = arith.constant 6 : index
    %c0_443 = arith.constant 0 : index
    %709 = vector.load %arg3[%c6_442, %c0_443] : memref<26x256xf32, #tpu.memory_space<vmem>>, vector<1x256xf32>
    %710 = vector.broadcast %709 : vector<1x256xf32> to vector<8x256xf32>
    %711 = arith.mulf %708, %710 : vector<8x256xf32>
    %c1_444 = arith.constant 1 : index
    %c0_445 = arith.constant 0 : index
    %c6_446 = arith.constant 6 : index
    %712 = vector.load %arg8[%c1_444, %c0_445, %c6_446] : memref<2x8x25xf32, #tpu.memory_space<vmem>>, vector<1x8x1xf32>
    %713 = vector.shape_cast %712 : vector<1x8x1xf32> to vector<8x1xf32>
    %714 = vector.broadcast %713 : vector<8x1xf32> to vector<8x256xf32>
    %715 = arith.mulf %711, %714 : vector<8x256xf32>
    %716 = arith.addf %707, %715 : vector<8x256xf32>
    %c16_i32_447 = arith.constant 16 : i32
    %717 = tpu.dynamic_rotate %654 by %c16_i32_447 dim 1 : vector<8x256xf32>, i32 -> vector<8x256xf32>
    %c7_448 = arith.constant 7 : index
    %c0_449 = arith.constant 0 : index
    %718 = vector.load %arg3[%c7_448, %c0_449] : memref<26x256xf32, #tpu.memory_space<vmem>>, vector<1x256xf32>
    %719 = vector.broadcast %718 : vector<1x256xf32> to vector<8x256xf32>
    %720 = arith.mulf %717, %719 : vector<8x256xf32>
    %c1_450 = arith.constant 1 : index
    %c0_451 = arith.constant 0 : index
    %c7_452 = arith.constant 7 : index
    %721 = vector.load %arg8[%c1_450, %c0_451, %c7_452] : memref<2x8x25xf32, #tpu.memory_space<vmem>>, vector<1x8x1xf32>
    %722 = vector.shape_cast %721 : vector<1x8x1xf32> to vector<8x1xf32>
    %723 = vector.broadcast %722 : vector<8x1xf32> to vector<8x256xf32>
    %724 = arith.mulf %720, %723 : vector<8x256xf32>
    %725 = arith.addf %716, %724 : vector<8x256xf32>
    %c15_i32_453 = arith.constant 15 : i32
    %726 = tpu.dynamic_rotate %654 by %c15_i32_453 dim 1 : vector<8x256xf32>, i32 -> vector<8x256xf32>
    %c8_454 = arith.constant 8 : index
    %c0_455 = arith.constant 0 : index
    %727 = vector.load %arg3[%c8_454, %c0_455] : memref<26x256xf32, #tpu.memory_space<vmem>>, vector<1x256xf32>
    %728 = vector.broadcast %727 : vector<1x256xf32> to vector<8x256xf32>
    %729 = arith.mulf %726, %728 : vector<8x256xf32>
    %c1_456 = arith.constant 1 : index
    %c0_457 = arith.constant 0 : index
    %c8_458 = arith.constant 8 : index
    %730 = vector.load %arg8[%c1_456, %c0_457, %c8_458] : memref<2x8x25xf32, #tpu.memory_space<vmem>>, vector<1x8x1xf32>
    %731 = vector.shape_cast %730 : vector<1x8x1xf32> to vector<8x1xf32>
    %732 = vector.broadcast %731 : vector<8x1xf32> to vector<8x256xf32>
    %733 = arith.mulf %729, %732 : vector<8x256xf32>
    %734 = arith.addf %725, %733 : vector<8x256xf32>
    %c14_i32_459 = arith.constant 14 : i32
    %735 = tpu.dynamic_rotate %654 by %c14_i32_459 dim 1 : vector<8x256xf32>, i32 -> vector<8x256xf32>
    %c9_460 = arith.constant 9 : index
    %c0_461 = arith.constant 0 : index
    %736 = vector.load %arg3[%c9_460, %c0_461] : memref<26x256xf32, #tpu.memory_space<vmem>>, vector<1x256xf32>
    %737 = vector.broadcast %736 : vector<1x256xf32> to vector<8x256xf32>
    %738 = arith.mulf %735, %737 : vector<8x256xf32>
    %c1_462 = arith.constant 1 : index
    %c0_463 = arith.constant 0 : index
    %c9_464 = arith.constant 9 : index
    %739 = vector.load %arg8[%c1_462, %c0_463, %c9_464] : memref<2x8x25xf32, #tpu.memory_space<vmem>>, vector<1x8x1xf32>
    %740 = vector.shape_cast %739 : vector<1x8x1xf32> to vector<8x1xf32>
    %741 = vector.broadcast %740 : vector<8x1xf32> to vector<8x256xf32>
    %742 = arith.mulf %738, %741 : vector<8x256xf32>
    %743 = arith.addf %734, %742 : vector<8x256xf32>
    %c2_i32_465 = arith.constant 2 : i32
    %744 = tpu.dynamic_rotate %654 by %c2_i32_465 dim 1 : vector<8x256xf32>, i32 -> vector<8x256xf32>
    %c10_466 = arith.constant 10 : index
    %c0_467 = arith.constant 0 : index
    %745 = vector.load %arg3[%c10_466, %c0_467] : memref<26x256xf32, #tpu.memory_space<vmem>>, vector<1x256xf32>
    %746 = vector.broadcast %745 : vector<1x256xf32> to vector<8x256xf32>
    %747 = arith.mulf %744, %746 : vector<8x256xf32>
    %c1_468 = arith.constant 1 : index
    %c0_469 = arith.constant 0 : index
    %c10_470 = arith.constant 10 : index
    %748 = vector.load %arg8[%c1_468, %c0_469, %c10_470] : memref<2x8x25xf32, #tpu.memory_space<vmem>>, vector<1x8x1xf32>
    %749 = vector.shape_cast %748 : vector<1x8x1xf32> to vector<8x1xf32>
    %750 = vector.broadcast %749 : vector<8x1xf32> to vector<8x256xf32>
    %751 = arith.mulf %747, %750 : vector<8x256xf32>
    %752 = arith.addf %743, %751 : vector<8x256xf32>
    %c1_i32_471 = arith.constant 1 : i32
    %753 = tpu.dynamic_rotate %654 by %c1_i32_471 dim 1 : vector<8x256xf32>, i32 -> vector<8x256xf32>
    %c11_472 = arith.constant 11 : index
    %c0_473 = arith.constant 0 : index
    %754 = vector.load %arg3[%c11_472, %c0_473] : memref<26x256xf32, #tpu.memory_space<vmem>>, vector<1x256xf32>
    %755 = vector.broadcast %754 : vector<1x256xf32> to vector<8x256xf32>
    %756 = arith.mulf %753, %755 : vector<8x256xf32>
    %c1_474 = arith.constant 1 : index
    %c0_475 = arith.constant 0 : index
    %c11_476 = arith.constant 11 : index
    %757 = vector.load %arg8[%c1_474, %c0_475, %c11_476] : memref<2x8x25xf32, #tpu.memory_space<vmem>>, vector<1x8x1xf32>
    %758 = vector.shape_cast %757 : vector<1x8x1xf32> to vector<8x1xf32>
    %759 = vector.broadcast %758 : vector<8x1xf32> to vector<8x256xf32>
    %760 = arith.mulf %756, %759 : vector<8x256xf32>
    %761 = arith.addf %752, %760 : vector<8x256xf32>
    %c1_477 = arith.constant 1 : index
    %c0_478 = arith.constant 0 : index
    %c12_479 = arith.constant 12 : index
    %762 = vector.load %arg8[%c1_477, %c0_478, %c12_479] : memref<2x8x25xf32, #tpu.memory_space<vmem>>, vector<1x8x1xf32>
    %763 = vector.shape_cast %762 : vector<1x8x1xf32> to vector<8x1xf32>
    %764 = vector.broadcast %763 : vector<8x1xf32> to vector<8x256xf32>
    %765 = arith.mulf %654, %764 : vector<8x256xf32>
    %766 = arith.addf %761, %765 : vector<8x256xf32>
    %c255_i32_480 = arith.constant 255 : i32
    %767 = tpu.dynamic_rotate %654 by %c255_i32_480 dim 1 : vector<8x256xf32>, i32 -> vector<8x256xf32>
    %c13_481 = arith.constant 13 : index
    %c0_482 = arith.constant 0 : index
    %768 = vector.load %arg3[%c13_481, %c0_482] : memref<26x256xf32, #tpu.memory_space<vmem>>, vector<1x256xf32>
    %769 = vector.broadcast %768 : vector<1x256xf32> to vector<8x256xf32>
    %770 = arith.mulf %767, %769 : vector<8x256xf32>
    %c1_483 = arith.constant 1 : index
    %c0_484 = arith.constant 0 : index
    %c13_485 = arith.constant 13 : index
    %771 = vector.load %arg8[%c1_483, %c0_484, %c13_485] : memref<2x8x25xf32, #tpu.memory_space<vmem>>, vector<1x8x1xf32>
    %772 = vector.shape_cast %771 : vector<1x8x1xf32> to vector<8x1xf32>
    %773 = vector.broadcast %772 : vector<8x1xf32> to vector<8x256xf32>
    %774 = arith.mulf %770, %773 : vector<8x256xf32>
    %775 = arith.addf %766, %774 : vector<8x256xf32>
    %c254_i32_486 = arith.constant 254 : i32
    %776 = tpu.dynamic_rotate %654 by %c254_i32_486 dim 1 : vector<8x256xf32>, i32 -> vector<8x256xf32>
    %c14_487 = arith.constant 14 : index
    %c0_488 = arith.constant 0 : index
    %777 = vector.load %arg3[%c14_487, %c0_488] : memref<26x256xf32, #tpu.memory_space<vmem>>, vector<1x256xf32>
    %778 = vector.broadcast %777 : vector<1x256xf32> to vector<8x256xf32>
    %779 = arith.mulf %776, %778 : vector<8x256xf32>
    %c1_489 = arith.constant 1 : index
    %c0_490 = arith.constant 0 : index
    %c14_491 = arith.constant 14 : index
    %780 = vector.load %arg8[%c1_489, %c0_490, %c14_491] : memref<2x8x25xf32, #tpu.memory_space<vmem>>, vector<1x8x1xf32>
    %781 = vector.shape_cast %780 : vector<1x8x1xf32> to vector<8x1xf32>
    %782 = vector.broadcast %781 : vector<8x1xf32> to vector<8x256xf32>
    %783 = arith.mulf %779, %782 : vector<8x256xf32>
    %784 = arith.addf %775, %783 : vector<8x256xf32>
    %c242_i32_492 = arith.constant 242 : i32
    %785 = tpu.dynamic_rotate %654 by %c242_i32_492 dim 1 : vector<8x256xf32>, i32 -> vector<8x256xf32>
    %c15_493 = arith.constant 15 : index
    %c0_494 = arith.constant 0 : index
    %786 = vector.load %arg3[%c15_493, %c0_494] : memref<26x256xf32, #tpu.memory_space<vmem>>, vector<1x256xf32>
    %787 = vector.broadcast %786 : vector<1x256xf32> to vector<8x256xf32>
    %788 = arith.mulf %785, %787 : vector<8x256xf32>
    %c1_495 = arith.constant 1 : index
    %c0_496 = arith.constant 0 : index
    %c15_497 = arith.constant 15 : index
    %789 = vector.load %arg8[%c1_495, %c0_496, %c15_497] : memref<2x8x25xf32, #tpu.memory_space<vmem>>, vector<1x8x1xf32>
    %790 = vector.shape_cast %789 : vector<1x8x1xf32> to vector<8x1xf32>
    %791 = vector.broadcast %790 : vector<8x1xf32> to vector<8x256xf32>
    %792 = arith.mulf %788, %791 : vector<8x256xf32>
    %793 = arith.addf %784, %792 : vector<8x256xf32>
    %c241_i32_498 = arith.constant 241 : i32
    %794 = tpu.dynamic_rotate %654 by %c241_i32_498 dim 1 : vector<8x256xf32>, i32 -> vector<8x256xf32>
    %c16_499 = arith.constant 16 : index
    %c0_500 = arith.constant 0 : index
    %795 = vector.load %arg3[%c16_499, %c0_500] : memref<26x256xf32, #tpu.memory_space<vmem>>, vector<1x256xf32>
    %796 = vector.broadcast %795 : vector<1x256xf32> to vector<8x256xf32>
    %797 = arith.mulf %794, %796 : vector<8x256xf32>
    %c1_501 = arith.constant 1 : index
    %c0_502 = arith.constant 0 : index
    %c16_503 = arith.constant 16 : index
    %798 = vector.load %arg8[%c1_501, %c0_502, %c16_503] : memref<2x8x25xf32, #tpu.memory_space<vmem>>, vector<1x8x1xf32>
    %799 = vector.shape_cast %798 : vector<1x8x1xf32> to vector<8x1xf32>
    %800 = vector.broadcast %799 : vector<8x1xf32> to vector<8x256xf32>
    %801 = arith.mulf %797, %800 : vector<8x256xf32>
    %802 = arith.addf %793, %801 : vector<8x256xf32>
    %c240_i32_504 = arith.constant 240 : i32
    %803 = tpu.dynamic_rotate %654 by %c240_i32_504 dim 1 : vector<8x256xf32>, i32 -> vector<8x256xf32>
    %c17_505 = arith.constant 17 : index
    %c0_506 = arith.constant 0 : index
    %804 = vector.load %arg3[%c17_505, %c0_506] : memref<26x256xf32, #tpu.memory_space<vmem>>, vector<1x256xf32>
    %805 = vector.broadcast %804 : vector<1x256xf32> to vector<8x256xf32>
    %806 = arith.mulf %803, %805 : vector<8x256xf32>
    %c1_507 = arith.constant 1 : index
    %c0_508 = arith.constant 0 : index
    %c17_509 = arith.constant 17 : index
    %807 = vector.load %arg8[%c1_507, %c0_508, %c17_509] : memref<2x8x25xf32, #tpu.memory_space<vmem>>, vector<1x8x1xf32>
    %808 = vector.shape_cast %807 : vector<1x8x1xf32> to vector<8x1xf32>
    %809 = vector.broadcast %808 : vector<8x1xf32> to vector<8x256xf32>
    %810 = arith.mulf %806, %809 : vector<8x256xf32>
    %811 = arith.addf %802, %810 : vector<8x256xf32>
    %c239_i32_510 = arith.constant 239 : i32
    %812 = tpu.dynamic_rotate %654 by %c239_i32_510 dim 1 : vector<8x256xf32>, i32 -> vector<8x256xf32>
    %c18_511 = arith.constant 18 : index
    %c0_512 = arith.constant 0 : index
    %813 = vector.load %arg3[%c18_511, %c0_512] : memref<26x256xf32, #tpu.memory_space<vmem>>, vector<1x256xf32>
    %814 = vector.broadcast %813 : vector<1x256xf32> to vector<8x256xf32>
    %815 = arith.mulf %812, %814 : vector<8x256xf32>
    %c1_513 = arith.constant 1 : index
    %c0_514 = arith.constant 0 : index
    %c18_515 = arith.constant 18 : index
    %816 = vector.load %arg8[%c1_513, %c0_514, %c18_515] : memref<2x8x25xf32, #tpu.memory_space<vmem>>, vector<1x8x1xf32>
    %817 = vector.shape_cast %816 : vector<1x8x1xf32> to vector<8x1xf32>
    %818 = vector.broadcast %817 : vector<8x1xf32> to vector<8x256xf32>
    %819 = arith.mulf %815, %818 : vector<8x256xf32>
    %820 = arith.addf %811, %819 : vector<8x256xf32>
    %c238_i32_516 = arith.constant 238 : i32
    %821 = tpu.dynamic_rotate %654 by %c238_i32_516 dim 1 : vector<8x256xf32>, i32 -> vector<8x256xf32>
    %c19_517 = arith.constant 19 : index
    %c0_518 = arith.constant 0 : index
    %822 = vector.load %arg3[%c19_517, %c0_518] : memref<26x256xf32, #tpu.memory_space<vmem>>, vector<1x256xf32>
    %823 = vector.broadcast %822 : vector<1x256xf32> to vector<8x256xf32>
    %824 = arith.mulf %821, %823 : vector<8x256xf32>
    %c1_519 = arith.constant 1 : index
    %c0_520 = arith.constant 0 : index
    %c19_521 = arith.constant 19 : index
    %825 = vector.load %arg8[%c1_519, %c0_520, %c19_521] : memref<2x8x25xf32, #tpu.memory_space<vmem>>, vector<1x8x1xf32>
    %826 = vector.shape_cast %825 : vector<1x8x1xf32> to vector<8x1xf32>
    %827 = vector.broadcast %826 : vector<8x1xf32> to vector<8x256xf32>
    %828 = arith.mulf %824, %827 : vector<8x256xf32>
    %829 = arith.addf %820, %828 : vector<8x256xf32>
    %c226_i32_522 = arith.constant 226 : i32
    %830 = tpu.dynamic_rotate %654 by %c226_i32_522 dim 1 : vector<8x256xf32>, i32 -> vector<8x256xf32>
    %c20_523 = arith.constant 20 : index
    %c0_524 = arith.constant 0 : index
    %831 = vector.load %arg3[%c20_523, %c0_524] : memref<26x256xf32, #tpu.memory_space<vmem>>, vector<1x256xf32>
    %832 = vector.broadcast %831 : vector<1x256xf32> to vector<8x256xf32>
    %833 = arith.mulf %830, %832 : vector<8x256xf32>
    %c1_525 = arith.constant 1 : index
    %c0_526 = arith.constant 0 : index
    %c20_527 = arith.constant 20 : index
    %834 = vector.load %arg8[%c1_525, %c0_526, %c20_527] : memref<2x8x25xf32, #tpu.memory_space<vmem>>, vector<1x8x1xf32>
    %835 = vector.shape_cast %834 : vector<1x8x1xf32> to vector<8x1xf32>
    %836 = vector.broadcast %835 : vector<8x1xf32> to vector<8x256xf32>
    %837 = arith.mulf %833, %836 : vector<8x256xf32>
    %838 = arith.addf %829, %837 : vector<8x256xf32>
    %c225_i32_528 = arith.constant 225 : i32
    %839 = tpu.dynamic_rotate %654 by %c225_i32_528 dim 1 : vector<8x256xf32>, i32 -> vector<8x256xf32>
    %c21_529 = arith.constant 21 : index
    %c0_530 = arith.constant 0 : index
    %840 = vector.load %arg3[%c21_529, %c0_530] : memref<26x256xf32, #tpu.memory_space<vmem>>, vector<1x256xf32>
    %841 = vector.broadcast %840 : vector<1x256xf32> to vector<8x256xf32>
    %842 = arith.mulf %839, %841 : vector<8x256xf32>
    %c1_531 = arith.constant 1 : index
    %c0_532 = arith.constant 0 : index
    %c21_533 = arith.constant 21 : index
    %843 = vector.load %arg8[%c1_531, %c0_532, %c21_533] : memref<2x8x25xf32, #tpu.memory_space<vmem>>, vector<1x8x1xf32>
    %844 = vector.shape_cast %843 : vector<1x8x1xf32> to vector<8x1xf32>
    %845 = vector.broadcast %844 : vector<8x1xf32> to vector<8x256xf32>
    %846 = arith.mulf %842, %845 : vector<8x256xf32>
    %847 = arith.addf %838, %846 : vector<8x256xf32>
    %c224_i32_534 = arith.constant 224 : i32
    %848 = tpu.dynamic_rotate %654 by %c224_i32_534 dim 1 : vector<8x256xf32>, i32 -> vector<8x256xf32>
    %c22_535 = arith.constant 22 : index
    %c0_536 = arith.constant 0 : index
    %849 = vector.load %arg3[%c22_535, %c0_536] : memref<26x256xf32, #tpu.memory_space<vmem>>, vector<1x256xf32>
    %850 = vector.broadcast %849 : vector<1x256xf32> to vector<8x256xf32>
    %851 = arith.mulf %848, %850 : vector<8x256xf32>
    %c1_537 = arith.constant 1 : index
    %c0_538 = arith.constant 0 : index
    %c22_539 = arith.constant 22 : index
    %852 = vector.load %arg8[%c1_537, %c0_538, %c22_539] : memref<2x8x25xf32, #tpu.memory_space<vmem>>, vector<1x8x1xf32>
    %853 = vector.shape_cast %852 : vector<1x8x1xf32> to vector<8x1xf32>
    %854 = vector.broadcast %853 : vector<8x1xf32> to vector<8x256xf32>
    %855 = arith.mulf %851, %854 : vector<8x256xf32>
    %856 = arith.addf %847, %855 : vector<8x256xf32>
    %c223_i32_540 = arith.constant 223 : i32
    %857 = tpu.dynamic_rotate %654 by %c223_i32_540 dim 1 : vector<8x256xf32>, i32 -> vector<8x256xf32>
    %c23_541 = arith.constant 23 : index
    %c0_542 = arith.constant 0 : index
    %858 = vector.load %arg3[%c23_541, %c0_542] : memref<26x256xf32, #tpu.memory_space<vmem>>, vector<1x256xf32>
    %859 = vector.broadcast %858 : vector<1x256xf32> to vector<8x256xf32>
    %860 = arith.mulf %857, %859 : vector<8x256xf32>
    %c1_543 = arith.constant 1 : index
    %c0_544 = arith.constant 0 : index
    %c23_545 = arith.constant 23 : index
    %861 = vector.load %arg8[%c1_543, %c0_544, %c23_545] : memref<2x8x25xf32, #tpu.memory_space<vmem>>, vector<1x8x1xf32>
    %862 = vector.shape_cast %861 : vector<1x8x1xf32> to vector<8x1xf32>
    %863 = vector.broadcast %862 : vector<8x1xf32> to vector<8x256xf32>
    %864 = arith.mulf %860, %863 : vector<8x256xf32>
    %865 = arith.addf %856, %864 : vector<8x256xf32>
    %c222_i32_546 = arith.constant 222 : i32
    %866 = tpu.dynamic_rotate %654 by %c222_i32_546 dim 1 : vector<8x256xf32>, i32 -> vector<8x256xf32>
    %c24_547 = arith.constant 24 : index
    %c0_548 = arith.constant 0 : index
    %867 = vector.load %arg3[%c24_547, %c0_548] : memref<26x256xf32, #tpu.memory_space<vmem>>, vector<1x256xf32>
    %868 = vector.broadcast %867 : vector<1x256xf32> to vector<8x256xf32>
    %869 = arith.mulf %866, %868 : vector<8x256xf32>
    %c1_549 = arith.constant 1 : index
    %c0_550 = arith.constant 0 : index
    %c24_551 = arith.constant 24 : index
    %870 = vector.load %arg8[%c1_549, %c0_550, %c24_551] : memref<2x8x25xf32, #tpu.memory_space<vmem>>, vector<1x8x1xf32>
    %871 = vector.shape_cast %870 : vector<1x8x1xf32> to vector<8x1xf32>
    %872 = vector.broadcast %871 : vector<8x1xf32> to vector<8x256xf32>
    %873 = arith.mulf %869, %872 : vector<8x256xf32>
    %874 = arith.addf %865, %873 : vector<8x256xf32>
    %c1_552 = arith.constant 1 : index
    %c0_553 = arith.constant 0 : index
    %c0_554 = arith.constant 0 : index
    %875 = vector.load %arg9[%c1_552, %c0_553, %c0_554] : memref<2x8x8xf32, #tpu.memory_space<vmem>>, vector<1x8x8xf32>
    %876 = vector.shape_cast %875 : vector<1x8x8xf32> to vector<8x8xf32>
    %cst_555 = arith.constant dense<0.000000e+00> : vector<8x256xf32>
    %877 = tpu.matmul %876, %874, %cst_555 {dimension_numbers = #tpu.dot_dimension_numbers<[1], [0], [0], [1], [0, 0, 1, 1], [], []>} : vector<8x8xf32>, vector<8x256xf32>, vector<8x256xf32> -> vector<8x256xf32>
    %c1_556 = arith.constant 1 : index
    %c0_557 = arith.constant 0 : index
    %c0_558 = arith.constant 0 : index
    %878 = vector.load %arg10[%c1_556, %c0_557, %c0_558] : memref<2x8x1xf32, #tpu.memory_space<vmem>>, vector<1x8x1xf32>
    %879 = vector.shape_cast %878 : vector<1x8x1xf32> to vector<8x1xf32>
    %880 = vector.broadcast %879 : vector<8x1xf32> to vector<8x256xf32>
    %881 = arith.addf %877, %880 : vector<8x256xf32>
    %cst_559 = arith.constant 0.000000e+00 : f32
    %882 = vector.broadcast %cst_559 : f32 to vector<8x256xf32>
    %883 = arith.maximumf %881, %882 : vector<8x256xf32>
    %c34_i32_560 = arith.constant 34 : i32
    %884 = tpu.dynamic_rotate %883 by %c34_i32_560 dim 1 : vector<8x256xf32>, i32 -> vector<8x256xf32>
    %c0_561 = arith.constant 0 : index
    %c0_562 = arith.constant 0 : index
    %885 = vector.load %arg3[%c0_561, %c0_562] : memref<26x256xf32, #tpu.memory_space<vmem>>, vector<1x256xf32>
    %886 = vector.broadcast %885 : vector<1x256xf32> to vector<8x256xf32>
    %887 = arith.mulf %884, %886 : vector<8x256xf32>
    %c1_563 = arith.constant 1 : index
    %c0_564 = arith.constant 0 : index
    %c0_565 = arith.constant 0 : index
    %888 = vector.load %arg11[%c1_563, %c0_564, %c0_565] : memref<2x8x25xf32, #tpu.memory_space<vmem>>, vector<1x8x1xf32>
    %889 = vector.shape_cast %888 : vector<1x8x1xf32> to vector<8x1xf32>
    %890 = vector.broadcast %889 : vector<8x1xf32> to vector<8x256xf32>
    %891 = arith.mulf %887, %890 : vector<8x256xf32>
    %c33_i32_566 = arith.constant 33 : i32
    %892 = tpu.dynamic_rotate %883 by %c33_i32_566 dim 1 : vector<8x256xf32>, i32 -> vector<8x256xf32>
    %c1_567 = arith.constant 1 : index
    %c0_568 = arith.constant 0 : index
    %893 = vector.load %arg3[%c1_567, %c0_568] : memref<26x256xf32, #tpu.memory_space<vmem>>, vector<1x256xf32>
    %894 = vector.broadcast %893 : vector<1x256xf32> to vector<8x256xf32>
    %895 = arith.mulf %892, %894 : vector<8x256xf32>
    %c1_569 = arith.constant 1 : index
    %c0_570 = arith.constant 0 : index
    %c1_571 = arith.constant 1 : index
    %896 = vector.load %arg11[%c1_569, %c0_570, %c1_571] : memref<2x8x25xf32, #tpu.memory_space<vmem>>, vector<1x8x1xf32>
    %897 = vector.shape_cast %896 : vector<1x8x1xf32> to vector<8x1xf32>
    %898 = vector.broadcast %897 : vector<8x1xf32> to vector<8x256xf32>
    %899 = arith.mulf %895, %898 : vector<8x256xf32>
    %900 = arith.addf %891, %899 : vector<8x256xf32>
    %c32_i32_572 = arith.constant 32 : i32
    %901 = tpu.dynamic_rotate %883 by %c32_i32_572 dim 1 : vector<8x256xf32>, i32 -> vector<8x256xf32>
    %c2_573 = arith.constant 2 : index
    %c0_574 = arith.constant 0 : index
    %902 = vector.load %arg3[%c2_573, %c0_574] : memref<26x256xf32, #tpu.memory_space<vmem>>, vector<1x256xf32>
    %903 = vector.broadcast %902 : vector<1x256xf32> to vector<8x256xf32>
    %904 = arith.mulf %901, %903 : vector<8x256xf32>
    %c1_575 = arith.constant 1 : index
    %c0_576 = arith.constant 0 : index
    %c2_577 = arith.constant 2 : index
    %905 = vector.load %arg11[%c1_575, %c0_576, %c2_577] : memref<2x8x25xf32, #tpu.memory_space<vmem>>, vector<1x8x1xf32>
    %906 = vector.shape_cast %905 : vector<1x8x1xf32> to vector<8x1xf32>
    %907 = vector.broadcast %906 : vector<8x1xf32> to vector<8x256xf32>
    %908 = arith.mulf %904, %907 : vector<8x256xf32>
    %909 = arith.addf %900, %908 : vector<8x256xf32>
    %c31_i32_578 = arith.constant 31 : i32
    %910 = tpu.dynamic_rotate %883 by %c31_i32_578 dim 1 : vector<8x256xf32>, i32 -> vector<8x256xf32>
    %c3_579 = arith.constant 3 : index
    %c0_580 = arith.constant 0 : index
    %911 = vector.load %arg3[%c3_579, %c0_580] : memref<26x256xf32, #tpu.memory_space<vmem>>, vector<1x256xf32>
    %912 = vector.broadcast %911 : vector<1x256xf32> to vector<8x256xf32>
    %913 = arith.mulf %910, %912 : vector<8x256xf32>
    %c1_581 = arith.constant 1 : index
    %c0_582 = arith.constant 0 : index
    %c3_583 = arith.constant 3 : index
    %914 = vector.load %arg11[%c1_581, %c0_582, %c3_583] : memref<2x8x25xf32, #tpu.memory_space<vmem>>, vector<1x8x1xf32>
    %915 = vector.shape_cast %914 : vector<1x8x1xf32> to vector<8x1xf32>
    %916 = vector.broadcast %915 : vector<8x1xf32> to vector<8x256xf32>
    %917 = arith.mulf %913, %916 : vector<8x256xf32>
    %918 = arith.addf %909, %917 : vector<8x256xf32>
    %c30_i32_584 = arith.constant 30 : i32
    %919 = tpu.dynamic_rotate %883 by %c30_i32_584 dim 1 : vector<8x256xf32>, i32 -> vector<8x256xf32>
    %c4_585 = arith.constant 4 : index
    %c0_586 = arith.constant 0 : index
    %920 = vector.load %arg3[%c4_585, %c0_586] : memref<26x256xf32, #tpu.memory_space<vmem>>, vector<1x256xf32>
    %921 = vector.broadcast %920 : vector<1x256xf32> to vector<8x256xf32>
    %922 = arith.mulf %919, %921 : vector<8x256xf32>
    %c1_587 = arith.constant 1 : index
    %c0_588 = arith.constant 0 : index
    %c4_589 = arith.constant 4 : index
    %923 = vector.load %arg11[%c1_587, %c0_588, %c4_589] : memref<2x8x25xf32, #tpu.memory_space<vmem>>, vector<1x8x1xf32>
    %924 = vector.shape_cast %923 : vector<1x8x1xf32> to vector<8x1xf32>
    %925 = vector.broadcast %924 : vector<8x1xf32> to vector<8x256xf32>
    %926 = arith.mulf %922, %925 : vector<8x256xf32>
    %927 = arith.addf %918, %926 : vector<8x256xf32>
    %c18_i32_590 = arith.constant 18 : i32
    %928 = tpu.dynamic_rotate %883 by %c18_i32_590 dim 1 : vector<8x256xf32>, i32 -> vector<8x256xf32>
    %c5_591 = arith.constant 5 : index
    %c0_592 = arith.constant 0 : index
    %929 = vector.load %arg3[%c5_591, %c0_592] : memref<26x256xf32, #tpu.memory_space<vmem>>, vector<1x256xf32>
    %930 = vector.broadcast %929 : vector<1x256xf32> to vector<8x256xf32>
    %931 = arith.mulf %928, %930 : vector<8x256xf32>
    %c1_593 = arith.constant 1 : index
    %c0_594 = arith.constant 0 : index
    %c5_595 = arith.constant 5 : index
    %932 = vector.load %arg11[%c1_593, %c0_594, %c5_595] : memref<2x8x25xf32, #tpu.memory_space<vmem>>, vector<1x8x1xf32>
    %933 = vector.shape_cast %932 : vector<1x8x1xf32> to vector<8x1xf32>
    %934 = vector.broadcast %933 : vector<8x1xf32> to vector<8x256xf32>
    %935 = arith.mulf %931, %934 : vector<8x256xf32>
    %936 = arith.addf %927, %935 : vector<8x256xf32>
    %c17_i32_596 = arith.constant 17 : i32
    %937 = tpu.dynamic_rotate %883 by %c17_i32_596 dim 1 : vector<8x256xf32>, i32 -> vector<8x256xf32>
    %c6_597 = arith.constant 6 : index
    %c0_598 = arith.constant 0 : index
    %938 = vector.load %arg3[%c6_597, %c0_598] : memref<26x256xf32, #tpu.memory_space<vmem>>, vector<1x256xf32>
    %939 = vector.broadcast %938 : vector<1x256xf32> to vector<8x256xf32>
    %940 = arith.mulf %937, %939 : vector<8x256xf32>
    %c1_599 = arith.constant 1 : index
    %c0_600 = arith.constant 0 : index
    %c6_601 = arith.constant 6 : index
    %941 = vector.load %arg11[%c1_599, %c0_600, %c6_601] : memref<2x8x25xf32, #tpu.memory_space<vmem>>, vector<1x8x1xf32>
    %942 = vector.shape_cast %941 : vector<1x8x1xf32> to vector<8x1xf32>
    %943 = vector.broadcast %942 : vector<8x1xf32> to vector<8x256xf32>
    %944 = arith.mulf %940, %943 : vector<8x256xf32>
    %945 = arith.addf %936, %944 : vector<8x256xf32>
    %c16_i32_602 = arith.constant 16 : i32
    %946 = tpu.dynamic_rotate %883 by %c16_i32_602 dim 1 : vector<8x256xf32>, i32 -> vector<8x256xf32>
    %c7_603 = arith.constant 7 : index
    %c0_604 = arith.constant 0 : index
    %947 = vector.load %arg3[%c7_603, %c0_604] : memref<26x256xf32, #tpu.memory_space<vmem>>, vector<1x256xf32>
    %948 = vector.broadcast %947 : vector<1x256xf32> to vector<8x256xf32>
    %949 = arith.mulf %946, %948 : vector<8x256xf32>
    %c1_605 = arith.constant 1 : index
    %c0_606 = arith.constant 0 : index
    %c7_607 = arith.constant 7 : index
    %950 = vector.load %arg11[%c1_605, %c0_606, %c7_607] : memref<2x8x25xf32, #tpu.memory_space<vmem>>, vector<1x8x1xf32>
    %951 = vector.shape_cast %950 : vector<1x8x1xf32> to vector<8x1xf32>
    %952 = vector.broadcast %951 : vector<8x1xf32> to vector<8x256xf32>
    %953 = arith.mulf %949, %952 : vector<8x256xf32>
    %954 = arith.addf %945, %953 : vector<8x256xf32>
    %c15_i32_608 = arith.constant 15 : i32
    %955 = tpu.dynamic_rotate %883 by %c15_i32_608 dim 1 : vector<8x256xf32>, i32 -> vector<8x256xf32>
    %c8_609 = arith.constant 8 : index
    %c0_610 = arith.constant 0 : index
    %956 = vector.load %arg3[%c8_609, %c0_610] : memref<26x256xf32, #tpu.memory_space<vmem>>, vector<1x256xf32>
    %957 = vector.broadcast %956 : vector<1x256xf32> to vector<8x256xf32>
    %958 = arith.mulf %955, %957 : vector<8x256xf32>
    %c1_611 = arith.constant 1 : index
    %c0_612 = arith.constant 0 : index
    %c8_613 = arith.constant 8 : index
    %959 = vector.load %arg11[%c1_611, %c0_612, %c8_613] : memref<2x8x25xf32, #tpu.memory_space<vmem>>, vector<1x8x1xf32>
    %960 = vector.shape_cast %959 : vector<1x8x1xf32> to vector<8x1xf32>
    %961 = vector.broadcast %960 : vector<8x1xf32> to vector<8x256xf32>
    %962 = arith.mulf %958, %961 : vector<8x256xf32>
    %963 = arith.addf %954, %962 : vector<8x256xf32>
    %c14_i32_614 = arith.constant 14 : i32
    %964 = tpu.dynamic_rotate %883 by %c14_i32_614 dim 1 : vector<8x256xf32>, i32 -> vector<8x256xf32>
    %c9_615 = arith.constant 9 : index
    %c0_616 = arith.constant 0 : index
    %965 = vector.load %arg3[%c9_615, %c0_616] : memref<26x256xf32, #tpu.memory_space<vmem>>, vector<1x256xf32>
    %966 = vector.broadcast %965 : vector<1x256xf32> to vector<8x256xf32>
    %967 = arith.mulf %964, %966 : vector<8x256xf32>
    %c1_617 = arith.constant 1 : index
    %c0_618 = arith.constant 0 : index
    %c9_619 = arith.constant 9 : index
    %968 = vector.load %arg11[%c1_617, %c0_618, %c9_619] : memref<2x8x25xf32, #tpu.memory_space<vmem>>, vector<1x8x1xf32>
    %969 = vector.shape_cast %968 : vector<1x8x1xf32> to vector<8x1xf32>
    %970 = vector.broadcast %969 : vector<8x1xf32> to vector<8x256xf32>
    %971 = arith.mulf %967, %970 : vector<8x256xf32>
    %972 = arith.addf %963, %971 : vector<8x256xf32>
    %c2_i32_620 = arith.constant 2 : i32
    %973 = tpu.dynamic_rotate %883 by %c2_i32_620 dim 1 : vector<8x256xf32>, i32 -> vector<8x256xf32>
    %c10_621 = arith.constant 10 : index
    %c0_622 = arith.constant 0 : index
    %974 = vector.load %arg3[%c10_621, %c0_622] : memref<26x256xf32, #tpu.memory_space<vmem>>, vector<1x256xf32>
    %975 = vector.broadcast %974 : vector<1x256xf32> to vector<8x256xf32>
    %976 = arith.mulf %973, %975 : vector<8x256xf32>
    %c1_623 = arith.constant 1 : index
    %c0_624 = arith.constant 0 : index
    %c10_625 = arith.constant 10 : index
    %977 = vector.load %arg11[%c1_623, %c0_624, %c10_625] : memref<2x8x25xf32, #tpu.memory_space<vmem>>, vector<1x8x1xf32>
    %978 = vector.shape_cast %977 : vector<1x8x1xf32> to vector<8x1xf32>
    %979 = vector.broadcast %978 : vector<8x1xf32> to vector<8x256xf32>
    %980 = arith.mulf %976, %979 : vector<8x256xf32>
    %981 = arith.addf %972, %980 : vector<8x256xf32>
    %c1_i32_626 = arith.constant 1 : i32
    %982 = tpu.dynamic_rotate %883 by %c1_i32_626 dim 1 : vector<8x256xf32>, i32 -> vector<8x256xf32>
    %c11_627 = arith.constant 11 : index
    %c0_628 = arith.constant 0 : index
    %983 = vector.load %arg3[%c11_627, %c0_628] : memref<26x256xf32, #tpu.memory_space<vmem>>, vector<1x256xf32>
    %984 = vector.broadcast %983 : vector<1x256xf32> to vector<8x256xf32>
    %985 = arith.mulf %982, %984 : vector<8x256xf32>
    %c1_629 = arith.constant 1 : index
    %c0_630 = arith.constant 0 : index
    %c11_631 = arith.constant 11 : index
    %986 = vector.load %arg11[%c1_629, %c0_630, %c11_631] : memref<2x8x25xf32, #tpu.memory_space<vmem>>, vector<1x8x1xf32>
    %987 = vector.shape_cast %986 : vector<1x8x1xf32> to vector<8x1xf32>
    %988 = vector.broadcast %987 : vector<8x1xf32> to vector<8x256xf32>
    %989 = arith.mulf %985, %988 : vector<8x256xf32>
    %990 = arith.addf %981, %989 : vector<8x256xf32>
    %c1_632 = arith.constant 1 : index
    %c0_633 = arith.constant 0 : index
    %c12_634 = arith.constant 12 : index
    %991 = vector.load %arg11[%c1_632, %c0_633, %c12_634] : memref<2x8x25xf32, #tpu.memory_space<vmem>>, vector<1x8x1xf32>
    %992 = vector.shape_cast %991 : vector<1x8x1xf32> to vector<8x1xf32>
    %993 = vector.broadcast %992 : vector<8x1xf32> to vector<8x256xf32>
    %994 = arith.mulf %883, %993 : vector<8x256xf32>
    %995 = arith.addf %990, %994 : vector<8x256xf32>
    %c255_i32_635 = arith.constant 255 : i32
    %996 = tpu.dynamic_rotate %883 by %c255_i32_635 dim 1 : vector<8x256xf32>, i32 -> vector<8x256xf32>
    %c13_636 = arith.constant 13 : index
    %c0_637 = arith.constant 0 : index
    %997 = vector.load %arg3[%c13_636, %c0_637] : memref<26x256xf32, #tpu.memory_space<vmem>>, vector<1x256xf32>
    %998 = vector.broadcast %997 : vector<1x256xf32> to vector<8x256xf32>
    %999 = arith.mulf %996, %998 : vector<8x256xf32>
    %c1_638 = arith.constant 1 : index
    %c0_639 = arith.constant 0 : index
    %c13_640 = arith.constant 13 : index
    %1000 = vector.load %arg11[%c1_638, %c0_639, %c13_640] : memref<2x8x25xf32, #tpu.memory_space<vmem>>, vector<1x8x1xf32>
    %1001 = vector.shape_cast %1000 : vector<1x8x1xf32> to vector<8x1xf32>
    %1002 = vector.broadcast %1001 : vector<8x1xf32> to vector<8x256xf32>
    %1003 = arith.mulf %999, %1002 : vector<8x256xf32>
    %1004 = arith.addf %995, %1003 : vector<8x256xf32>
    %c254_i32_641 = arith.constant 254 : i32
    %1005 = tpu.dynamic_rotate %883 by %c254_i32_641 dim 1 : vector<8x256xf32>, i32 -> vector<8x256xf32>
    %c14_642 = arith.constant 14 : index
    %c0_643 = arith.constant 0 : index
    %1006 = vector.load %arg3[%c14_642, %c0_643] : memref<26x256xf32, #tpu.memory_space<vmem>>, vector<1x256xf32>
    %1007 = vector.broadcast %1006 : vector<1x256xf32> to vector<8x256xf32>
    %1008 = arith.mulf %1005, %1007 : vector<8x256xf32>
    %c1_644 = arith.constant 1 : index
    %c0_645 = arith.constant 0 : index
    %c14_646 = arith.constant 14 : index
    %1009 = vector.load %arg11[%c1_644, %c0_645, %c14_646] : memref<2x8x25xf32, #tpu.memory_space<vmem>>, vector<1x8x1xf32>
    %1010 = vector.shape_cast %1009 : vector<1x8x1xf32> to vector<8x1xf32>
    %1011 = vector.broadcast %1010 : vector<8x1xf32> to vector<8x256xf32>
    %1012 = arith.mulf %1008, %1011 : vector<8x256xf32>
    %1013 = arith.addf %1004, %1012 : vector<8x256xf32>
    %c242_i32_647 = arith.constant 242 : i32
    %1014 = tpu.dynamic_rotate %883 by %c242_i32_647 dim 1 : vector<8x256xf32>, i32 -> vector<8x256xf32>
    %c15_648 = arith.constant 15 : index
    %c0_649 = arith.constant 0 : index
    %1015 = vector.load %arg3[%c15_648, %c0_649] : memref<26x256xf32, #tpu.memory_space<vmem>>, vector<1x256xf32>
    %1016 = vector.broadcast %1015 : vector<1x256xf32> to vector<8x256xf32>
    %1017 = arith.mulf %1014, %1016 : vector<8x256xf32>
    %c1_650 = arith.constant 1 : index
    %c0_651 = arith.constant 0 : index
    %c15_652 = arith.constant 15 : index
    %1018 = vector.load %arg11[%c1_650, %c0_651, %c15_652] : memref<2x8x25xf32, #tpu.memory_space<vmem>>, vector<1x8x1xf32>
    %1019 = vector.shape_cast %1018 : vector<1x8x1xf32> to vector<8x1xf32>
    %1020 = vector.broadcast %1019 : vector<8x1xf32> to vector<8x256xf32>
    %1021 = arith.mulf %1017, %1020 : vector<8x256xf32>
    %1022 = arith.addf %1013, %1021 : vector<8x256xf32>
    %c241_i32_653 = arith.constant 241 : i32
    %1023 = tpu.dynamic_rotate %883 by %c241_i32_653 dim 1 : vector<8x256xf32>, i32 -> vector<8x256xf32>
    %c16_654 = arith.constant 16 : index
    %c0_655 = arith.constant 0 : index
    %1024 = vector.load %arg3[%c16_654, %c0_655] : memref<26x256xf32, #tpu.memory_space<vmem>>, vector<1x256xf32>
    %1025 = vector.broadcast %1024 : vector<1x256xf32> to vector<8x256xf32>
    %1026 = arith.mulf %1023, %1025 : vector<8x256xf32>
    %c1_656 = arith.constant 1 : index
    %c0_657 = arith.constant 0 : index
    %c16_658 = arith.constant 16 : index
    %1027 = vector.load %arg11[%c1_656, %c0_657, %c16_658] : memref<2x8x25xf32, #tpu.memory_space<vmem>>, vector<1x8x1xf32>
    %1028 = vector.shape_cast %1027 : vector<1x8x1xf32> to vector<8x1xf32>
    %1029 = vector.broadcast %1028 : vector<8x1xf32> to vector<8x256xf32>
    %1030 = arith.mulf %1026, %1029 : vector<8x256xf32>
    %1031 = arith.addf %1022, %1030 : vector<8x256xf32>
    %c240_i32_659 = arith.constant 240 : i32
    %1032 = tpu.dynamic_rotate %883 by %c240_i32_659 dim 1 : vector<8x256xf32>, i32 -> vector<8x256xf32>
    %c17_660 = arith.constant 17 : index
    %c0_661 = arith.constant 0 : index
    %1033 = vector.load %arg3[%c17_660, %c0_661] : memref<26x256xf32, #tpu.memory_space<vmem>>, vector<1x256xf32>
    %1034 = vector.broadcast %1033 : vector<1x256xf32> to vector<8x256xf32>
    %1035 = arith.mulf %1032, %1034 : vector<8x256xf32>
    %c1_662 = arith.constant 1 : index
    %c0_663 = arith.constant 0 : index
    %c17_664 = arith.constant 17 : index
    %1036 = vector.load %arg11[%c1_662, %c0_663, %c17_664] : memref<2x8x25xf32, #tpu.memory_space<vmem>>, vector<1x8x1xf32>
    %1037 = vector.shape_cast %1036 : vector<1x8x1xf32> to vector<8x1xf32>
    %1038 = vector.broadcast %1037 : vector<8x1xf32> to vector<8x256xf32>
    %1039 = arith.mulf %1035, %1038 : vector<8x256xf32>
    %1040 = arith.addf %1031, %1039 : vector<8x256xf32>
    %c239_i32_665 = arith.constant 239 : i32
    %1041 = tpu.dynamic_rotate %883 by %c239_i32_665 dim 1 : vector<8x256xf32>, i32 -> vector<8x256xf32>
    %c18_666 = arith.constant 18 : index
    %c0_667 = arith.constant 0 : index
    %1042 = vector.load %arg3[%c18_666, %c0_667] : memref<26x256xf32, #tpu.memory_space<vmem>>, vector<1x256xf32>
    %1043 = vector.broadcast %1042 : vector<1x256xf32> to vector<8x256xf32>
    %1044 = arith.mulf %1041, %1043 : vector<8x256xf32>
    %c1_668 = arith.constant 1 : index
    %c0_669 = arith.constant 0 : index
    %c18_670 = arith.constant 18 : index
    %1045 = vector.load %arg11[%c1_668, %c0_669, %c18_670] : memref<2x8x25xf32, #tpu.memory_space<vmem>>, vector<1x8x1xf32>
    %1046 = vector.shape_cast %1045 : vector<1x8x1xf32> to vector<8x1xf32>
    %1047 = vector.broadcast %1046 : vector<8x1xf32> to vector<8x256xf32>
    %1048 = arith.mulf %1044, %1047 : vector<8x256xf32>
    %1049 = arith.addf %1040, %1048 : vector<8x256xf32>
    %c238_i32_671 = arith.constant 238 : i32
    %1050 = tpu.dynamic_rotate %883 by %c238_i32_671 dim 1 : vector<8x256xf32>, i32 -> vector<8x256xf32>
    %c19_672 = arith.constant 19 : index
    %c0_673 = arith.constant 0 : index
    %1051 = vector.load %arg3[%c19_672, %c0_673] : memref<26x256xf32, #tpu.memory_space<vmem>>, vector<1x256xf32>
    %1052 = vector.broadcast %1051 : vector<1x256xf32> to vector<8x256xf32>
    %1053 = arith.mulf %1050, %1052 : vector<8x256xf32>
    %c1_674 = arith.constant 1 : index
    %c0_675 = arith.constant 0 : index
    %c19_676 = arith.constant 19 : index
    %1054 = vector.load %arg11[%c1_674, %c0_675, %c19_676] : memref<2x8x25xf32, #tpu.memory_space<vmem>>, vector<1x8x1xf32>
    %1055 = vector.shape_cast %1054 : vector<1x8x1xf32> to vector<8x1xf32>
    %1056 = vector.broadcast %1055 : vector<8x1xf32> to vector<8x256xf32>
    %1057 = arith.mulf %1053, %1056 : vector<8x256xf32>
    %1058 = arith.addf %1049, %1057 : vector<8x256xf32>
    %c226_i32_677 = arith.constant 226 : i32
    %1059 = tpu.dynamic_rotate %883 by %c226_i32_677 dim 1 : vector<8x256xf32>, i32 -> vector<8x256xf32>
    %c20_678 = arith.constant 20 : index
    %c0_679 = arith.constant 0 : index
    %1060 = vector.load %arg3[%c20_678, %c0_679] : memref<26x256xf32, #tpu.memory_space<vmem>>, vector<1x256xf32>
    %1061 = vector.broadcast %1060 : vector<1x256xf32> to vector<8x256xf32>
    %1062 = arith.mulf %1059, %1061 : vector<8x256xf32>
    %c1_680 = arith.constant 1 : index
    %c0_681 = arith.constant 0 : index
    %c20_682 = arith.constant 20 : index
    %1063 = vector.load %arg11[%c1_680, %c0_681, %c20_682] : memref<2x8x25xf32, #tpu.memory_space<vmem>>, vector<1x8x1xf32>
    %1064 = vector.shape_cast %1063 : vector<1x8x1xf32> to vector<8x1xf32>
    %1065 = vector.broadcast %1064 : vector<8x1xf32> to vector<8x256xf32>
    %1066 = arith.mulf %1062, %1065 : vector<8x256xf32>
    %1067 = arith.addf %1058, %1066 : vector<8x256xf32>
    %c225_i32_683 = arith.constant 225 : i32
    %1068 = tpu.dynamic_rotate %883 by %c225_i32_683 dim 1 : vector<8x256xf32>, i32 -> vector<8x256xf32>
    %c21_684 = arith.constant 21 : index
    %c0_685 = arith.constant 0 : index
    %1069 = vector.load %arg3[%c21_684, %c0_685] : memref<26x256xf32, #tpu.memory_space<vmem>>, vector<1x256xf32>
    %1070 = vector.broadcast %1069 : vector<1x256xf32> to vector<8x256xf32>
    %1071 = arith.mulf %1068, %1070 : vector<8x256xf32>
    %c1_686 = arith.constant 1 : index
    %c0_687 = arith.constant 0 : index
    %c21_688 = arith.constant 21 : index
    %1072 = vector.load %arg11[%c1_686, %c0_687, %c21_688] : memref<2x8x25xf32, #tpu.memory_space<vmem>>, vector<1x8x1xf32>
    %1073 = vector.shape_cast %1072 : vector<1x8x1xf32> to vector<8x1xf32>
    %1074 = vector.broadcast %1073 : vector<8x1xf32> to vector<8x256xf32>
    %1075 = arith.mulf %1071, %1074 : vector<8x256xf32>
    %1076 = arith.addf %1067, %1075 : vector<8x256xf32>
    %c224_i32_689 = arith.constant 224 : i32
    %1077 = tpu.dynamic_rotate %883 by %c224_i32_689 dim 1 : vector<8x256xf32>, i32 -> vector<8x256xf32>
    %c22_690 = arith.constant 22 : index
    %c0_691 = arith.constant 0 : index
    %1078 = vector.load %arg3[%c22_690, %c0_691] : memref<26x256xf32, #tpu.memory_space<vmem>>, vector<1x256xf32>
    %1079 = vector.broadcast %1078 : vector<1x256xf32> to vector<8x256xf32>
    %1080 = arith.mulf %1077, %1079 : vector<8x256xf32>
    %c1_692 = arith.constant 1 : index
    %c0_693 = arith.constant 0 : index
    %c22_694 = arith.constant 22 : index
    %1081 = vector.load %arg11[%c1_692, %c0_693, %c22_694] : memref<2x8x25xf32, #tpu.memory_space<vmem>>, vector<1x8x1xf32>
    %1082 = vector.shape_cast %1081 : vector<1x8x1xf32> to vector<8x1xf32>
    %1083 = vector.broadcast %1082 : vector<8x1xf32> to vector<8x256xf32>
    %1084 = arith.mulf %1080, %1083 : vector<8x256xf32>
    %1085 = arith.addf %1076, %1084 : vector<8x256xf32>
    %c223_i32_695 = arith.constant 223 : i32
    %1086 = tpu.dynamic_rotate %883 by %c223_i32_695 dim 1 : vector<8x256xf32>, i32 -> vector<8x256xf32>
    %c23_696 = arith.constant 23 : index
    %c0_697 = arith.constant 0 : index
    %1087 = vector.load %arg3[%c23_696, %c0_697] : memref<26x256xf32, #tpu.memory_space<vmem>>, vector<1x256xf32>
    %1088 = vector.broadcast %1087 : vector<1x256xf32> to vector<8x256xf32>
    %1089 = arith.mulf %1086, %1088 : vector<8x256xf32>
    %c1_698 = arith.constant 1 : index
    %c0_699 = arith.constant 0 : index
    %c23_700 = arith.constant 23 : index
    %1090 = vector.load %arg11[%c1_698, %c0_699, %c23_700] : memref<2x8x25xf32, #tpu.memory_space<vmem>>, vector<1x8x1xf32>
    %1091 = vector.shape_cast %1090 : vector<1x8x1xf32> to vector<8x1xf32>
    %1092 = vector.broadcast %1091 : vector<8x1xf32> to vector<8x256xf32>
    %1093 = arith.mulf %1089, %1092 : vector<8x256xf32>
    %1094 = arith.addf %1085, %1093 : vector<8x256xf32>
    %c222_i32_701 = arith.constant 222 : i32
    %1095 = tpu.dynamic_rotate %883 by %c222_i32_701 dim 1 : vector<8x256xf32>, i32 -> vector<8x256xf32>
    %c24_702 = arith.constant 24 : index
    %c0_703 = arith.constant 0 : index
    %1096 = vector.load %arg3[%c24_702, %c0_703] : memref<26x256xf32, #tpu.memory_space<vmem>>, vector<1x256xf32>
    %1097 = vector.broadcast %1096 : vector<1x256xf32> to vector<8x256xf32>
    %1098 = arith.mulf %1095, %1097 : vector<8x256xf32>
    %c1_704 = arith.constant 1 : index
    %c0_705 = arith.constant 0 : index
    %c24_706 = arith.constant 24 : index
    %1099 = vector.load %arg11[%c1_704, %c0_705, %c24_706] : memref<2x8x25xf32, #tpu.memory_space<vmem>>, vector<1x8x1xf32>
    %1100 = vector.shape_cast %1099 : vector<1x8x1xf32> to vector<8x1xf32>
    %1101 = vector.broadcast %1100 : vector<8x1xf32> to vector<8x256xf32>
    %1102 = arith.mulf %1098, %1101 : vector<8x256xf32>
    %1103 = arith.addf %1094, %1102 : vector<8x256xf32>
    %c1_707 = arith.constant 1 : index
    %c0_708 = arith.constant 0 : index
    %c0_709 = arith.constant 0 : index
    %1104 = vector.load %arg12[%c1_707, %c0_708, %c0_709] : memref<2x8x8xf32, #tpu.memory_space<vmem>>, vector<1x8x8xf32>
    %1105 = vector.shape_cast %1104 : vector<1x8x8xf32> to vector<8x8xf32>
    %cst_710 = arith.constant dense<0.000000e+00> : vector<8x256xf32>
    %1106 = tpu.matmul %1105, %1103, %cst_710 {dimension_numbers = #tpu.dot_dimension_numbers<[1], [0], [0], [1], [0, 0, 1, 1], [], []>} : vector<8x8xf32>, vector<8x256xf32>, vector<8x256xf32> -> vector<8x256xf32>
    %c1_711 = arith.constant 1 : index
    %c0_712 = arith.constant 0 : index
    %c0_713 = arith.constant 0 : index
    %1107 = vector.load %arg13[%c1_711, %c0_712, %c0_713] : memref<2x8x1xf32, #tpu.memory_space<vmem>>, vector<1x8x1xf32>
    %1108 = vector.shape_cast %1107 : vector<1x8x1xf32> to vector<8x1xf32>
    %1109 = vector.broadcast %1108 : vector<8x1xf32> to vector<8x256xf32>
    %1110 = arith.addf %1106, %1109 : vector<8x256xf32>
    %cst_714 = arith.constant 0.000000e+00 : f32
    %1111 = vector.broadcast %cst_714 : f32 to vector<8x256xf32>
    %1112 = arith.maximumf %17, %1111 : vector<8x256xf32>
    %c17_i32_715 = arith.constant 17 : i32
    %1113 = tpu.dynamic_rotate %1112 by %c17_i32_715 dim 1 : vector<8x256xf32>, i32 -> vector<8x256xf32>
    %c6_716 = arith.constant 6 : index
    %c0_717 = arith.constant 0 : index
    %1114 = vector.load %arg3[%c6_716, %c0_717] : memref<26x256xf32, #tpu.memory_space<vmem>>, vector<1x256xf32>
    %1115 = vector.broadcast %1114 : vector<1x256xf32> to vector<8x256xf32>
    %1116 = arith.mulf %1113, %1115 : vector<8x256xf32>
    %c1_718 = arith.constant 1 : index
    %c0_719 = arith.constant 0 : index
    %c0_720 = arith.constant 0 : index
    %1117 = vector.load %arg14[%c1_718, %c0_719, %c0_720] : memref<3x8x9xf32, #tpu.memory_space<vmem>>, vector<1x8x1xf32>
    %1118 = vector.shape_cast %1117 : vector<1x8x1xf32> to vector<8x1xf32>
    %1119 = vector.broadcast %1118 : vector<8x1xf32> to vector<8x256xf32>
    %1120 = arith.mulf %1116, %1119 : vector<8x256xf32>
    %c16_i32_721 = arith.constant 16 : i32
    %1121 = tpu.dynamic_rotate %1112 by %c16_i32_721 dim 1 : vector<8x256xf32>, i32 -> vector<8x256xf32>
    %c7_722 = arith.constant 7 : index
    %c0_723 = arith.constant 0 : index
    %1122 = vector.load %arg3[%c7_722, %c0_723] : memref<26x256xf32, #tpu.memory_space<vmem>>, vector<1x256xf32>
    %1123 = vector.broadcast %1122 : vector<1x256xf32> to vector<8x256xf32>
    %1124 = arith.mulf %1121, %1123 : vector<8x256xf32>
    %c1_724 = arith.constant 1 : index
    %c0_725 = arith.constant 0 : index
    %c1_726 = arith.constant 1 : index
    %1125 = vector.load %arg14[%c1_724, %c0_725, %c1_726] : memref<3x8x9xf32, #tpu.memory_space<vmem>>, vector<1x8x1xf32>
    %1126 = vector.shape_cast %1125 : vector<1x8x1xf32> to vector<8x1xf32>
    %1127 = vector.broadcast %1126 : vector<8x1xf32> to vector<8x256xf32>
    %1128 = arith.mulf %1124, %1127 : vector<8x256xf32>
    %1129 = arith.addf %1120, %1128 : vector<8x256xf32>
    %c15_i32_727 = arith.constant 15 : i32
    %1130 = tpu.dynamic_rotate %1112 by %c15_i32_727 dim 1 : vector<8x256xf32>, i32 -> vector<8x256xf32>
    %c8_728 = arith.constant 8 : index
    %c0_729 = arith.constant 0 : index
    %1131 = vector.load %arg3[%c8_728, %c0_729] : memref<26x256xf32, #tpu.memory_space<vmem>>, vector<1x256xf32>
    %1132 = vector.broadcast %1131 : vector<1x256xf32> to vector<8x256xf32>
    %1133 = arith.mulf %1130, %1132 : vector<8x256xf32>
    %c1_730 = arith.constant 1 : index
    %c0_731 = arith.constant 0 : index
    %c2_732 = arith.constant 2 : index
    %1134 = vector.load %arg14[%c1_730, %c0_731, %c2_732] : memref<3x8x9xf32, #tpu.memory_space<vmem>>, vector<1x8x1xf32>
    %1135 = vector.shape_cast %1134 : vector<1x8x1xf32> to vector<8x1xf32>
    %1136 = vector.broadcast %1135 : vector<8x1xf32> to vector<8x256xf32>
    %1137 = arith.mulf %1133, %1136 : vector<8x256xf32>
    %1138 = arith.addf %1129, %1137 : vector<8x256xf32>
    %c1_i32_733 = arith.constant 1 : i32
    %1139 = tpu.dynamic_rotate %1112 by %c1_i32_733 dim 1 : vector<8x256xf32>, i32 -> vector<8x256xf32>
    %c11_734 = arith.constant 11 : index
    %c0_735 = arith.constant 0 : index
    %1140 = vector.load %arg3[%c11_734, %c0_735] : memref<26x256xf32, #tpu.memory_space<vmem>>, vector<1x256xf32>
    %1141 = vector.broadcast %1140 : vector<1x256xf32> to vector<8x256xf32>
    %1142 = arith.mulf %1139, %1141 : vector<8x256xf32>
    %c1_736 = arith.constant 1 : index
    %c0_737 = arith.constant 0 : index
    %c3_738 = arith.constant 3 : index
    %1143 = vector.load %arg14[%c1_736, %c0_737, %c3_738] : memref<3x8x9xf32, #tpu.memory_space<vmem>>, vector<1x8x1xf32>
    %1144 = vector.shape_cast %1143 : vector<1x8x1xf32> to vector<8x1xf32>
    %1145 = vector.broadcast %1144 : vector<8x1xf32> to vector<8x256xf32>
    %1146 = arith.mulf %1142, %1145 : vector<8x256xf32>
    %1147 = arith.addf %1138, %1146 : vector<8x256xf32>
    %c1_739 = arith.constant 1 : index
    %c0_740 = arith.constant 0 : index
    %c4_741 = arith.constant 4 : index
    %1148 = vector.load %arg14[%c1_739, %c0_740, %c4_741] : memref<3x8x9xf32, #tpu.memory_space<vmem>>, vector<1x8x1xf32>
    %1149 = vector.shape_cast %1148 : vector<1x8x1xf32> to vector<8x1xf32>
    %1150 = vector.broadcast %1149 : vector<8x1xf32> to vector<8x256xf32>
    %1151 = arith.mulf %1112, %1150 : vector<8x256xf32>
    %1152 = arith.addf %1147, %1151 : vector<8x256xf32>
    %c255_i32_742 = arith.constant 255 : i32
    %1153 = tpu.dynamic_rotate %1112 by %c255_i32_742 dim 1 : vector<8x256xf32>, i32 -> vector<8x256xf32>
    %c13_743 = arith.constant 13 : index
    %c0_744 = arith.constant 0 : index
    %1154 = vector.load %arg3[%c13_743, %c0_744] : memref<26x256xf32, #tpu.memory_space<vmem>>, vector<1x256xf32>
    %1155 = vector.broadcast %1154 : vector<1x256xf32> to vector<8x256xf32>
    %1156 = arith.mulf %1153, %1155 : vector<8x256xf32>
    %c1_745 = arith.constant 1 : index
    %c0_746 = arith.constant 0 : index
    %c5_747 = arith.constant 5 : index
    %1157 = vector.load %arg14[%c1_745, %c0_746, %c5_747] : memref<3x8x9xf32, #tpu.memory_space<vmem>>, vector<1x8x1xf32>
    %1158 = vector.shape_cast %1157 : vector<1x8x1xf32> to vector<8x1xf32>
    %1159 = vector.broadcast %1158 : vector<8x1xf32> to vector<8x256xf32>
    %1160 = arith.mulf %1156, %1159 : vector<8x256xf32>
    %1161 = arith.addf %1152, %1160 : vector<8x256xf32>
    %c241_i32_748 = arith.constant 241 : i32
    %1162 = tpu.dynamic_rotate %1112 by %c241_i32_748 dim 1 : vector<8x256xf32>, i32 -> vector<8x256xf32>
    %c16_749 = arith.constant 16 : index
    %c0_750 = arith.constant 0 : index
    %1163 = vector.load %arg3[%c16_749, %c0_750] : memref<26x256xf32, #tpu.memory_space<vmem>>, vector<1x256xf32>
    %1164 = vector.broadcast %1163 : vector<1x256xf32> to vector<8x256xf32>
    %1165 = arith.mulf %1162, %1164 : vector<8x256xf32>
    %c1_751 = arith.constant 1 : index
    %c0_752 = arith.constant 0 : index
    %c6_753 = arith.constant 6 : index
    %1166 = vector.load %arg14[%c1_751, %c0_752, %c6_753] : memref<3x8x9xf32, #tpu.memory_space<vmem>>, vector<1x8x1xf32>
    %1167 = vector.shape_cast %1166 : vector<1x8x1xf32> to vector<8x1xf32>
    %1168 = vector.broadcast %1167 : vector<8x1xf32> to vector<8x256xf32>
    %1169 = arith.mulf %1165, %1168 : vector<8x256xf32>
    %1170 = arith.addf %1161, %1169 : vector<8x256xf32>
    %c240_i32_754 = arith.constant 240 : i32
    %1171 = tpu.dynamic_rotate %1112 by %c240_i32_754 dim 1 : vector<8x256xf32>, i32 -> vector<8x256xf32>
    %c17_755 = arith.constant 17 : index
    %c0_756 = arith.constant 0 : index
    %1172 = vector.load %arg3[%c17_755, %c0_756] : memref<26x256xf32, #tpu.memory_space<vmem>>, vector<1x256xf32>
    %1173 = vector.broadcast %1172 : vector<1x256xf32> to vector<8x256xf32>
    %1174 = arith.mulf %1171, %1173 : vector<8x256xf32>
    %c1_757 = arith.constant 1 : index
    %c0_758 = arith.constant 0 : index
    %c7_759 = arith.constant 7 : index
    %1175 = vector.load %arg14[%c1_757, %c0_758, %c7_759] : memref<3x8x9xf32, #tpu.memory_space<vmem>>, vector<1x8x1xf32>
    %1176 = vector.shape_cast %1175 : vector<1x8x1xf32> to vector<8x1xf32>
    %1177 = vector.broadcast %1176 : vector<8x1xf32> to vector<8x256xf32>
    %1178 = arith.mulf %1174, %1177 : vector<8x256xf32>
    %1179 = arith.addf %1170, %1178 : vector<8x256xf32>
    %c239_i32_760 = arith.constant 239 : i32
    %1180 = tpu.dynamic_rotate %1112 by %c239_i32_760 dim 1 : vector<8x256xf32>, i32 -> vector<8x256xf32>
    %c18_761 = arith.constant 18 : index
    %c0_762 = arith.constant 0 : index
    %1181 = vector.load %arg3[%c18_761, %c0_762] : memref<26x256xf32, #tpu.memory_space<vmem>>, vector<1x256xf32>
    %1182 = vector.broadcast %1181 : vector<1x256xf32> to vector<8x256xf32>
    %1183 = arith.mulf %1180, %1182 : vector<8x256xf32>
    %c1_763 = arith.constant 1 : index
    %c0_764 = arith.constant 0 : index
    %c8_765 = arith.constant 8 : index
    %1184 = vector.load %arg14[%c1_763, %c0_764, %c8_765] : memref<3x8x9xf32, #tpu.memory_space<vmem>>, vector<1x8x1xf32>
    %1185 = vector.shape_cast %1184 : vector<1x8x1xf32> to vector<8x1xf32>
    %1186 = vector.broadcast %1185 : vector<8x1xf32> to vector<8x256xf32>
    %1187 = arith.mulf %1183, %1186 : vector<8x256xf32>
    %1188 = arith.addf %1179, %1187 : vector<8x256xf32>
    %c1_766 = arith.constant 1 : index
    %c0_767 = arith.constant 0 : index
    %c0_768 = arith.constant 0 : index
    %1189 = vector.load %arg15[%c1_766, %c0_767, %c0_768] : memref<3x8x8xf32, #tpu.memory_space<vmem>>, vector<1x8x8xf32>
    %1190 = vector.shape_cast %1189 : vector<1x8x8xf32> to vector<8x8xf32>
    %cst_769 = arith.constant dense<0.000000e+00> : vector<8x256xf32>
    %1191 = tpu.matmul %1190, %1188, %cst_769 {dimension_numbers = #tpu.dot_dimension_numbers<[1], [0], [0], [1], [0, 0, 1, 1], [], []>} : vector<8x8xf32>, vector<8x256xf32>, vector<8x256xf32> -> vector<8x256xf32>
    %c1_770 = arith.constant 1 : index
    %c0_771 = arith.constant 0 : index
    %c0_772 = arith.constant 0 : index
    %1192 = vector.load %arg16[%c1_770, %c0_771, %c0_772] : memref<3x8x1xf32, #tpu.memory_space<vmem>>, vector<1x8x1xf32>
    %1193 = vector.shape_cast %1192 : vector<1x8x1xf32> to vector<8x1xf32>
    %1194 = vector.broadcast %1193 : vector<8x1xf32> to vector<8x256xf32>
    %1195 = arith.addf %1191, %1194 : vector<8x256xf32>
    %cst_773 = arith.constant 0.000000e+00 : f32
    %1196 = vector.broadcast %cst_773 : f32 to vector<8x256xf32>
    %1197 = arith.maximumf %1195, %1196 : vector<8x256xf32>
    %c17_i32_774 = arith.constant 17 : i32
    %1198 = tpu.dynamic_rotate %1197 by %c17_i32_774 dim 1 : vector<8x256xf32>, i32 -> vector<8x256xf32>
    %c6_775 = arith.constant 6 : index
    %c0_776 = arith.constant 0 : index
    %1199 = vector.load %arg3[%c6_775, %c0_776] : memref<26x256xf32, #tpu.memory_space<vmem>>, vector<1x256xf32>
    %1200 = vector.broadcast %1199 : vector<1x256xf32> to vector<8x256xf32>
    %1201 = arith.mulf %1198, %1200 : vector<8x256xf32>
    %c1_777 = arith.constant 1 : index
    %c0_778 = arith.constant 0 : index
    %c0_779 = arith.constant 0 : index
    %1202 = vector.load %arg17[%c1_777, %c0_778, %c0_779] : memref<3x8x9xf32, #tpu.memory_space<vmem>>, vector<1x8x1xf32>
    %1203 = vector.shape_cast %1202 : vector<1x8x1xf32> to vector<8x1xf32>
    %1204 = vector.broadcast %1203 : vector<8x1xf32> to vector<8x256xf32>
    %1205 = arith.mulf %1201, %1204 : vector<8x256xf32>
    %c16_i32_780 = arith.constant 16 : i32
    %1206 = tpu.dynamic_rotate %1197 by %c16_i32_780 dim 1 : vector<8x256xf32>, i32 -> vector<8x256xf32>
    %c7_781 = arith.constant 7 : index
    %c0_782 = arith.constant 0 : index
    %1207 = vector.load %arg3[%c7_781, %c0_782] : memref<26x256xf32, #tpu.memory_space<vmem>>, vector<1x256xf32>
    %1208 = vector.broadcast %1207 : vector<1x256xf32> to vector<8x256xf32>
    %1209 = arith.mulf %1206, %1208 : vector<8x256xf32>
    %c1_783 = arith.constant 1 : index
    %c0_784 = arith.constant 0 : index
    %c1_785 = arith.constant 1 : index
    %1210 = vector.load %arg17[%c1_783, %c0_784, %c1_785] : memref<3x8x9xf32, #tpu.memory_space<vmem>>, vector<1x8x1xf32>
    %1211 = vector.shape_cast %1210 : vector<1x8x1xf32> to vector<8x1xf32>
    %1212 = vector.broadcast %1211 : vector<8x1xf32> to vector<8x256xf32>
    %1213 = arith.mulf %1209, %1212 : vector<8x256xf32>
    %1214 = arith.addf %1205, %1213 : vector<8x256xf32>
    %c15_i32_786 = arith.constant 15 : i32
    %1215 = tpu.dynamic_rotate %1197 by %c15_i32_786 dim 1 : vector<8x256xf32>, i32 -> vector<8x256xf32>
    %c8_787 = arith.constant 8 : index
    %c0_788 = arith.constant 0 : index
    %1216 = vector.load %arg3[%c8_787, %c0_788] : memref<26x256xf32, #tpu.memory_space<vmem>>, vector<1x256xf32>
    %1217 = vector.broadcast %1216 : vector<1x256xf32> to vector<8x256xf32>
    %1218 = arith.mulf %1215, %1217 : vector<8x256xf32>
    %c1_789 = arith.constant 1 : index
    %c0_790 = arith.constant 0 : index
    %c2_791 = arith.constant 2 : index
    %1219 = vector.load %arg17[%c1_789, %c0_790, %c2_791] : memref<3x8x9xf32, #tpu.memory_space<vmem>>, vector<1x8x1xf32>
    %1220 = vector.shape_cast %1219 : vector<1x8x1xf32> to vector<8x1xf32>
    %1221 = vector.broadcast %1220 : vector<8x1xf32> to vector<8x256xf32>
    %1222 = arith.mulf %1218, %1221 : vector<8x256xf32>
    %1223 = arith.addf %1214, %1222 : vector<8x256xf32>
    %c1_i32_792 = arith.constant 1 : i32
    %1224 = tpu.dynamic_rotate %1197 by %c1_i32_792 dim 1 : vector<8x256xf32>, i32 -> vector<8x256xf32>
    %c11_793 = arith.constant 11 : index
    %c0_794 = arith.constant 0 : index
    %1225 = vector.load %arg3[%c11_793, %c0_794] : memref<26x256xf32, #tpu.memory_space<vmem>>, vector<1x256xf32>
    %1226 = vector.broadcast %1225 : vector<1x256xf32> to vector<8x256xf32>
    %1227 = arith.mulf %1224, %1226 : vector<8x256xf32>
    %c1_795 = arith.constant 1 : index
    %c0_796 = arith.constant 0 : index
    %c3_797 = arith.constant 3 : index
    %1228 = vector.load %arg17[%c1_795, %c0_796, %c3_797] : memref<3x8x9xf32, #tpu.memory_space<vmem>>, vector<1x8x1xf32>
    %1229 = vector.shape_cast %1228 : vector<1x8x1xf32> to vector<8x1xf32>
    %1230 = vector.broadcast %1229 : vector<8x1xf32> to vector<8x256xf32>
    %1231 = arith.mulf %1227, %1230 : vector<8x256xf32>
    %1232 = arith.addf %1223, %1231 : vector<8x256xf32>
    %c1_798 = arith.constant 1 : index
    %c0_799 = arith.constant 0 : index
    %c4_800 = arith.constant 4 : index
    %1233 = vector.load %arg17[%c1_798, %c0_799, %c4_800] : memref<3x8x9xf32, #tpu.memory_space<vmem>>, vector<1x8x1xf32>
    %1234 = vector.shape_cast %1233 : vector<1x8x1xf32> to vector<8x1xf32>
    %1235 = vector.broadcast %1234 : vector<8x1xf32> to vector<8x256xf32>
    %1236 = arith.mulf %1197, %1235 : vector<8x256xf32>
    %1237 = arith.addf %1232, %1236 : vector<8x256xf32>
    %c255_i32_801 = arith.constant 255 : i32
    %1238 = tpu.dynamic_rotate %1197 by %c255_i32_801 dim 1 : vector<8x256xf32>, i32 -> vector<8x256xf32>
    %c13_802 = arith.constant 13 : index
    %c0_803 = arith.constant 0 : index
    %1239 = vector.load %arg3[%c13_802, %c0_803] : memref<26x256xf32, #tpu.memory_space<vmem>>, vector<1x256xf32>
    %1240 = vector.broadcast %1239 : vector<1x256xf32> to vector<8x256xf32>
    %1241 = arith.mulf %1238, %1240 : vector<8x256xf32>
    %c1_804 = arith.constant 1 : index
    %c0_805 = arith.constant 0 : index
    %c5_806 = arith.constant 5 : index
    %1242 = vector.load %arg17[%c1_804, %c0_805, %c5_806] : memref<3x8x9xf32, #tpu.memory_space<vmem>>, vector<1x8x1xf32>
    %1243 = vector.shape_cast %1242 : vector<1x8x1xf32> to vector<8x1xf32>
    %1244 = vector.broadcast %1243 : vector<8x1xf32> to vector<8x256xf32>
    %1245 = arith.mulf %1241, %1244 : vector<8x256xf32>
    %1246 = arith.addf %1237, %1245 : vector<8x256xf32>
    %c241_i32_807 = arith.constant 241 : i32
    %1247 = tpu.dynamic_rotate %1197 by %c241_i32_807 dim 1 : vector<8x256xf32>, i32 -> vector<8x256xf32>
    %c16_808 = arith.constant 16 : index
    %c0_809 = arith.constant 0 : index
    %1248 = vector.load %arg3[%c16_808, %c0_809] : memref<26x256xf32, #tpu.memory_space<vmem>>, vector<1x256xf32>
    %1249 = vector.broadcast %1248 : vector<1x256xf32> to vector<8x256xf32>
    %1250 = arith.mulf %1247, %1249 : vector<8x256xf32>
    %c1_810 = arith.constant 1 : index
    %c0_811 = arith.constant 0 : index
    %c6_812 = arith.constant 6 : index
    %1251 = vector.load %arg17[%c1_810, %c0_811, %c6_812] : memref<3x8x9xf32, #tpu.memory_space<vmem>>, vector<1x8x1xf32>
    %1252 = vector.shape_cast %1251 : vector<1x8x1xf32> to vector<8x1xf32>
    %1253 = vector.broadcast %1252 : vector<8x1xf32> to vector<8x256xf32>
    %1254 = arith.mulf %1250, %1253 : vector<8x256xf32>
    %1255 = arith.addf %1246, %1254 : vector<8x256xf32>
    %c240_i32_813 = arith.constant 240 : i32
    %1256 = tpu.dynamic_rotate %1197 by %c240_i32_813 dim 1 : vector<8x256xf32>, i32 -> vector<8x256xf32>
    %c17_814 = arith.constant 17 : index
    %c0_815 = arith.constant 0 : index
    %1257 = vector.load %arg3[%c17_814, %c0_815] : memref<26x256xf32, #tpu.memory_space<vmem>>, vector<1x256xf32>
    %1258 = vector.broadcast %1257 : vector<1x256xf32> to vector<8x256xf32>
    %1259 = arith.mulf %1256, %1258 : vector<8x256xf32>
    %c1_816 = arith.constant 1 : index
    %c0_817 = arith.constant 0 : index
    %c7_818 = arith.constant 7 : index
    %1260 = vector.load %arg17[%c1_816, %c0_817, %c7_818] : memref<3x8x9xf32, #tpu.memory_space<vmem>>, vector<1x8x1xf32>
    %1261 = vector.shape_cast %1260 : vector<1x8x1xf32> to vector<8x1xf32>
    %1262 = vector.broadcast %1261 : vector<8x1xf32> to vector<8x256xf32>
    %1263 = arith.mulf %1259, %1262 : vector<8x256xf32>
    %1264 = arith.addf %1255, %1263 : vector<8x256xf32>
    %c239_i32_819 = arith.constant 239 : i32
    %1265 = tpu.dynamic_rotate %1197 by %c239_i32_819 dim 1 : vector<8x256xf32>, i32 -> vector<8x256xf32>
    %c18_820 = arith.constant 18 : index
    %c0_821 = arith.constant 0 : index
    %1266 = vector.load %arg3[%c18_820, %c0_821] : memref<26x256xf32, #tpu.memory_space<vmem>>, vector<1x256xf32>
    %1267 = vector.broadcast %1266 : vector<1x256xf32> to vector<8x256xf32>
    %1268 = arith.mulf %1265, %1267 : vector<8x256xf32>
    %c1_822 = arith.constant 1 : index
    %c0_823 = arith.constant 0 : index
    %c8_824 = arith.constant 8 : index
    %1269 = vector.load %arg17[%c1_822, %c0_823, %c8_824] : memref<3x8x9xf32, #tpu.memory_space<vmem>>, vector<1x8x1xf32>
    %1270 = vector.shape_cast %1269 : vector<1x8x1xf32> to vector<8x1xf32>
    %1271 = vector.broadcast %1270 : vector<8x1xf32> to vector<8x256xf32>
    %1272 = arith.mulf %1268, %1271 : vector<8x256xf32>
    %1273 = arith.addf %1264, %1272 : vector<8x256xf32>
    %c1_825 = arith.constant 1 : index
    %c0_826 = arith.constant 0 : index
    %c0_827 = arith.constant 0 : index
    %1274 = vector.load %arg18[%c1_825, %c0_826, %c0_827] : memref<3x8x8xf32, #tpu.memory_space<vmem>>, vector<1x8x8xf32>
    %1275 = vector.shape_cast %1274 : vector<1x8x8xf32> to vector<8x8xf32>
    %cst_828 = arith.constant dense<0.000000e+00> : vector<8x256xf32>
    %1276 = tpu.matmul %1275, %1273, %cst_828 {dimension_numbers = #tpu.dot_dimension_numbers<[1], [0], [0], [1], [0, 0, 1, 1], [], []>} : vector<8x8xf32>, vector<8x256xf32>, vector<8x256xf32> -> vector<8x256xf32>
    %c1_829 = arith.constant 1 : index
    %c0_830 = arith.constant 0 : index
    %c0_831 = arith.constant 0 : index
    %1277 = vector.load %arg19[%c1_829, %c0_830, %c0_831] : memref<3x8x1xf32, #tpu.memory_space<vmem>>, vector<1x8x1xf32>
    %1278 = vector.shape_cast %1277 : vector<1x8x1xf32> to vector<8x1xf32>
    %1279 = vector.broadcast %1278 : vector<8x1xf32> to vector<8x256xf32>
    %1280 = arith.addf %1276, %1279 : vector<8x256xf32>
    %1281 = arith.addf %1110, %1280 : vector<8x256xf32>
    %c0_832 = arith.constant 0 : index
    %c2_833 = arith.constant 2 : index
    %c0_834 = arith.constant 0 : index
    %c0_835 = arith.constant 0 : index
    %1282 = vector.load %arg20[%c0_832, %c2_833, %c0_834, %c0_835] : memref<1x6x8x256xf32, #tpu.memory_space<vmem>>, vector<1x1x8x256xf32>
    %1283 = vector.shape_cast %1282 : vector<1x1x8x256xf32> to vector<8x256xf32>
    %1284 = vector.shape_cast %1281 : vector<8x256xf32> to vector<1x1x8x256xf32>
    tpu.vector_store %arg20[%c0_832, %c2_833, %c0_834, %c0_835], %1284 {strides = array<i32>} : memref<1x6x8x256xf32, #tpu.memory_space<vmem>>, vector<1x1x8x256xf32>,
    %c17_i32_836 = arith.constant 17 : i32
    %1285 = tpu.dynamic_rotate %8 by %c17_i32_836 dim 1 : vector<8x256xf32>, i32 -> vector<8x256xf32>
    %c6_837 = arith.constant 6 : index
    %c0_838 = arith.constant 0 : index
    %1286 = vector.load %arg3[%c6_837, %c0_838] : memref<26x256xf32, #tpu.memory_space<vmem>>, vector<1x256xf32>
    %1287 = vector.broadcast %1286 : vector<1x256xf32> to vector<8x256xf32>
    %1288 = arith.mulf %1285, %1287 : vector<8x256xf32>
    %c16_i32_839 = arith.constant 16 : i32
    %1289 = tpu.dynamic_rotate %8 by %c16_i32_839 dim 1 : vector<8x256xf32>, i32 -> vector<8x256xf32>
    %c7_840 = arith.constant 7 : index
    %c0_841 = arith.constant 0 : index
    %1290 = vector.load %arg3[%c7_840, %c0_841] : memref<26x256xf32, #tpu.memory_space<vmem>>, vector<1x256xf32>
    %1291 = vector.broadcast %1290 : vector<1x256xf32> to vector<8x256xf32>
    %1292 = arith.mulf %1289, %1291 : vector<8x256xf32>
    %1293 = arith.addf %1288, %1292 : vector<8x256xf32>
    %c15_i32_842 = arith.constant 15 : i32
    %1294 = tpu.dynamic_rotate %8 by %c15_i32_842 dim 1 : vector<8x256xf32>, i32 -> vector<8x256xf32>
    %c8_843 = arith.constant 8 : index
    %c0_844 = arith.constant 0 : index
    %1295 = vector.load %arg3[%c8_843, %c0_844] : memref<26x256xf32, #tpu.memory_space<vmem>>, vector<1x256xf32>
    %1296 = vector.broadcast %1295 : vector<1x256xf32> to vector<8x256xf32>
    %1297 = arith.mulf %1294, %1296 : vector<8x256xf32>
    %1298 = arith.addf %1293, %1297 : vector<8x256xf32>
    %c1_i32_845 = arith.constant 1 : i32
    %1299 = tpu.dynamic_rotate %8 by %c1_i32_845 dim 1 : vector<8x256xf32>, i32 -> vector<8x256xf32>
    %c11_846 = arith.constant 11 : index
    %c0_847 = arith.constant 0 : index
    %1300 = vector.load %arg3[%c11_846, %c0_847] : memref<26x256xf32, #tpu.memory_space<vmem>>, vector<1x256xf32>
    %1301 = vector.broadcast %1300 : vector<1x256xf32> to vector<8x256xf32>
    %1302 = arith.mulf %1299, %1301 : vector<8x256xf32>
    %1303 = arith.addf %1298, %1302 : vector<8x256xf32>
    %1304 = arith.addf %1303, %8 : vector<8x256xf32>
    %c255_i32_848 = arith.constant 255 : i32
    %1305 = tpu.dynamic_rotate %8 by %c255_i32_848 dim 1 : vector<8x256xf32>, i32 -> vector<8x256xf32>
    %c13_849 = arith.constant 13 : index
    %c0_850 = arith.constant 0 : index
    %1306 = vector.load %arg3[%c13_849, %c0_850] : memref<26x256xf32, #tpu.memory_space<vmem>>, vector<1x256xf32>
    %1307 = vector.broadcast %1306 : vector<1x256xf32> to vector<8x256xf32>
    %1308 = arith.mulf %1305, %1307 : vector<8x256xf32>
    %1309 = arith.addf %1304, %1308 : vector<8x256xf32>
    %c241_i32_851 = arith.constant 241 : i32
    %1310 = tpu.dynamic_rotate %8 by %c241_i32_851 dim 1 : vector<8x256xf32>, i32 -> vector<8x256xf32>
    %c16_852 = arith.constant 16 : index
    %c0_853 = arith.constant 0 : index
    %1311 = vector.load %arg3[%c16_852, %c0_853] : memref<26x256xf32, #tpu.memory_space<vmem>>, vector<1x256xf32>
    %1312 = vector.broadcast %1311 : vector<1x256xf32> to vector<8x256xf32>
    %1313 = arith.mulf %1310, %1312 : vector<8x256xf32>
    %1314 = arith.addf %1309, %1313 : vector<8x256xf32>
    %c240_i32_854 = arith.constant 240 : i32
    %1315 = tpu.dynamic_rotate %8 by %c240_i32_854 dim 1 : vector<8x256xf32>, i32 -> vector<8x256xf32>
    %c17_855 = arith.constant 17 : index
    %c0_856 = arith.constant 0 : index
    %1316 = vector.load %arg3[%c17_855, %c0_856] : memref<26x256xf32, #tpu.memory_space<vmem>>, vector<1x256xf32>
    %1317 = vector.broadcast %1316 : vector<1x256xf32> to vector<8x256xf32>
    %1318 = arith.mulf %1315, %1317 : vector<8x256xf32>
    %1319 = arith.addf %1314, %1318 : vector<8x256xf32>
    %c239_i32_857 = arith.constant 239 : i32
    %1320 = tpu.dynamic_rotate %8 by %c239_i32_857 dim 1 : vector<8x256xf32>, i32 -> vector<8x256xf32>
    %c18_858 = arith.constant 18 : index
    %c0_859 = arith.constant 0 : index
    %1321 = vector.load %arg3[%c18_858, %c0_859] : memref<26x256xf32, #tpu.memory_space<vmem>>, vector<1x256xf32>
    %1322 = vector.broadcast %1321 : vector<1x256xf32> to vector<8x256xf32>
    %1323 = arith.mulf %1320, %1322 : vector<8x256xf32>
    %1324 = arith.addf %1319, %1323 : vector<8x256xf32>
    %c25 = arith.constant 25 : index
    %c0_860 = arith.constant 0 : index
    %1325 = vector.load %arg3[%c25, %c0_860] : memref<26x256xf32, #tpu.memory_space<vmem>>, vector<1x256xf32>
    %1326 = vector.broadcast %1325 : vector<1x256xf32> to vector<8x256xf32>
    %1327 = arith.mulf %1324, %1326 : vector<8x256xf32>
    %1328 = arith.addf %1327, %17 : vector<8x256xf32>
    %c0_861 = arith.constant 0 : index
    %c3_862 = arith.constant 3 : index
    %c0_863 = arith.constant 0 : index
    %c0_864 = arith.constant 0 : index
    %1329 = vector.load %arg20[%c0_861, %c3_862, %c0_863, %c0_864] : memref<1x6x8x256xf32, #tpu.memory_space<vmem>>, vector<1x1x8x256xf32>
    %1330 = vector.shape_cast %1329 : vector<1x1x8x256xf32> to vector<8x256xf32>
    %1331 = vector.shape_cast %1328 : vector<8x256xf32> to vector<1x1x8x256xf32>
    tpu.vector_store %arg20[%c0_861, %c3_862, %c0_863, %c0_864], %1331 {strides = array<i32>} : memref<1x6x8x256xf32, #tpu.memory_space<vmem>>, vector<1x1x8x256xf32>,
    %c17_i32_865 = arith.constant 17 : i32
    %1332 = tpu.dynamic_rotate %17 by %c17_i32_865 dim 1 : vector<8x256xf32>, i32 -> vector<8x256xf32>
    %c6_866 = arith.constant 6 : index
    %c0_867 = arith.constant 0 : index
    %1333 = vector.load %arg3[%c6_866, %c0_867] : memref<26x256xf32, #tpu.memory_space<vmem>>, vector<1x256xf32>
    %1334 = vector.broadcast %1333 : vector<1x256xf32> to vector<8x256xf32>
    %1335 = arith.mulf %1332, %1334 : vector<8x256xf32>
    %c16_i32_868 = arith.constant 16 : i32
    %1336 = tpu.dynamic_rotate %17 by %c16_i32_868 dim 1 : vector<8x256xf32>, i32 -> vector<8x256xf32>
    %c7_869 = arith.constant 7 : index
    %c0_870 = arith.constant 0 : index
    %1337 = vector.load %arg3[%c7_869, %c0_870] : memref<26x256xf32, #tpu.memory_space<vmem>>, vector<1x256xf32>
    %1338 = vector.broadcast %1337 : vector<1x256xf32> to vector<8x256xf32>
    %1339 = arith.mulf %1336, %1338 : vector<8x256xf32>
    %1340 = arith.addf %1335, %1339 : vector<8x256xf32>
    %c15_i32_871 = arith.constant 15 : i32
    %1341 = tpu.dynamic_rotate %17 by %c15_i32_871 dim 1 : vector<8x256xf32>, i32 -> vector<8x256xf32>
    %c8_872 = arith.constant 8 : index
    %c0_873 = arith.constant 0 : index
    %1342 = vector.load %arg3[%c8_872, %c0_873] : memref<26x256xf32, #tpu.memory_space<vmem>>, vector<1x256xf32>
    %1343 = vector.broadcast %1342 : vector<1x256xf32> to vector<8x256xf32>
    %1344 = arith.mulf %1341, %1343 : vector<8x256xf32>
    %1345 = arith.addf %1340, %1344 : vector<8x256xf32>
    %c1_i32_874 = arith.constant 1 : i32
    %1346 = tpu.dynamic_rotate %17 by %c1_i32_874 dim 1 : vector<8x256xf32>, i32 -> vector<8x256xf32>
    %c11_875 = arith.constant 11 : index
    %c0_876 = arith.constant 0 : index
    %1347 = vector.load %arg3[%c11_875, %c0_876] : memref<26x256xf32, #tpu.memory_space<vmem>>, vector<1x256xf32>
    %1348 = vector.broadcast %1347 : vector<1x256xf32> to vector<8x256xf32>
    %1349 = arith.mulf %1346, %1348 : vector<8x256xf32>
    %1350 = arith.addf %1345, %1349 : vector<8x256xf32>
    %1351 = arith.addf %1350, %17 : vector<8x256xf32>
    %c255_i32_877 = arith.constant 255 : i32
    %1352 = tpu.dynamic_rotate %17 by %c255_i32_877 dim 1 : vector<8x256xf32>, i32 -> vector<8x256xf32>
    %c13_878 = arith.constant 13 : index
    %c0_879 = arith.constant 0 : index
    %1353 = vector.load %arg3[%c13_878, %c0_879] : memref<26x256xf32, #tpu.memory_space<vmem>>, vector<1x256xf32>
    %1354 = vector.broadcast %1353 : vector<1x256xf32> to vector<8x256xf32>
    %1355 = arith.mulf %1352, %1354 : vector<8x256xf32>
    %1356 = arith.addf %1351, %1355 : vector<8x256xf32>
    %c241_i32_880 = arith.constant 241 : i32
    %1357 = tpu.dynamic_rotate %17 by %c241_i32_880 dim 1 : vector<8x256xf32>, i32 -> vector<8x256xf32>
    %c16_881 = arith.constant 16 : index
    %c0_882 = arith.constant 0 : index
    %1358 = vector.load %arg3[%c16_881, %c0_882] : memref<26x256xf32, #tpu.memory_space<vmem>>, vector<1x256xf32>
    %1359 = vector.broadcast %1358 : vector<1x256xf32> to vector<8x256xf32>
    %1360 = arith.mulf %1357, %1359 : vector<8x256xf32>
    %1361 = arith.addf %1356, %1360 : vector<8x256xf32>
    %c240_i32_883 = arith.constant 240 : i32
    %1362 = tpu.dynamic_rotate %17 by %c240_i32_883 dim 1 : vector<8x256xf32>, i32 -> vector<8x256xf32>
    %c17_884 = arith.constant 17 : index
    %c0_885 = arith.constant 0 : index
    %1363 = vector.load %arg3[%c17_884, %c0_885] : memref<26x256xf32, #tpu.memory_space<vmem>>, vector<1x256xf32>
    %1364 = vector.broadcast %1363 : vector<1x256xf32> to vector<8x256xf32>
    %1365 = arith.mulf %1362, %1364 : vector<8x256xf32>
    %1366 = arith.addf %1361, %1365 : vector<8x256xf32>
    %c239_i32_886 = arith.constant 239 : i32
    %1367 = tpu.dynamic_rotate %17 by %c239_i32_886 dim 1 : vector<8x256xf32>, i32 -> vector<8x256xf32>
    %c18_887 = arith.constant 18 : index
    %c0_888 = arith.constant 0 : index
    %1368 = vector.load %arg3[%c18_887, %c0_888] : memref<26x256xf32, #tpu.memory_space<vmem>>, vector<1x256xf32>
    %1369 = vector.broadcast %1368 : vector<1x256xf32> to vector<8x256xf32>
    %1370 = arith.mulf %1367, %1369 : vector<8x256xf32>
    %1371 = arith.addf %1366, %1370 : vector<8x256xf32>
    %c25_889 = arith.constant 25 : index
    %c0_890 = arith.constant 0 : index
    %1372 = vector.load %arg3[%c25_889, %c0_890] : memref<26x256xf32, #tpu.memory_space<vmem>>, vector<1x256xf32>
    %1373 = vector.broadcast %1372 : vector<1x256xf32> to vector<8x256xf32>
    %1374 = arith.mulf %1371, %1373 : vector<8x256xf32>
    %1375 = arith.addf %1374, %1374 : vector<8x256xf32>
    %c0_891 = arith.constant 0 : index
    %c4_892 = arith.constant 4 : index
    %c0_893 = arith.constant 0 : index
    %c0_894 = arith.constant 0 : index
    %1376 = vector.load %arg20[%c0_891, %c4_892, %c0_893, %c0_894] : memref<1x6x8x256xf32, #tpu.memory_space<vmem>>, vector<1x1x8x256xf32>
    %1377 = vector.shape_cast %1376 : vector<1x1x8x256xf32> to vector<8x256xf32>
    %1378 = vector.shape_cast %1375 : vector<8x256xf32> to vector<1x1x8x256xf32>
    tpu.vector_store %arg20[%c0_891, %c4_892, %c0_893, %c0_894], %1378 {strides = array<i32>} : memref<1x6x8x256xf32, #tpu.memory_space<vmem>>, vector<1x1x8x256xf32>,
    %cst_895 = arith.constant 0.000000e+00 : f32
    %1379 = vector.broadcast %cst_895 : f32 to vector<8x256xf32>
    %1380 = arith.maximumf %8, %1379 : vector<8x256xf32>
    %c17_i32_896 = arith.constant 17 : i32
    %1381 = tpu.dynamic_rotate %1380 by %c17_i32_896 dim 1 : vector<8x256xf32>, i32 -> vector<8x256xf32>
    %c6_897 = arith.constant 6 : index
    %c0_898 = arith.constant 0 : index
    %1382 = vector.load %arg3[%c6_897, %c0_898] : memref<26x256xf32, #tpu.memory_space<vmem>>, vector<1x256xf32>
    %1383 = vector.broadcast %1382 : vector<1x256xf32> to vector<8x256xf32>
    %1384 = arith.mulf %1381, %1383 : vector<8x256xf32>
    %c2_899 = arith.constant 2 : index
    %c0_900 = arith.constant 0 : index
    %c0_901 = arith.constant 0 : index
    %1385 = vector.load %arg14[%c2_899, %c0_900, %c0_901] : memref<3x8x9xf32, #tpu.memory_space<vmem>>, vector<1x8x1xf32>
    %1386 = vector.shape_cast %1385 : vector<1x8x1xf32> to vector<8x1xf32>
    %1387 = vector.broadcast %1386 : vector<8x1xf32> to vector<8x256xf32>
    %1388 = arith.mulf %1384, %1387 : vector<8x256xf32>
    %c16_i32_902 = arith.constant 16 : i32
    %1389 = tpu.dynamic_rotate %1380 by %c16_i32_902 dim 1 : vector<8x256xf32>, i32 -> vector<8x256xf32>
    %c7_903 = arith.constant 7 : index
    %c0_904 = arith.constant 0 : index
    %1390 = vector.load %arg3[%c7_903, %c0_904] : memref<26x256xf32, #tpu.memory_space<vmem>>, vector<1x256xf32>
    %1391 = vector.broadcast %1390 : vector<1x256xf32> to vector<8x256xf32>
    %1392 = arith.mulf %1389, %1391 : vector<8x256xf32>
    %c2_905 = arith.constant 2 : index
    %c0_906 = arith.constant 0 : index
    %c1_907 = arith.constant 1 : index
    %1393 = vector.load %arg14[%c2_905, %c0_906, %c1_907] : memref<3x8x9xf32, #tpu.memory_space<vmem>>, vector<1x8x1xf32>
    %1394 = vector.shape_cast %1393 : vector<1x8x1xf32> to vector<8x1xf32>
    %1395 = vector.broadcast %1394 : vector<8x1xf32> to vector<8x256xf32>
    %1396 = arith.mulf %1392, %1395 : vector<8x256xf32>
    %1397 = arith.addf %1388, %1396 : vector<8x256xf32>
    %c15_i32_908 = arith.constant 15 : i32
    %1398 = tpu.dynamic_rotate %1380 by %c15_i32_908 dim 1 : vector<8x256xf32>, i32 -> vector<8x256xf32>
    %c8_909 = arith.constant 8 : index
    %c0_910 = arith.constant 0 : index
    %1399 = vector.load %arg3[%c8_909, %c0_910] : memref<26x256xf32, #tpu.memory_space<vmem>>, vector<1x256xf32>
    %1400 = vector.broadcast %1399 : vector<1x256xf32> to vector<8x256xf32>
    %1401 = arith.mulf %1398, %1400 : vector<8x256xf32>
    %c2_911 = arith.constant 2 : index
    %c0_912 = arith.constant 0 : index
    %c2_913 = arith.constant 2 : index
    %1402 = vector.load %arg14[%c2_911, %c0_912, %c2_913] : memref<3x8x9xf32, #tpu.memory_space<vmem>>, vector<1x8x1xf32>
    %1403 = vector.shape_cast %1402 : vector<1x8x1xf32> to vector<8x1xf32>
    %1404 = vector.broadcast %1403 : vector<8x1xf32> to vector<8x256xf32>
    %1405 = arith.mulf %1401, %1404 : vector<8x256xf32>
    %1406 = arith.addf %1397, %1405 : vector<8x256xf32>
    %c1_i32_914 = arith.constant 1 : i32
    %1407 = tpu.dynamic_rotate %1380 by %c1_i32_914 dim 1 : vector<8x256xf32>, i32 -> vector<8x256xf32>
    %c11_915 = arith.constant 11 : index
    %c0_916 = arith.constant 0 : index
    %1408 = vector.load %arg3[%c11_915, %c0_916] : memref<26x256xf32, #tpu.memory_space<vmem>>, vector<1x256xf32>
    %1409 = vector.broadcast %1408 : vector<1x256xf32> to vector<8x256xf32>
    %1410 = arith.mulf %1407, %1409 : vector<8x256xf32>
    %c2_917 = arith.constant 2 : index
    %c0_918 = arith.constant 0 : index
    %c3_919 = arith.constant 3 : index
    %1411 = vector.load %arg14[%c2_917, %c0_918, %c3_919] : memref<3x8x9xf32, #tpu.memory_space<vmem>>, vector<1x8x1xf32>
    %1412 = vector.shape_cast %1411 : vector<1x8x1xf32> to vector<8x1xf32>
    %1413 = vector.broadcast %1412 : vector<8x1xf32> to vector<8x256xf32>
    %1414 = arith.mulf %1410, %1413 : vector<8x256xf32>
    %1415 = arith.addf %1406, %1414 : vector<8x256xf32>
    %c2_920 = arith.constant 2 : index
    %c0_921 = arith.constant 0 : index
    %c4_922 = arith.constant 4 : index
    %1416 = vector.load %arg14[%c2_920, %c0_921, %c4_922] : memref<3x8x9xf32, #tpu.memory_space<vmem>>, vector<1x8x1xf32>
    %1417 = vector.shape_cast %1416 : vector<1x8x1xf32> to vector<8x1xf32>
    %1418 = vector.broadcast %1417 : vector<8x1xf32> to vector<8x256xf32>
    %1419 = arith.mulf %1380, %1418 : vector<8x256xf32>
    %1420 = arith.addf %1415, %1419 : vector<8x256xf32>
    %c255_i32_923 = arith.constant 255 : i32
    %1421 = tpu.dynamic_rotate %1380 by %c255_i32_923 dim 1 : vector<8x256xf32>, i32 -> vector<8x256xf32>
    %c13_924 = arith.constant 13 : index
    %c0_925 = arith.constant 0 : index
    %1422 = vector.load %arg3[%c13_924, %c0_925] : memref<26x256xf32, #tpu.memory_space<vmem>>, vector<1x256xf32>
    %1423 = vector.broadcast %1422 : vector<1x256xf32> to vector<8x256xf32>
    %1424 = arith.mulf %1421, %1423 : vector<8x256xf32>
    %c2_926 = arith.constant 2 : index
    %c0_927 = arith.constant 0 : index
    %c5_928 = arith.constant 5 : index
    %1425 = vector.load %arg14[%c2_926, %c0_927, %c5_928] : memref<3x8x9xf32, #tpu.memory_space<vmem>>, vector<1x8x1xf32>
    %1426 = vector.shape_cast %1425 : vector<1x8x1xf32> to vector<8x1xf32>
    %1427 = vector.broadcast %1426 : vector<8x1xf32> to vector<8x256xf32>
    %1428 = arith.mulf %1424, %1427 : vector<8x256xf32>
    %1429 = arith.addf %1420, %1428 : vector<8x256xf32>
    %c241_i32_929 = arith.constant 241 : i32
    %1430 = tpu.dynamic_rotate %1380 by %c241_i32_929 dim 1 : vector<8x256xf32>, i32 -> vector<8x256xf32>
    %c16_930 = arith.constant 16 : index
    %c0_931 = arith.constant 0 : index
    %1431 = vector.load %arg3[%c16_930, %c0_931] : memref<26x256xf32, #tpu.memory_space<vmem>>, vector<1x256xf32>
    %1432 = vector.broadcast %1431 : vector<1x256xf32> to vector<8x256xf32>
    %1433 = arith.mulf %1430, %1432 : vector<8x256xf32>
    %c2_932 = arith.constant 2 : index
    %c0_933 = arith.constant 0 : index
    %c6_934 = arith.constant 6 : index
    %1434 = vector.load %arg14[%c2_932, %c0_933, %c6_934] : memref<3x8x9xf32, #tpu.memory_space<vmem>>, vector<1x8x1xf32>
    %1435 = vector.shape_cast %1434 : vector<1x8x1xf32> to vector<8x1xf32>
    %1436 = vector.broadcast %1435 : vector<8x1xf32> to vector<8x256xf32>
    %1437 = arith.mulf %1433, %1436 : vector<8x256xf32>
    %1438 = arith.addf %1429, %1437 : vector<8x256xf32>
    %c240_i32_935 = arith.constant 240 : i32
    %1439 = tpu.dynamic_rotate %1380 by %c240_i32_935 dim 1 : vector<8x256xf32>, i32 -> vector<8x256xf32>
    %c17_936 = arith.constant 17 : index
    %c0_937 = arith.constant 0 : index
    %1440 = vector.load %arg3[%c17_936, %c0_937] : memref<26x256xf32, #tpu.memory_space<vmem>>, vector<1x256xf32>
    %1441 = vector.broadcast %1440 : vector<1x256xf32> to vector<8x256xf32>
    %1442 = arith.mulf %1439, %1441 : vector<8x256xf32>
    %c2_938 = arith.constant 2 : index
    %c0_939 = arith.constant 0 : index
    %c7_940 = arith.constant 7 : index
    %1443 = vector.load %arg14[%c2_938, %c0_939, %c7_940] : memref<3x8x9xf32, #tpu.memory_space<vmem>>, vector<1x8x1xf32>
    %1444 = vector.shape_cast %1443 : vector<1x8x1xf32> to vector<8x1xf32>
    %1445 = vector.broadcast %1444 : vector<8x1xf32> to vector<8x256xf32>
    %1446 = arith.mulf %1442, %1445 : vector<8x256xf32>
    %1447 = arith.addf %1438, %1446 : vector<8x256xf32>
    %c239_i32_941 = arith.constant 239 : i32
    %1448 = tpu.dynamic_rotate %1380 by %c239_i32_941 dim 1 : vector<8x256xf32>, i32 -> vector<8x256xf32>
    %c18_942 = arith.constant 18 : index
    %c0_943 = arith.constant 0 : index
    %1449 = vector.load %arg3[%c18_942, %c0_943] : memref<26x256xf32, #tpu.memory_space<vmem>>, vector<1x256xf32>
    %1450 = vector.broadcast %1449 : vector<1x256xf32> to vector<8x256xf32>
    %1451 = arith.mulf %1448, %1450 : vector<8x256xf32>
    %c2_944 = arith.constant 2 : index
    %c0_945 = arith.constant 0 : index
    %c8_946 = arith.constant 8 : index
    %1452 = vector.load %arg14[%c2_944, %c0_945, %c8_946] : memref<3x8x9xf32, #tpu.memory_space<vmem>>, vector<1x8x1xf32>
    %1453 = vector.shape_cast %1452 : vector<1x8x1xf32> to vector<8x1xf32>
    %1454 = vector.broadcast %1453 : vector<8x1xf32> to vector<8x256xf32>
    %1455 = arith.mulf %1451, %1454 : vector<8x256xf32>
    %1456 = arith.addf %1447, %1455 : vector<8x256xf32>
    %c2_947 = arith.constant 2 : index
    %c0_948 = arith.constant 0 : index
    %c0_949 = arith.constant 0 : index
    %1457 = vector.load %arg15[%c2_947, %c0_948, %c0_949] : memref<3x8x8xf32, #tpu.memory_space<vmem>>, vector<1x8x8xf32>
    %1458 = vector.shape_cast %1457 : vector<1x8x8xf32> to vector<8x8xf32>
    %cst_950 = arith.constant dense<0.000000e+00> : vector<8x256xf32>
    %1459 = tpu.matmul %1458, %1456, %cst_950 {dimension_numbers = #tpu.dot_dimension_numbers<[1], [0], [0], [1], [0, 0, 1, 1], [], []>} : vector<8x8xf32>, vector<8x256xf32>, vector<8x256xf32> -> vector<8x256xf32>
    %c2_951 = arith.constant 2 : index
    %c0_952 = arith.constant 0 : index
    %c0_953 = arith.constant 0 : index
    %1460 = vector.load %arg16[%c2_951, %c0_952, %c0_953] : memref<3x8x1xf32, #tpu.memory_space<vmem>>, vector<1x8x1xf32>
    %1461 = vector.shape_cast %1460 : vector<1x8x1xf32> to vector<8x1xf32>
    %1462 = vector.broadcast %1461 : vector<8x1xf32> to vector<8x256xf32>
    %1463 = arith.addf %1459, %1462 : vector<8x256xf32>
    %cst_954 = arith.constant 0.000000e+00 : f32
    %1464 = vector.broadcast %cst_954 : f32 to vector<8x256xf32>
    %1465 = arith.maximumf %1463, %1464 : vector<8x256xf32>
    %c17_i32_955 = arith.constant 17 : i32
    %1466 = tpu.dynamic_rotate %1465 by %c17_i32_955 dim 1 : vector<8x256xf32>, i32 -> vector<8x256xf32>
    %c6_956 = arith.constant 6 : index
    %c0_957 = arith.constant 0 : index
    %1467 = vector.load %arg3[%c6_956, %c0_957] : memref<26x256xf32, #tpu.memory_space<vmem>>, vector<1x256xf32>
    %1468 = vector.broadcast %1467 : vector<1x256xf32> to vector<8x256xf32>
    %1469 = arith.mulf %1466, %1468 : vector<8x256xf32>
    %c2_958 = arith.constant 2 : index
    %c0_959 = arith.constant 0 : index
    %c0_960 = arith.constant 0 : index
    %1470 = vector.load %arg17[%c2_958, %c0_959, %c0_960] : memref<3x8x9xf32, #tpu.memory_space<vmem>>, vector<1x8x1xf32>
    %1471 = vector.shape_cast %1470 : vector<1x8x1xf32> to vector<8x1xf32>
    %1472 = vector.broadcast %1471 : vector<8x1xf32> to vector<8x256xf32>
    %1473 = arith.mulf %1469, %1472 : vector<8x256xf32>
    %c16_i32_961 = arith.constant 16 : i32
    %1474 = tpu.dynamic_rotate %1465 by %c16_i32_961 dim 1 : vector<8x256xf32>, i32 -> vector<8x256xf32>
    %c7_962 = arith.constant 7 : index
    %c0_963 = arith.constant 0 : index
    %1475 = vector.load %arg3[%c7_962, %c0_963] : memref<26x256xf32, #tpu.memory_space<vmem>>, vector<1x256xf32>
    %1476 = vector.broadcast %1475 : vector<1x256xf32> to vector<8x256xf32>
    %1477 = arith.mulf %1474, %1476 : vector<8x256xf32>
    %c2_964 = arith.constant 2 : index
    %c0_965 = arith.constant 0 : index
    %c1_966 = arith.constant 1 : index
    %1478 = vector.load %arg17[%c2_964, %c0_965, %c1_966] : memref<3x8x9xf32, #tpu.memory_space<vmem>>, vector<1x8x1xf32>
    %1479 = vector.shape_cast %1478 : vector<1x8x1xf32> to vector<8x1xf32>
    %1480 = vector.broadcast %1479 : vector<8x1xf32> to vector<8x256xf32>
    %1481 = arith.mulf %1477, %1480 : vector<8x256xf32>
    %1482 = arith.addf %1473, %1481 : vector<8x256xf32>
    %c15_i32_967 = arith.constant 15 : i32
    %1483 = tpu.dynamic_rotate %1465 by %c15_i32_967 dim 1 : vector<8x256xf32>, i32 -> vector<8x256xf32>
    %c8_968 = arith.constant 8 : index
    %c0_969 = arith.constant 0 : index
    %1484 = vector.load %arg3[%c8_968, %c0_969] : memref<26x256xf32, #tpu.memory_space<vmem>>, vector<1x256xf32>
    %1485 = vector.broadcast %1484 : vector<1x256xf32> to vector<8x256xf32>
    %1486 = arith.mulf %1483, %1485 : vector<8x256xf32>
    %c2_970 = arith.constant 2 : index
    %c0_971 = arith.constant 0 : index
    %c2_972 = arith.constant 2 : index
    %1487 = vector.load %arg17[%c2_970, %c0_971, %c2_972] : memref<3x8x9xf32, #tpu.memory_space<vmem>>, vector<1x8x1xf32>
    %1488 = vector.shape_cast %1487 : vector<1x8x1xf32> to vector<8x1xf32>
    %1489 = vector.broadcast %1488 : vector<8x1xf32> to vector<8x256xf32>
    %1490 = arith.mulf %1486, %1489 : vector<8x256xf32>
    %1491 = arith.addf %1482, %1490 : vector<8x256xf32>
    %c1_i32_973 = arith.constant 1 : i32
    %1492 = tpu.dynamic_rotate %1465 by %c1_i32_973 dim 1 : vector<8x256xf32>, i32 -> vector<8x256xf32>
    %c11_974 = arith.constant 11 : index
    %c0_975 = arith.constant 0 : index
    %1493 = vector.load %arg3[%c11_974, %c0_975] : memref<26x256xf32, #tpu.memory_space<vmem>>, vector<1x256xf32>
    %1494 = vector.broadcast %1493 : vector<1x256xf32> to vector<8x256xf32>
    %1495 = arith.mulf %1492, %1494 : vector<8x256xf32>
    %c2_976 = arith.constant 2 : index
    %c0_977 = arith.constant 0 : index
    %c3_978 = arith.constant 3 : index
    %1496 = vector.load %arg17[%c2_976, %c0_977, %c3_978] : memref<3x8x9xf32, #tpu.memory_space<vmem>>, vector<1x8x1xf32>
    %1497 = vector.shape_cast %1496 : vector<1x8x1xf32> to vector<8x1xf32>
    %1498 = vector.broadcast %1497 : vector<8x1xf32> to vector<8x256xf32>
    %1499 = arith.mulf %1495, %1498 : vector<8x256xf32>
    %1500 = arith.addf %1491, %1499 : vector<8x256xf32>
    %c2_979 = arith.constant 2 : index
    %c0_980 = arith.constant 0 : index
    %c4_981 = arith.constant 4 : index
    %1501 = vector.load %arg17[%c2_979, %c0_980, %c4_981] : memref<3x8x9xf32, #tpu.memory_space<vmem>>, vector<1x8x1xf32>
    %1502 = vector.shape_cast %1501 : vector<1x8x1xf32> to vector<8x1xf32>
    %1503 = vector.broadcast %1502 : vector<8x1xf32> to vector<8x256xf32>
    %1504 = arith.mulf %1465, %1503 : vector<8x256xf32>
    %1505 = arith.addf %1500, %1504 : vector<8x256xf32>
    %c255_i32_982 = arith.constant 255 : i32
    %1506 = tpu.dynamic_rotate %1465 by %c255_i32_982 dim 1 : vector<8x256xf32>, i32 -> vector<8x256xf32>
    %c13_983 = arith.constant 13 : index
    %c0_984 = arith.constant 0 : index
    %1507 = vector.load %arg3[%c13_983, %c0_984] : memref<26x256xf32, #tpu.memory_space<vmem>>, vector<1x256xf32>
    %1508 = vector.broadcast %1507 : vector<1x256xf32> to vector<8x256xf32>
    %1509 = arith.mulf %1506, %1508 : vector<8x256xf32>
    %c2_985 = arith.constant 2 : index
    %c0_986 = arith.constant 0 : index
    %c5_987 = arith.constant 5 : index
    %1510 = vector.load %arg17[%c2_985, %c0_986, %c5_987] : memref<3x8x9xf32, #tpu.memory_space<vmem>>, vector<1x8x1xf32>
    %1511 = vector.shape_cast %1510 : vector<1x8x1xf32> to vector<8x1xf32>
    %1512 = vector.broadcast %1511 : vector<8x1xf32> to vector<8x256xf32>
    %1513 = arith.mulf %1509, %1512 : vector<8x256xf32>
    %1514 = arith.addf %1505, %1513 : vector<8x256xf32>
    %c241_i32_988 = arith.constant 241 : i32
    %1515 = tpu.dynamic_rotate %1465 by %c241_i32_988 dim 1 : vector<8x256xf32>, i32 -> vector<8x256xf32>
    %c16_989 = arith.constant 16 : index
    %c0_990 = arith.constant 0 : index
    %1516 = vector.load %arg3[%c16_989, %c0_990] : memref<26x256xf32, #tpu.memory_space<vmem>>, vector<1x256xf32>
    %1517 = vector.broadcast %1516 : vector<1x256xf32> to vector<8x256xf32>
    %1518 = arith.mulf %1515, %1517 : vector<8x256xf32>
    %c2_991 = arith.constant 2 : index
    %c0_992 = arith.constant 0 : index
    %c6_993 = arith.constant 6 : index
    %1519 = vector.load %arg17[%c2_991, %c0_992, %c6_993] : memref<3x8x9xf32, #tpu.memory_space<vmem>>, vector<1x8x1xf32>
    %1520 = vector.shape_cast %1519 : vector<1x8x1xf32> to vector<8x1xf32>
    %1521 = vector.broadcast %1520 : vector<8x1xf32> to vector<8x256xf32>
    %1522 = arith.mulf %1518, %1521 : vector<8x256xf32>
    %1523 = arith.addf %1514, %1522 : vector<8x256xf32>
    %c240_i32_994 = arith.constant 240 : i32
    %1524 = tpu.dynamic_rotate %1465 by %c240_i32_994 dim 1 : vector<8x256xf32>, i32 -> vector<8x256xf32>
    %c17_995 = arith.constant 17 : index
    %c0_996 = arith.constant 0 : index
    %1525 = vector.load %arg3[%c17_995, %c0_996] : memref<26x256xf32, #tpu.memory_space<vmem>>, vector<1x256xf32>
    %1526 = vector.broadcast %1525 : vector<1x256xf32> to vector<8x256xf32>
    %1527 = arith.mulf %1524, %1526 : vector<8x256xf32>
    %c2_997 = arith.constant 2 : index
    %c0_998 = arith.constant 0 : index
    %c7_999 = arith.constant 7 : index
    %1528 = vector.load %arg17[%c2_997, %c0_998, %c7_999] : memref<3x8x9xf32, #tpu.memory_space<vmem>>, vector<1x8x1xf32>
    %1529 = vector.shape_cast %1528 : vector<1x8x1xf32> to vector<8x1xf32>
    %1530 = vector.broadcast %1529 : vector<8x1xf32> to vector<8x256xf32>
    %1531 = arith.mulf %1527, %1530 : vector<8x256xf32>
    %1532 = arith.addf %1523, %1531 : vector<8x256xf32>
    %c239_i32_1000 = arith.constant 239 : i32
    %1533 = tpu.dynamic_rotate %1465 by %c239_i32_1000 dim 1 : vector<8x256xf32>, i32 -> vector<8x256xf32>
    %c18_1001 = arith.constant 18 : index
    %c0_1002 = arith.constant 0 : index
    %1534 = vector.load %arg3[%c18_1001, %c0_1002] : memref<26x256xf32, #tpu.memory_space<vmem>>, vector<1x256xf32>
    %1535 = vector.broadcast %1534 : vector<1x256xf32> to vector<8x256xf32>
    %1536 = arith.mulf %1533, %1535 : vector<8x256xf32>
    %c2_1003 = arith.constant 2 : index
    %c0_1004 = arith.constant 0 : index
    %c8_1005 = arith.constant 8 : index
    %1537 = vector.load %arg17[%c2_1003, %c0_1004, %c8_1005] : memref<3x8x9xf32, #tpu.memory_space<vmem>>, vector<1x8x1xf32>
    %1538 = vector.shape_cast %1537 : vector<1x8x1xf32> to vector<8x1xf32>
    %1539 = vector.broadcast %1538 : vector<8x1xf32> to vector<8x256xf32>
    %1540 = arith.mulf %1536, %1539 : vector<8x256xf32>
    %1541 = arith.addf %1532, %1540 : vector<8x256xf32>
    %c2_1006 = arith.constant 2 : index
    %c0_1007 = arith.constant 0 : index
    %c0_1008 = arith.constant 0 : index
    %1542 = vector.load %arg18[%c2_1006, %c0_1007, %c0_1008] : memref<3x8x8xf32, #tpu.memory_space<vmem>>, vector<1x8x8xf32>
    %1543 = vector.shape_cast %1542 : vector<1x8x8xf32> to vector<8x8xf32>
    %cst_1009 = arith.constant dense<0.000000e+00> : vector<8x256xf32>
    %1544 = tpu.matmul %1543, %1541, %cst_1009 {dimension_numbers = #tpu.dot_dimension_numbers<[1], [0], [0], [1], [0, 0, 1, 1], [], []>} : vector<8x8xf32>, vector<8x256xf32>, vector<8x256xf32> -> vector<8x256xf32>
    %c2_1010 = arith.constant 2 : index
    %c0_1011 = arith.constant 0 : index
    %c0_1012 = arith.constant 0 : index
    %1545 = vector.load %arg19[%c2_1010, %c0_1011, %c0_1012] : memref<3x8x1xf32, #tpu.memory_space<vmem>>, vector<1x8x1xf32>
    %1546 = vector.shape_cast %1545 : vector<1x8x1xf32> to vector<8x1xf32>
    %1547 = vector.broadcast %1546 : vector<8x1xf32> to vector<8x256xf32>
    %1548 = arith.addf %1544, %1547 : vector<8x256xf32>
    %1549 = arith.addf %1548, %8 : vector<8x256xf32>
    %c0_1013 = arith.constant 0 : index
    %c5_1014 = arith.constant 5 : index
    %c0_1015 = arith.constant 0 : index
    %c0_1016 = arith.constant 0 : index
    %1550 = vector.load %arg20[%c0_1013, %c5_1014, %c0_1015, %c0_1016] : memref<1x6x8x256xf32, #tpu.memory_space<vmem>>, vector<1x1x8x256xf32>
    %1551 = vector.shape_cast %1550 : vector<1x1x8x256xf32> to vector<8x256xf32>
    %1552 = vector.shape_cast %1549 : vector<8x256xf32> to vector<1x1x8x256xf32>
    tpu.vector_store %arg20[%c0_1013, %c5_1014, %c0_1015, %c0_1016], %1552 {strides = array<i32>} : memref<1x6x8x256xf32, #tpu.memory_space<vmem>>, vector<1x1x8x256xf32>,
    return
  }
  func.func @transform_0(%arg0: i32) -> (i32, i32, i32) {
    %c0_i32 = arith.constant 0 : i32
    %c0_i32_0 = arith.constant 0 : i32
    %c0_i32_1 = arith.constant 0 : i32
    return %arg0, %c0_i32, %c0_i32_0 : i32, i32, i32
  }
  func.func @transform_1(%arg0: i32) -> (i32, i32, i32) {
    %c0_i32 = arith.constant 0 : i32
    %c0_i32_0 = arith.constant 0 : i32
    %c0_i32_1 = arith.constant 0 : i32
    return %arg0, %c0_i32, %c0_i32_0 : i32, i32, i32
  }
  func.func @transform_2(%arg0: i32) -> (i32, i32) {
    %c0_i32 = arith.constant 0 : i32
    %c0_i32_0 = arith.constant 0 : i32
    %c0_i32_1 = arith.constant 0 : i32
    return %c0_i32, %c0_i32_0 : i32, i32
  }
  func.func @transform_3(%arg0: i32) -> (i32, i32) {
    %c0_i32 = arith.constant 0 : i32
    %c0_i32_0 = arith.constant 0 : i32
    %c0_i32_1 = arith.constant 0 : i32
    return %c0_i32, %c0_i32_0 : i32, i32
  }
  func.func @transform_4(%arg0: i32) -> (i32, i32) {
    %c0_i32 = arith.constant 0 : i32
    %c0_i32_0 = arith.constant 0 : i32
    %c0_i32_1 = arith.constant 0 : i32
    return %c0_i32, %c0_i32_0 : i32, i32
  }
  func.func @transform_5(%arg0: i32) -> (i32, i32) {
    %c0_i32 = arith.constant 0 : i32
    %c0_i32_0 = arith.constant 0 : i32
    %c0_i32_1 = arith.constant 0 : i32
    return %c0_i32, %c0_i32_0 : i32, i32
  }
  func.func @transform_6(%arg0: i32) -> (i32, i32) {
    %c0_i32 = arith.constant 0 : i32
    %c0_i32_0 = arith.constant 0 : i32
    %c0_i32_1 = arith.constant 0 : i32
    return %c0_i32, %c0_i32_0 : i32, i32
  }
  func.func @transform_7(%arg0: i32) -> (i32, i32, i32) {
    %c0_i32 = arith.constant 0 : i32
    %c0_i32_0 = arith.constant 0 : i32
    %c0_i32_1 = arith.constant 0 : i32
    %c0_i32_2 = arith.constant 0 : i32
    return %c0_i32, %c0_i32_0, %c0_i32_1 : i32, i32, i32
  }
  func.func @transform_8(%arg0: i32) -> (i32, i32, i32) {
    %c0_i32 = arith.constant 0 : i32
    %c0_i32_0 = arith.constant 0 : i32
    %c0_i32_1 = arith.constant 0 : i32
    %c0_i32_2 = arith.constant 0 : i32
    return %c0_i32, %c0_i32_0, %c0_i32_1 : i32, i32, i32
  }
  func.func @transform_9(%arg0: i32) -> (i32, i32, i32) {
    %c0_i32 = arith.constant 0 : i32
    %c0_i32_0 = arith.constant 0 : i32
    %c0_i32_1 = arith.constant 0 : i32
    %c0_i32_2 = arith.constant 0 : i32
    return %c0_i32, %c0_i32_0, %c0_i32_1 : i32, i32, i32
  }
  func.func @transform_10(%arg0: i32) -> (i32, i32, i32) {
    %c0_i32 = arith.constant 0 : i32
    %c0_i32_0 = arith.constant 0 : i32
    %c0_i32_1 = arith.constant 0 : i32
    %c0_i32_2 = arith.constant 0 : i32
    return %c0_i32, %c0_i32_0, %c0_i32_1 : i32, i32, i32
  }
  func.func @transform_11(%arg0: i32) -> (i32, i32, i32) {
    %c0_i32 = arith.constant 0 : i32
    %c0_i32_0 = arith.constant 0 : i32
    %c0_i32_1 = arith.constant 0 : i32
    %c0_i32_2 = arith.constant 0 : i32
    return %c0_i32, %c0_i32_0, %c0_i32_1 : i32, i32, i32
  }
  func.func @transform_12(%arg0: i32) -> (i32, i32, i32) {
    %c0_i32 = arith.constant 0 : i32
    %c0_i32_0 = arith.constant 0 : i32
    %c0_i32_1 = arith.constant 0 : i32
    %c0_i32_2 = arith.constant 0 : i32
    return %c0_i32, %c0_i32_0, %c0_i32_1 : i32, i32, i32
  }
  func.func @transform_13(%arg0: i32) -> (i32, i32, i32) {
    %c0_i32 = arith.constant 0 : i32
    %c0_i32_0 = arith.constant 0 : i32
    %c0_i32_1 = arith.constant 0 : i32
    %c0_i32_2 = arith.constant 0 : i32
    return %c0_i32, %c0_i32_0, %c0_i32_1 : i32, i32, i32
  }
  func.func @transform_14(%arg0: i32) -> (i32, i32, i32) {
    %c0_i32 = arith.constant 0 : i32
    %c0_i32_0 = arith.constant 0 : i32
    %c0_i32_1 = arith.constant 0 : i32
    %c0_i32_2 = arith.constant 0 : i32
    return %c0_i32, %c0_i32_0, %c0_i32_1 : i32, i32, i32
  }
  func.func @transform_15(%arg0: i32) -> (i32, i32, i32) {
    %c0_i32 = arith.constant 0 : i32
    %c0_i32_0 = arith.constant 0 : i32
    %c0_i32_1 = arith.constant 0 : i32
    %c0_i32_2 = arith.constant 0 : i32
    return %c0_i32, %c0_i32_0, %c0_i32_1 : i32, i32, i32
  }
  func.func @transform_16(%arg0: i32) -> (i32, i32, i32) {
    %c0_i32 = arith.constant 0 : i32
    %c0_i32_0 = arith.constant 0 : i32
    %c0_i32_1 = arith.constant 0 : i32
    %c0_i32_2 = arith.constant 0 : i32
    return %c0_i32, %c0_i32_0, %c0_i32_1 : i32, i32, i32
  }
  func.func @transform_17(%arg0: i32) -> (i32, i32, i32) {
    %c0_i32 = arith.constant 0 : i32
    %c0_i32_0 = arith.constant 0 : i32
    %c0_i32_1 = arith.constant 0 : i32
    %c0_i32_2 = arith.constant 0 : i32
    return %c0_i32, %c0_i32_0, %c0_i32_1 : i32, i32, i32
  }
  func.func @transform_18(%arg0: i32) -> (i32, i32, i32) {
    %c0_i32 = arith.constant 0 : i32
    %c0_i32_0 = arith.constant 0 : i32
    %c0_i32_1 = arith.constant 0 : i32
    %c0_i32_2 = arith.constant 0 : i32
    return %c0_i32, %c0_i32_0, %c0_i32_1 : i32, i32, i32
  }
  func.func @transform_19(%arg0: i32) -> (i32, i32, i32, i32) {
    %c0_i32 = arith.constant 0 : i32
    %c0_i32_0 = arith.constant 0 : i32
    %c0_i32_1 = arith.constant 0 : i32
    %c0_i32_2 = arith.constant 0 : i32
    return %arg0, %c0_i32, %c0_i32_0, %c0_i32_1 : i32, i32, i32, i32
  }
}

</mosaic_0001>

<llo_original>
// kernel: normal_cell.1
$region0: #{normal_cell.1}
  #allocation0 [shape = 'u32[]', space=smem, size = 0x4, offset = 0x4, fixed_abs, tag = 'smem constant byte address 0x4 - core index']
  #allocation1 [shape = 'u32[144,128]{1,0:T(1,128)}', space=vmem, size = 0x12000, scoped, tag = 'internal scratch']
  %s0 = inlined_call_operand.vmem [shape: f32[2,16,256], index: 0, kind: input, shape index: {}]
  %s1 = inlined_call_operand.vmem [shape: f32[2,16,256], index: 1, kind: input, shape index: {}]
  %s2 = inlined_call_operand.vmem [shape: f32[26,256], index: 2, kind: input, shape index: {}]
  %s3 = inlined_call_operand.vmem [shape: f32[8,16], index: 3, kind: input, shape index: {}]
  %s4 = inlined_call_operand.vmem [shape: f32[8,1], index: 4, kind: input, shape index: {}]
  %s5 = inlined_call_operand.vmem [shape: f32[8,16], index: 5, kind: input, shape index: {}]
  %s6 = inlined_call_operand.vmem [shape: f32[8,1], index: 6, kind: input, shape index: {}]
  %s7 = inlined_call_operand.vmem [shape: f32[2,8,25], index: 7, kind: input, shape index: {}]
  %s8 = inlined_call_operand.vmem [shape: f32[2,8,8], index: 8, kind: input, shape index: {}]
  %s9 = inlined_call_operand.vmem [shape: f32[2,8,1], index: 9, kind: input, shape index: {}]
  %s10 = inlined_call_operand.vmem [shape: f32[2,8,25], index: 10, kind: input, shape index: {}]
  %s11 = inlined_call_operand.vmem [shape: f32[2,8,8], index: 11, kind: input, shape index: {}]
  %s12 = inlined_call_operand.vmem [shape: f32[2,8,1], index: 12, kind: input, shape index: {}]
  %s13 = inlined_call_operand.vmem [shape: f32[3,8,9], index: 13, kind: input, shape index: {}]
  %s14 = inlined_call_operand.vmem [shape: f32[3,8,8], index: 14, kind: input, shape index: {}]
  %s15 = inlined_call_operand.vmem [shape: f32[3,8,1], index: 15, kind: input, shape index: {}]
  %s16 = inlined_call_operand.vmem [shape: f32[3,8,9], index: 16, kind: input, shape index: {}]
  %s17 = inlined_call_operand.vmem [shape: f32[3,8,8], index: 17, kind: input, shape index: {}]
  %s18 = inlined_call_operand.vmem [shape: f32[3,8,1], index: 18, kind: input, shape index: {}]
  %s19 = inlined_call_operand.vmem [shape: f32[2,6,8,256], index: 19, kind: output, shape index: {}]
  %s20 = sld [smem:[#allocation0]]
  $region109: #{normal_cell.1} parent=0
    _
  %s22 = ssub.s32 1, %s20
  %s23 = scalar_select 0, %s22, %s20
  loop: start=0, step=1, limit=4
  $region2: #{normal_cell.1} parent=0 // loop_pre_header
    _
  $region3: #{normal_cell.1} parent=0 // loop_header
    %s25 = sphi 0, %s29
    %p26 = scmp.ge.s32.totalorder %s25, 4
    %s35 = sphi 0, %s37
    %s38 = sphi 0, %s35
    %s39 = sphi 0, %s38
    %s55 = sphi 0, %s39
    %s61 = sphi 0, %s63
    %s64 = sphi 0, %s61
    %s65 = sphi 0, %s64
    %s81 = sphi 0, %s65
    %s85 = sphi 0, %s85
    %s87 = sphi 0, %s85
    %s88 = sphi 0, %s87
    %s102 = sphi 0, %s88
    %s106 = sphi 0, %s106
    %s108 = sphi 0, %s106
    %s109 = sphi 0, %s108
    %s123 = sphi 0, %s109
    %s127 = sphi 0, %s127
    %s129 = sphi 0, %s127
    %s130 = sphi 0, %s129
    %s144 = sphi 0, %s130
    %s148 = sphi 0, %s148
    %s150 = sphi 0, %s148
    %s151 = sphi 0, %s150
    %s165 = sphi 0, %s151
    %s169 = sphi 0, %s169
    %s171 = sphi 0, %s169
    %s172 = sphi 0, %s171
    %s186 = sphi 0, %s172
    %s190 = sphi 0, %s190
    %s192 = sphi 0, %s190
    %s193 = sphi 0, %s192
    %s207 = sphi 0, %s193
    %s211 = sphi 0, %s211
    %s213 = sphi 0, %s211
    %s214 = sphi 0, %s213
    %s228 = sphi 0, %s214
    %s232 = sphi 0, %s232
    %s234 = sphi 0, %s232
    %s235 = sphi 0, %s234
    %s249 = sphi 0, %s235
    %s253 = sphi 0, %s253
    %s255 = sphi 0, %s253
    %s256 = sphi 0, %s255
    %s270 = sphi 0, %s256
    %s274 = sphi 0, %s274
    %s276 = sphi 0, %s274
    %s277 = sphi 0, %s276
    %s291 = sphi 0, %s277
    %s295 = sphi 0, %s295
    %s297 = sphi 0, %s295
    %s298 = sphi 0, %s297
    %s312 = sphi 0, %s298
    %s316 = sphi 0, %s316
    %s318 = sphi 0, %s316
    %s319 = sphi 0, %s318
    %s333 = sphi 0, %s319
    %s337 = sphi 0, %s337
    %s339 = sphi 0, %s337
    %s340 = sphi 0, %s339
    %s354 = sphi 0, %s340
    %s358 = sphi 0, %s358
    %s360 = sphi 0, %s358
    %s361 = sphi 0, %s360
    %s375 = sphi 0, %s361
    %s379 = sphi 0, %s379
    %s381 = sphi 0, %s379
    %s382 = sphi 0, %s381
    %s396 = sphi 0, %s382
    %s400 = sphi 0, %s400
    %s402 = sphi 0, %s400
    %s403 = sphi 0, %s402
    %s417 = sphi 0, %s403
    %s421 = sphi 0, %s421
    %s423 = sphi 0, %s421
    %s424 = sphi 0, %s423
    %s438 = sphi 0, %s424
    %s444 = sphi 0, %s446
    %s447 = sphi 0, %s444
    %s448 = sphi 0, %s447
    %s464 = sphi 0, %s448
  $region4: #{normal_cell.1} parent=0 // loop_header_branch
    %28 = sbr.rel (%p26) target = $region8
  $region5: #{normal_cell.1} parent=0 // loop_body
    %s30 = ssub.s32 %s25, 1
    %s31 = ssub.s32 %s25, 2
    %s32 = sadd.s32 %s25, 1
    %s33 = ssub.s32 %s25, %s32
    %p34 = scmp.eq.s32.totalorder %s33, 0
    %s36 = sadd.s32 %s35, 1
    %s37 = scalar_select %p34, %s35, %s36
    %p40 = pneg %p34
    %p41 = scmp.eq.s32.totalorder %s25, 1
    %p42 = por %p40, %p41
    %p43 = scmp.ne.s32.totalorder %s35, %s38
    %p44 = scmp.eq.s32.totalorder %s25, 0
    %p45 = por %p43, %p44
    %p46 = scmp.ne.s32.totalorder %s35, %s38
    %p47 = scmp.eq.s32.totalorder %s30, 1
    %p48 = por %p46, %p47
    %p49 = scmp.ne.s32.totalorder %s38, %s39
    %p50 = scmp.eq.s32.totalorder %s30, 0
    %p51 = por %p49, %p50
    %p52 = scmp.ne.s32.totalorder %s38, %s39
    %p53 = scmp.eq.s32.totalorder %s31, 1
    %p54 = por %p52, %p53
    %p56 = scmp.ne.s32.totalorder %s39, %s55
    %p57 = scmp.eq.s32.totalorder %s31, 0
    %p58 = por %p56, %p57
    %s59 = ssub.s32 %s25, %s32
    %p60 = scmp.eq.s32.totalorder %s59, 0
    %s62 = sadd.s32 %s61, 1
    %s63 = scalar_select %p60, %s61, %s62
    %p66 = pneg %p60
    %p67 = scmp.eq.s32.totalorder %s25, 1
    %p68 = por %p66, %p67
    %p69 = scmp.ne.s32.totalorder %s61, %s64
    %p70 = scmp.eq.s32.totalorder %s25, 0
    %p71 = por %p69, %p70
    %p72 = scmp.ne.s32.totalorder %s61, %s64
    %p73 = scmp.eq.s32.totalorder %s30, 1
    %p74 = por %p72, %p73
    %p75 = scmp.ne.s32.totalorder %s64, %s65
    %p76 = scmp.eq.s32.totalorder %s30, 0
    %p77 = por %p75, %p76
    %p78 = scmp.ne.s32.totalorder %s64, %s65
    %p79 = scmp.eq.s32.totalorder %s31, 1
    %p80 = por %p78, %p79
    %p82 = scmp.ne.s32.totalorder %s65, %s81
    %p83 = scmp.eq.s32.totalorder %s31, 0
    %p84 = por %p82, %p83
    %s86 = sadd.s32 %s85, 1
    %p89 = scmp.eq.s32.totalorder %s25, 1
    %p90 = scmp.ne.s32.totalorder %s85, %s87
    %p91 = scmp.eq.s32.totalorder %s25, 0
    %p92 = por %p90, %p91
    %p93 = scmp.ne.s32.totalorder %s85, %s87
    %p94 = scmp.eq.s32.totalorder %s30, 1
    %p95 = por %p93, %p94
    %p96 = scmp.ne.s32.totalorder %s87, %s88
    %p97 = scmp.eq.s32.totalorder %s30, 0
    %p98 = por %p96, %p97
    %p99 = scmp.ne.s32.totalorder %s87, %s88
    %p100 = scmp.eq.s32.totalorder %s31, 1
    %p101 = por %p99, %p100
    %p103 = scmp.ne.s32.totalorder %s88, %s102
    %p104 = scmp.eq.s32.totalorder %s31, 0
    %p105 = por %p103, %p104
    %s107 = sadd.s32 %s106, 1
    %p110 = scmp.eq.s32.totalorder %s25, 1
    %p111 = scmp.ne.s32.totalorder %s106, %s108
    %p112 = scmp.eq.s32.totalorder %s25, 0
    %p113 = por %p111, %p112
    %p114 = scmp.ne.s32.totalorder %s106, %s108
    %p115 = scmp.eq.s32.totalorder %s30, 1
    %p116 = por %p114, %p115
    %p117 = scmp.ne.s32.totalorder %s108, %s109
    %p118 = scmp.eq.s32.totalorder %s30, 0
    %p119 = por %p117, %p118
    %p120 = scmp.ne.s32.totalorder %s108, %s109
    %p121 = scmp.eq.s32.totalorder %s31, 1
    %p122 = por %p120, %p121
    %p124 = scmp.ne.s32.totalorder %s109, %s123
    %p125 = scmp.eq.s32.totalorder %s31, 0
    %p126 = por %p124, %p125
    %s128 = sadd.s32 %s127, 1
    %p131 = scmp.eq.s32.totalorder %s25, 1
    %p132 = scmp.ne.s32.totalorder %s127, %s129
    %p133 = scmp.eq.s32.totalorder %s25, 0
    %p134 = por %p132, %p133
    %p135 = scmp.ne.s32.totalorder %s127, %s129
    %p136 = scmp.eq.s32.totalorder %s30, 1
    %p137 = por %p135, %p136
    %p138 = scmp.ne.s32.totalorder %s129, %s130
    %p139 = scmp.eq.s32.totalorder %s30, 0
    %p140 = por %p138, %p139
    %p141 = scmp.ne.s32.totalorder %s129, %s130
    %p142 = scmp.eq.s32.totalorder %s31, 1
    %p143 = por %p141, %p142
    %p145 = scmp.ne.s32.totalorder %s130, %s144
    %p146 = scmp.eq.s32.totalorder %s31, 0
    %p147 = por %p145, %p146
    %s149 = sadd.s32 %s148, 1
    %p152 = scmp.eq.s32.totalorder %s25, 1
    %p153 = scmp.ne.s32.totalorder %s148, %s150
    %p154 = scmp.eq.s32.totalorder %s25, 0
    %p155 = por %p153, %p154
    %p156 = scmp.ne.s32.totalorder %s148, %s150
    %p157 = scmp.eq.s32.totalorder %s30, 1
    %p158 = por %p156, %p157
    %p159 = scmp.ne.s32.totalorder %s150, %s151
    %p160 = scmp.eq.s32.totalorder %s30, 0
    %p161 = por %p159, %p160
    %p162 = scmp.ne.s32.totalorder %s150, %s151
    %p163 = scmp.eq.s32.totalorder %s31, 1
    %p164 = por %p162, %p163
    %p166 = scmp.ne.s32.totalorder %s151, %s165
    %p167 = scmp.eq.s32.totalorder %s31, 0
    %p168 = por %p166, %p167
    %s170 = sadd.s32 %s169, 1
    %p173 = scmp.eq.s32.totalorder %s25, 1
    %p174 = scmp.ne.s32.totalorder %s169, %s171
    %p175 = scmp.eq.s32.totalorder %s25, 0
    %p176 = por %p174, %p175
    %p177 = scmp.ne.s32.totalorder %s169, %s171
    %p178 = scmp.eq.s32.totalorder %s30, 1
    %p179 = por %p177, %p178
    %p180 = scmp.ne.s32.totalorder %s171, %s172
    %p181 = scmp.eq.s32.totalorder %s30, 0
    %p182 = por %p180, %p181
    %p183 = scmp.ne.s32.totalorder %s171, %s172
    %p184 = scmp.eq.s32.totalorder %s31, 1
    %p185 = por %p183, %p184
    %p187 = scmp.ne.s32.totalorder %s172, %s186
    %p188 = scmp.eq.s32.totalorder %s31, 0
    %p189 = por %p187, %p188
    %s191 = sadd.s32 %s190, 1
    %p194 = scmp.eq.s32.totalorder %s25, 1
    %p195 = scmp.ne.s32.totalorder %s190, %s192
    %p196 = scmp.eq.s32.totalorder %s25, 0
    %p197 = por %p195, %p196
    %p198 = scmp.ne.s32.totalorder %s190, %s192
    %p199 = scmp.eq.s32.totalorder %s30, 1
    %p200 = por %p198, %p199
    %p201 = scmp.ne.s32.totalorder %s192, %s193
    %p202 = scmp.eq.s32.totalorder %s30, 0
    %p203 = por %p201, %p202
    %p204 = scmp.ne.s32.totalorder %s192, %s193
    %p205 = scmp.eq.s32.totalorder %s31, 1
    %p206 = por %p204, %p205
    %p208 = scmp.ne.s32.totalorder %s193, %s207
    %p209 = scmp.eq.s32.totalorder %s31, 0
    %p210 = por %p208, %p209
    %s212 = sadd.s32 %s211, 1
    %p215 = scmp.eq.s32.totalorder %s25, 1
    %p216 = scmp.ne.s32.totalorder %s211, %s213
    %p217 = scmp.eq.s32.totalorder %s25, 0
    %p218 = por %p216, %p217
    %p219 = scmp.ne.s32.totalorder %s211, %s213
    %p220 = scmp.eq.s32.totalorder %s30, 1
    %p221 = por %p219, %p220
    %p222 = scmp.ne.s32.totalorder %s213, %s214
    %p223 = scmp.eq.s32.totalorder %s30, 0
    %p224 = por %p222, %p223
    %p225 = scmp.ne.s32.totalorder %s213, %s214
    %p226 = scmp.eq.s32.totalorder %s31, 1
    %p227 = por %p225, %p226
    %p229 = scmp.ne.s32.totalorder %s214, %s228
    %p230 = scmp.eq.s32.totalorder %s31, 0
    %p231 = por %p229, %p230
    %s233 = sadd.s32 %s232, 1
    %p236 = scmp.eq.s32.totalorder %s25, 1
    %p237 = scmp.ne.s32.totalorder %s232, %s234
    %p238 = scmp.eq.s32.totalorder %s25, 0
    %p239 = por %p237, %p238
    %p240 = scmp.ne.s32.totalorder %s232, %s234
    %p241 = scmp.eq.s32.totalorder %s30, 1
    %p242 = por %p240, %p241
    %p243 = scmp.ne.s32.totalorder %s234, %s235
    %p244 = scmp.eq.s32.totalorder %s30, 0
    %p245 = por %p243, %p244
    %p246 = scmp.ne.s32.totalorder %s234, %s235
    %p247 = scmp.eq.s32.totalorder %s31, 1
    %p248 = por %p246, %p247
    %p250 = scmp.ne.s32.totalorder %s235, %s249
    %p251 = scmp.eq.s32.totalorder %s31, 0
    %p252 = por %p250, %p251
    %s254 = sadd.s32 %s253, 1
    %p257 = scmp.eq.s32.totalorder %s25, 1
    %p258 = scmp.ne.s32.totalorder %s253, %s255
    %p259 = scmp.eq.s32.totalorder %s25, 0
    %p260 = por %p258, %p259
    %p261 = scmp.ne.s32.totalorder %s253, %s255
    %p262 = scmp.eq.s32.totalorder %s30, 1
    %p263 = por %p261, %p262
    %p264 = scmp.ne.s32.totalorder %s255, %s256
    %p265 = scmp.eq.s32.totalorder %s30, 0
    %p266 = por %p264, %p265
    %p267 = scmp.ne.s32.totalorder %s255, %s256
    %p268 = scmp.eq.s32.totalorder %s31, 1
    %p269 = por %p267, %p268
    %p271 = scmp.ne.s32.totalorder %s256, %s270
    %p272 = scmp.eq.s32.totalorder %s31, 0
    %p273 = por %p271, %p272
    %s275 = sadd.s32 %s274, 1
    %p278 = scmp.eq.s32.totalorder %s25, 1
    %p279 = scmp.ne.s32.totalorder %s274, %s276
    %p280 = scmp.eq.s32.totalorder %s25, 0
    %p281 = por %p279, %p280
    %p282 = scmp.ne.s32.totalorder %s274, %s276
    %p283 = scmp.eq.s32.totalorder %s30, 1
    %p284 = por %p282, %p283
    %p285 = scmp.ne.s32.totalorder %s276, %s277
    %p286 = scmp.eq.s32.totalorder %s30, 0
    %p287 = por %p285, %p286
    %p288 = scmp.ne.s32.totalorder %s276, %s277
    %p289 = scmp.eq.s32.totalorder %s31, 1
    %p290 = por %p288, %p289
    %p292 = scmp.ne.s32.totalorder %s277, %s291
    %p293 = scmp.eq.s32.totalorder %s31, 0
    %p294 = por %p292, %p293
    %s296 = sadd.s32 %s295, 1
    %p299 = scmp.eq.s32.totalorder %s25, 1
    %p300 = scmp.ne.s32.totalorder %s295, %s297
    %p301 = scmp.eq.s32.totalorder %s25, 0
    %p302 = por %p300, %p301
    %p303 = scmp.ne.s32.totalorder %s295, %s297
    %p304 = scmp.eq.s32.totalorder %s30, 1
    %p305 = por %p303, %p304
    %p306 = scmp.ne.s32.totalorder %s297, %s298
    %p307 = scmp.eq.s32.totalorder %s30, 0
    %p308 = por %p306, %p307
    %p309 = scmp.ne.s32.totalorder %s297, %s298
    %p310 = scmp.eq.s32.totalorder %s31, 1
    %p311 = por %p309, %p310
    %p313 = scmp.ne.s32.totalorder %s298, %s312
    %p314 = scmp.eq.s32.totalorder %s31, 0
    %p315 = por %p313, %p314
    %s317 = sadd.s32 %s316, 1
    %p320 = scmp.eq.s32.totalorder %s25, 1
    %p321 = scmp.ne.s32.totalorder %s316, %s318
    %p322 = scmp.eq.s32.totalorder %s25, 0
    %p323 = por %p321, %p322
    %p324 = scmp.ne.s32.totalorder %s316, %s318
    %p325 = scmp.eq.s32.totalorder %s30, 1
    %p326 = por %p324, %p325
    %p327 = scmp.ne.s32.totalorder %s318, %s319
    %p328 = scmp.eq.s32.totalorder %s30, 0
    %p329 = por %p327, %p328
    %p330 = scmp.ne.s32.totalorder %s318, %s319
    %p331 = scmp.eq.s32.totalorder %s31, 1
    %p332 = por %p330, %p331
    %p334 = scmp.ne.s32.totalorder %s319, %s333
    %p335 = scmp.eq.s32.totalorder %s31, 0
    %p336 = por %p334, %p335
    %s338 = sadd.s32 %s337, 1
    %p341 = scmp.eq.s32.totalorder %s25, 1
    %p342 = scmp.ne.s32.totalorder %s337, %s339
    %p343 = scmp.eq.s32.totalorder %s25, 0
    %p344 = por %p342, %p343
    %p345 = scmp.ne.s32.totalorder %s337, %s339
    %p346 = scmp.eq.s32.totalorder %s30, 1
    %p347 = por %p345, %p346
    %p348 = scmp.ne.s32.totalorder %s339, %s340
    %p349 = scmp.eq.s32.totalorder %s30, 0
    %p350 = por %p348, %p349
    %p351 = scmp.ne.s32.totalorder %s339, %s340
    %p352 = scmp.eq.s32.totalorder %s31, 1
    %p353 = por %p351, %p352
    %p355 = scmp.ne.s32.totalorder %s340, %s354
    %p356 = scmp.eq.s32.totalorder %s31, 0
    %p357 = por %p355, %p356
    %s359 = sadd.s32 %s358, 1
    %p362 = scmp.eq.s32.totalorder %s25, 1
    %p363 = scmp.ne.s32.totalorder %s358, %s360
    %p364 = scmp.eq.s32.totalorder %s25, 0
    %p365 = por %p363, %p364
    %p366 = scmp.ne.s32.totalorder %s358, %s360
    %p367 = scmp.eq.s32.totalorder %s30, 1
    %p368 = por %p366, %p367
    %p369 = scmp.ne.s32.totalorder %s360, %s361
    %p370 = scmp.eq.s32.totalorder %s30, 0
    %p371 = por %p369, %p370
    %p372 = scmp.ne.s32.totalorder %s360, %s361
    %p373 = scmp.eq.s32.totalorder %s31, 1
    %p374 = por %p372, %p373
    %p376 = scmp.ne.s32.totalorder %s361, %s375
    %p377 = scmp.eq.s32.totalorder %s31, 0
    %p378 = por %p376, %p377
    %s380 = sadd.s32 %s379, 1
    %p383 = scmp.eq.s32.totalorder %s25, 1
    %p384 = scmp.ne.s32.totalorder %s379, %s381
    %p385 = scmp.eq.s32.totalorder %s25, 0
    %p386 = por %p384, %p385
    %p387 = scmp.ne.s32.totalorder %s379, %s381
    %p388 = scmp.eq.s32.totalorder %s30, 1
    %p389 = por %p387, %p388
    %p390 = scmp.ne.s32.totalorder %s381, %s382
    %p391 = scmp.eq.s32.totalorder %s30, 0
    %p392 = por %p390, %p391
    %p393 = scmp.ne.s32.totalorder %s381, %s382
    %p394 = scmp.eq.s32.totalorder %s31, 1
    %p395 = por %p393, %p394
    %p397 = scmp.ne.s32.totalorder %s382, %s396
    %p398 = scmp.eq.s32.totalorder %s31, 0
    %p399 = por %p397, %p398
    %s401 = sadd.s32 %s400, 1
    %p404 = scmp.eq.s32.totalorder %s25, 1
    %p405 = scmp.ne.s32.totalorder %s400, %s402
    %p406 = scmp.eq.s32.totalorder %s25, 0
    %p407 = por %p405, %p406
    %p408 = scmp.ne.s32.totalorder %s400, %s402
    %p409 = scmp.eq.s32.totalorder %s30, 1
    %p410 = por %p408, %p409
    %p411 = scmp.ne.s32.totalorder %s402, %s403
    %p412 = scmp.eq.s32.totalorder %s30, 0
    %p413 = por %p411, %p412
    %p414 = scmp.ne.s32.totalorder %s402, %s403
    %p415 = scmp.eq.s32.totalorder %s31, 1
    %p416 = por %p414, %p415
    %p418 = scmp.ne.s32.totalorder %s403, %s417
    %p419 = scmp.eq.s32.totalorder %s31, 0
    %p420 = por %p418, %p419
    %s422 = sadd.s32 %s421, 1
    %p425 = scmp.eq.s32.totalorder %s25, 1
    %p426 = scmp.ne.s32.totalorder %s421, %s423
    %p427 = scmp.eq.s32.totalorder %s25, 0
    %p428 = por %p426, %p427
    %p429 = scmp.ne.s32.totalorder %s421, %s423
    %p430 = scmp.eq.s32.totalorder %s30, 1
    %p431 = por %p429, %p430
    %p432 = scmp.ne.s32.totalorder %s423, %s424
    %p433 = scmp.eq.s32.totalorder %s30, 0
    %p434 = por %p432, %p433
    %p435 = scmp.ne.s32.totalorder %s423, %s424
    %p436 = scmp.eq.s32.totalorder %s31, 1
    %p437 = por %p435, %p436
    %p439 = scmp.ne.s32.totalorder %s424, %s438
    %p440 = scmp.eq.s32.totalorder %s31, 0
    %p441 = por %p439, %p440
    %s442 = ssub.s32 %s25, %s32
    %p443 = scmp.eq.s32.totalorder %s442, 0
    %s445 = sadd.s32 %s444, 1
    %s446 = scalar_select %p443, %s444, %s445
    %p449 = pneg %p443
    %p450 = scmp.eq.s32.totalorder %s25, 1
    %p451 = por %p449, %p450
    %p452 = scmp.ne.s32.totalorder %s444, %s447
    %p453 = scmp.eq.s32.totalorder %s25, 0
    %p454 = por %p452, %p453
    %p455 = scmp.ne.s32.totalorder %s444, %s447
    %p456 = scmp.eq.s32.totalorder %s30, 1
    %p457 = por %p455, %p456
    %p458 = scmp.ne.s32.totalorder %s447, %s448
    %p459 = scmp.eq.s32.totalorder %s30, 0
    %p460 = por %p458, %p459
    %p461 = scmp.ne.s32.totalorder %s447, %s448
    %p462 = scmp.eq.s32.totalorder %s31, 1
    %p463 = por %p461, %p462
    %p465 = scmp.ne.s32.totalorder %s448, %s464
    %p466 = scmp.eq.s32.totalorder %s31, 0
    %p467 = por %p465, %p466
    %p468 = scmp.le.s32.totalorder 1, %s25
    %p469 = scmp.lt.s32.totalorder %s25, 3
    %p470 = pnand %p468, %p469
    %p471 = pneg %p470
    // Predicated region
    $region9: #{normal_cell.1} parent=5 // pred_check
      _
    $region10: #{normal_cell.1} parent=5 // pred_check_branch
      %473 = sbr.rel (%p470) target = $region12
    $region11: #{normal_cell.1} parent=5 // pred_region
      %s474 = ssub.s32 %s25, 1
      // Predicated region
      $region13: #{normal_cell.1} parent=11 // pred_check
        %p475 = pneg %p98
      $region14: #{normal_cell.1} parent=11 // pred_check_branch
        %477 = sbr.rel (%p475) target = $region16
      $region15: #{normal_cell.1} parent=11 // pred_region
        _
      $region16: #{normal_cell.1} parent=11 // pred_fallthru
        _
      // Predicated region
      $region17: #{normal_cell.1} parent=11 // pred_check
        %p478 = pneg %p119
      $region18: #{normal_cell.1} parent=11 // pred_check_branch
        %480 = sbr.rel (%p478) target = $region20
      $region19: #{normal_cell.1} parent=11 // pred_region
        _
      $region20: #{normal_cell.1} parent=11 // pred_fallthru
        _
      // Predicated region
      $region21: #{normal_cell.1} parent=11 // pred_check
        %p481 = pneg %p140
      $region22: #{normal_cell.1} parent=11 // pred_check_branch
        %483 = sbr.rel (%p481) target = $region24
      $region23: #{normal_cell.1} parent=11 // pred_region
        _
      $region24: #{normal_cell.1} parent=11 // pred_fallthru
        _
      // Predicated region
      $region25: #{normal_cell.1} parent=11 // pred_check
        %p484 = pneg %p161
      $region26: #{normal_cell.1} parent=11 // pred_check_branch
        %486 = sbr.rel (%p484) target = $region28
      $region27: #{normal_cell.1} parent=11 // pred_region
        _
      $region28: #{normal_cell.1} parent=11 // pred_fallthru
        _
      // Predicated region
      $region29: #{normal_cell.1} parent=11 // pred_check
        %p487 = pneg %p182
      $region30: #{normal_cell.1} parent=11 // pred_check_branch
        %489 = sbr.rel (%p487) target = $region32
      $region31: #{normal_cell.1} parent=11 // pred_region
        _
      $region32: #{normal_cell.1} parent=11 // pred_fallthru
        _
      // Predicated region
      $region33: #{normal_cell.1} parent=11 // pred_check
        %p490 = pneg %p203
      $region34: #{normal_cell.1} parent=11 // pred_check_branch
        %492 = sbr.rel (%p490) target = $region36
      $region35: #{normal_cell.1} parent=11 // pred_region
        _
      $region36: #{normal_cell.1} parent=11 // pred_fallthru
        _
      // Predicated region
      $region37: #{normal_cell.1} parent=11 // pred_check
        %p493 = pneg %p224
      $region38: #{normal_cell.1} parent=11 // pred_check_branch
        %495 = sbr.rel (%p493) target = $region40
      $region39: #{normal_cell.1} parent=11 // pred_region
        _
      $region40: #{normal_cell.1} parent=11 // pred_fallthru
        _
      // Predicated region
      $region41: #{normal_cell.1} parent=11 // pred_check
        %p496 = pneg %p245
      $region42: #{normal_cell.1} parent=11 // pred_check_branch
        %498 = sbr.rel (%p496) target = $region44
      $region43: #{normal_cell.1} parent=11 // pred_region
        _
      $region44: #{normal_cell.1} parent=11 // pred_fallthru
        _
      // Predicated region
      $region45: #{normal_cell.1} parent=11 // pred_check
        %p499 = pneg %p266
      $region46: #{normal_cell.1} parent=11 // pred_check_branch
        %501 = sbr.rel (%p499) target = $region48
      $region47: #{normal_cell.1} parent=11 // pred_region
        _
      $region48: #{normal_cell.1} parent=11 // pred_fallthru
        _
      // Predicated region
      $region49: #{normal_cell.1} parent=11 // pred_check
        %p502 = pneg %p287
      $region50: #{normal_cell.1} parent=11 // pred_check_branch
        %504 = sbr.rel (%p502) target = $region52
      $region51: #{normal_cell.1} parent=11 // pred_region
        _
      $region52: #{normal_cell.1} parent=11 // pred_fallthru
        _
      // Predicated region
      $region53: #{normal_cell.1} parent=11 // pred_check
        %p505 = pneg %p308
      $region54: #{normal_cell.1} parent=11 // pred_check_branch
        %507 = sbr.rel (%p505) target = $region56
      $region55: #{normal_cell.1} parent=11 // pred_region
        _
      $region56: #{normal_cell.1} parent=11 // pred_fallthru
        _
      // Predicated region
      $region57: #{normal_cell.1} parent=11 // pred_check
        %p508 = pneg %p329
      $region58: #{normal_cell.1} parent=11 // pred_check_branch
        %510 = sbr.rel (%p508) target = $region60
      $region59: #{normal_cell.1} parent=11 // pred_region
        _
      $region60: #{normal_cell.1} parent=11 // pred_fallthru
        _
      // Predicated region
      $region61: #{normal_cell.1} parent=11 // pred_check
        %p511 = pneg %p350
      $region62: #{normal_cell.1} parent=11 // pred_check_branch
        %513 = sbr.rel (%p511) target = $region64
      $region63: #{normal_cell.1} parent=11 // pred_region
        _
      $region64: #{normal_cell.1} parent=11 // pred_fallthru
        _
      // Predicated region
      $region65: #{normal_cell.1} parent=11 // pred_check
        %p514 = pneg %p371
      $region66: #{normal_cell.1} parent=11 // pred_check_branch
        %516 = sbr.rel (%p514) target = $region68
      $region67: #{normal_cell.1} parent=11 // pred_region
        _
      $region68: #{normal_cell.1} parent=11 // pred_fallthru
        _
      // Predicated region
      $region69: #{normal_cell.1} parent=11 // pred_check
        %p517 = pneg %p392
      $region70: #{normal_cell.1} parent=11 // pred_check_branch
        %519 = sbr.rel (%p517) target = $region72
      $region71: #{normal_cell.1} parent=11 // pred_region
        _
      $region72: #{normal_cell.1} parent=11 // pred_fallthru
        _
      // Predicated region
      $region73: #{normal_cell.1} parent=11 // pred_check
        %p520 = pneg %p413
      $region74: #{normal_cell.1} parent=11 // pred_check_branch
        %522 = sbr.rel (%p520) target = $region76
      $region75: #{normal_cell.1} parent=11 // pred_region
        _
      $region76: #{normal_cell.1} parent=11 // pred_fallthru
        _
      // Predicated region
      $region77: #{normal_cell.1} parent=11 // pred_check
        %p523 = pneg %p434
      $region78: #{normal_cell.1} parent=11 // pred_check_branch
        %525 = sbr.rel (%p523) target = $region80
      $region79: #{normal_cell.1} parent=11 // pred_region
        _
      $region80: #{normal_cell.1} parent=11 // pred_fallthru
        _
    $region12: #{normal_cell.1} parent=5 // pred_fallthru
      _
    %p526 = scmp.lt.s32.totalorder %s25, 2
    // Predicated region
    $region81: #{normal_cell.1} parent=5 // pred_check
      %p527 = pneg %p526
    $region82: #{normal_cell.1} parent=5 // pred_check_branch
      %529 = sbr.rel (%p527) target = $region84
    $region83: #{normal_cell.1} parent=5 // pred_region
      // Predicated region
      $region85: #{normal_cell.1} parent=83 // pred_check
        %p530 = pneg %p45
      $region86: #{normal_cell.1} parent=83 // pred_check_branch
        %532 = sbr.rel (%p530) target = $region88
      $region87: #{normal_cell.1} parent=83 // pred_region
        %p533 = scmp.lt.s32.totalorder %s25, 1
        %s534 = scalar_select %p533, %s25, 1
        %s535 = smul.addr %s534, 4
        %s536 = smul.addr %s535, 8
        %s537 = scalar_lea.vmem %s0, %s536
      $region88: #{normal_cell.1} parent=83 // pred_fallthru
        _
      // Predicated region
      $region89: #{normal_cell.1} parent=83 // pred_check
        %p538 = pneg %p71
      $region90: #{normal_cell.1} parent=83 // pred_check_branch
        %540 = sbr.rel (%p538) target = $region92
      $region91: #{normal_cell.1} parent=83 // pred_region
        %p541 = scmp.lt.s32.totalorder %s25, 1
        %s542 = scalar_select %p541, %s25, 1
        %s543 = smul.addr %s542, 4
        %s544 = smul.addr %s543, 8
        %s545 = scalar_lea.vmem %s1, %s544
      $region92: #{normal_cell.1} parent=83 // pred_fallthru
        _
    $region84: #{normal_cell.1} parent=5 // pred_fallthru
      _
    %p546 = scmp.le.s32.totalorder 1, %s25
    %p547 = scmp.lt.s32.totalorder %s25, 3
    %p548 = pnand %p546, %p547
    %p549 = pneg %p548
    // Predicated region
    $region93: #{normal_cell.1} parent=5 // pred_check
      _
    $region94: #{normal_cell.1} parent=5 // pred_check_branch
      %551 = sbr.rel (%p548) target = $region96
    $region95: #{normal_cell.1} parent=5 // pred_region
      %s552 = ssub.s32 %s25, 1
      %p553 = scmp.lt.s32.totalorder %s30, 1
      %s554 = scalar_select %p553, %s30, 1
      %s555 = smul.addr %s554, 4
      %s556 = smul.addr %s555, 8
      %s557 = scalar_lea.vmem %s0, %s556
      %p558 = pneg %p51
      %p559 = pneg %p48
      %p560 = scmp.lt.s32.totalorder %s30, 1
      %s561 = scalar_select %p560, %s30, 1
      %s562 = smul.addr %s561, 4
      %s563 = smul.addr %s562, 8
      %s564 = scalar_lea.vmem %s1, %s563
      %p565 = pneg %p77
      %p566 = pneg %p74
      %p567 = pneg %p98
      %p568 = pneg %p95
      %p569 = pneg %p119
      %p570 = pneg %p116
      %p571 = pneg %p140
      %p572 = pneg %p137
      %p573 = pneg %p161
      %p574 = pneg %p158
      %p575 = pneg %p182
      %p576 = pneg %p179
      %p577 = pneg %p203
      %p578 = pneg %p200
      %p579 = pneg %p224
      %p580 = pneg %p221
      %p581 = pneg %p245
      %p582 = pneg %p242
      %p583 = pneg %p266
      %p584 = pneg %p263
      %p585 = pneg %p287
      %p586 = pneg %p284
      %p587 = pneg %p308
      %p588 = pneg %p305
      %p589 = pneg %p329
      %p590 = pneg %p326
      %p591 = pneg %p350
      %p592 = pneg %p347
      %p593 = pneg %p371
      %p594 = pneg %p368
      %p595 = pneg %p392
      %p596 = pneg %p389
      %p597 = pneg %p413
      %p598 = pneg %p410
      %p599 = pneg %p434
      %p600 = pneg %p431
      %p601 = pneg %p460
      %p602 = pneg %p457
      %p603 = scmp.lt.s32.totalorder %s30, 1
      %s604 = scalar_select %p603, %s30, 1
      %s605 = smul.addr %s604, 12
      %s606 = smul.addr %s605, 8
      %s607 = scalar_lea.vmem %s19, %s606
      %p608 = scmp.lt.s32.totalorder %s30, 1
      %s609 = scalar_select %p608, %s30, 1
      %s610 = smul.addr %s609, 4
      %s611 = smul.addr %s610, 8
      %s612 = scalar_lea.vmem %s0, %s611
      %p613 = scmp.lt.s32.totalorder %s30, 1
      %s614 = scalar_select %p613, %s30, 1
      %s615 = smul.addr %s614, 4
      %s616 = smul.addr %s615, 8
      %s617 = scalar_lea.vmem %s1, %s616
      %p618 = scmp.lt.s32.totalorder %s30, 1
      %s619 = scalar_select %p618, %s30, 1
      %s620 = smul.addr %s619, 12
      %s621 = smul.addr %s620, 8
      %s622 = scalar_lea.vmem %s19, %s621
      %v623 = vld [vmem:[%s612] sm:$0xff]
      %v624 = vld [vmem:[%s612 + $0x8] sm:$0xff]
      %v625 = vld [vmem:[%s612 + $0x10] sm:$0xff]
      %v626 = vld [vmem:[%s612 + $0x18] sm:$0xff]
      %v627 = vld [vmem:[%s3] sm:$0xff]
      %v628 = vmax.f32 %v623, 0.0
      %v629 = vmax.f32 %v624, 0.0
      %v630 = vmax.f32 %v625, 0.0
      %v631 = vmax.f32 %v626, 0.0
      %v632 = vld [vmem:[%s4] sm:$0xff]
      %634 = vset.pattern.permute.xlu0 0
      %635 = vperm.xlu0 %634, %v632
      %v636 = vpop.permute.xlu0 %635
      %vm638 = vcmask 130048
      %v640 = vsel %vm638, %v627, 0
      %642 = vmatprep.subr.mxu0 %v629
      %643 = vmatpush1.msra.mxu0 %v628
      %644 = vmatprep.subr.mxu0 %v631
      %645 = vmatpush1.msra.mxu0 %v630
      %646 = vmatprep.subr.mxu0 0.0
      %647 = vmatpush1.msra.mxu0 0.0
      %648 = vmatprep.subr.mxu0 0.0
      %649 = vmatpush1.msra.mxu0 0.0
      %650 = vmatprep.subr.mxu0 0.0
      %651 = vmatpush1.msra.mxu0 0.0
      %652 = vmatprep.subr.mxu0 0.0
      %653 = vmatpush1.msra.mxu0 0.0
      %654 = vmatprep.subr.mxu0 0.0
      %655 = vmatpush1.msra.mxu0 0.0
      %656 = vmatprep.subr.mxu0 0.0
      %657 = vmatpush1.msra.mxu0 0.0
      %658 = vmatprep.subr.mxu0 0.0
      %659 = vmatpush1.msra.mxu0 0.0
      %660 = vmatprep.subr.mxu0 0.0
      %661 = vmatpush1.msra.mxu0 0.0
      %662 = vmatprep.subr.mxu0 0.0
      %663 = vmatpush1.msra.mxu0 0.0
      %664 = vmatprep.subr.mxu0 0.0
      %665 = vmatpush1.msra.mxu0 0.0
      %666 = vmatprep.subr.mxu0 0.0
      %667 = vmatpush1.msra.mxu0 0.0
      %668 = vmatprep.subr.mxu0 0.0
      %669 = vmatpush1.msra.mxu0 0.0
      %670 = vmatprep.subr.mxu0 0.0
      %671 = vmatpush1.msra.mxu0 0.0
      %672 = vmatprep.subr.mxu0 0.0
      %673 = vmatpush1.msra.mxu0 0.0
      %674 = vmatprep.subr.mxu0 0.0
      %675 = vmatpush1.msra.mxu0 0.0
      %676 = vmatprep.subr.mxu0 0.0
      %677 = vmatpush1.msra.mxu0 0.0
      %678 = vmatprep.subr.mxu0 0.0
      %679 = vmatpush1.msra.mxu0 0.0
      %680 = vmatprep.subr.mxu0 0.0
      %681 = vmatpush1.msra.mxu0 0.0
      %682 = vmatprep.subr.mxu0 0.0
      %683 = vmatpush1.msra.mxu0 0.0
      %684 = vmatprep.subr.mxu0 0.0
      %685 = vmatpush1.msra.mxu0 0.0
      %686 = vmatprep.subr.mxu0 0.0
      %687 = vmatpush1.msra.mxu0 0.0
      %688 = vmatprep.subr.mxu0 0.0
      %689 = vmatpush1.msra.mxu0 0.0
      %690 = vmatprep.subr.mxu0 0.0
      %691 = vmatpush1.msra.mxu0 0.0
      %692 = vmatprep.subr.mxu0 0.0
      %693 = vmatpush1.msra.mxu0 0.0
      %694 = vmatprep.subr.mxu0 0.0
      %695 = vmatpush1.msra.mxu0 0.0
      %696 = vmatprep.subr.mxu0 0.0
      %697 = vmatpush1.msra.mxu0 0.0
      %698 = vmatprep.subr.mxu0 0.0
      %699 = vmatpush1.msra.mxu0 0.0
      %700 = vmatprep.subr.mxu0 0.0
      %701 = vmatpush1.msra.mxu0 0.0
      %702 = vmatprep.subr.mxu0 0.0
      %703 = vmatpush1.msra.mxu0 0.0
      %704 = vmatprep.subr.mxu0 0.0
      %705 = vmatpush1.msra.mxu0 0.0
      %706 = vmatprep.mubr.f32.mxu0 0.0
      %707 = vmatmul.mubr.f32.gmra.mrb[0].mxu0 %v640
      %v708 = vpop.f32.mrb[0].mxu0
      %v709 = vadd.f32 %v636, %v708
      %v710 = vpop.f32.mrb[0].mxu0
      %v711 = vadd.f32 %v636, %v710
      %712 = vdwg.mxu0
      %v713 = vld [vmem:[%s617] sm:$0xff]
      %v714 = vld [vmem:[%s617 + $0x8] sm:$0xff]
      %v715 = vld [vmem:[%s617 + $0x10] sm:$0xff]
      %v716 = vld [vmem:[%s617 + $0x18] sm:$0xff]
      %v717 = vld [vmem:[%s5] sm:$0xff]
      %v718 = vmax.f32 %v713, 0.0
      %v719 = vmax.f32 %v714, 0.0
      %v720 = vmax.f32 %v715, 0.0
      %v721 = vmax.f32 %v716, 0.0
      %v722 = vld [vmem:[%s6] sm:$0xff]
      %724 = vset.pattern.permute.xlu0 0
      %725 = vperm.xlu0 %724, %v722
      %v726 = vpop.permute.xlu0 %725
      %v729 = vsel %vm638, %v717, 0
      %731 = vmatprep.subr.mxu0 %v719
      %732 = vmatpush1.msra.mxu0 %v718
      %733 = vmatprep.subr.mxu0 %v721
      %734 = vmatpush1.msra.mxu0 %v720
      %735 = vmatprep.subr.mxu0 0.0
      %736 = vmatpush1.msra.mxu0 0.0
      %737 = vmatprep.subr.mxu0 0.0
      %738 = vmatpush1.msra.mxu0 0.0
      %739 = vmatprep.subr.mxu0 0.0
      %740 = vmatpush1.msra.mxu0 0.0
      %741 = vmatprep.subr.mxu0 0.0
      %742 = vmatpush1.msra.mxu0 0.0
      %743 = vmatprep.subr.mxu0 0.0
      %744 = vmatpush1.msra.mxu0 0.0
      %745 = vmatprep.subr.mxu0 0.0
      %746 = vmatpush1.msra.mxu0 0.0
      %747 = vmatprep.subr.mxu0 0.0
      %748 = vmatpush1.msra.mxu0 0.0
      %749 = vmatprep.subr.mxu0 0.0
      %750 = vmatpush1.msra.mxu0 0.0
      %751 = vmatprep.subr.mxu0 0.0
      %752 = vmatpush1.msra.mxu0 0.0
      %753 = vmatprep.subr.mxu0 0.0
      %754 = vmatpush1.msra.mxu0 0.0
      %755 = vmatprep.subr.mxu0 0.0
      %756 = vmatpush1.msra.mxu0 0.0
      %757 = vmatprep.subr.mxu0 0.0
      %758 = vmatpush1.msra.mxu0 0.0
      %759 = vmatprep.subr.mxu0 0.0
      %760 = vmatpush1.msra.mxu0 0.0
      %761 = vmatprep.subr.mxu0 0.0
      %762 = vmatpush1.msra.mxu0 0.0
      %763 = vmatprep.subr.mxu0 0.0
      %764 = vmatpush1.msra.mxu0 0.0
      %765 = vmatprep.subr.mxu0 0.0
      %766 = vmatpush1.msra.mxu0 0.0
      %767 = vmatprep.subr.mxu0 0.0
      %768 = vmatpush1.msra.mxu0 0.0
      %769 = vmatprep.subr.mxu0 0.0
      %770 = vmatpush1.msra.mxu0 0.0
      %771 = vmatprep.subr.mxu0 0.0
      %772 = vmatpush1.msra.mxu0 0.0
      %773 = vmatprep.subr.mxu0 0.0
      %774 = vmatpush1.msra.mxu0 0.0
      %775 = vmatprep.subr.mxu0 0.0
      %776 = vmatpush1.msra.mxu0 0.0
      %777 = vmatprep.subr.mxu0 0.0
      %778 = vmatpush1.msra.mxu0 0.0
      %779 = vmatprep.subr.mxu0 0.0
      %780 = vmatpush1.msra.mxu0 0.0
      %781 = vmatprep.subr.mxu0 0.0
      %782 = vmatpush1.msra.mxu0 0.0
      %783 = vmatprep.subr.mxu0 0.0
      %784 = vmatpush1.msra.mxu0 0.0
      %785 = vmatprep.subr.mxu0 0.0
      %786 = vmatpush1.msra.mxu0 0.0
      %787 = vmatprep.subr.mxu0 0.0
      %788 = vmatpush1.msra.mxu0 0.0
      %789 = vmatprep.subr.mxu0 0.0
      %790 = vmatpush1.msra.mxu0 0.0
      %791 = vmatprep.subr.mxu0 0.0
      %792 = vmatpush1.msra.mxu0 0.0
      %793 = vmatprep.subr.mxu0 0.0
      %794 = vmatpush1.msra.mxu0 0.0
      %795 = vmatprep.mubr.f32.mxu0 0.0
      %796 = vmatmul.mubr.f32.gmra.mrb[0].mxu0 %v729
      %v797 = vpop.f32.mrb[0].mxu0
      %v798 = vadd.f32 %v726, %v797
      %v799 = vpop.f32.mrb[0].mxu0
      %v800 = vadd.f32 %v726, %v799
      %801 = vdwg.mxu0
      %802 = vst [vmem:[%s622] sm:$0xff] %v798
      %803 = vst [vmem:[%s622 + $0x8] sm:$0xff] %v800
      %v804 = vmax.f32 %v709, 0.0
      %v805 = vmax.f32 %v711, 0.0
      %806 = vrot.lane.b32.xlu0 %v804, 34
      %v807 = vpop.permute.xlu0 %806
      %808 = vrot.lane.b32.xlu0 %v805, 34
      %v809 = vpop.permute.xlu0 %808
      %v810 = vlaneseq
      %v811 = vand.u32 %v810, 127
      %vm812 = vcmp.lt.s32.totalorder %v811, 34
      %v813 = vsel %vm812, %v807, %v809
      %v814 = vsel %vm812, %v809, %v807
      %v815 = vld [vmem:[%s2] ss:$8 sm:$0x3]
      %v817 = vlaneseq
      %v818 = vshrl.u32 %v817, 7
      %v819 = vsub.s32 0, %v818
      %v820 = vrot.slane %v815, %v819
      %v821 = vlaneseq
      %v822 = vshrl.u32 %v821, 7
      %v823 = vsub.s32 1, %v822
      %v824 = vrot.slane %v815, %v823
      %v827 = vmul.f32 %v814, %v820
      %v828 = vmul.f32 %v813, %v824
      %v829 = vld [vmem:[%s7] sm:$0xff]
      %831 = vset.pattern.permute.xlu0 0
      %832 = vperm.xlu0 %831, %v829
      %v833 = vpop.permute.xlu0 %832
      %v835 = vmul.f32 %v827, %v833
      %v836 = vmul.f32 %v828, %v833
      %837 = vrot.lane.b32.xlu0 %v804, 33
      %v838 = vpop.permute.xlu0 %837
      %839 = vrot.lane.b32.xlu0 %v805, 33
      %v840 = vpop.permute.xlu0 %839
      %vm841 = vcmp.lt.s32.totalorder %v811, 33
      %v842 = vsel %vm841, %v838, %v840
      %v843 = vsel %vm841, %v840, %v838
      %s844 = scalar_lea.vmem %s2, 1
      %v845 = vld [vmem:[%s844] ss:$8 sm:$0x3]
      %v847 = vlaneseq
      %v848 = vshrl.u32 %v847, 7
      %v849 = vsub.s32 0, %v848
      %v850 = vrot.slane %v845, %v849
      %v851 = vlaneseq
      %v852 = vshrl.u32 %v851, 7
      %v853 = vsub.s32 1, %v852
      %v854 = vrot.slane %v845, %v853
      %v857 = vmul.f32 %v843, %v850
      %v858 = vmul.f32 %v842, %v854
      %859 = vset.pattern.permute.xlu0 1
      %860 = vperm.xlu0 %859, %v829
      %v861 = vpop.permute.xlu0 %860
      %v863 = vmul.f32 %v857, %v861
      %v864 = vmul.f32 %v858, %v861
      %v865 = vadd.f32 %v835, %v863
      %v866 = vadd.f32 %v836, %v864
      %867 = vrot.lane.b32.xlu0 %v804, 32
      %v868 = vpop.permute.xlu0 %867
      %869 = vrot.lane.b32.xlu0 %v805, 32
      %v870 = vpop.permute.xlu0 %869
      %vm871 = vcmp.lt.s32.totalorder %v811, 32
      %v872 = vsel %vm871, %v868, %v870
      %v873 = vsel %vm871, %v870, %v868
      %s874 = scalar_lea.vmem %s2, 2
      %v875 = vld [vmem:[%s874] ss:$8 sm:$0x3]
      %v877 = vlaneseq
      %v878 = vshrl.u32 %v877, 7
      %v879 = vsub.s32 0, %v878
      %v880 = vrot.slane %v875, %v879
      %v881 = vlaneseq
      %v882 = vshrl.u32 %v881, 7
      %v883 = vsub.s32 1, %v882
      %v884 = vrot.slane %v875, %v883
      %v887 = vmul.f32 %v873, %v880
      %v888 = vmul.f32 %v872, %v884
      %889 = vset.pattern.permute.xlu0 2
      %890 = vperm.xlu0 %889, %v829
      %v891 = vpop.permute.xlu0 %890
      %v893 = vmul.f32 %v887, %v891
      %v894 = vmul.f32 %v888, %v891
      %v895 = vadd.f32 %v865, %v893
      %v896 = vadd.f32 %v866, %v894
      %897 = vrot.lane.b32.xlu0 %v804, 31
      %v898 = vpop.permute.xlu0 %897
      %899 = vrot.lane.b32.xlu0 %v805, 31
      %v900 = vpop.permute.xlu0 %899
      %vm901 = vcmp.lt.s32.totalorder %v811, 31
      %v902 = vsel %vm901, %v898, %v900
      %v903 = vsel %vm901, %v900, %v898
      %s904 = scalar_lea.vmem %s2, 3
      %v905 = vld [vmem:[%s904] ss:$8 sm:$0x3]
      %v907 = vlaneseq
      %v908 = vshrl.u32 %v907, 7
      %v909 = vsub.s32 0, %v908
      %v910 = vrot.slane %v905, %v909
      %v911 = vlaneseq
      %v912 = vshrl.u32 %v911, 7
      %v913 = vsub.s32 1, %v912
      %v914 = vrot.slane %v905, %v913
      %v917 = vmul.f32 %v903, %v910
      %v918 = vmul.f32 %v902, %v914
      %919 = vset.pattern.permute.xlu0 3
      %920 = vperm.xlu0 %919, %v829
      %v921 = vpop.permute.xlu0 %920
      %v923 = vmul.f32 %v917, %v921
      %v924 = vmul.f32 %v918, %v921
      %v925 = vadd.f32 %v895, %v923
      %v926 = vadd.f32 %v896, %v924
      %927 = vrot.lane.b32.xlu0 %v804, 30
      %v928 = vpop.permute.xlu0 %927
      %929 = vrot.lane.b32.xlu0 %v805, 30
      %v930 = vpop.permute.xlu0 %929
      %vm931 = vcmp.lt.s32.totalorder %v811, 30
      %v932 = vsel %vm931, %v928, %v930
      %v933 = vsel %vm931, %v930, %v928
      %s934 = scalar_lea.vmem %s2, 4
      %v935 = vld [vmem:[%s934] ss:$8 sm:$0x3]
      %v937 = vlaneseq
      %v938 = vshrl.u32 %v937, 7
      %v939 = vsub.s32 0, %v938
      %v940 = vrot.slane %v935, %v939
      %v941 = vlaneseq
      %v942 = vshrl.u32 %v941, 7
      %v943 = vsub.s32 1, %v942
      %v944 = vrot.slane %v935, %v943
      %v947 = vmul.f32 %v933, %v940
      %v948 = vmul.f32 %v932, %v944
      %949 = vset.pattern.permute.xlu0 4
      %950 = vperm.xlu0 %949, %v829
      %v951 = vpop.permute.xlu0 %950
      %v953 = vmul.f32 %v947, %v951
      %v954 = vmul.f32 %v948, %v951
      %v955 = vadd.f32 %v925, %v953
      %v956 = vadd.f32 %v926, %v954
      %957 = vrot.lane.b32.xlu0 %v804, 18
      %v958 = vpop.permute.xlu0 %957
      %959 = vrot.lane.b32.xlu0 %v805, 18
      %v960 = vpop.permute.xlu0 %959
      %vm961 = vcmp.lt.s32.totalorder %v811, 18
      %v962 = vsel %vm961, %v958, %v960
      %v963 = vsel %vm961, %v960, %v958
      %s964 = scalar_lea.vmem %s2, 5
      %v965 = vld [vmem:[%s964] ss:$8 sm:$0x3]
      %v967 = vlaneseq
      %v968 = vshrl.u32 %v967, 7
      %v969 = vsub.s32 0, %v968
      %v970 = vrot.slane %v965, %v969
      %v971 = vlaneseq
      %v972 = vshrl.u32 %v971, 7
      %v973 = vsub.s32 1, %v972
      %v974 = vrot.slane %v965, %v973
      %v977 = vmul.f32 %v963, %v970
      %v978 = vmul.f32 %v962, %v974
      %979 = vset.pattern.permute.xlu0 5
      %980 = vperm.xlu0 %979, %v829
      %v981 = vpop.permute.xlu0 %980
      %v983 = vmul.f32 %v977, %v981
      %v984 = vmul.f32 %v978, %v981
      %v985 = vadd.f32 %v955, %v983
      %v986 = vadd.f32 %v956, %v984
      %987 = vrot.lane.b32.xlu0 %v804, 17
      %v988 = vpop.permute.xlu0 %987
      %989 = vrot.lane.b32.xlu0 %v805, 17
      %v990 = vpop.permute.xlu0 %989
      %vm991 = vcmp.lt.s32.totalorder %v811, 17
      %v992 = vsel %vm991, %v988, %v990
      %v993 = vsel %vm991, %v990, %v988
      %s994 = scalar_lea.vmem %s2, 6
      %v995 = vld [vmem:[%s994] ss:$8 sm:$0x3]
      %v997 = vlaneseq
      %v998 = vshrl.u32 %v997, 7
      %v999 = vsub.s32 0, %v998
      %v1000 = vrot.slane %v995, %v999
      %v1001 = vlaneseq
      %v1002 = vshrl.u32 %v1001, 7
      %v1003 = vsub.s32 1, %v1002
      %v1004 = vrot.slane %v995, %v1003
      %v1007 = vmul.f32 %v993, %v1000
      %v1008 = vmul.f32 %v992, %v1004
      %1009 = vset.pattern.permute.xlu0 6
      %1010 = vperm.xlu0 %1009, %v829
      %v1011 = vpop.permute.xlu0 %1010
      %v1013 = vmul.f32 %v1007, %v1011
      %v1014 = vmul.f32 %v1008, %v1011
      %v1015 = vadd.f32 %v985, %v1013
      %v1016 = vadd.f32 %v986, %v1014
      %1017 = vrot.lane.b32.xlu0 %v804, 16
      %v1018 = vpop.permute.xlu0 %1017
      %1019 = vrot.lane.b32.xlu0 %v805, 16
      %v1020 = vpop.permute.xlu0 %1019
      %vm1021 = vcmp.lt.s32.totalorder %v811, 16
      %v1022 = vsel %vm1021, %v1018, %v1020
      %v1023 = vsel %vm1021, %v1020, %v1018
      %s1024 = scalar_lea.vmem %s2, 7
      %v1025 = vld [vmem:[%s1024] ss:$8 sm:$0x3]
      %v1027 = vlaneseq
      %v1028 = vshrl.u32 %v1027, 7
      %v1029 = vsub.s32 0, %v1028
      %v1030 = vrot.slane %v1025, %v1029
      %v1031 = vlaneseq
      %v1032 = vshrl.u32 %v1031, 7
      %v1033 = vsub.s32 1, %v1032
      %v1034 = vrot.slane %v1025, %v1033
      %v1037 = vmul.f32 %v1023, %v1030
      %v1038 = vmul.f32 %v1022, %v1034
      %1039 = vset.pattern.permute.xlu0 7
      %1040 = vperm.xlu0 %1039, %v829
      %v1041 = vpop.permute.xlu0 %1040
      %v1043 = vmul.f32 %v1037, %v1041
      %v1044 = vmul.f32 %v1038, %v1041
      %v1045 = vadd.f32 %v1015, %v1043
      %v1046 = vadd.f32 %v1016, %v1044
      %1047 = vrot.lane.b32.xlu0 %v804, 15
      %v1048 = vpop.permute.xlu0 %1047
      %1049 = vrot.lane.b32.xlu0 %v805, 15
      %v1050 = vpop.permute.xlu0 %1049
      %vm1051 = vcmp.lt.s32.totalorder %v811, 15
      %v1052 = vsel %vm1051, %v1048, %v1050
      %v1053 = vsel %vm1051, %v1050, %v1048
      %s1054 = scalar_lea.vmem %s2, 16
      %v1055 = vld [vmem:[%s1054] ss:$8 sm:$0x3]
      %v1057 = vlaneseq
      %v1058 = vshrl.u32 %v1057, 7
      %v1059 = vsub.s32 0, %v1058
      %v1060 = vrot.slane %v1055, %v1059
      %v1061 = vlaneseq
      %v1062 = vshrl.u32 %v1061, 7
      %v1063 = vsub.s32 1, %v1062
      %v1064 = vrot.slane %v1055, %v1063
      %v1067 = vmul.f32 %v1053, %v1060
      %v1068 = vmul.f32 %v1052, %v1064
      %1069 = vset.pattern.permute.xlu0 8
      %1070 = vperm.xlu0 %1069, %v829
      %v1071 = vpop.permute.xlu0 %1070
      %v1073 = vmul.f32 %v1067, %v1071
      %v1074 = vmul.f32 %v1068, %v1071
      %v1075 = vadd.f32 %v1045, %v1073
      %v1076 = vadd.f32 %v1046, %v1074
      %1077 = vrot.lane.b32.xlu0 %v804, 14
      %v1078 = vpop.permute.xlu0 %1077
      %1079 = vrot.lane.b32.xlu0 %v805, 14
      %v1080 = vpop.permute.xlu0 %1079
      %vm1081 = vcmp.lt.s32.totalorder %v811, 14
      %v1082 = vsel %vm1081, %v1078, %v1080
      %v1083 = vsel %vm1081, %v1080, %v1078
      %s1084 = scalar_lea.vmem %s2, 17
      %v1085 = vld [vmem:[%s1084] ss:$8 sm:$0x3]
      %v1087 = vlaneseq
      %v1088 = vshrl.u32 %v1087, 7
      %v1089 = vsub.s32 0, %v1088
      %v1090 = vrot.slane %v1085, %v1089
      %v1091 = vlaneseq
      %v1092 = vshrl.u32 %v1091, 7
      %v1093 = vsub.s32 1, %v1092
      %v1094 = vrot.slane %v1085, %v1093
      %v1097 = vmul.f32 %v1083, %v1090
      %v1098 = vmul.f32 %v1082, %v1094
      %1099 = vset.pattern.permute.xlu0 9
      %1100 = vperm.xlu0 %1099, %v829
      %v1101 = vpop.permute.xlu0 %1100
      %v1103 = vmul.f32 %v1097, %v1101
      %v1104 = vmul.f32 %v1098, %v1101
      %v1105 = vadd.f32 %v1075, %v1103
      %v1106 = vadd.f32 %v1076, %v1104
      %1107 = vrot.lane.b32.xlu0 %v804, 2
      %v1108 = vpop.permute.xlu0 %1107
      %1109 = vrot.lane.b32.xlu0 %v805, 2
      %v1110 = vpop.permute.xlu0 %1109
      %vm1111 = vcmp.lt.s32.totalorder %v811, 2
      %v1112 = vsel %vm1111, %v1108, %v1110
      %v1113 = vsel %vm1111, %v1110, %v1108
      %s1114 = scalar_lea.vmem %s2, 18
      %v1115 = vld [vmem:[%s1114] ss:$8 sm:$0x3]
      %v1117 = vlaneseq
      %v1118 = vshrl.u32 %v1117, 7
      %v1119 = vsub.s32 0, %v1118
      %v1120 = vrot.slane %v1115, %v1119
      %v1121 = vlaneseq
      %v1122 = vshrl.u32 %v1121, 7
      %v1123 = vsub.s32 1, %v1122
      %v1124 = vrot.slane %v1115, %v1123
      %v1127 = vmul.f32 %v1113, %v1120
      %v1128 = vmul.f32 %v1112, %v1124
      %1129 = vset.pattern.permute.xlu0 10
      %1130 = vperm.xlu0 %1129, %v829
      %v1131 = vpop.permute.xlu0 %1130
      %v1133 = vmul.f32 %v1127, %v1131
      %v1134 = vmul.f32 %v1128, %v1131
      %v1135 = vadd.f32 %v1105, %v1133
      %v1136 = vadd.f32 %v1106, %v1134
      %1137 = vrot.lane.b32.xlu0 %v804, 1
      %v1138 = vpop.permute.xlu0 %1137
      %1139 = vrot.lane.b32.xlu0 %v805, 1
      %v1140 = vpop.permute.xlu0 %1139
      %vm1141 = vcmp.lt.s32.totalorder %v811, 1
      %v1142 = vsel %vm1141, %v1138, %v1140
      %v1143 = vsel %vm1141, %v1140, %v1138
      %s1144 = scalar_lea.vmem %s2, 19
      %v1145 = vld [vmem:[%s1144] ss:$8 sm:$0x3]
      %v1147 = vlaneseq
      %v1148 = vshrl.u32 %v1147, 7
      %v1149 = vsub.s32 0, %v1148
      %v1150 = vrot.slane %v1145, %v1149
      %v1151 = vlaneseq
      %v1152 = vshrl.u32 %v1151, 7
      %v1153 = vsub.s32 1, %v1152
      %v1154 = vrot.slane %v1145, %v1153
      %v1157 = vmul.f32 %v1143, %v1150
      %v1158 = vmul.f32 %v1142, %v1154
      %1159 = vset.pattern.permute.xlu0 11
      %1160 = vperm.xlu0 %1159, %v829
      %v1161 = vpop.permute.xlu0 %1160
      %v1163 = vmul.f32 %v1157, %v1161
      %v1164 = vmul.f32 %v1158, %v1161
      %v1165 = vadd.f32 %v1135, %v1163
      %v1166 = vadd.f32 %v1136, %v1164
      %1167 = vset.pattern.permute.xlu0 12
      %1168 = vperm.xlu0 %1167, %v829
      %v1169 = vpop.permute.xlu0 %1168
      %v1171 = vmul.f32 %v804, %v1169
      %v1172 = vmul.f32 %v805, %v1169
      %v1173 = vadd.f32 %v1165, %v1171
      %v1174 = vadd.f32 %v1166, %v1172
      %1175 = vrot.lane.b32.xlu0 %v804, 127
      %v1176 = vpop.permute.xlu0 %1175
      %1177 = vrot.lane.b32.xlu0 %v805, 127
      %v1178 = vpop.permute.xlu0 %1177
      %vm1179 = vcmp.lt.s32.totalorder %v811, 127
      %v1180 = vsel %vm1179, %v1176, %v1178
      %v1181 = vsel %vm1179, %v1178, %v1176
      %s1182 = scalar_lea.vmem %s2, 21
      %v1183 = vld [vmem:[%s1182] ss:$8 sm:$0x3]
      %v1185 = vlaneseq
      %v1186 = vshrl.u32 %v1185, 7
      %v1187 = vsub.s32 0, %v1186
      %v1188 = vrot.slane %v1183, %v1187
      %v1189 = vlaneseq
      %v1190 = vshrl.u32 %v1189, 7
      %v1191 = vsub.s32 1, %v1190
      %v1192 = vrot.slane %v1183, %v1191
      %v1195 = vmul.f32 %v1180, %v1188
      %v1196 = vmul.f32 %v1181, %v1192
      %1197 = vset.pattern.permute.xlu0 13
      %1198 = vperm.xlu0 %1197, %v829
      %v1199 = vpop.permute.xlu0 %1198
      %v1201 = vmul.f32 %v1195, %v1199
      %v1202 = vmul.f32 %v1196, %v1199
      %v1203 = vadd.f32 %v1173, %v1201
      %v1204 = vadd.f32 %v1174, %v1202
      %1205 = vrot.lane.b32.xlu0 %v804, 126
      %v1206 = vpop.permute.xlu0 %1205
      %1207 = vrot.lane.b32.xlu0 %v805, 126
      %v1208 = vpop.permute.xlu0 %1207
      %vm1209 = vcmp.lt.s32.totalorder %v811, 126
      %v1210 = vsel %vm1209, %v1206, %v1208
      %v1211 = vsel %vm1209, %v1208, %v1206
      %s1212 = scalar_lea.vmem %s2, 22
      %v1213 = vld [vmem:[%s1212] ss:$8 sm:$0x3]
      %v1215 = vlaneseq
      %v1216 = vshrl.u32 %v1215, 7
      %v1217 = vsub.s32 0, %v1216
      %v1218 = vrot.slane %v1213, %v1217
      %v1219 = vlaneseq
      %v1220 = vshrl.u32 %v1219, 7
      %v1221 = vsub.s32 1, %v1220
      %v1222 = vrot.slane %v1213, %v1221
      %v1225 = vmul.f32 %v1210, %v1218
      %v1226 = vmul.f32 %v1211, %v1222
      %1227 = vset.pattern.permute.xlu0 14
      %1228 = vperm.xlu0 %1227, %v829
      %v1229 = vpop.permute.xlu0 %1228
      %v1231 = vmul.f32 %v1225, %v1229
      %v1232 = vmul.f32 %v1226, %v1229
      %v1233 = vadd.f32 %v1203, %v1231
      %v1234 = vadd.f32 %v1204, %v1232
      %1235 = vrot.lane.b32.xlu0 %v804, 114
      %v1236 = vpop.permute.xlu0 %1235
      %1237 = vrot.lane.b32.xlu0 %v805, 114
      %v1238 = vpop.permute.xlu0 %1237
      %vm1239 = vcmp.lt.s32.totalorder %v811, 114
      %v1240 = vsel %vm1239, %v1236, %v1238
      %v1241 = vsel %vm1239, %v1238, %v1236
      %s1242 = scalar_lea.vmem %s2, 23
      %v1243 = vld [vmem:[%s1242] ss:$8 sm:$0x3]
      %v1245 = vlaneseq
      %v1246 = vshrl.u32 %v1245, 7
      %v1247 = vsub.s32 0, %v1246
      %v1248 = vrot.slane %v1243, %v1247
      %v1249 = vlaneseq
      %v1250 = vshrl.u32 %v1249, 7
      %v1251 = vsub.s32 1, %v1250
      %v1252 = vrot.slane %v1243, %v1251
      %v1255 = vmul.f32 %v1240, %v1248
      %v1256 = vmul.f32 %v1241, %v1252
      %1257 = vset.pattern.permute.xlu0 15
      %1258 = vperm.xlu0 %1257, %v829
      %v1259 = vpop.permute.xlu0 %1258
      %v1261 = vmul.f32 %v1255, %v1259
      %v1262 = vmul.f32 %v1256, %v1259
      %v1263 = vadd.f32 %v1233, %v1261
      %v1264 = vadd.f32 %v1234, %v1262
      %1265 = vrot.lane.b32.xlu0 %v804, 113
      %v1266 = vpop.permute.xlu0 %1265
      %1267 = vrot.lane.b32.xlu0 %v805, 113
      %v1268 = vpop.permute.xlu0 %1267
      %vm1269 = vcmp.lt.s32.totalorder %v811, 113
      %v1270 = vsel %vm1269, %v1266, %v1268
      %v1271 = vsel %vm1269, %v1268, %v1266
      %s1272 = scalar_lea.vmem %s2, 32
      %v1273 = vld [vmem:[%s1272] ss:$8 sm:$0x3]
      %v1275 = vlaneseq
      %v1276 = vshrl.u32 %v1275, 7
      %v1277 = vsub.s32 0, %v1276
      %v1278 = vrot.slane %v1273, %v1277
      %v1279 = vlaneseq
      %v1280 = vshrl.u32 %v1279, 7
      %v1281 = vsub.s32 1, %v1280
      %v1282 = vrot.slane %v1273, %v1281
      %v1285 = vmul.f32 %v1270, %v1278
      %v1286 = vmul.f32 %v1271, %v1282
      %1287 = vset.pattern.permute.xlu0 16
      %1288 = vperm.xlu0 %1287, %v829
      %v1289 = vpop.permute.xlu0 %1288
      %v1291 = vmul.f32 %v1285, %v1289
      %v1292 = vmul.f32 %v1286, %v1289
      %v1293 = vadd.f32 %v1263, %v1291
      %v1294 = vadd.f32 %v1264, %v1292
      %1295 = vrot.lane.b32.xlu0 %v804, 112
      %v1296 = vpop.permute.xlu0 %1295
      %1297 = vrot.lane.b32.xlu0 %v805, 112
      %v1298 = vpop.permute.xlu0 %1297
      %vm1299 = vcmp.lt.s32.totalorder %v811, 112
      %v1300 = vsel %vm1299, %v1296, %v1298
      %v1301 = vsel %vm1299, %v1298, %v1296
      %s1302 = scalar_lea.vmem %s2, 33
      %v1303 = vld [vmem:[%s1302] ss:$8 sm:$0x3]
      %v1305 = vlaneseq
      %v1306 = vshrl.u32 %v1305, 7
      %v1307 = vsub.s32 0, %v1306
      %v1308 = vrot.slane %v1303, %v1307
      %v1309 = vlaneseq
      %v1310 = vshrl.u32 %v1309, 7
      %v1311 = vsub.s32 1, %v1310
      %v1312 = vrot.slane %v1303, %v1311
      %v1315 = vmul.f32 %v1300, %v1308
      %v1316 = vmul.f32 %v1301, %v1312
      %1317 = vset.pattern.permute.xlu0 17
      %1318 = vperm.xlu0 %1317, %v829
      %v1319 = vpop.permute.xlu0 %1318
      %v1321 = vmul.f32 %v1315, %v1319
      %v1322 = vmul.f32 %v1316, %v1319
      %v1323 = vadd.f32 %v1293, %v1321
      %v1324 = vadd.f32 %v1294, %v1322
      %1325 = vrot.lane.b32.xlu0 %v804, 111
      %v1326 = vpop.permute.xlu0 %1325
      %1327 = vrot.lane.b32.xlu0 %v805, 111
      %v1328 = vpop.permute.xlu0 %1327
      %vm1329 = vcmp.lt.s32.totalorder %v811, 111
      %v1330 = vsel %vm1329, %v1326, %v1328
      %v1331 = vsel %vm1329, %v1328, %v1326
      %s1332 = scalar_lea.vmem %s2, 34
      %v1333 = vld [vmem:[%s1332] ss:$8 sm:$0x3]
      %v1335 = vlaneseq
      %v1336 = vshrl.u32 %v1335, 7
      %v1337 = vsub.s32 0, %v1336
      %v1338 = vrot.slane %v1333, %v1337
      %v1339 = vlaneseq
      %v1340 = vshrl.u32 %v1339, 7
      %v1341 = vsub.s32 1, %v1340
      %v1342 = vrot.slane %v1333, %v1341
      %v1345 = vmul.f32 %v1330, %v1338
      %v1346 = vmul.f32 %v1331, %v1342
      %1347 = vset.pattern.permute.xlu0 18
      %1348 = vperm.xlu0 %1347, %v829
      %v1349 = vpop.permute.xlu0 %1348
      %v1351 = vmul.f32 %v1345, %v1349
      %v1352 = vmul.f32 %v1346, %v1349
      %v1353 = vadd.f32 %v1323, %v1351
      %v1354 = vadd.f32 %v1324, %v1352
      %1355 = vrot.lane.b32.xlu0 %v804, 110
      %v1356 = vpop.permute.xlu0 %1355
      %1357 = vrot.lane.b32.xlu0 %v805, 110
      %v1358 = vpop.permute.xlu0 %1357
      %vm1359 = vcmp.lt.s32.totalorder %v811, 110
      %v1360 = vsel %vm1359, %v1356, %v1358
      %v1361 = vsel %vm1359, %v1358, %v1356
      %s1362 = scalar_lea.vmem %s2, 35
      %v1363 = vld [vmem:[%s1362] ss:$8 sm:$0x3]
      %v1365 = vlaneseq
      %v1366 = vshrl.u32 %v1365, 7
      %v1367 = vsub.s32 0, %v1366
      %v1368 = vrot.slane %v1363, %v1367
      %v1369 = vlaneseq
      %v1370 = vshrl.u32 %v1369, 7
      %v1371 = vsub.s32 1, %v1370
      %v1372 = vrot.slane %v1363, %v1371
      %v1375 = vmul.f32 %v1360, %v1368
      %v1376 = vmul.f32 %v1361, %v1372
      %1377 = vset.pattern.permute.xlu0 19
      %1378 = vperm.xlu0 %1377, %v829
      %v1379 = vpop.permute.xlu0 %1378
      %v1381 = vmul.f32 %v1375, %v1379
      %v1382 = vmul.f32 %v1376, %v1379
      %v1383 = vadd.f32 %v1353, %v1381
      %v1384 = vadd.f32 %v1354, %v1382
      %1385 = vrot.lane.b32.xlu0 %v804, 98
      %v1386 = vpop.permute.xlu0 %1385
      %1387 = vrot.lane.b32.xlu0 %v805, 98
      %v1388 = vpop.permute.xlu0 %1387
      %vm1389 = vcmp.lt.s32.totalorder %v811, 98
      %v1390 = vsel %vm1389, %v1386, %v1388
      %v1391 = vsel %vm1389, %v1388, %v1386
      %s1392 = scalar_lea.vmem %s2, 36
      %v1393 = vld [vmem:[%s1392] ss:$8 sm:$0x3]
      %v1395 = vlaneseq
      %v1396 = vshrl.u32 %v1395, 7
      %v1397 = vsub.s32 0, %v1396
      %v1398 = vrot.slane %v1393, %v1397
      %v1399 = vlaneseq
      %v1400 = vshrl.u32 %v1399, 7
      %v1401 = vsub.s32 1, %v1400
      %v1402 = vrot.slane %v1393, %v1401
      %v1405 = vmul.f32 %v1390, %v1398
      %v1406 = vmul.f32 %v1391, %v1402
      %1407 = vset.pattern.permute.xlu0 20
      %1408 = vperm.xlu0 %1407, %v829
      %v1409 = vpop.permute.xlu0 %1408
      %v1411 = vmul.f32 %v1405, %v1409
      %v1412 = vmul.f32 %v1406, %v1409
      %v1413 = vadd.f32 %v1383, %v1411
      %v1414 = vadd.f32 %v1384, %v1412
      %1415 = vrot.lane.b32.xlu0 %v804, 97
      %v1416 = vpop.permute.xlu0 %1415
      %1417 = vrot.lane.b32.xlu0 %v805, 97
      %v1418 = vpop.permute.xlu0 %1417
      %vm1419 = vcmp.lt.s32.totalorder %v811, 97
      %v1420 = vsel %vm1419, %v1416, %v1418
      %v1421 = vsel %vm1419, %v1418, %v1416
      %s1422 = scalar_lea.vmem %s2, 37
      %v1423 = vld [vmem:[%s1422] ss:$8 sm:$0x3]
      %v1425 = vlaneseq
      %v1426 = vshrl.u32 %v1425, 7
      %v1427 = vsub.s32 0, %v1426
      %v1428 = vrot.slane %v1423, %v1427
      %v1429 = vlaneseq
      %v1430 = vshrl.u32 %v1429, 7
      %v1431 = vsub.s32 1, %v1430
      %v1432 = vrot.slane %v1423, %v1431
      %v1435 = vmul.f32 %v1420, %v1428
      %v1436 = vmul.f32 %v1421, %v1432
      %1437 = vset.pattern.permute.xlu0 21
      %1438 = vperm.xlu0 %1437, %v829
      %v1439 = vpop.permute.xlu0 %1438
      %v1441 = vmul.f32 %v1435, %v1439
      %v1442 = vmul.f32 %v1436, %v1439
      %v1443 = vadd.f32 %v1413, %v1441
      %v1444 = vadd.f32 %v1414, %v1442
      %1445 = vrot.lane.b32.xlu0 %v804, 96
      %v1446 = vpop.permute.xlu0 %1445
      %1447 = vrot.lane.b32.xlu0 %v805, 96
      %v1448 = vpop.permute.xlu0 %1447
      %vm1449 = vcmp.lt.s32.totalorder %v811, 96
      %v1450 = vsel %vm1449, %v1446, %v1448
      %v1451 = vsel %vm1449, %v1448, %v1446
      %s1452 = scalar_lea.vmem %s2, 38
      %v1453 = vld [vmem:[%s1452] ss:$8 sm:$0x3]
      %v1455 = vlaneseq
      %v1456 = vshrl.u32 %v1455, 7
      %v1457 = vsub.s32 0, %v1456
      %v1458 = vrot.slane %v1453, %v1457
      %v1459 = vlaneseq
      %v1460 = vshrl.u32 %v1459, 7
      %v1461 = vsub.s32 1, %v1460
      %v1462 = vrot.slane %v1453, %v1461
      %v1465 = vmul.f32 %v1450, %v1458
      %v1466 = vmul.f32 %v1451, %v1462
      %1467 = vset.pattern.permute.xlu0 22
      %1468 = vperm.xlu0 %1467, %v829
      %v1469 = vpop.permute.xlu0 %1468
      %v1471 = vmul.f32 %v1465, %v1469
      %v1472 = vmul.f32 %v1466, %v1469
      %v1473 = vadd.f32 %v1443, %v1471
      %v1474 = vadd.f32 %v1444, %v1472
      %1475 = vrot.lane.b32.xlu0 %v804, 95
      %v1476 = vpop.permute.xlu0 %1475
      %1477 = vrot.lane.b32.xlu0 %v805, 95
      %v1478 = vpop.permute.xlu0 %1477
      %vm1479 = vcmp.lt.s32.totalorder %v811, 95
      %v1480 = vsel %vm1479, %v1476, %v1478
      %v1481 = vsel %vm1479, %v1478, %v1476
      %s1482 = scalar_lea.vmem %s2, 39
      %v1483 = vld [vmem:[%s1482] ss:$8 sm:$0x3]
      %v1485 = vlaneseq
      %v1486 = vshrl.u32 %v1485, 7
      %v1487 = vsub.s32 0, %v1486
      %v1488 = vrot.slane %v1483, %v1487
      %v1489 = vlaneseq
      %v1490 = vshrl.u32 %v1489, 7
      %v1491 = vsub.s32 1, %v1490
      %v1492 = vrot.slane %v1483, %v1491
      %v1495 = vmul.f32 %v1480, %v1488
      %v1496 = vmul.f32 %v1481, %v1492
      %1497 = vset.pattern.permute.xlu0 23
      %1498 = vperm.xlu0 %1497, %v829
      %v1499 = vpop.permute.xlu0 %1498
      %v1501 = vmul.f32 %v1495, %v1499
      %v1502 = vmul.f32 %v1496, %v1499
      %v1503 = vadd.f32 %v1473, %v1501
      %v1504 = vadd.f32 %v1474, %v1502
      %1505 = vrot.lane.b32.xlu0 %v804, 94
      %v1506 = vpop.permute.xlu0 %1505
      %1507 = vrot.lane.b32.xlu0 %v805, 94
      %v1508 = vpop.permute.xlu0 %1507
      %vm1509 = vcmp.lt.s32.totalorder %v811, 94
      %v1510 = vsel %vm1509, %v1506, %v1508
      %v1511 = vsel %vm1509, %v1508, %v1506
      %s1512 = scalar_lea.vmem %s2, 48
      %v1513 = vld [vmem:[%s1512] ss:$8 sm:$0x3]
      %v1515 = vlaneseq
      %v1516 = vshrl.u32 %v1515, 7
      %v1517 = vsub.s32 0, %v1516
      %v1518 = vrot.slane %v1513, %v1517
      %v1519 = vlaneseq
      %v1520 = vshrl.u32 %v1519, 7
      %v1521 = vsub.s32 1, %v1520
      %v1522 = vrot.slane %v1513, %v1521
      %v1525 = vmul.f32 %v1510, %v1518
      %v1526 = vmul.f32 %v1511, %v1522
      %1527 = vset.pattern.permute.xlu0 24
      %1528 = vperm.xlu0 %1527, %v829
      %v1529 = vpop.permute.xlu0 %1528
      %v1531 = vmul.f32 %v1525, %v1529
      %v1532 = vmul.f32 %v1526, %v1529
      %v1533 = vadd.f32 %v1503, %v1531
      %v1534 = vadd.f32 %v1504, %v1532
      %v1535 = vld [vmem:[%s8] sm:$0xff]
      %v1536 = vld [vmem:[%s9] sm:$0xff]
      %1538 = vset.pattern.permute.xlu0 0
      %1539 = vperm.xlu0 %1538, %v1536
      %v1540 = vpop.permute.xlu0 %1539
      %vm1542 = vcmask 64512
      %v1544 = vsel %vm1542, %v1535, 0
      %1546 = vmatprep.subr.mxu0 %v1534
      %1547 = vmatpush1.msra.mxu0 %v1533
      %1548 = vmatprep.subr.mxu0 0.0
      %1549 = vmatpush1.msra.mxu0 0.0
      %1550 = vmatprep.subr.mxu0 0.0
      %1551 = vmatpush1.msra.mxu0 0.0
      %1552 = vmatprep.subr.mxu0 0.0
      %1553 = vmatpush1.msra.mxu0 0.0
      %1554 = vmatprep.subr.mxu0 0.0
      %1555 = vmatpush1.msra.mxu0 0.0
      %1556 = vmatprep.subr.mxu0 0.0
      %1557 = vmatpush1.msra.mxu0 0.0
      %1558 = vmatprep.subr.mxu0 0.0
      %1559 = vmatpush1.msra.mxu0 0.0
      %1560 = vmatprep.subr.mxu0 0.0
      %1561 = vmatpush1.msra.mxu0 0.0
      %1562 = vmatprep.subr.mxu0 0.0
      %1563 = vmatpush1.msra.mxu0 0.0
      %1564 = vmatprep.subr.mxu0 0.0
      %1565 = vmatpush1.msra.mxu0 0.0
      %1566 = vmatprep.subr.mxu0 0.0
      %1567 = vmatpush1.msra.mxu0 0.0
      %1568 = vmatprep.subr.mxu0 0.0
      %1569 = vmatpush1.msra.mxu0 0.0
      %1570 = vmatprep.subr.mxu0 0.0
      %1571 = vmatpush1.msra.mxu0 0.0
      %1572 = vmatprep.subr.mxu0 0.0
      %1573 = vmatpush1.msra.mxu0 0.0
      %1574 = vmatprep.subr.mxu0 0.0
      %1575 = vmatpush1.msra.mxu0 0.0
      %1576 = vmatprep.subr.mxu0 0.0
      %1577 = vmatpush1.msra.mxu0 0.0
      %1578 = vmatprep.subr.mxu0 0.0
      %1579 = vmatpush1.msra.mxu0 0.0
      %1580 = vmatprep.subr.mxu0 0.0
      %1581 = vmatpush1.msra.mxu0 0.0
      %1582 = vmatprep.subr.mxu0 0.0
      %1583 = vmatpush1.msra.mxu0 0.0
      %1584 = vmatprep.subr.mxu0 0.0
      %1585 = vmatpush1.msra.mxu0 0.0
      %1586 = vmatprep.subr.mxu0 0.0
      %1587 = vmatpush1.msra.mxu0 0.0
      %1588 = vmatprep.subr.mxu0 0.0
      %1589 = vmatpush1.msra.mxu0 0.0
      %1590 = vmatprep.subr.mxu0 0.0
      %1591 = vmatpush1.msra.mxu0 0.0
      %1592 = vmatprep.subr.mxu0 0.0
      %1593 = vmatpush1.msra.mxu0 0.0
      %1594 = vmatprep.subr.mxu0 0.0
      %1595 = vmatpush1.msra.mxu0 0.0
      %1596 = vmatprep.subr.mxu0 0.0
      %1597 = vmatpush1.msra.mxu0 0.0
      %1598 = vmatprep.subr.mxu0 0.0
      %1599 = vmatpush1.msra.mxu0 0.0
      %1600 = vmatprep.subr.mxu0 0.0
      %1601 = vmatpush1.msra.mxu0 0.0
      %1602 = vmatprep.subr.mxu0 0.0
      %1603 = vmatpush1.msra.mxu0 0.0
      %1604 = vmatprep.subr.mxu0 0.0
      %1605 = vmatpush1.msra.mxu0 0.0
      %1606 = vmatprep.subr.mxu0 0.0
      %1607 = vmatpush1.msra.mxu0 0.0
      %1608 = vmatprep.subr.mxu0 0.0
      %1609 = vmatpush1.msra.mxu0 0.0
      %1610 = vmatprep.mubr.f32.mxu0 0.0
      %1611 = vmatmul.mubr.f32.gmra.mrb[0].mxu0 %v1544
      %v1612 = vpop.f32.mrb[0].mxu0
      %v1613 = vadd.f32 %v1540, %v1612
      %v1614 = vpop.f32.mrb[0].mxu0
      %v1615 = vadd.f32 %v1540, %v1614
      %1616 = vdwg.mxu0
      %v1617 = vmax.f32 %v1613, 0.0
      %v1618 = vmax.f32 %v1615, 0.0
      %1619 = vrot.lane.b32.xlu0 %v1617, 34
      %v1620 = vpop.permute.xlu0 %1619
      %1621 = vrot.lane.b32.xlu0 %v1618, 34
      %v1622 = vpop.permute.xlu0 %1621
      %v1623 = vsel %vm812, %v1620, %v1622
      %v1624 = vsel %vm812, %v1622, %v1620
      %v1625 = vmul.f32 %v1624, %v820
      %v1626 = vmul.f32 %v1623, %v824
      %v1627 = vld [vmem:[%s10] sm:$0xff]
      %1629 = vset.pattern.permute.xlu0 0
      %1630 = vperm.xlu0 %1629, %v1627
      %v1631 = vpop.permute.xlu0 %1630
      %v1633 = vmul.f32 %v1625, %v1631
      %v1634 = vmul.f32 %v1626, %v1631
      %1635 = vrot.lane.b32.xlu0 %v1617, 33
      %v1636 = vpop.permute.xlu0 %1635
      %1637 = vrot.lane.b32.xlu0 %v1618, 33
      %v1638 = vpop.permute.xlu0 %1637
      %v1639 = vsel %vm841, %v1636, %v1638
      %v1640 = vsel %vm841, %v1638, %v1636
      %v1641 = vmul.f32 %v1640, %v850
      %v1642 = vmul.f32 %v1639, %v854
      %1643 = vset.pattern.permute.xlu0 1
      %1644 = vperm.xlu0 %1643, %v1627
      %v1645 = vpop.permute.xlu0 %1644
      %v1647 = vmul.f32 %v1641, %v1645
      %v1648 = vmul.f32 %v1642, %v1645
      %v1649 = vadd.f32 %v1633, %v1647
      %v1650 = vadd.f32 %v1634, %v1648
      %1651 = vrot.lane.b32.xlu0 %v1617, 32
      %v1652 = vpop.permute.xlu0 %1651
      %1653 = vrot.lane.b32.xlu0 %v1618, 32
      %v1654 = vpop.permute.xlu0 %1653
      %v1655 = vsel %vm871, %v1652, %v1654
      %v1656 = vsel %vm871, %v1654, %v1652
      %v1657 = vmul.f32 %v1656, %v880
      %v1658 = vmul.f32 %v1655, %v884
      %1659 = vset.pattern.permute.xlu0 2
      %1660 = vperm.xlu0 %1659, %v1627
      %v1661 = vpop.permute.xlu0 %1660
      %v1663 = vmul.f32 %v1657, %v1661
      %v1664 = vmul.f32 %v1658, %v1661
      %v1665 = vadd.f32 %v1649, %v1663
      %v1666 = vadd.f32 %v1650, %v1664
      %1667 = vrot.lane.b32.xlu0 %v1617, 31
      %v1668 = vpop.permute.xlu0 %1667
      %1669 = vrot.lane.b32.xlu0 %v1618, 31
      %v1670 = vpop.permute.xlu0 %1669
      %v1671 = vsel %vm901, %v1668, %v1670
      %v1672 = vsel %vm901, %v1670, %v1668
      %v1673 = vmul.f32 %v1672, %v910
      %v1674 = vmul.f32 %v1671, %v914
      %1675 = vset.pattern.permute.xlu0 3
      %1676 = vperm.xlu0 %1675, %v1627
      %v1677 = vpop.permute.xlu0 %1676
      %v1679 = vmul.f32 %v1673, %v1677
      %v1680 = vmul.f32 %v1674, %v1677
      %v1681 = vadd.f32 %v1665, %v1679
      %v1682 = vadd.f32 %v1666, %v1680
      %1683 = vrot.lane.b32.xlu0 %v1617, 30
      %v1684 = vpop.permute.xlu0 %1683
      %1685 = vrot.lane.b32.xlu0 %v1618, 30
      %v1686 = vpop.permute.xlu0 %1685
      %v1687 = vsel %vm931, %v1684, %v1686
      %v1688 = vsel %vm931, %v1686, %v1684
      %v1689 = vmul.f32 %v1688, %v940
      %v1690 = vmul.f32 %v1687, %v944
      %1691 = vset.pattern.permute.xlu0 4
      %1692 = vperm.xlu0 %1691, %v1627
      %v1693 = vpop.permute.xlu0 %1692
      %v1695 = vmul.f32 %v1689, %v1693
      %v1696 = vmul.f32 %v1690, %v1693
      %v1697 = vadd.f32 %v1681, %v1695
      %v1698 = vadd.f32 %v1682, %v1696
      %1699 = vrot.lane.b32.xlu0 %v1617, 18
      %v1700 = vpop.permute.xlu0 %1699
      %1701 = vrot.lane.b32.xlu0 %v1618, 18
      %v1702 = vpop.permute.xlu0 %1701
      %v1703 = vsel %vm961, %v1700, %v1702
      %v1704 = vsel %vm961, %v1702, %v1700
      %v1705 = vmul.f32 %v1704, %v970
      %v1706 = vmul.f32 %v1703, %v974
      %1707 = vset.pattern.permute.xlu0 5
      %1708 = vperm.xlu0 %1707, %v1627
      %v1709 = vpop.permute.xlu0 %1708
      %v1711 = vmul.f32 %v1705, %v1709
      %v1712 = vmul.f32 %v1706, %v1709
      %v1713 = vadd.f32 %v1697, %v1711
      %v1714 = vadd.f32 %v1698, %v1712
      %1715 = vrot.lane.b32.xlu0 %v1617, 17
      %v1716 = vpop.permute.xlu0 %1715
      %1717 = vrot.lane.b32.xlu0 %v1618, 17
      %v1718 = vpop.permute.xlu0 %1717
      %v1719 = vsel %vm991, %v1716, %v1718
      %v1720 = vsel %vm991, %v1718, %v1716
      %v1721 = vmul.f32 %v1720, %v1000
      %v1722 = vmul.f32 %v1719, %v1004
      %1723 = vset.pattern.permute.xlu0 6
      %1724 = vperm.xlu0 %1723, %v1627
      %v1725 = vpop.permute.xlu0 %1724
      %v1727 = vmul.f32 %v1721, %v1725
      %v1728 = vmul.f32 %v1722, %v1725
      %v1729 = vadd.f32 %v1713, %v1727
      %v1730 = vadd.f32 %v1714, %v1728
      %1731 = vrot.lane.b32.xlu0 %v1617, 16
      %v1732 = vpop.permute.xlu0 %1731
      %1733 = vrot.lane.b32.xlu0 %v1618, 16
      %v1734 = vpop.permute.xlu0 %1733
      %v1735 = vsel %vm1021, %v1732, %v1734
      %v1736 = vsel %vm1021, %v1734, %v1732
      %v1737 = vmul.f32 %v1736, %v1030
      %v1738 = vmul.f32 %v1735, %v1034
      %1739 = vset.pattern.permute.xlu0 7
      %1740 = vperm.xlu0 %1739, %v1627
      %v1741 = vpop.permute.xlu0 %1740
      %v1743 = vmul.f32 %v1737, %v1741
      %v1744 = vmul.f32 %v1738, %v1741
      %v1745 = vadd.f32 %v1729, %v1743
      %v1746 = vadd.f32 %v1730, %v1744
      %1747 = vrot.lane.b32.xlu0 %v1617, 15
      %v1748 = vpop.permute.xlu0 %1747
      %1749 = vrot.lane.b32.xlu0 %v1618, 15
      %v1750 = vpop.permute.xlu0 %1749
      %v1751 = vsel %vm1051, %v1748, %v1750
      %v1752 = vsel %vm1051, %v1750, %v1748
      %v1753 = vmul.f32 %v1752, %v1060
      %v1754 = vmul.f32 %v1751, %v1064
      %1755 = vset.pattern.permute.xlu0 8
      %1756 = vperm.xlu0 %1755, %v1627
      %v1757 = vpop.permute.xlu0 %1756
      %v1759 = vmul.f32 %v1753, %v1757
      %v1760 = vmul.f32 %v1754, %v1757
      %v1761 = vadd.f32 %v1745, %v1759
      %v1762 = vadd.f32 %v1746, %v1760
      %1763 = vrot.lane.b32.xlu0 %v1617, 14
      %v1764 = vpop.permute.xlu0 %1763
      %1765 = vrot.lane.b32.xlu0 %v1618, 14
      %v1766 = vpop.permute.xlu0 %1765
      %v1767 = vsel %vm1081, %v1764, %v1766
      %v1768 = vsel %vm1081, %v1766, %v1764
      %v1769 = vmul.f32 %v1768, %v1090
      %v1770 = vmul.f32 %v1767, %v1094
      %1771 = vset.pattern.permute.xlu0 9
      %1772 = vperm.xlu0 %1771, %v1627
      %v1773 = vpop.permute.xlu0 %1772
      %v1775 = vmul.f32 %v1769, %v1773
      %v1776 = vmul.f32 %v1770, %v1773
      %v1777 = vadd.f32 %v1761, %v1775
      %v1778 = vadd.f32 %v1762, %v1776
      %1779 = vrot.lane.b32.xlu0 %v1617, 2
      %v1780 = vpop.permute.xlu0 %1779
      %1781 = vrot.lane.b32.xlu0 %v1618, 2
      %v1782 = vpop.permute.xlu0 %1781
      %v1783 = vsel %vm1111, %v1780, %v1782
      %v1784 = vsel %vm1111, %v1782, %v1780
      %v1785 = vmul.f32 %v1784, %v1120
      %v1786 = vmul.f32 %v1783, %v1124
      %1787 = vset.pattern.permute.xlu0 10
      %1788 = vperm.xlu0 %1787, %v1627
      %v1789 = vpop.permute.xlu0 %1788
      %v1791 = vmul.f32 %v1785, %v1789
      %v1792 = vmul.f32 %v1786, %v1789
      %v1793 = vadd.f32 %v1777, %v1791
      %v1794 = vadd.f32 %v1778, %v1792
      %1795 = vrot.lane.b32.xlu0 %v1617, 1
      %v1796 = vpop.permute.xlu0 %1795
      %1797 = vrot.lane.b32.xlu0 %v1618, 1
      %v1798 = vpop.permute.xlu0 %1797
      %v1799 = vsel %vm1141, %v1796, %v1798
      %v1800 = vsel %vm1141, %v1798, %v1796
      %v1801 = vmul.f32 %v1800, %v1150
      %v1802 = vmul.f32 %v1799, %v1154
      %1803 = vset.pattern.permute.xlu0 11
      %1804 = vperm.xlu0 %1803, %v1627
      %v1805 = vpop.permute.xlu0 %1804
      %v1807 = vmul.f32 %v1801, %v1805
      %v1808 = vmul.f32 %v1802, %v1805
      %v1809 = vadd.f32 %v1793, %v1807
      %v1810 = vadd.f32 %v1794, %v1808
      %1811 = vset.pattern.permute.xlu0 12
      %1812 = vperm.xlu0 %1811, %v1627
      %v1813 = vpop.permute.xlu0 %1812
      %v1815 = vmul.f32 %v1617, %v1813
      %v1816 = vmul.f32 %v1618, %v1813
      %v1817 = vadd.f32 %v1809, %v1815
      %v1818 = vadd.f32 %v1810, %v1816
      %1819 = vrot.lane.b32.xlu0 %v1617, 127
      %v1820 = vpop.permute.xlu0 %1819
      %1821 = vrot.lane.b32.xlu0 %v1618, 127
      %v1822 = vpop.permute.xlu0 %1821
      %v1823 = vsel %vm1179, %v1820, %v1822
      %v1824 = vsel %vm1179, %v1822, %v1820
      %v1825 = vmul.f32 %v1823, %v1188
      %v1826 = vmul.f32 %v1824, %v1192
      %1827 = vset.pattern.permute.xlu0 13
      %1828 = vperm.xlu0 %1827, %v1627
      %v1829 = vpop.permute.xlu0 %1828
      %v1831 = vmul.f32 %v1825, %v1829
      %v1832 = vmul.f32 %v1826, %v1829
      %v1833 = vadd.f32 %v1817, %v1831
      %v1834 = vadd.f32 %v1818, %v1832
      %1835 = vrot.lane.b32.xlu0 %v1617, 126
      %v1836 = vpop.permute.xlu0 %1835
      %1837 = vrot.lane.b32.xlu0 %v1618, 126
      %v1838 = vpop.permute.xlu0 %1837
      %v1839 = vsel %vm1209, %v1836, %v1838
      %v1840 = vsel %vm1209, %v1838, %v1836
      %v1841 = vmul.f32 %v1839, %v1218
      %v1842 = vmul.f32 %v1840, %v1222
      %1843 = vset.pattern.permute.xlu0 14
      %1844 = vperm.xlu0 %1843, %v1627
      %v1845 = vpop.permute.xlu0 %1844
      %v1847 = vmul.f32 %v1841, %v1845
      %v1848 = vmul.f32 %v1842, %v1845
      %v1849 = vadd.f32 %v1833, %v1847
      %v1850 = vadd.f32 %v1834, %v1848
      %1851 = vrot.lane.b32.xlu0 %v1617, 114
      %v1852 = vpop.permute.xlu0 %1851
      %1853 = vrot.lane.b32.xlu0 %v1618, 114
      %v1854 = vpop.permute.xlu0 %1853
      %v1855 = vsel %vm1239, %v1852, %v1854
      %v1856 = vsel %vm1239, %v1854, %v1852
      %v1857 = vmul.f32 %v1855, %v1248
      %v1858 = vmul.f32 %v1856, %v1252
      %1859 = vset.pattern.permute.xlu0 15
      %1860 = vperm.xlu0 %1859, %v1627
      %v1861 = vpop.permute.xlu0 %1860
      %v1863 = vmul.f32 %v1857, %v1861
      %v1864 = vmul.f32 %v1858, %v1861
      %v1865 = vadd.f32 %v1849, %v1863
      %v1866 = vadd.f32 %v1850, %v1864
      %1867 = vrot.lane.b32.xlu0 %v1617, 113
      %v1868 = vpop.permute.xlu0 %1867
      %1869 = vrot.lane.b32.xlu0 %v1618, 113
      %v1870 = vpop.permute.xlu0 %1869
      %v1871 = vsel %vm1269, %v1868, %v1870
      %v1872 = vsel %vm1269, %v1870, %v1868
      %v1873 = vmul.f32 %v1871, %v1278
      %v1874 = vmul.f32 %v1872, %v1282
      %1875 = vset.pattern.permute.xlu0 16
      %1876 = vperm.xlu0 %1875, %v1627
      %v1877 = vpop.permute.xlu0 %1876
      %v1879 = vmul.f32 %v1873, %v1877
      %v1880 = vmul.f32 %v1874, %v1877
      %v1881 = vadd.f32 %v1865, %v1879
      %v1882 = vadd.f32 %v1866, %v1880
      %1883 = vrot.lane.b32.xlu0 %v1617, 112
      %v1884 = vpop.permute.xlu0 %1883
      %1885 = vrot.lane.b32.xlu0 %v1618, 112
      %v1886 = vpop.permute.xlu0 %1885
      %v1887 = vsel %vm1299, %v1884, %v1886
      %v1888 = vsel %vm1299, %v1886, %v1884
      %v1889 = vmul.f32 %v1887, %v1308
      %v1890 = vmul.f32 %v1888, %v1312
      %1891 = vset.pattern.permute.xlu0 17
      %1892 = vperm.xlu0 %1891, %v1627
      %v1893 = vpop.permute.xlu0 %1892
      %v1895 = vmul.f32 %v1889, %v1893
      %v1896 = vmul.f32 %v1890, %v1893
      %v1897 = vadd.f32 %v1881, %v1895
      %v1898 = vadd.f32 %v1882, %v1896
      %1899 = vrot.lane.b32.xlu0 %v1617, 111
      %v1900 = vpop.permute.xlu0 %1899
      %1901 = vrot.lane.b32.xlu0 %v1618, 111
      %v1902 = vpop.permute.xlu0 %1901
      %v1903 = vsel %vm1329, %v1900, %v1902
      %v1904 = vsel %vm1329, %v1902, %v1900
      %v1905 = vmul.f32 %v1903, %v1338
      %v1906 = vmul.f32 %v1904, %v1342
      %1907 = vset.pattern.permute.xlu0 18
      %1908 = vperm.xlu0 %1907, %v1627
      %v1909 = vpop.permute.xlu0 %1908
      %v1911 = vmul.f32 %v1905, %v1909
      %v1912 = vmul.f32 %v1906, %v1909
      %v1913 = vadd.f32 %v1897, %v1911
      %v1914 = vadd.f32 %v1898, %v1912
      %1915 = vrot.lane.b32.xlu0 %v1617, 110
      %v1916 = vpop.permute.xlu0 %1915
      %1917 = vrot.lane.b32.xlu0 %v1618, 110
      %v1918 = vpop.permute.xlu0 %1917
      %v1919 = vsel %vm1359, %v1916, %v1918
      %v1920 = vsel %vm1359, %v1918, %v1916
      %v1921 = vmul.f32 %v1919, %v1368
      %v1922 = vmul.f32 %v1920, %v1372
      %1923 = vset.pattern.permute.xlu0 19
      %1924 = vperm.xlu0 %1923, %v1627
      %v1925 = vpop.permute.xlu0 %1924
      %v1927 = vmul.f32 %v1921, %v1925
      %v1928 = vmul.f32 %v1922, %v1925
      %v1929 = vadd.f32 %v1913, %v1927
      %v1930 = vadd.f32 %v1914, %v1928
      %1931 = vrot.lane.b32.xlu0 %v1617, 98
      %v1932 = vpop.permute.xlu0 %1931
      %1933 = vrot.lane.b32.xlu0 %v1618, 98
      %v1934 = vpop.permute.xlu0 %1933
      %v1935 = vsel %vm1389, %v1932, %v1934
      %v1936 = vsel %vm1389, %v1934, %v1932
      %v1937 = vmul.f32 %v1935, %v1398
      %v1938 = vmul.f32 %v1936, %v1402
      %1939 = vset.pattern.permute.xlu0 20
      %1940 = vperm.xlu0 %1939, %v1627
      %v1941 = vpop.permute.xlu0 %1940
      %v1943 = vmul.f32 %v1937, %v1941
      %v1944 = vmul.f32 %v1938, %v1941
      %v1945 = vadd.f32 %v1929, %v1943
      %v1946 = vadd.f32 %v1930, %v1944
      %1947 = vrot.lane.b32.xlu0 %v1617, 97
      %v1948 = vpop.permute.xlu0 %1947
      %1949 = vrot.lane.b32.xlu0 %v1618, 97
      %v1950 = vpop.permute.xlu0 %1949
      %v1951 = vsel %vm1419, %v1948, %v1950
      %v1952 = vsel %vm1419, %v1950, %v1948
      %v1953 = vmul.f32 %v1951, %v1428
      %v1954 = vmul.f32 %v1952, %v1432
      %1955 = vset.pattern.permute.xlu0 21
      %1956 = vperm.xlu0 %1955, %v1627
      %v1957 = vpop.permute.xlu0 %1956
      %v1959 = vmul.f32 %v1953, %v1957
      %v1960 = vmul.f32 %v1954, %v1957
      %v1961 = vadd.f32 %v1945, %v1959
      %v1962 = vadd.f32 %v1946, %v1960
      %1963 = vrot.lane.b32.xlu0 %v1617, 96
      %v1964 = vpop.permute.xlu0 %1963
      %1965 = vrot.lane.b32.xlu0 %v1618, 96
      %v1966 = vpop.permute.xlu0 %1965
      %v1967 = vsel %vm1449, %v1964, %v1966
      %v1968 = vsel %vm1449, %v1966, %v1964
      %v1969 = vmul.f32 %v1967, %v1458
      %v1970 = vmul.f32 %v1968, %v1462
      %1971 = vset.pattern.permute.xlu0 22
      %1972 = vperm.xlu0 %1971, %v1627
      %v1973 = vpop.permute.xlu0 %1972
      %v1975 = vmul.f32 %v1969, %v1973
      %v1976 = vmul.f32 %v1970, %v1973
      %v1977 = vadd.f32 %v1961, %v1975
      %v1978 = vadd.f32 %v1962, %v1976
      %1979 = vrot.lane.b32.xlu0 %v1617, 95
      %v1980 = vpop.permute.xlu0 %1979
      %1981 = vrot.lane.b32.xlu0 %v1618, 95
      %v1982 = vpop.permute.xlu0 %1981
      %v1983 = vsel %vm1479, %v1980, %v1982
      %v1984 = vsel %vm1479, %v1982, %v1980
      %v1985 = vmul.f32 %v1983, %v1488
      %v1986 = vmul.f32 %v1984, %v1492
      %1987 = vset.pattern.permute.xlu0 23
      %1988 = vperm.xlu0 %1987, %v1627
      %v1989 = vpop.permute.xlu0 %1988
      %v1991 = vmul.f32 %v1985, %v1989
      %v1992 = vmul.f32 %v1986, %v1989
      %v1993 = vadd.f32 %v1977, %v1991
      %v1994 = vadd.f32 %v1978, %v1992
      %1995 = vrot.lane.b32.xlu0 %v1617, 94
      %v1996 = vpop.permute.xlu0 %1995
      %1997 = vrot.lane.b32.xlu0 %v1618, 94
      %v1998 = vpop.permute.xlu0 %1997
      %v1999 = vsel %vm1509, %v1996, %v1998
      %v2000 = vsel %vm1509, %v1998, %v1996
      %v2001 = vmul.f32 %v1999, %v1518
      %v2002 = vmul.f32 %v2000, %v1522
      %2003 = vset.pattern.permute.xlu0 24
      %2004 = vperm.xlu0 %2003, %v1627
      %v2005 = vpop.permute.xlu0 %2004
      %v2007 = vmul.f32 %v2001, %v2005
      %v2008 = vmul.f32 %v2002, %v2005
      %v2009 = vadd.f32 %v1993, %v2007
      %v2010 = vadd.f32 %v1994, %v2008
      %v2011 = vld [vmem:[%s11] sm:$0xff]
      %v2012 = vld [vmem:[%s12] sm:$0xff]
      %2014 = vset.pattern.permute.xlu0 0
      %2015 = vperm.xlu0 %2014, %v2012
      %v2016 = vpop.permute.xlu0 %2015
      %v2019 = vsel %vm1542, %v2011, 0
      %2021 = vmatprep.subr.mxu0 %v2010
      %2022 = vmatpush1.msra.mxu0 %v2009
      %2023 = vmatprep.subr.mxu0 0.0
      %2024 = vmatpush1.msra.mxu0 0.0
      %2025 = vmatprep.subr.mxu0 0.0
      %2026 = vmatpush1.msra.mxu0 0.0
      %2027 = vmatprep.subr.mxu0 0.0
      %2028 = vmatpush1.msra.mxu0 0.0
      %2029 = vmatprep.subr.mxu0 0.0
      %2030 = vmatpush1.msra.mxu0 0.0
      %2031 = vmatprep.subr.mxu0 0.0
      %2032 = vmatpush1.msra.mxu0 0.0
      %2033 = vmatprep.subr.mxu0 0.0
      %2034 = vmatpush1.msra.mxu0 0.0
      %2035 = vmatprep.subr.mxu0 0.0
      %2036 = vmatpush1.msra.mxu0 0.0
      %2037 = vmatprep.subr.mxu0 0.0
      %2038 = vmatpush1.msra.mxu0 0.0
      %2039 = vmatprep.subr.mxu0 0.0
      %2040 = vmatpush1.msra.mxu0 0.0
      %2041 = vmatprep.subr.mxu0 0.0
      %2042 = vmatpush1.msra.mxu0 0.0
      %2043 = vmatprep.subr.mxu0 0.0
      %2044 = vmatpush1.msra.mxu0 0.0
      %2045 = vmatprep.subr.mxu0 0.0
      %2046 = vmatpush1.msra.mxu0 0.0
      %2047 = vmatprep.subr.mxu0 0.0
      %2048 = vmatpush1.msra.mxu0 0.0
      %2049 = vmatprep.subr.mxu0 0.0
      %2050 = vmatpush1.msra.mxu0 0.0
      %2051 = vmatprep.subr.mxu0 0.0
      %2052 = vmatpush1.msra.mxu0 0.0
      %2053 = vmatprep.subr.mxu0 0.0
      %2054 = vmatpush1.msra.mxu0 0.0
      %2055 = vmatprep.subr.mxu0 0.0
      %2056 = vmatpush1.msra.mxu0 0.0
      %2057 = vmatprep.subr.mxu0 0.0
      %2058 = vmatpush1.msra.mxu0 0.0
      %2059 = vmatprep.subr.mxu0 0.0
      %2060 = vmatpush1.msra.mxu0 0.0
      %2061 = vmatprep.subr.mxu0 0.0
      %2062 = vmatpush1.msra.mxu0 0.0
      %2063 = vmatprep.subr.mxu0 0.0
      %2064 = vmatpush1.msra.mxu0 0.0
      %2065 = vmatprep.subr.mxu0 0.0
      %2066 = vmatpush1.msra.mxu0 0.0
      %2067 = vmatprep.subr.mxu0 0.0
      %2068 = vmatpush1.msra.mxu0 0.0
      %2069 = vmatprep.subr.mxu0 0.0
      %2070 = vmatpush1.msra.mxu0 0.0
      %2071 = vmatprep.subr.mxu0 0.0
      %2072 = vmatpush1.msra.mxu0 0.0
      %2073 = vmatprep.subr.mxu0 0.0
      %2074 = vmatpush1.msra.mxu0 0.0
      %2075 = vmatprep.subr.mxu0 0.0
      %2076 = vmatpush1.msra.mxu0 0.0
      %2077 = vmatprep.subr.mxu0 0.0
      %2078 = vmatpush1.msra.mxu0 0.0
      %2079 = vmatprep.subr.mxu0 0.0
      %2080 = vmatpush1.msra.mxu0 0.0
      %2081 = vmatprep.subr.mxu0 0.0
      %2082 = vmatpush1.msra.mxu0 0.0
      %2083 = vmatprep.subr.mxu0 0.0
      %2084 = vmatpush1.msra.mxu0 0.0
      %2085 = vmatprep.mubr.f32.mxu0 0.0
      %2086 = vmatmul.mubr.f32.gmra.mrb[0].mxu0 %v2019
      %v2087 = vpop.f32.mrb[0].mxu0
      %v2088 = vadd.f32 %v2016, %v2087
      %v2089 = vpop.f32.mrb[0].mxu0
      %v2090 = vadd.f32 %v2016, %v2089
      %2091 = vdwg.mxu0
      %v2092 = vmax.f32 %v798, 0.0
      %v2093 = vmax.f32 %v800, 0.0
      %2094 = vrot.lane.b32.xlu0 %v2092, 17
      %v2095 = vpop.permute.xlu0 %2094
      %2096 = vrot.lane.b32.xlu0 %v2093, 17
      %v2097 = vpop.permute.xlu0 %2096
      %v2098 = vsel %vm991, %v2095, %v2097
      %v2099 = vsel %vm991, %v2097, %v2095
      %v2100 = vmul.f32 %v2099, %v1000
      %v2101 = vmul.f32 %v2098, %v1004
      %v2102 = vld [vmem:[%s13] sm:$0xff]
      %2104 = vset.pattern.permute.xlu0 0
      %2105 = vperm.xlu0 %2104, %v2102
      %v2106 = vpop.permute.xlu0 %2105
      %v2108 = vmul.f32 %v2100, %v2106
      %v2109 = vmul.f32 %v2101, %v2106
      %2110 = vrot.lane.b32.xlu0 %v2092, 16
      %v2111 = vpop.permute.xlu0 %2110
      %2112 = vrot.lane.b32.xlu0 %v2093, 16
      %v2113 = vpop.permute.xlu0 %2112
      %v2114 = vsel %vm1021, %v2111, %v2113
      %v2115 = vsel %vm1021, %v2113, %v2111
      %v2116 = vmul.f32 %v2115, %v1030
      %v2117 = vmul.f32 %v2114, %v1034
      %2118 = vset.pattern.permute.xlu0 1
      %2119 = vperm.xlu0 %2118, %v2102
      %v2120 = vpop.permute.xlu0 %2119
      %v2122 = vmul.f32 %v2116, %v2120
      %v2123 = vmul.f32 %v2117, %v2120
      %v2124 = vadd.f32 %v2108, %v2122
      %v2125 = vadd.f32 %v2109, %v2123
      %2126 = vrot.lane.b32.xlu0 %v2092, 15
      %v2127 = vpop.permute.xlu0 %2126
      %2128 = vrot.lane.b32.xlu0 %v2093, 15
      %v2129 = vpop.permute.xlu0 %2128
      %v2130 = vsel %vm1051, %v2127, %v2129
      %v2131 = vsel %vm1051, %v2129, %v2127
      %v2132 = vmul.f32 %v2131, %v1060
      %v2133 = vmul.f32 %v2130, %v1064
      %2134 = vset.pattern.permute.xlu0 2
      %2135 = vperm.xlu0 %2134, %v2102
      %v2136 = vpop.permute.xlu0 %2135
      %v2138 = vmul.f32 %v2132, %v2136
      %v2139 = vmul.f32 %v2133, %v2136
      %v2140 = vadd.f32 %v2124, %v2138
      %v2141 = vadd.f32 %v2125, %v2139
      %2142 = vrot.lane.b32.xlu0 %v2092, 1
      %v2143 = vpop.permute.xlu0 %2142
      %2144 = vrot.lane.b32.xlu0 %v2093, 1
      %v2145 = vpop.permute.xlu0 %2144
      %v2146 = vsel %vm1141, %v2143, %v2145
      %v2147 = vsel %vm1141, %v2145, %v2143
      %v2148 = vmul.f32 %v2147, %v1150
      %v2149 = vmul.f32 %v2146, %v1154
      %2150 = vset.pattern.permute.xlu0 3
      %2151 = vperm.xlu0 %2150, %v2102
      %v2152 = vpop.permute.xlu0 %2151
      %v2154 = vmul.f32 %v2148, %v2152
      %v2155 = vmul.f32 %v2149, %v2152
      %v2156 = vadd.f32 %v2140, %v2154
      %v2157 = vadd.f32 %v2141, %v2155
      %2158 = vset.pattern.permute.xlu0 4
      %2159 = vperm.xlu0 %2158, %v2102
      %v2160 = vpop.permute.xlu0 %2159
      %v2162 = vmul.f32 %v2092, %v2160
      %v2163 = vmul.f32 %v2093, %v2160
      %v2164 = vadd.f32 %v2156, %v2162
      %v2165 = vadd.f32 %v2157, %v2163
      %2166 = vrot.lane.b32.xlu0 %v2092, 127
      %v2167 = vpop.permute.xlu0 %2166
      %2168 = vrot.lane.b32.xlu0 %v2093, 127
      %v2169 = vpop.permute.xlu0 %2168
      %v2170 = vsel %vm1179, %v2167, %v2169
      %v2171 = vsel %vm1179, %v2169, %v2167
      %v2172 = vmul.f32 %v2170, %v1188
      %v2173 = vmul.f32 %v2171, %v1192
      %2174 = vset.pattern.permute.xlu0 5
      %2175 = vperm.xlu0 %2174, %v2102
      %v2176 = vpop.permute.xlu0 %2175
      %v2178 = vmul.f32 %v2172, %v2176
      %v2179 = vmul.f32 %v2173, %v2176
      %v2180 = vadd.f32 %v2164, %v2178
      %v2181 = vadd.f32 %v2165, %v2179
      %2182 = vrot.lane.b32.xlu0 %v2092, 113
      %v2183 = vpop.permute.xlu0 %2182
      %2184 = vrot.lane.b32.xlu0 %v2093, 113
      %v2185 = vpop.permute.xlu0 %2184
      %v2186 = vsel %vm1269, %v2183, %v2185
      %v2187 = vsel %vm1269, %v2185, %v2183
      %v2188 = vmul.f32 %v2186, %v1278
      %v2189 = vmul.f32 %v2187, %v1282
      %2190 = vset.pattern.permute.xlu0 6
      %2191 = vperm.xlu0 %2190, %v2102
      %v2192 = vpop.permute.xlu0 %2191
      %v2194 = vmul.f32 %v2188, %v2192
      %v2195 = vmul.f32 %v2189, %v2192
      %v2196 = vadd.f32 %v2180, %v2194
      %v2197 = vadd.f32 %v2181, %v2195
      %2198 = vrot.lane.b32.xlu0 %v2092, 112
      %v2199 = vpop.permute.xlu0 %2198
      %2200 = vrot.lane.b32.xlu0 %v2093, 112
      %v2201 = vpop.permute.xlu0 %2200
      %v2202 = vsel %vm1299, %v2199, %v2201
      %v2203 = vsel %vm1299, %v2201, %v2199
      %v2204 = vmul.f32 %v2202, %v1308
      %v2205 = vmul.f32 %v2203, %v1312
      %2206 = vset.pattern.permute.xlu0 7
      %2207 = vperm.xlu0 %2206, %v2102
      %v2208 = vpop.permute.xlu0 %2207
      %v2210 = vmul.f32 %v2204, %v2208
      %v2211 = vmul.f32 %v2205, %v2208
      %v2212 = vadd.f32 %v2196, %v2210
      %v2213 = vadd.f32 %v2197, %v2211
      %2214 = vrot.lane.b32.xlu0 %v2092, 111
      %v2215 = vpop.permute.xlu0 %2214
      %2216 = vrot.lane.b32.xlu0 %v2093, 111
      %v2217 = vpop.permute.xlu0 %2216
      %v2218 = vsel %vm1329, %v2215, %v2217
      %v2219 = vsel %vm1329, %v2217, %v2215
      %v2220 = vmul.f32 %v2218, %v1338
      %v2221 = vmul.f32 %v2219, %v1342
      %2222 = vset.pattern.permute.xlu0 8
      %2223 = vperm.xlu0 %2222, %v2102
      %v2224 = vpop.permute.xlu0 %2223
      %v2226 = vmul.f32 %v2220, %v2224
      %v2227 = vmul.f32 %v2221, %v2224
      %v2228 = vadd.f32 %v2212, %v2226
      %v2229 = vadd.f32 %v2213, %v2227
      %v2230 = vld [vmem:[%s14] sm:$0xff]
      %v2231 = vld [vmem:[%s15] sm:$0xff]
      %2233 = vset.pattern.permute.xlu0 0
      %2234 = vperm.xlu0 %2233, %v2231
      %v2235 = vpop.permute.xlu0 %2234
      %v2238 = vsel %vm1542, %v2230, 0
      %2240 = vmatprep.subr.mxu0 %v2229
      %2241 = vmatpush1.msra.mxu0 %v2228
      %2242 = vmatprep.subr.mxu0 0.0
      %2243 = vmatpush1.msra.mxu0 0.0
      %2244 = vmatprep.subr.mxu0 0.0
      %2245 = vmatpush1.msra.mxu0 0.0
      %2246 = vmatprep.subr.mxu0 0.0
      %2247 = vmatpush1.msra.mxu0 0.0
      %2248 = vmatprep.subr.mxu0 0.0
      %2249 = vmatpush1.msra.mxu0 0.0
      %2250 = vmatprep.subr.mxu0 0.0
      %2251 = vmatpush1.msra.mxu0 0.0
      %2252 = vmatprep.subr.mxu0 0.0
      %2253 = vmatpush1.msra.mxu0 0.0
      %2254 = vmatprep.subr.mxu0 0.0
      %2255 = vmatpush1.msra.mxu0 0.0
      %2256 = vmatprep.subr.mxu0 0.0
      %2257 = vmatpush1.msra.mxu0 0.0
      %2258 = vmatprep.subr.mxu0 0.0
      %2259 = vmatpush1.msra.mxu0 0.0
      %2260 = vmatprep.subr.mxu0 0.0
      %2261 = vmatpush1.msra.mxu0 0.0
      %2262 = vmatprep.subr.mxu0 0.0
      %2263 = vmatpush1.msra.mxu0 0.0
      %2264 = vmatprep.subr.mxu0 0.0
      %2265 = vmatpush1.msra.mxu0 0.0
      %2266 = vmatprep.subr.mxu0 0.0
      %2267 = vmatpush1.msra.mxu0 0.0
      %2268 = vmatprep.subr.mxu0 0.0
      %2269 = vmatpush1.msra.mxu0 0.0
      %2270 = vmatprep.subr.mxu0 0.0
      %2271 = vmatpush1.msra.mxu0 0.0
      %2272 = vmatprep.subr.mxu0 0.0
      %2273 = vmatpush1.msra.mxu0 0.0
      %2274 = vmatprep.subr.mxu0 0.0
      %2275 = vmatpush1.msra.mxu0 0.0
      %2276 = vmatprep.subr.mxu0 0.0
      %2277 = vmatpush1.msra.mxu0 0.0
      %2278 = vmatprep.subr.mxu0 0.0
      %2279 = vmatpush1.msra.mxu0 0.0
      %2280 = vmatprep.subr.mxu0 0.0
      %2281 = vmatpush1.msra.mxu0 0.0
      %2282 = vmatprep.subr.mxu0 0.0
      %2283 = vmatpush1.msra.mxu0 0.0
      %2284 = vmatprep.subr.mxu0 0.0
      %2285 = vmatpush1.msra.mxu0 0.0
      %2286 = vmatprep.subr.mxu0 0.0
      %2287 = vmatpush1.msra.mxu0 0.0
      %2288 = vmatprep.subr.mxu0 0.0
      %2289 = vmatpush1.msra.mxu0 0.0
      %2290 = vmatprep.subr.mxu0 0.0
      %2291 = vmatpush1.msra.mxu0 0.0
      %2292 = vmatprep.subr.mxu0 0.0
      %2293 = vmatpush1.msra.mxu0 0.0
      %2294 = vmatprep.subr.mxu0 0.0
      %2295 = vmatpush1.msra.mxu0 0.0
      %2296 = vmatprep.subr.mxu0 0.0
      %2297 = vmatpush1.msra.mxu0 0.0
      %2298 = vmatprep.subr.mxu0 0.0
      %2299 = vmatpush1.msra.mxu0 0.0
      %2300 = vmatprep.subr.mxu0 0.0
      %2301 = vmatpush1.msra.mxu0 0.0
      %2302 = vmatprep.subr.mxu0 0.0
      %2303 = vmatpush1.msra.mxu0 0.0
      %2304 = vmatprep.mubr.f32.mxu0 0.0
      %2305 = vmatmul.mubr.f32.gmra.mrb[0].mxu0 %v2238
      %v2306 = vpop.f32.mrb[0].mxu0
      %v2307 = vadd.f32 %v2235, %v2306
      %v2308 = vpop.f32.mrb[0].mxu0
      %v2309 = vadd.f32 %v2235, %v2308
      %2310 = vdwg.mxu0
      %v2311 = vmax.f32 %v2307, 0.0
      %v2312 = vmax.f32 %v2309, 0.0
      %2313 = vrot.lane.b32.xlu0 %v2311, 17
      %v2314 = vpop.permute.xlu0 %2313
      %2315 = vrot.lane.b32.xlu0 %v2312, 17
      %v2316 = vpop.permute.xlu0 %2315
      %v2317 = vsel %vm991, %v2314, %v2316
      %v2318 = vsel %vm991, %v2316, %v2314
      %v2319 = vmul.f32 %v2318, %v1000
      %v2320 = vmul.f32 %v2317, %v1004
      %v2321 = vld [vmem:[%s16] sm:$0xff]
      %2323 = vset.pattern.permute.xlu0 0
      %2324 = vperm.xlu0 %2323, %v2321
      %v2325 = vpop.permute.xlu0 %2324
      %v2327 = vmul.f32 %v2319, %v2325
      %v2328 = vmul.f32 %v2320, %v2325
      %2329 = vrot.lane.b32.xlu0 %v2311, 16
      %v2330 = vpop.permute.xlu0 %2329
      %2331 = vrot.lane.b32.xlu0 %v2312, 16
      %v2332 = vpop.permute.xlu0 %2331
      %v2333 = vsel %vm1021, %v2330, %v2332
      %v2334 = vsel %vm1021, %v2332, %v2330
      %v2335 = vmul.f32 %v2334, %v1030
      %v2336 = vmul.f32 %v2333, %v1034
      %2337 = vset.pattern.permute.xlu0 1
      %2338 = vperm.xlu0 %2337, %v2321
      %v2339 = vpop.permute.xlu0 %2338
      %v2341 = vmul.f32 %v2335, %v2339
      %v2342 = vmul.f32 %v2336, %v2339
      %v2343 = vadd.f32 %v2327, %v2341
      %v2344 = vadd.f32 %v2328, %v2342
      %2345 = vrot.lane.b32.xlu0 %v2311, 15
      %v2346 = vpop.permute.xlu0 %2345
      %2347 = vrot.lane.b32.xlu0 %v2312, 15
      %v2348 = vpop.permute.xlu0 %2347
      %v2349 = vsel %vm1051, %v2346, %v2348
      %v2350 = vsel %vm1051, %v2348, %v2346
      %v2351 = vmul.f32 %v2350, %v1060
      %v2352 = vmul.f32 %v2349, %v1064
      %2353 = vset.pattern.permute.xlu0 2
      %2354 = vperm.xlu0 %2353, %v2321
      %v2355 = vpop.permute.xlu0 %2354
      %v2357 = vmul.f32 %v2351, %v2355
      %v2358 = vmul.f32 %v2352, %v2355
      %v2359 = vadd.f32 %v2343, %v2357
      %v2360 = vadd.f32 %v2344, %v2358
      %2361 = vrot.lane.b32.xlu0 %v2311, 1
      %v2362 = vpop.permute.xlu0 %2361
      %2363 = vrot.lane.b32.xlu0 %v2312, 1
      %v2364 = vpop.permute.xlu0 %2363
      %v2365 = vsel %vm1141, %v2362, %v2364
      %v2366 = vsel %vm1141, %v2364, %v2362
      %v2367 = vmul.f32 %v2366, %v1150
      %v2368 = vmul.f32 %v2365, %v1154
      %2369 = vset.pattern.permute.xlu0 3
      %2370 = vperm.xlu0 %2369, %v2321
      %v2371 = vpop.permute.xlu0 %2370
      %v2373 = vmul.f32 %v2367, %v2371
      %v2374 = vmul.f32 %v2368, %v2371
      %v2375 = vadd.f32 %v2359, %v2373
      %v2376 = vadd.f32 %v2360, %v2374
      %2377 = vset.pattern.permute.xlu0 4
      %2378 = vperm.xlu0 %2377, %v2321
      %v2379 = vpop.permute.xlu0 %2378
      %v2381 = vmul.f32 %v2311, %v2379
      %v2382 = vmul.f32 %v2312, %v2379
      %v2383 = vadd.f32 %v2375, %v2381
      %v2384 = vadd.f32 %v2376, %v2382
      %2385 = vrot.lane.b32.xlu0 %v2311, 127
      %v2386 = vpop.permute.xlu0 %2385
      %2387 = vrot.lane.b32.xlu0 %v2312, 127
      %v2388 = vpop.permute.xlu0 %2387
      %v2389 = vsel %vm1179, %v2386, %v2388
      %v2390 = vsel %vm1179, %v2388, %v2386
      %v2391 = vmul.f32 %v2389, %v1188
      %v2392 = vmul.f32 %v2390, %v1192
      %2393 = vset.pattern.permute.xlu0 5
      %2394 = vperm.xlu0 %2393, %v2321
      %v2395 = vpop.permute.xlu0 %2394
      %v2397 = vmul.f32 %v2391, %v2395
      %v2398 = vmul.f32 %v2392, %v2395
      %v2399 = vadd.f32 %v2383, %v2397
      %v2400 = vadd.f32 %v2384, %v2398
      %2401 = vrot.lane.b32.xlu0 %v2311, 113
      %v2402 = vpop.permute.xlu0 %2401
      %2403 = vrot.lane.b32.xlu0 %v2312, 113
      %v2404 = vpop.permute.xlu0 %2403
      %v2405 = vsel %vm1269, %v2402, %v2404
      %v2406 = vsel %vm1269, %v2404, %v2402
      %v2407 = vmul.f32 %v2405, %v1278
      %v2408 = vmul.f32 %v2406, %v1282
      %2409 = vset.pattern.permute.xlu0 6
      %2410 = vperm.xlu0 %2409, %v2321
      %v2411 = vpop.permute.xlu0 %2410
      %v2413 = vmul.f32 %v2407, %v2411
      %v2414 = vmul.f32 %v2408, %v2411
      %v2415 = vadd.f32 %v2399, %v2413
      %v2416 = vadd.f32 %v2400, %v2414
      %2417 = vrot.lane.b32.xlu0 %v2311, 112
      %v2418 = vpop.permute.xlu0 %2417
      %2419 = vrot.lane.b32.xlu0 %v2312, 112
      %v2420 = vpop.permute.xlu0 %2419
      %v2421 = vsel %vm1299, %v2418, %v2420
      %v2422 = vsel %vm1299, %v2420, %v2418
      %v2423 = vmul.f32 %v2421, %v1308
      %v2424 = vmul.f32 %v2422, %v1312
      %2425 = vset.pattern.permute.xlu0 7
      %2426 = vperm.xlu0 %2425, %v2321
      %v2427 = vpop.permute.xlu0 %2426
      %v2429 = vmul.f32 %v2423, %v2427
      %v2430 = vmul.f32 %v2424, %v2427
      %v2431 = vadd.f32 %v2415, %v2429
      %v2432 = vadd.f32 %v2416, %v2430
      %2433 = vrot.lane.b32.xlu0 %v2311, 111
      %v2434 = vpop.permute.xlu0 %2433
      %2435 = vrot.lane.b32.xlu0 %v2312, 111
      %v2436 = vpop.permute.xlu0 %2435
      %v2437 = vsel %vm1329, %v2434, %v2436
      %v2438 = vsel %vm1329, %v2436, %v2434
      %v2439 = vmul.f32 %v2437, %v1338
      %v2440 = vmul.f32 %v2438, %v1342
      %2441 = vset.pattern.permute.xlu0 8
      %2442 = vperm.xlu0 %2441, %v2321
      %v2443 = vpop.permute.xlu0 %2442
      %v2445 = vmul.f32 %v2439, %v2443
      %v2446 = vmul.f32 %v2440, %v2443
      %v2447 = vadd.f32 %v2431, %v2445
      %v2448 = vadd.f32 %v2432, %v2446
      %v2449 = vld [vmem:[%s17] sm:$0xff]
      %v2450 = vld [vmem:[%s18] sm:$0xff]
      %2452 = vset.pattern.permute.xlu0 0
      %2453 = vperm.xlu0 %2452, %v2450
      %v2454 = vpop.permute.xlu0 %2453
      %v2457 = vsel %vm1542, %v2449, 0
      %2459 = vmatprep.subr.mxu0 %v2448
      %2460 = vmatpush1.msra.mxu0 %v2447
      %2461 = vmatprep.subr.mxu0 0.0
      %2462 = vmatpush1.msra.mxu0 0.0
      %2463 = vmatprep.subr.mxu0 0.0
      %2464 = vmatpush1.msra.mxu0 0.0
      %2465 = vmatprep.subr.mxu0 0.0
      %2466 = vmatpush1.msra.mxu0 0.0
      %2467 = vmatprep.subr.mxu0 0.0
      %2468 = vmatpush1.msra.mxu0 0.0
      %2469 = vmatprep.subr.mxu0 0.0
      %2470 = vmatpush1.msra.mxu0 0.0
      %2471 = vmatprep.subr.mxu0 0.0
      %2472 = vmatpush1.msra.mxu0 0.0
      %2473 = vmatprep.subr.mxu0 0.0
      %2474 = vmatpush1.msra.mxu0 0.0
      %2475 = vmatprep.subr.mxu0 0.0
      %2476 = vmatpush1.msra.mxu0 0.0
      %2477 = vmatprep.subr.mxu0 0.0
      %2478 = vmatpush1.msra.mxu0 0.0
      %2479 = vmatprep.subr.mxu0 0.0
      %2480 = vmatpush1.msra.mxu0 0.0
      %2481 = vmatprep.subr.mxu0 0.0
      %2482 = vmatpush1.msra.mxu0 0.0
      %2483 = vmatprep.subr.mxu0 0.0
      %2484 = vmatpush1.msra.mxu0 0.0
      %2485 = vmatprep.subr.mxu0 0.0
      %2486 = vmatpush1.msra.mxu0 0.0
      %2487 = vmatprep.subr.mxu0 0.0
      %2488 = vmatpush1.msra.mxu0 0.0
      %2489 = vmatprep.subr.mxu0 0.0
      %2490 = vmatpush1.msra.mxu0 0.0
      %2491 = vmatprep.subr.mxu0 0.0
      %2492 = vmatpush1.msra.mxu0 0.0
      %2493 = vmatprep.subr.mxu0 0.0
      %2494 = vmatpush1.msra.mxu0 0.0
      %2495 = vmatprep.subr.mxu0 0.0
      %2496 = vmatpush1.msra.mxu0 0.0
      %2497 = vmatprep.subr.mxu0 0.0
      %2498 = vmatpush1.msra.mxu0 0.0
      %2499 = vmatprep.subr.mxu0 0.0
      %2500 = vmatpush1.msra.mxu0 0.0
      %2501 = vmatprep.subr.mxu0 0.0
      %2502 = vmatpush1.msra.mxu0 0.0
      %2503 = vmatprep.subr.mxu0 0.0
      %2504 = vmatpush1.msra.mxu0 0.0
      %2505 = vmatprep.subr.mxu0 0.0
      %2506 = vmatpush1.msra.mxu0 0.0
      %2507 = vmatprep.subr.mxu0 0.0
      %2508 = vmatpush1.msra.mxu0 0.0
      %2509 = vmatprep.subr.mxu0 0.0
      %2510 = vmatpush1.msra.mxu0 0.0
      %2511 = vmatprep.subr.mxu0 0.0
      %2512 = vmatpush1.msra.mxu0 0.0
      %2513 = vmatprep.subr.mxu0 0.0
      %2514 = vmatpush1.msra.mxu0 0.0
      %2515 = vmatprep.subr.mxu0 0.0
      %2516 = vmatpush1.msra.mxu0 0.0
      %2517 = vmatprep.subr.mxu0 0.0
      %2518 = vmatpush1.msra.mxu0 0.0
      %2519 = vmatprep.subr.mxu0 0.0
      %2520 = vmatpush1.msra.mxu0 0.0
      %2521 = vmatprep.subr.mxu0 0.0
      %2522 = vmatpush1.msra.mxu0 0.0
      %2523 = vmatprep.mubr.f32.mxu0 0.0
      %2524 = vmatmul.mubr.f32.gmra.mrb[0].mxu0 %v2457
      %v2525 = vpop.f32.mrb[0].mxu0
      %v2526 = vadd.f32 %v2454, %v2525
      %v2527 = vpop.f32.mrb[0].mxu0
      %v2528 = vadd.f32 %v2454, %v2527
      %2529 = vdwg.mxu0
      %v2530 = vadd.f32 %v2088, %v2526
      %v2531 = vadd.f32 %v2090, %v2528
      %s2532 = scalar_lea.vmem %s622, 16
      %2533 = vst [vmem:[%s2532] sm:$0xff] %v2530
      %2534 = vst [vmem:[%s2532 + $0x8] sm:$0xff] %v2531
      %2535 = vrot.lane.b32.xlu0 %v2092, 34
      %v2536 = vpop.permute.xlu0 %2535
      %2537 = vrot.lane.b32.xlu0 %v2093, 34
      %v2538 = vpop.permute.xlu0 %2537
      %v2539 = vsel %vm812, %v2536, %v2538
      %v2540 = vsel %vm812, %v2538, %v2536
      %v2541 = vld [vmem:[%s2] ss:$8 sm:$0x3]
      %v2543 = vlaneseq
      %v2544 = vshrl.u32 %v2543, 7
      %v2545 = vsub.s32 0, %v2544
      %v2546 = vrot.slane %v2541, %v2545
      %v2547 = vlaneseq
      %v2548 = vshrl.u32 %v2547, 7
      %v2549 = vsub.s32 1, %v2548
      %v2550 = vrot.slane %v2541, %v2549
      %v2553 = vmul.f32 %v2540, %v2546
      %v2554 = vmul.f32 %v2539, %v2550
      %s2555 = scalar_lea.vmem %s7, 8
      %v2556 = vld [vmem:[%s2555] sm:$0xff]
      %2558 = vset.pattern.permute.xlu0 0
      %2559 = vperm.xlu0 %2558, %v2556
      %v2560 = vpop.permute.xlu0 %2559
      %v2562 = vmul.f32 %v2553, %v2560
      %v2563 = vmul.f32 %v2554, %v2560
      %2564 = vrot.lane.b32.xlu0 %v2092, 33
      %v2565 = vpop.permute.xlu0 %2564
      %2566 = vrot.lane.b32.xlu0 %v2093, 33
      %v2567 = vpop.permute.xlu0 %2566
      %v2568 = vsel %vm841, %v2565, %v2567
      %v2569 = vsel %vm841, %v2567, %v2565
      %v2570 = vld [vmem:[%s844] ss:$8 sm:$0x3]
      %v2572 = vlaneseq
      %v2573 = vshrl.u32 %v2572, 7
      %v2574 = vsub.s32 0, %v2573
      %v2575 = vrot.slane %v2570, %v2574
      %v2576 = vlaneseq
      %v2577 = vshrl.u32 %v2576, 7
      %v2578 = vsub.s32 1, %v2577
      %v2579 = vrot.slane %v2570, %v2578
      %v2582 = vmul.f32 %v2569, %v2575
      %v2583 = vmul.f32 %v2568, %v2579
      %2584 = vset.pattern.permute.xlu0 1
      %2585 = vperm.xlu0 %2584, %v2556
      %v2586 = vpop.permute.xlu0 %2585
      %v2588 = vmul.f32 %v2582, %v2586
      %v2589 = vmul.f32 %v2583, %v2586
      %v2590 = vadd.f32 %v2562, %v2588
      %v2591 = vadd.f32 %v2563, %v2589
      %2592 = vrot.lane.b32.xlu0 %v2092, 32
      %v2593 = vpop.permute.xlu0 %2592
      %2594 = vrot.lane.b32.xlu0 %v2093, 32
      %v2595 = vpop.permute.xlu0 %2594
      %v2596 = vsel %vm871, %v2593, %v2595
      %v2597 = vsel %vm871, %v2595, %v2593
      %v2598 = vld [vmem:[%s874] ss:$8 sm:$0x3]
      %v2600 = vlaneseq
      %v2601 = vshrl.u32 %v2600, 7
      %v2602 = vsub.s32 0, %v2601
      %v2603 = vrot.slane %v2598, %v2602
      %v2604 = vlaneseq
      %v2605 = vshrl.u32 %v2604, 7
      %v2606 = vsub.s32 1, %v2605
      %v2607 = vrot.slane %v2598, %v2606
      %v2610 = vmul.f32 %v2597, %v2603
      %v2611 = vmul.f32 %v2596, %v2607
      %2612 = vset.pattern.permute.xlu0 2
      %2613 = vperm.xlu0 %2612, %v2556
      %v2614 = vpop.permute.xlu0 %2613
      %v2616 = vmul.f32 %v2610, %v2614
      %v2617 = vmul.f32 %v2611, %v2614
      %v2618 = vadd.f32 %v2590, %v2616
      %v2619 = vadd.f32 %v2591, %v2617
      %2620 = vrot.lane.b32.xlu0 %v2092, 31
      %v2621 = vpop.permute.xlu0 %2620
      %2622 = vrot.lane.b32.xlu0 %v2093, 31
      %v2623 = vpop.permute.xlu0 %2622
      %v2624 = vsel %vm901, %v2621, %v2623
      %v2625 = vsel %vm901, %v2623, %v2621
      %v2626 = vld [vmem:[%s904] ss:$8 sm:$0x3]
      %v2628 = vlaneseq
      %v2629 = vshrl.u32 %v2628, 7
      %v2630 = vsub.s32 0, %v2629
      %v2631 = vrot.slane %v2626, %v2630
      %v2632 = vlaneseq
      %v2633 = vshrl.u32 %v2632, 7
      %v2634 = vsub.s32 1, %v2633
      %v2635 = vrot.slane %v2626, %v2634
      %v2638 = vmul.f32 %v2625, %v2631
      %v2639 = vmul.f32 %v2624, %v2635
      %2640 = vset.pattern.permute.xlu0 3
      %2641 = vperm.xlu0 %2640, %v2556
      %v2642 = vpop.permute.xlu0 %2641
      %v2644 = vmul.f32 %v2638, %v2642
      %v2645 = vmul.f32 %v2639, %v2642
      %v2646 = vadd.f32 %v2618, %v2644
      %v2647 = vadd.f32 %v2619, %v2645
      %2648 = vrot.lane.b32.xlu0 %v2092, 30
      %v2649 = vpop.permute.xlu0 %2648
      %2650 = vrot.lane.b32.xlu0 %v2093, 30
      %v2651 = vpop.permute.xlu0 %2650
      %v2652 = vsel %vm931, %v2649, %v2651
      %v2653 = vsel %vm931, %v2651, %v2649
      %v2654 = vld [vmem:[%s934] ss:$8 sm:$0x3]
      %v2656 = vlaneseq
      %v2657 = vshrl.u32 %v2656, 7
      %v2658 = vsub.s32 0, %v2657
      %v2659 = vrot.slane %v2654, %v2658
      %v2660 = vlaneseq
      %v2661 = vshrl.u32 %v2660, 7
      %v2662 = vsub.s32 1, %v2661
      %v2663 = vrot.slane %v2654, %v2662
      %v2666 = vmul.f32 %v2653, %v2659
      %v2667 = vmul.f32 %v2652, %v2663
      %2668 = vset.pattern.permute.xlu0 4
      %2669 = vperm.xlu0 %2668, %v2556
      %v2670 = vpop.permute.xlu0 %2669
      %v2672 = vmul.f32 %v2666, %v2670
      %v2673 = vmul.f32 %v2667, %v2670
      %v2674 = vadd.f32 %v2646, %v2672
      %v2675 = vadd.f32 %v2647, %v2673
      %2676 = vrot.lane.b32.xlu0 %v2092, 18
      %v2677 = vpop.permute.xlu0 %2676
      %2678 = vrot.lane.b32.xlu0 %v2093, 18
      %v2679 = vpop.permute.xlu0 %2678
      %v2680 = vsel %vm961, %v2677, %v2679
      %v2681 = vsel %vm961, %v2679, %v2677
      %v2682 = vld [vmem:[%s964] ss:$8 sm:$0x3]
      %v2684 = vlaneseq
      %v2685 = vshrl.u32 %v2684, 7
      %v2686 = vsub.s32 0, %v2685
      %v2687 = vrot.slane %v2682, %v2686
      %v2688 = vlaneseq
      %v2689 = vshrl.u32 %v2688, 7
      %v2690 = vsub.s32 1, %v2689
      %v2691 = vrot.slane %v2682, %v2690
      %v2694 = vmul.f32 %v2681, %v2687
      %v2695 = vmul.f32 %v2680, %v2691
      %2696 = vset.pattern.permute.xlu0 5
      %2697 = vperm.xlu0 %2696, %v2556
      %v2698 = vpop.permute.xlu0 %2697
      %v2700 = vmul.f32 %v2694, %v2698
      %v2701 = vmul.f32 %v2695, %v2698
      %v2702 = vadd.f32 %v2674, %v2700
      %v2703 = vadd.f32 %v2675, %v2701
      %v2704 = vld [vmem:[%s994] ss:$8 sm:$0x3]
      %v2706 = vlaneseq
      %v2707 = vshrl.u32 %v2706, 7
      %v2708 = vsub.s32 0, %v2707
      %v2709 = vrot.slane %v2704, %v2708
      %v2710 = vlaneseq
      %v2711 = vshrl.u32 %v2710, 7
      %v2712 = vsub.s32 1, %v2711
      %v2713 = vrot.slane %v2704, %v2712
      %v2716 = vmul.f32 %v2099, %v2709
      %v2717 = vmul.f32 %v2098, %v2713
      %2718 = vset.pattern.permute.xlu0 6
      %2719 = vperm.xlu0 %2718, %v2556
      %v2720 = vpop.permute.xlu0 %2719
      %v2722 = vmul.f32 %v2716, %v2720
      %v2723 = vmul.f32 %v2717, %v2720
      %v2724 = vadd.f32 %v2702, %v2722
      %v2725 = vadd.f32 %v2703, %v2723
      %v2726 = vld [vmem:[%s1024] ss:$8 sm:$0x3]
      %v2728 = vlaneseq
      %v2729 = vshrl.u32 %v2728, 7
      %v2730 = vsub.s32 0, %v2729
      %v2731 = vrot.slane %v2726, %v2730
      %v2732 = vlaneseq
      %v2733 = vshrl.u32 %v2732, 7
      %v2734 = vsub.s32 1, %v2733
      %v2735 = vrot.slane %v2726, %v2734
      %v2738 = vmul.f32 %v2115, %v2731
      %v2739 = vmul.f32 %v2114, %v2735
      %2740 = vset.pattern.permute.xlu0 7
      %2741 = vperm.xlu0 %2740, %v2556
      %v2742 = vpop.permute.xlu0 %2741
      %v2744 = vmul.f32 %v2738, %v2742
      %v2745 = vmul.f32 %v2739, %v2742
      %v2746 = vadd.f32 %v2724, %v2744
      %v2747 = vadd.f32 %v2725, %v2745
      %v2748 = vld [vmem:[%s1054] ss:$8 sm:$0x3]
      %v2750 = vlaneseq
      %v2751 = vshrl.u32 %v2750, 7
      %v2752 = vsub.s32 0, %v2751
      %v2753 = vrot.slane %v2748, %v2752
      %v2754 = vlaneseq
      %v2755 = vshrl.u32 %v2754, 7
      %v2756 = vsub.s32 1, %v2755
      %v2757 = vrot.slane %v2748, %v2756
      %v2760 = vmul.f32 %v2131, %v2753
      %v2761 = vmul.f32 %v2130, %v2757
      %2762 = vset.pattern.permute.xlu0 8
      %2763 = vperm.xlu0 %2762, %v2556
      %v2764 = vpop.permute.xlu0 %2763
      %v2766 = vmul.f32 %v2760, %v2764
      %v2767 = vmul.f32 %v2761, %v2764
      %v2768 = vadd.f32 %v2746, %v2766
      %v2769 = vadd.f32 %v2747, %v2767
      %2770 = vrot.lane.b32.xlu0 %v2092, 14
      %v2771 = vpop.permute.xlu0 %2770
      %2772 = vrot.lane.b32.xlu0 %v2093, 14
      %v2773 = vpop.permute.xlu0 %2772
      %v2774 = vsel %vm1081, %v2771, %v2773
      %v2775 = vsel %vm1081, %v2773, %v2771
      %v2776 = vld [vmem:[%s1084] ss:$8 sm:$0x3]
      %v2778 = vlaneseq
      %v2779 = vshrl.u32 %v2778, 7
      %v2780 = vsub.s32 0, %v2779
      %v2781 = vrot.slane %v2776, %v2780
      %v2782 = vlaneseq
      %v2783 = vshrl.u32 %v2782, 7
      %v2784 = vsub.s32 1, %v2783
      %v2785 = vrot.slane %v2776, %v2784
      %v2788 = vmul.f32 %v2775, %v2781
      %v2789 = vmul.f32 %v2774, %v2785
      %2790 = vset.pattern.permute.xlu0 9
      %2791 = vperm.xlu0 %2790, %v2556
      %v2792 = vpop.permute.xlu0 %2791
      %v2794 = vmul.f32 %v2788, %v2792
      %v2795 = vmul.f32 %v2789, %v2792
      %v2796 = vadd.f32 %v2768, %v2794
      %v2797 = vadd.f32 %v2769, %v2795
      %2798 = vrot.lane.b32.xlu0 %v2092, 2
      %v2799 = vpop.permute.xlu0 %2798
      %2800 = vrot.lane.b32.xlu0 %v2093, 2
      %v2801 = vpop.permute.xlu0 %2800
      %v2802 = vsel %vm1111, %v2799, %v2801
      %v2803 = vsel %vm1111, %v2801, %v2799
      %v2804 = vld [vmem:[%s1114] ss:$8 sm:$0x3]
      %v2806 = vlaneseq
      %v2807 = vshrl.u32 %v2806, 7
      %v2808 = vsub.s32 0, %v2807
      %v2809 = vrot.slane %v2804, %v2808
      %v2810 = vlaneseq
      %v2811 = vshrl.u32 %v2810, 7
      %v2812 = vsub.s32 1, %v2811
      %v2813 = vrot.slane %v2804, %v2812
      %v2816 = vmul.f32 %v2803, %v2809
      %v2817 = vmul.f32 %v2802, %v2813
      %2818 = vset.pattern.permute.xlu0 10
      %2819 = vperm.xlu0 %2818, %v2556
      %v2820 = vpop.permute.xlu0 %2819
      %v2822 = vmul.f32 %v2816, %v2820
      %v2823 = vmul.f32 %v2817, %v2820
      %v2824 = vadd.f32 %v2796, %v2822
      %v2825 = vadd.f32 %v2797, %v2823
      %v2826 = vld [vmem:[%s1144] ss:$8 sm:$0x3]
      %v2828 = vlaneseq
      %v2829 = vshrl.u32 %v2828, 7
      %v2830 = vsub.s32 0, %v2829
      %v2831 = vrot.slane %v2826, %v2830
      %v2832 = vlaneseq
      %v2833 = vshrl.u32 %v2832, 7
      %v2834 = vsub.s32 1, %v2833
      %v2835 = vrot.slane %v2826, %v2834
      %v2838 = vmul.f32 %v2147, %v2831
      %v2839 = vmul.f32 %v2146, %v2835
      %2840 = vset.pattern.permute.xlu0 11
      %2841 = vperm.xlu0 %2840, %v2556
      %v2842 = vpop.permute.xlu0 %2841
      %v2844 = vmul.f32 %v2838, %v2842
      %v2845 = vmul.f32 %v2839, %v2842
      %v2846 = vadd.f32 %v2824, %v2844
      %v2847 = vadd.f32 %v2825, %v2845
      %2848 = vset.pattern.permute.xlu0 12
      %2849 = vperm.xlu0 %2848, %v2556
      %v2850 = vpop.permute.xlu0 %2849
      %v2852 = vmul.f32 %v2092, %v2850
      %v2853 = vmul.f32 %v2093, %v2850
      %v2854 = vadd.f32 %v2846, %v2852
      %v2855 = vadd.f32 %v2847, %v2853
      %v2856 = vld [vmem:[%s1182] ss:$8 sm:$0x3]
      %v2858 = vlaneseq
      %v2859 = vshrl.u32 %v2858, 7
      %v2860 = vsub.s32 0, %v2859
      %v2861 = vrot.slane %v2856, %v2860
      %v2862 = vlaneseq
      %v2863 = vshrl.u32 %v2862, 7
      %v2864 = vsub.s32 1, %v2863
      %v2865 = vrot.slane %v2856, %v2864
      %v2868 = vmul.f32 %v2170, %v2861
      %v2869 = vmul.f32 %v2171, %v2865
      %2870 = vset.pattern.permute.xlu0 13
      %2871 = vperm.xlu0 %2870, %v2556
      %v2872 = vpop.permute.xlu0 %2871
      %v2874 = vmul.f32 %v2868, %v2872
      %v2875 = vmul.f32 %v2869, %v2872
      %v2876 = vadd.f32 %v2854, %v2874
      %v2877 = vadd.f32 %v2855, %v2875
      %2878 = vrot.lane.b32.xlu0 %v2092, 126
      %v2879 = vpop.permute.xlu0 %2878
      %2880 = vrot.lane.b32.xlu0 %v2093, 126
      %v2881 = vpop.permute.xlu0 %2880
      %v2882 = vsel %vm1209, %v2879, %v2881
      %v2883 = vsel %vm1209, %v2881, %v2879
      %v2884 = vld [vmem:[%s1212] ss:$8 sm:$0x3]
      %v2886 = vlaneseq
      %v2887 = vshrl.u32 %v2886, 7
      %v2888 = vsub.s32 0, %v2887
      %v2889 = vrot.slane %v2884, %v2888
      %v2890 = vlaneseq
      %v2891 = vshrl.u32 %v2890, 7
      %v2892 = vsub.s32 1, %v2891
      %v2893 = vrot.slane %v2884, %v2892
      %v2896 = vmul.f32 %v2882, %v2889
      %v2897 = vmul.f32 %v2883, %v2893
      %2898 = vset.pattern.permute.xlu0 14
      %2899 = vperm.xlu0 %2898, %v2556
      %v2900 = vpop.permute.xlu0 %2899
      %v2902 = vmul.f32 %v2896, %v2900
      %v2903 = vmul.f32 %v2897, %v2900
      %v2904 = vadd.f32 %v2876, %v2902
      %v2905 = vadd.f32 %v2877, %v2903
      %2906 = vrot.lane.b32.xlu0 %v2092, 114
      %v2907 = vpop.permute.xlu0 %2906
      %2908 = vrot.lane.b32.xlu0 %v2093, 114
      %v2909 = vpop.permute.xlu0 %2908
      %v2910 = vsel %vm1239, %v2907, %v2909
      %v2911 = vsel %vm1239, %v2909, %v2907
      %v2912 = vld [vmem:[%s1242] ss:$8 sm:$0x3]
      %v2914 = vlaneseq
      %v2915 = vshrl.u32 %v2914, 7
      %v2916 = vsub.s32 0, %v2915
      %v2917 = vrot.slane %v2912, %v2916
      %v2918 = vlaneseq
      %v2919 = vshrl.u32 %v2918, 7
      %v2920 = vsub.s32 1, %v2919
      %v2921 = vrot.slane %v2912, %v2920
      %v2924 = vmul.f32 %v2910, %v2917
      %v2925 = vmul.f32 %v2911, %v2921
      %2926 = vset.pattern.permute.xlu0 15
      %2927 = vperm.xlu0 %2926, %v2556
      %v2928 = vpop.permute.xlu0 %2927
      %v2930 = vmul.f32 %v2924, %v2928
      %v2931 = vmul.f32 %v2925, %v2928
      %v2932 = vadd.f32 %v2904, %v2930
      %v2933 = vadd.f32 %v2905, %v2931
      %v2934 = vld [vmem:[%s1272] ss:$8 sm:$0x3]
      %v2936 = vlaneseq
      %v2937 = vshrl.u32 %v2936, 7
      %v2938 = vsub.s32 0, %v2937
      %v2939 = vrot.slane %v2934, %v2938
      %v2940 = vlaneseq
      %v2941 = vshrl.u32 %v2940, 7
      %v2942 = vsub.s32 1, %v2941
      %v2943 = vrot.slane %v2934, %v2942
      %v2946 = vmul.f32 %v2186, %v2939
      %v2947 = vmul.f32 %v2187, %v2943
      %2948 = vset.pattern.permute.xlu0 16
      %2949 = vperm.xlu0 %2948, %v2556
      %v2950 = vpop.permute.xlu0 %2949
      %v2952 = vmul.f32 %v2946, %v2950
      %v2953 = vmul.f32 %v2947, %v2950
      %v2954 = vadd.f32 %v2932, %v2952
      %v2955 = vadd.f32 %v2933, %v2953
      %v2956 = vld [vmem:[%s1302] ss:$8 sm:$0x3]
      %v2958 = vlaneseq
      %v2959 = vshrl.u32 %v2958, 7
      %v2960 = vsub.s32 0, %v2959
      %v2961 = vrot.slane %v2956, %v2960
      %v2962 = vlaneseq
      %v2963 = vshrl.u32 %v2962, 7
      %v2964 = vsub.s32 1, %v2963
      %v2965 = vrot.slane %v2956, %v2964
      %v2968 = vmul.f32 %v2202, %v2961
      %v2969 = vmul.f32 %v2203, %v2965
      %2970 = vset.pattern.permute.xlu0 17
      %2971 = vperm.xlu0 %2970, %v2556
      %v2972 = vpop.permute.xlu0 %2971
      %v2974 = vmul.f32 %v2968, %v2972
      %v2975 = vmul.f32 %v2969, %v2972
      %v2976 = vadd.f32 %v2954, %v2974
      %v2977 = vadd.f32 %v2955, %v2975
      %v2978 = vld [vmem:[%s1332] ss:$8 sm:$0x3]
      %v2980 = vlaneseq
      %v2981 = vshrl.u32 %v2980, 7
      %v2982 = vsub.s32 0, %v2981
      %v2983 = vrot.slane %v2978, %v2982
      %v2984 = vlaneseq
      %v2985 = vshrl.u32 %v2984, 7
      %v2986 = vsub.s32 1, %v2985
      %v2987 = vrot.slane %v2978, %v2986
      %v2990 = vmul.f32 %v2218, %v2983
      %v2991 = vmul.f32 %v2219, %v2987
      %2992 = vset.pattern.permute.xlu0 18
      %2993 = vperm.xlu0 %2992, %v2556
      %v2994 = vpop.permute.xlu0 %2993
      %v2996 = vmul.f32 %v2990, %v2994
      %v2997 = vmul.f32 %v2991, %v2994
      %v2998 = vadd.f32 %v2976, %v2996
      %v2999 = vadd.f32 %v2977, %v2997
      %3000 = vrot.lane.b32.xlu0 %v2092, 110
      %v3001 = vpop.permute.xlu0 %3000
      %3002 = vrot.lane.b32.xlu0 %v2093, 110
      %v3003 = vpop.permute.xlu0 %3002
      %v3004 = vsel %vm1359, %v3001, %v3003
      %v3005 = vsel %vm1359, %v3003, %v3001
      %v3006 = vld [vmem:[%s1362] ss:$8 sm:$0x3]
      %v3008 = vlaneseq
      %v3009 = vshrl.u32 %v3008, 7
      %v3010 = vsub.s32 0, %v3009
      %v3011 = vrot.slane %v3006, %v3010
      %v3012 = vlaneseq
      %v3013 = vshrl.u32 %v3012, 7
      %v3014 = vsub.s32 1, %v3013
      %v3015 = vrot.slane %v3006, %v3014
      %v3018 = vmul.f32 %v3004, %v3011
      %v3019 = vmul.f32 %v3005, %v3015
      %3020 = vset.pattern.permute.xlu0 19
      %3021 = vperm.xlu0 %3020, %v2556
      %v3022 = vpop.permute.xlu0 %3021
      %v3024 = vmul.f32 %v3018, %v3022
      %v3025 = vmul.f32 %v3019, %v3022
      %v3026 = vadd.f32 %v2998, %v3024
      %v3027 = vadd.f32 %v2999, %v3025
      %3028 = vrot.lane.b32.xlu0 %v2092, 98
      %v3029 = vpop.permute.xlu0 %3028
      %3030 = vrot.lane.b32.xlu0 %v2093, 98
      %v3031 = vpop.permute.xlu0 %3030
      %v3032 = vsel %vm1389, %v3029, %v3031
      %v3033 = vsel %vm1389, %v3031, %v3029
      %v3034 = vld [vmem:[%s1392] ss:$8 sm:$0x3]
      %v3036 = vlaneseq
      %v3037 = vshrl.u32 %v3036, 7
      %v3038 = vsub.s32 0, %v3037
      %v3039 = vrot.slane %v3034, %v3038
      %v3040 = vlaneseq
      %v3041 = vshrl.u32 %v3040, 7
      %v3042 = vsub.s32 1, %v3041
      %v3043 = vrot.slane %v3034, %v3042
      %v3046 = vmul.f32 %v3032, %v3039
      %v3047 = vmul.f32 %v3033, %v3043
      %3048 = vset.pattern.permute.xlu0 20
      %3049 = vperm.xlu0 %3048, %v2556
      %v3050 = vpop.permute.xlu0 %3049
      %v3052 = vmul.f32 %v3046, %v3050
      %v3053 = vmul.f32 %v3047, %v3050
      %v3054 = vadd.f32 %v3026, %v3052
      %v3055 = vadd.f32 %v3027, %v3053
      %3056 = vrot.lane.b32.xlu0 %v2092, 97
      %v3057 = vpop.permute.xlu0 %3056
      %3058 = vrot.lane.b32.xlu0 %v2093, 97
      %v3059 = vpop.permute.xlu0 %3058
      %v3060 = vsel %vm1419, %v3057, %v3059
      %v3061 = vsel %vm1419, %v3059, %v3057
      %v3062 = vld [vmem:[%s1422] ss:$8 sm:$0x3]
      %v3064 = vlaneseq
      %v3065 = vshrl.u32 %v3064, 7
      %v3066 = vsub.s32 0, %v3065
      %v3067 = vrot.slane %v3062, %v3066
      %v3068 = vlaneseq
      %v3069 = vshrl.u32 %v3068, 7
      %v3070 = vsub.s32 1, %v3069
      %v3071 = vrot.slane %v3062, %v3070
      %v3074 = vmul.f32 %v3060, %v3067
      %v3075 = vmul.f32 %v3061, %v3071
      %3076 = vset.pattern.permute.xlu0 21
      %3077 = vperm.xlu0 %3076, %v2556
      %v3078 = vpop.permute.xlu0 %3077
      %v3080 = vmul.f32 %v3074, %v3078
      %v3081 = vmul.f32 %v3075, %v3078
      %v3082 = vadd.f32 %v3054, %v3080
      %v3083 = vadd.f32 %v3055, %v3081
      %3084 = vrot.lane.b32.xlu0 %v2092, 96
      %v3085 = vpop.permute.xlu0 %3084
      %3086 = vrot.lane.b32.xlu0 %v2093, 96
      %v3087 = vpop.permute.xlu0 %3086
      %v3088 = vsel %vm1449, %v3085, %v3087
      %v3089 = vsel %vm1449, %v3087, %v3085
      %v3090 = vld [vmem:[%s1452] ss:$8 sm:$0x3]
      %v3092 = vlaneseq
      %v3093 = vshrl.u32 %v3092, 7
      %v3094 = vsub.s32 0, %v3093
      %v3095 = vrot.slane %v3090, %v3094
      %v3096 = vlaneseq
      %v3097 = vshrl.u32 %v3096, 7
      %v3098 = vsub.s32 1, %v3097
      %v3099 = vrot.slane %v3090, %v3098
      %v3102 = vmul.f32 %v3088, %v3095
      %v3103 = vmul.f32 %v3089, %v3099
      %3104 = vset.pattern.permute.xlu0 22
      %3105 = vperm.xlu0 %3104, %v2556
      %v3106 = vpop.permute.xlu0 %3105
      %v3108 = vmul.f32 %v3102, %v3106
      %v3109 = vmul.f32 %v3103, %v3106
      %v3110 = vadd.f32 %v3082, %v3108
      %v3111 = vadd.f32 %v3083, %v3109
      %3112 = vrot.lane.b32.xlu0 %v2092, 95
      %v3113 = vpop.permute.xlu0 %3112
      %3114 = vrot.lane.b32.xlu0 %v2093, 95
      %v3115 = vpop.permute.xlu0 %3114
      %v3116 = vsel %vm1479, %v3113, %v3115
      %v3117 = vsel %vm1479, %v3115, %v3113
      %v3118 = vld [vmem:[%s1482] ss:$8 sm:$0x3]
      %v3120 = vlaneseq
      %v3121 = vshrl.u32 %v3120, 7
      %v3122 = vsub.s32 0, %v3121
      %v3123 = vrot.slane %v3118, %v3122
      %v3124 = vlaneseq
      %v3125 = vshrl.u32 %v3124, 7
      %v3126 = vsub.s32 1, %v3125
      %v3127 = vrot.slane %v3118, %v3126
      %v3130 = vmul.f32 %v3116, %v3123
      %v3131 = vmul.f32 %v3117, %v3127
      %3132 = vset.pattern.permute.xlu0 23
      %3133 = vperm.xlu0 %3132, %v2556
      %v3134 = vpop.permute.xlu0 %3133
      %v3136 = vmul.f32 %v3130, %v3134
      %v3137 = vmul.f32 %v3131, %v3134
      %v3138 = vadd.f32 %v3110, %v3136
      %v3139 = vadd.f32 %v3111, %v3137
      %3140 = vrot.lane.b32.xlu0 %v2092, 94
      %v3141 = vpop.permute.xlu0 %3140
      %3142 = vrot.lane.b32.xlu0 %v2093, 94
      %v3143 = vpop.permute.xlu0 %3142
      %v3144 = vsel %vm1509, %v3141, %v3143
      %v3145 = vsel %vm1509, %v3143, %v3141
      %v3146 = vld [vmem:[%s1512] ss:$8 sm:$0x3]
      %v3148 = vlaneseq
      %v3149 = vshrl.u32 %v3148, 7
      %v3150 = vsub.s32 0, %v3149
      %v3151 = vrot.slane %v3146, %v3150
      %v3152 = vlaneseq
      %v3153 = vshrl.u32 %v3152, 7
      %v3154 = vsub.s32 1, %v3153
      %v3155 = vrot.slane %v3146, %v3154
      %v3158 = vmul.f32 %v3144, %v3151
      %v3159 = vmul.f32 %v3145, %v3155
      %3160 = vset.pattern.permute.xlu0 24
      %3161 = vperm.xlu0 %3160, %v2556
      %v3162 = vpop.permute.xlu0 %3161
      %v3164 = vmul.f32 %v3158, %v3162
      %v3165 = vmul.f32 %v3159, %v3162
      %v3166 = vadd.f32 %v3138, %v3164
      %v3167 = vadd.f32 %v3139, %v3165
      %s3168 = scalar_lea.vmem %s8, 8
      %v3169 = vld [vmem:[%s3168] sm:$0xff]
      %s3170 = scalar_lea.vmem %s9, 8
      %v3171 = vld [vmem:[%s3170] sm:$0xff]
      %3173 = vset.pattern.permute.xlu0 0
      %3174 = vperm.xlu0 %3173, %v3171
      %v3175 = vpop.permute.xlu0 %3174
      %v3178 = vsel %vm1542, %v3169, 0
      %3180 = vmatprep.subr.mxu0 %v3167
      %3181 = vmatpush1.msra.mxu0 %v3166
      %3182 = vmatprep.subr.mxu0 0.0
      %3183 = vmatpush1.msra.mxu0 0.0
      %3184 = vmatprep.subr.mxu0 0.0
      %3185 = vmatpush1.msra.mxu0 0.0
      %3186 = vmatprep.subr.mxu0 0.0
      %3187 = vmatpush1.msra.mxu0 0.0
      %3188 = vmatprep.subr.mxu0 0.0
      %3189 = vmatpush1.msra.mxu0 0.0
      %3190 = vmatprep.subr.mxu0 0.0
      %3191 = vmatpush1.msra.mxu0 0.0
      %3192 = vmatprep.subr.mxu0 0.0
      %3193 = vmatpush1.msra.mxu0 0.0
      %3194 = vmatprep.subr.mxu0 0.0
      %3195 = vmatpush1.msra.mxu0 0.0
      %3196 = vmatprep.subr.mxu0 0.0
      %3197 = vmatpush1.msra.mxu0 0.0
      %3198 = vmatprep.subr.mxu0 0.0
      %3199 = vmatpush1.msra.mxu0 0.0
      %3200 = vmatprep.subr.mxu0 0.0
      %3201 = vmatpush1.msra.mxu0 0.0
      %3202 = vmatprep.subr.mxu0 0.0
      %3203 = vmatpush1.msra.mxu0 0.0
      %3204 = vmatprep.subr.mxu0 0.0
      %3205 = vmatpush1.msra.mxu0 0.0
      %3206 = vmatprep.subr.mxu0 0.0
      %3207 = vmatpush1.msra.mxu0 0.0
      %3208 = vmatprep.subr.mxu0 0.0
      %3209 = vmatpush1.msra.mxu0 0.0
      %3210 = vmatprep.subr.mxu0 0.0
      %3211 = vmatpush1.msra.mxu0 0.0
      %3212 = vmatprep.subr.mxu0 0.0
      %3213 = vmatpush1.msra.mxu0 0.0
      %3214 = vmatprep.subr.mxu0 0.0
      %3215 = vmatpush1.msra.mxu0 0.0
      %3216 = vmatprep.subr.mxu0 0.0
      %3217 = vmatpush1.msra.mxu0 0.0
      %3218 = vmatprep.subr.mxu0 0.0
      %3219 = vmatpush1.msra.mxu0 0.0
      %3220 = vmatprep.subr.mxu0 0.0
      %3221 = vmatpush1.msra.mxu0 0.0
      %3222 = vmatprep.subr.mxu0 0.0
      %3223 = vmatpush1.msra.mxu0 0.0
      %3224 = vmatprep.subr.mxu0 0.0
      %3225 = vmatpush1.msra.mxu0 0.0
      %3226 = vmatprep.subr.mxu0 0.0
      %3227 = vmatpush1.msra.mxu0 0.0
      %3228 = vmatprep.subr.mxu0 0.0
      %3229 = vmatpush1.msra.mxu0 0.0
      %3230 = vmatprep.subr.mxu0 0.0
      %3231 = vmatpush1.msra.mxu0 0.0
      %3232 = vmatprep.subr.mxu0 0.0
      %3233 = vmatpush1.msra.mxu0 0.0
      %3234 = vmatprep.subr.mxu0 0.0
      %3235 = vmatpush1.msra.mxu0 0.0
      %3236 = vmatprep.subr.mxu0 0.0
      %3237 = vmatpush1.msra.mxu0 0.0
      %3238 = vmatprep.subr.mxu0 0.0
      %3239 = vmatpush1.msra.mxu0 0.0
      %3240 = vmatprep.subr.mxu0 0.0
      %3241 = vmatpush1.msra.mxu0 0.0
      %3242 = vmatprep.subr.mxu0 0.0
      %3243 = vmatpush1.msra.mxu0 0.0
      %3244 = vmatprep.mubr.f32.mxu0 0.0
      %3245 = vmatmul.mubr.f32.gmra.mrb[0].mxu0 %v3178
      %v3246 = vpop.f32.mrb[0].mxu0
      %v3247 = vadd.f32 %v3175, %v3246
      %v3248 = vpop.f32.mrb[0].mxu0
      %v3249 = vadd.f32 %v3175, %v3248
      %3250 = vdwg.mxu0
      %v3251 = vmax.f32 %v3247, 0.0
      %v3252 = vmax.f32 %v3249, 0.0
      %3253 = vrot.lane.b32.xlu0 %v3251, 34
      %v3254 = vpop.permute.xlu0 %3253
      %3255 = vrot.lane.b32.xlu0 %v3252, 34
      %v3256 = vpop.permute.xlu0 %3255
      %v3257 = vsel %vm812, %v3254, %v3256
      %v3258 = vsel %vm812, %v3256, %v3254
      %v3259 = vmul.f32 %v3258, %v2546
      %v3260 = vmul.f32 %v3257, %v2550
      %s3261 = scalar_lea.vmem %s10, 8
      %v3262 = vld [vmem:[%s3261] sm:$0xff]
      %3264 = vset.pattern.permute.xlu0 0
      %3265 = vperm.xlu0 %3264, %v3262
      %v3266 = vpop.permute.xlu0 %3265
      %v3268 = vmul.f32 %v3259, %v3266
      %v3269 = vmul.f32 %v3260, %v3266
      %3270 = vrot.lane.b32.xlu0 %v3251, 33
      %v3271 = vpop.permute.xlu0 %3270
      %3272 = vrot.lane.b32.xlu0 %v3252, 33
      %v3273 = vpop.permute.xlu0 %3272
      %v3274 = vsel %vm841, %v3271, %v3273
      %v3275 = vsel %vm841, %v3273, %v3271
      %v3276 = vmul.f32 %v3275, %v2575
      %v3277 = vmul.f32 %v3274, %v2579
      %3278 = vset.pattern.permute.xlu0 1
      %3279 = vperm.xlu0 %3278, %v3262
      %v3280 = vpop.permute.xlu0 %3279
      %v3282 = vmul.f32 %v3276, %v3280
      %v3283 = vmul.f32 %v3277, %v3280
      %v3284 = vadd.f32 %v3268, %v3282
      %v3285 = vadd.f32 %v3269, %v3283
      %3286 = vrot.lane.b32.xlu0 %v3251, 32
      %v3287 = vpop.permute.xlu0 %3286
      %3288 = vrot.lane.b32.xlu0 %v3252, 32
      %v3289 = vpop.permute.xlu0 %3288
      %v3290 = vsel %vm871, %v3287, %v3289
      %v3291 = vsel %vm871, %v3289, %v3287
      %v3292 = vmul.f32 %v3291, %v2603
      %v3293 = vmul.f32 %v3290, %v2607
      %3294 = vset.pattern.permute.xlu0 2
      %3295 = vperm.xlu0 %3294, %v3262
      %v3296 = vpop.permute.xlu0 %3295
      %v3298 = vmul.f32 %v3292, %v3296
      %v3299 = vmul.f32 %v3293, %v3296
      %v3300 = vadd.f32 %v3284, %v3298
      %v3301 = vadd.f32 %v3285, %v3299
      %3302 = vrot.lane.b32.xlu0 %v3251, 31
      %v3303 = vpop.permute.xlu0 %3302
      %3304 = vrot.lane.b32.xlu0 %v3252, 31
      %v3305 = vpop.permute.xlu0 %3304
      %v3306 = vsel %vm901, %v3303, %v3305
      %v3307 = vsel %vm901, %v3305, %v3303
      %v3308 = vmul.f32 %v3307, %v2631
      %v3309 = vmul.f32 %v3306, %v2635
      %3310 = vset.pattern.permute.xlu0 3
      %3311 = vperm.xlu0 %3310, %v3262
      %v3312 = vpop.permute.xlu0 %3311
      %v3314 = vmul.f32 %v3308, %v3312
      %v3315 = vmul.f32 %v3309, %v3312
      %v3316 = vadd.f32 %v3300, %v3314
      %v3317 = vadd.f32 %v3301, %v3315
      %3318 = vrot.lane.b32.xlu0 %v3251, 30
      %v3319 = vpop.permute.xlu0 %3318
      %3320 = vrot.lane.b32.xlu0 %v3252, 30
      %v3321 = vpop.permute.xlu0 %3320
      %v3322 = vsel %vm931, %v3319, %v3321
      %v3323 = vsel %vm931, %v3321, %v3319
      %v3324 = vmul.f32 %v3323, %v2659
      %v3325 = vmul.f32 %v3322, %v2663
      %3326 = vset.pattern.permute.xlu0 4
      %3327 = vperm.xlu0 %3326, %v3262
      %v3328 = vpop.permute.xlu0 %3327
      %v3330 = vmul.f32 %v3324, %v3328
      %v3331 = vmul.f32 %v3325, %v3328
      %v3332 = vadd.f32 %v3316, %v3330
      %v3333 = vadd.f32 %v3317, %v3331
      %3334 = vrot.lane.b32.xlu0 %v3251, 18
      %v3335 = vpop.permute.xlu0 %3334
      %3336 = vrot.lane.b32.xlu0 %v3252, 18
      %v3337 = vpop.permute.xlu0 %3336
      %v3338 = vsel %vm961, %v3335, %v3337
      %v3339 = vsel %vm961, %v3337, %v3335
      %v3340 = vmul.f32 %v3339, %v2687
      %v3341 = vmul.f32 %v3338, %v2691
      %3342 = vset.pattern.permute.xlu0 5
      %3343 = vperm.xlu0 %3342, %v3262
      %v3344 = vpop.permute.xlu0 %3343
      %v3346 = vmul.f32 %v3340, %v3344
      %v3347 = vmul.f32 %v3341, %v3344
      %v3348 = vadd.f32 %v3332, %v3346
      %v3349 = vadd.f32 %v3333, %v3347
      %3350 = vrot.lane.b32.xlu0 %v3251, 17
      %v3351 = vpop.permute.xlu0 %3350
      %3352 = vrot.lane.b32.xlu0 %v3252, 17
      %v3353 = vpop.permute.xlu0 %3352
      %v3354 = vsel %vm991, %v3351, %v3353
      %v3355 = vsel %vm991, %v3353, %v3351
      %v3356 = vmul.f32 %v3355, %v2709
      %v3357 = vmul.f32 %v3354, %v2713
      %3358 = vset.pattern.permute.xlu0 6
      %3359 = vperm.xlu0 %3358, %v3262
      %v3360 = vpop.permute.xlu0 %3359
      %v3362 = vmul.f32 %v3356, %v3360
      %v3363 = vmul.f32 %v3357, %v3360
      %v3364 = vadd.f32 %v3348, %v3362
      %v3365 = vadd.f32 %v3349, %v3363
      %3366 = vrot.lane.b32.xlu0 %v3251, 16
      %v3367 = vpop.permute.xlu0 %3366
      %3368 = vrot.lane.b32.xlu0 %v3252, 16
      %v3369 = vpop.permute.xlu0 %3368
      %v3370 = vsel %vm1021, %v3367, %v3369
      %v3371 = vsel %vm1021, %v3369, %v3367
      %v3372 = vmul.f32 %v3371, %v2731
      %v3373 = vmul.f32 %v3370, %v2735
      %3374 = vset.pattern.permute.xlu0 7
      %3375 = vperm.xlu0 %3374, %v3262
      %v3376 = vpop.permute.xlu0 %3375
      %v3378 = vmul.f32 %v3372, %v3376
      %v3379 = vmul.f32 %v3373, %v3376
      %v3380 = vadd.f32 %v3364, %v3378
      %v3381 = vadd.f32 %v3365, %v3379
      %3382 = vrot.lane.b32.xlu0 %v3251, 15
      %v3383 = vpop.permute.xlu0 %3382
      %3384 = vrot.lane.b32.xlu0 %v3252, 15
      %v3385 = vpop.permute.xlu0 %3384
      %v3386 = vsel %vm1051, %v3383, %v3385
      %v3387 = vsel %vm1051, %v3385, %v3383
      %v3388 = vmul.f32 %v3387, %v2753
      %v3389 = vmul.f32 %v3386, %v2757
      %3390 = vset.pattern.permute.xlu0 8
      %3391 = vperm.xlu0 %3390, %v3262
      %v3392 = vpop.permute.xlu0 %3391
      %v3394 = vmul.f32 %v3388, %v3392
      %v3395 = vmul.f32 %v3389, %v3392
      %v3396 = vadd.f32 %v3380, %v3394
      %v3397 = vadd.f32 %v3381, %v3395
      %3398 = vrot.lane.b32.xlu0 %v3251, 14
      %v3399 = vpop.permute.xlu0 %3398
      %3400 = vrot.lane.b32.xlu0 %v3252, 14
      %v3401 = vpop.permute.xlu0 %3400
      %v3402 = vsel %vm1081, %v3399, %v3401
      %v3403 = vsel %vm1081, %v3401, %v3399
      %v3404 = vmul.f32 %v3403, %v2781
      %v3405 = vmul.f32 %v3402, %v2785
      %3406 = vset.pattern.permute.xlu0 9
      %3407 = vperm.xlu0 %3406, %v3262
      %v3408 = vpop.permute.xlu0 %3407
      %v3410 = vmul.f32 %v3404, %v3408
      %v3411 = vmul.f32 %v3405, %v3408
      %v3412 = vadd.f32 %v3396, %v3410
      %v3413 = vadd.f32 %v3397, %v3411
      %3414 = vrot.lane.b32.xlu0 %v3251, 2
      %v3415 = vpop.permute.xlu0 %3414
      %3416 = vrot.lane.b32.xlu0 %v3252, 2
      %v3417 = vpop.permute.xlu0 %3416
      %v3418 = vsel %vm1111, %v3415, %v3417
      %v3419 = vsel %vm1111, %v3417, %v3415
      %v3420 = vmul.f32 %v3419, %v2809
      %v3421 = vmul.f32 %v3418, %v2813
      %3422 = vset.pattern.permute.xlu0 10
      %3423 = vperm.xlu0 %3422, %v3262
      %v3424 = vpop.permute.xlu0 %3423
      %v3426 = vmul.f32 %v3420, %v3424
      %v3427 = vmul.f32 %v3421, %v3424
      %v3428 = vadd.f32 %v3412, %v3426
      %v3429 = vadd.f32 %v3413, %v3427
      %3430 = vrot.lane.b32.xlu0 %v3251, 1
      %v3431 = vpop.permute.xlu0 %3430
      %3432 = vrot.lane.b32.xlu0 %v3252, 1
      %v3433 = vpop.permute.xlu0 %3432
      %v3434 = vsel %vm1141, %v3431, %v3433
      %v3435 = vsel %vm1141, %v3433, %v3431
      %v3436 = vmul.f32 %v3435, %v2831
      %v3437 = vmul.f32 %v3434, %v2835
      %3438 = vset.pattern.permute.xlu0 11
      %3439 = vperm.xlu0 %3438, %v3262
      %v3440 = vpop.permute.xlu0 %3439
      %v3442 = vmul.f32 %v3436, %v3440
      %v3443 = vmul.f32 %v3437, %v3440
      %v3444 = vadd.f32 %v3428, %v3442
      %v3445 = vadd.f32 %v3429, %v3443
      %3446 = vset.pattern.permute.xlu0 12
      %3447 = vperm.xlu0 %3446, %v3262
      %v3448 = vpop.permute.xlu0 %3447
      %v3450 = vmul.f32 %v3251, %v3448
      %v3451 = vmul.f32 %v3252, %v3448
      %v3452 = vadd.f32 %v3444, %v3450
      %v3453 = vadd.f32 %v3445, %v3451
      %3454 = vrot.lane.b32.xlu0 %v3251, 127
      %v3455 = vpop.permute.xlu0 %3454
      %3456 = vrot.lane.b32.xlu0 %v3252, 127
      %v3457 = vpop.permute.xlu0 %3456
      %v3458 = vsel %vm1179, %v3455, %v3457
      %v3459 = vsel %vm1179, %v3457, %v3455
      %v3460 = vmul.f32 %v3458, %v2861
      %v3461 = vmul.f32 %v3459, %v2865
      %3462 = vset.pattern.permute.xlu0 13
      %3463 = vperm.xlu0 %3462, %v3262
      %v3464 = vpop.permute.xlu0 %3463
      %v3466 = vmul.f32 %v3460, %v3464
      %v3467 = vmul.f32 %v3461, %v3464
      %v3468 = vadd.f32 %v3452, %v3466
      %v3469 = vadd.f32 %v3453, %v3467
      %3470 = vrot.lane.b32.xlu0 %v3251, 126
      %v3471 = vpop.permute.xlu0 %3470
      %3472 = vrot.lane.b32.xlu0 %v3252, 126
      %v3473 = vpop.permute.xlu0 %3472
      %v3474 = vsel %vm1209, %v3471, %v3473
      %v3475 = vsel %vm1209, %v3473, %v3471
      %v3476 = vmul.f32 %v3474, %v2889
      %v3477 = vmul.f32 %v3475, %v2893
      %3478 = vset.pattern.permute.xlu0 14
      %3479 = vperm.xlu0 %3478, %v3262
      %v3480 = vpop.permute.xlu0 %3479
      %v3482 = vmul.f32 %v3476, %v3480
      %v3483 = vmul.f32 %v3477, %v3480
      %v3484 = vadd.f32 %v3468, %v3482
      %v3485 = vadd.f32 %v3469, %v3483
      %3486 = vrot.lane.b32.xlu0 %v3251, 114
      %v3487 = vpop.permute.xlu0 %3486
      %3488 = vrot.lane.b32.xlu0 %v3252, 114
      %v3489 = vpop.permute.xlu0 %3488
      %v3490 = vsel %vm1239, %v3487, %v3489
      %v3491 = vsel %vm1239, %v3489, %v3487
      %v3492 = vmul.f32 %v3490, %v2917
      %v3493 = vmul.f32 %v3491, %v2921
      %3494 = vset.pattern.permute.xlu0 15
      %3495 = vperm.xlu0 %3494, %v3262
      %v3496 = vpop.permute.xlu0 %3495
      %v3498 = vmul.f32 %v3492, %v3496
      %v3499 = vmul.f32 %v3493, %v3496
      %v3500 = vadd.f32 %v3484, %v3498
      %v3501 = vadd.f32 %v3485, %v3499
      %3502 = vrot.lane.b32.xlu0 %v3251, 113
      %v3503 = vpop.permute.xlu0 %3502
      %3504 = vrot.lane.b32.xlu0 %v3252, 113
      %v3505 = vpop.permute.xlu0 %3504
      %v3506 = vsel %vm1269, %v3503, %v3505
      %v3507 = vsel %vm1269, %v3505, %v3503
      %v3508 = vmul.f32 %v3506, %v2939
      %v3509 = vmul.f32 %v3507, %v2943
      %3510 = vset.pattern.permute.xlu0 16
      %3511 = vperm.xlu0 %3510, %v3262
      %v3512 = vpop.permute.xlu0 %3511
      %v3514 = vmul.f32 %v3508, %v3512
      %v3515 = vmul.f32 %v3509, %v3512
      %v3516 = vadd.f32 %v3500, %v3514
      %v3517 = vadd.f32 %v3501, %v3515
      %3518 = vrot.lane.b32.xlu0 %v3251, 112
      %v3519 = vpop.permute.xlu0 %3518
      %3520 = vrot.lane.b32.xlu0 %v3252, 112
      %v3521 = vpop.permute.xlu0 %3520
      %v3522 = vsel %vm1299, %v3519, %v3521
      %v3523 = vsel %vm1299, %v3521, %v3519
      %v3524 = vmul.f32 %v3522, %v2961
      %v3525 = vmul.f32 %v3523, %v2965
      %3526 = vset.pattern.permute.xlu0 17
      %3527 = vperm.xlu0 %3526, %v3262
      %v3528 = vpop.permute.xlu0 %3527
      %v3530 = vmul.f32 %v3524, %v3528
      %v3531 = vmul.f32 %v3525, %v3528
      %v3532 = vadd.f32 %v3516, %v3530
      %v3533 = vadd.f32 %v3517, %v3531
      %3534 = vrot.lane.b32.xlu0 %v3251, 111
      %v3535 = vpop.permute.xlu0 %3534
      %3536 = vrot.lane.b32.xlu0 %v3252, 111
      %v3537 = vpop.permute.xlu0 %3536
      %v3538 = vsel %vm1329, %v3535, %v3537
      %v3539 = vsel %vm1329, %v3537, %v3535
      %v3540 = vmul.f32 %v3538, %v2983
      %v3541 = vmul.f32 %v3539, %v2987
      %3542 = vset.pattern.permute.xlu0 18
      %3543 = vperm.xlu0 %3542, %v3262
      %v3544 = vpop.permute.xlu0 %3543
      %v3546 = vmul.f32 %v3540, %v3544
      %v3547 = vmul.f32 %v3541, %v3544
      %v3548 = vadd.f32 %v3532, %v3546
      %v3549 = vadd.f32 %v3533, %v3547
      %3550 = vrot.lane.b32.xlu0 %v3251, 110
      %v3551 = vpop.permute.xlu0 %3550
      %3552 = vrot.lane.b32.xlu0 %v3252, 110
      %v3553 = vpop.permute.xlu0 %3552
      %v3554 = vsel %vm1359, %v3551, %v3553
      %v3555 = vsel %vm1359, %v3553, %v3551
      %v3556 = vmul.f32 %v3554, %v3011
      %v3557 = vmul.f32 %v3555, %v3015
      %3558 = vset.pattern.permute.xlu0 19
      %3559 = vperm.xlu0 %3558, %v3262
      %v3560 = vpop.permute.xlu0 %3559
      %v3562 = vmul.f32 %v3556, %v3560
      %v3563 = vmul.f32 %v3557, %v3560
      %v3564 = vadd.f32 %v3548, %v3562
      %v3565 = vadd.f32 %v3549, %v3563
      %3566 = vrot.lane.b32.xlu0 %v3251, 98
      %v3567 = vpop.permute.xlu0 %3566
      %3568 = vrot.lane.b32.xlu0 %v3252, 98
      %v3569 = vpop.permute.xlu0 %3568
      %v3570 = vsel %vm1389, %v3567, %v3569
      %v3571 = vsel %vm1389, %v3569, %v3567
      %v3572 = vmul.f32 %v3570, %v3039
      %v3573 = vmul.f32 %v3571, %v3043
      %3574 = vset.pattern.permute.xlu0 20
      %3575 = vperm.xlu0 %3574, %v3262
      %v3576 = vpop.permute.xlu0 %3575
      %v3578 = vmul.f32 %v3572, %v3576
      %v3579 = vmul.f32 %v3573, %v3576
      %v3580 = vadd.f32 %v3564, %v3578
      %v3581 = vadd.f32 %v3565, %v3579
      %3582 = vrot.lane.b32.xlu0 %v3251, 97
      %v3583 = vpop.permute.xlu0 %3582
      %3584 = vrot.lane.b32.xlu0 %v3252, 97
      %v3585 = vpop.permute.xlu0 %3584
      %v3586 = vsel %vm1419, %v3583, %v3585
      %v3587 = vsel %vm1419, %v3585, %v3583
      %v3588 = vmul.f32 %v3586, %v3067
      %v3589 = vmul.f32 %v3587, %v3071
      %3590 = vset.pattern.permute.xlu0 21
      %3591 = vperm.xlu0 %3590, %v3262
      %v3592 = vpop.permute.xlu0 %3591
      %v3594 = vmul.f32 %v3588, %v3592
      %v3595 = vmul.f32 %v3589, %v3592
      %v3596 = vadd.f32 %v3580, %v3594
      %v3597 = vadd.f32 %v3581, %v3595
      %3598 = vrot.lane.b32.xlu0 %v3251, 96
      %v3599 = vpop.permute.xlu0 %3598
      %3600 = vrot.lane.b32.xlu0 %v3252, 96
      %v3601 = vpop.permute.xlu0 %3600
      %v3602 = vsel %vm1449, %v3599, %v3601
      %v3603 = vsel %vm1449, %v3601, %v3599
      %v3604 = vmul.f32 %v3602, %v3095
      %v3605 = vmul.f32 %v3603, %v3099
      %3606 = vset.pattern.permute.xlu0 22
      %3607 = vperm.xlu0 %3606, %v3262
      %v3608 = vpop.permute.xlu0 %3607
      %v3610 = vmul.f32 %v3604, %v3608
      %v3611 = vmul.f32 %v3605, %v3608
      %v3612 = vadd.f32 %v3596, %v3610
      %v3613 = vadd.f32 %v3597, %v3611
      %3614 = vrot.lane.b32.xlu0 %v3251, 95
      %v3615 = vpop.permute.xlu0 %3614
      %3616 = vrot.lane.b32.xlu0 %v3252, 95
      %v3617 = vpop.permute.xlu0 %3616
      %v3618 = vsel %vm1479, %v3615, %v3617
      %v3619 = vsel %vm1479, %v3617, %v3615
      %v3620 = vmul.f32 %v3618, %v3123
      %v3621 = vmul.f32 %v3619, %v3127
      %3622 = vset.pattern.permute.xlu0 23
      %3623 = vperm.xlu0 %3622, %v3262
      %v3624 = vpop.permute.xlu0 %3623
      %v3626 = vmul.f32 %v3620, %v3624
      %v3627 = vmul.f32 %v3621, %v3624
      %v3628 = vadd.f32 %v3612, %v3626
      %v3629 = vadd.f32 %v3613, %v3627
      %3630 = vrot.lane.b32.xlu0 %v3251, 94
      %v3631 = vpop.permute.xlu0 %3630
      %3632 = vrot.lane.b32.xlu0 %v3252, 94
      %v3633 = vpop.permute.xlu0 %3632
      %v3634 = vsel %vm1509, %v3631, %v3633
      %v3635 = vsel %vm1509, %v3633, %v3631
      %v3636 = vmul.f32 %v3634, %v3151
      %v3637 = vmul.f32 %v3635, %v3155
      %3638 = vset.pattern.permute.xlu0 24
      %3639 = vperm.xlu0 %3638, %v3262
      %v3640 = vpop.permute.xlu0 %3639
      %v3642 = vmul.f32 %v3636, %v3640
      %v3643 = vmul.f32 %v3637, %v3640
      %v3644 = vadd.f32 %v3628, %v3642
      %v3645 = vadd.f32 %v3629, %v3643
      %s3646 = scalar_lea.vmem %s11, 8
      %v3647 = vld [vmem:[%s3646] sm:$0xff]
      %s3648 = scalar_lea.vmem %s12, 8
      %v3649 = vld [vmem:[%s3648] sm:$0xff]
      %3651 = vset.pattern.permute.xlu0 0
      %3652 = vperm.xlu0 %3651, %v3649
      %v3653 = vpop.permute.xlu0 %3652
      %v3656 = vsel %vm1542, %v3647, 0
      %3658 = vmatprep.subr.mxu0 %v3645
      %3659 = vmatpush1.msra.mxu0 %v3644
      %3660 = vmatprep.subr.mxu0 0.0
      %3661 = vmatpush1.msra.mxu0 0.0
      %3662 = vmatprep.subr.mxu0 0.0
      %3663 = vmatpush1.msra.mxu0 0.0
      %3664 = vmatprep.subr.mxu0 0.0
      %3665 = vmatpush1.msra.mxu0 0.0
      %3666 = vmatprep.subr.mxu0 0.0
      %3667 = vmatpush1.msra.mxu0 0.0
      %3668 = vmatprep.subr.mxu0 0.0
      %3669 = vmatpush1.msra.mxu0 0.0
      %3670 = vmatprep.subr.mxu0 0.0
      %3671 = vmatpush1.msra.mxu0 0.0
      %3672 = vmatprep.subr.mxu0 0.0
      %3673 = vmatpush1.msra.mxu0 0.0
      %3674 = vmatprep.subr.mxu0 0.0
      %3675 = vmatpush1.msra.mxu0 0.0
      %3676 = vmatprep.subr.mxu0 0.0
      %3677 = vmatpush1.msra.mxu0 0.0
      %3678 = vmatprep.subr.mxu0 0.0
      %3679 = vmatpush1.msra.mxu0 0.0
      %3680 = vmatprep.subr.mxu0 0.0
      %3681 = vmatpush1.msra.mxu0 0.0
      %3682 = vmatprep.subr.mxu0 0.0
      %3683 = vmatpush1.msra.mxu0 0.0
      %3684 = vmatprep.subr.mxu0 0.0
      %3685 = vmatpush1.msra.mxu0 0.0
      %3686 = vmatprep.subr.mxu0 0.0
      %3687 = vmatpush1.msra.mxu0 0.0
      %3688 = vmatprep.subr.mxu0 0.0
      %3689 = vmatpush1.msra.mxu0 0.0
      %3690 = vmatprep.subr.mxu0 0.0
      %3691 = vmatpush1.msra.mxu0 0.0
      %3692 = vmatprep.subr.mxu0 0.0
      %3693 = vmatpush1.msra.mxu0 0.0
      %3694 = vmatprep.subr.mxu0 0.0
      %3695 = vmatpush1.msra.mxu0 0.0
      %3696 = vmatprep.subr.mxu0 0.0
      %3697 = vmatpush1.msra.mxu0 0.0
      %3698 = vmatprep.subr.mxu0 0.0
      %3699 = vmatpush1.msra.mxu0 0.0
      %3700 = vmatprep.subr.mxu0 0.0
      %3701 = vmatpush1.msra.mxu0 0.0
      %3702 = vmatprep.subr.mxu0 0.0
      %3703 = vmatpush1.msra.mxu0 0.0
      %3704 = vmatprep.subr.mxu0 0.0
      %3705 = vmatpush1.msra.mxu0 0.0
      %3706 = vmatprep.subr.mxu0 0.0
      %3707 = vmatpush1.msra.mxu0 0.0
      %3708 = vmatprep.subr.mxu0 0.0
      %3709 = vmatpush1.msra.mxu0 0.0
      %3710 = vmatprep.subr.mxu0 0.0
      %3711 = vmatpush1.msra.mxu0 0.0
      %3712 = vmatprep.subr.mxu0 0.0
      %3713 = vmatpush1.msra.mxu0 0.0
      %3714 = vmatprep.subr.mxu0 0.0
      %3715 = vmatpush1.msra.mxu0 0.0
      %3716 = vmatprep.subr.mxu0 0.0
      %3717 = vmatpush1.msra.mxu0 0.0
      %3718 = vmatprep.subr.mxu0 0.0
      %3719 = vmatpush1.msra.mxu0 0.0
      %3720 = vmatprep.subr.mxu0 0.0
      %3721 = vmatpush1.msra.mxu0 0.0
      %3722 = vmatprep.mubr.f32.mxu0 0.0
      %3723 = vmatmul.mubr.f32.gmra.mrb[0].mxu0 %v3656
      %v3724 = vpop.f32.mrb[0].mxu0
      %v3725 = vadd.f32 %v3653, %v3724
      %v3726 = vpop.f32.mrb[0].mxu0
      %v3727 = vadd.f32 %v3653, %v3726
      %3728 = vdwg.mxu0
      %s3729 = scalar_lea.vmem %s13, 8
      %v3730 = vld [vmem:[%s3729] sm:$0xff]
      %3732 = vset.pattern.permute.xlu0 0
      %3733 = vperm.xlu0 %3732, %v3730
      %v3734 = vpop.permute.xlu0 %3733
      %v3736 = vmul.f32 %v2716, %v3734
      %v3737 = vmul.f32 %v2717, %v3734
      %3738 = vset.pattern.permute.xlu0 1
      %3739 = vperm.xlu0 %3738, %v3730
      %v3740 = vpop.permute.xlu0 %3739
      %v3742 = vmul.f32 %v2738, %v3740
      %v3743 = vmul.f32 %v2739, %v3740
      %v3744 = vadd.f32 %v3736, %v3742
      %v3745 = vadd.f32 %v3737, %v3743
      %3746 = vset.pattern.permute.xlu0 2
      %3747 = vperm.xlu0 %3746, %v3730
      %v3748 = vpop.permute.xlu0 %3747
      %v3750 = vmul.f32 %v2760, %v3748
      %v3751 = vmul.f32 %v2761, %v3748
      %v3752 = vadd.f32 %v3744, %v3750
      %v3753 = vadd.f32 %v3745, %v3751
      %3754 = vset.pattern.permute.xlu0 3
      %3755 = vperm.xlu0 %3754, %v3730
      %v3756 = vpop.permute.xlu0 %3755
      %v3758 = vmul.f32 %v2838, %v3756
      %v3759 = vmul.f32 %v2839, %v3756
      %v3760 = vadd.f32 %v3752, %v3758
      %v3761 = vadd.f32 %v3753, %v3759
      %3762 = vset.pattern.permute.xlu0 4
      %3763 = vperm.xlu0 %3762, %v3730
      %v3764 = vpop.permute.xlu0 %3763
      %v3766 = vmul.f32 %v2092, %v3764
      %v3767 = vmul.f32 %v2093, %v3764
      %v3768 = vadd.f32 %v3760, %v3766
      %v3769 = vadd.f32 %v3761, %v3767
      %3770 = vset.pattern.permute.xlu0 5
      %3771 = vperm.xlu0 %3770, %v3730
      %v3772 = vpop.permute.xlu0 %3771
      %v3774 = vmul.f32 %v2868, %v3772
      %v3775 = vmul.f32 %v2869, %v3772
      %v3776 = vadd.f32 %v3768, %v3774
      %v3777 = vadd.f32 %v3769, %v3775
      %3778 = vset.pattern.permute.xlu0 6
      %3779 = vperm.xlu0 %3778, %v3730
      %v3780 = vpop.permute.xlu0 %3779
      %v3782 = vmul.f32 %v2946, %v3780
      %v3783 = vmul.f32 %v2947, %v3780
      %v3784 = vadd.f32 %v3776, %v3782
      %v3785 = vadd.f32 %v3777, %v3783
      %3786 = vset.pattern.permute.xlu0 7
      %3787 = vperm.xlu0 %3786, %v3730
      %v3788 = vpop.permute.xlu0 %3787
      %v3790 = vmul.f32 %v2968, %v3788
      %v3791 = vmul.f32 %v2969, %v3788
      %v3792 = vadd.f32 %v3784, %v3790
      %v3793 = vadd.f32 %v3785, %v3791
      %3794 = vset.pattern.permute.xlu0 8
      %3795 = vperm.xlu0 %3794, %v3730
      %v3796 = vpop.permute.xlu0 %3795
      %v3798 = vmul.f32 %v2990, %v3796
      %v3799 = vmul.f32 %v2991, %v3796
      %v3800 = vadd.f32 %v3792, %v3798
      %v3801 = vadd.f32 %v3793, %v3799
      %s3802 = scalar_lea.vmem %s14, 8
      %v3803 = vld [vmem:[%s3802] sm:$0xff]
      %s3804 = scalar_lea.vmem %s15, 8
      %v3805 = vld [vmem:[%s3804] sm:$0xff]
      %3807 = vset.pattern.permute.xlu0 0
      %3808 = vperm.xlu0 %3807, %v3805
      %v3809 = vpop.permute.xlu0 %3808
      %v3812 = vsel %vm1542, %v3803, 0
      %3814 = vmatprep.subr.mxu0 %v3801
      %3815 = vmatpush1.msra.mxu0 %v3800
      %3816 = vmatprep.subr.mxu0 0.0
      %3817 = vmatpush1.msra.mxu0 0.0
      %3818 = vmatprep.subr.mxu0 0.0
      %3819 = vmatpush1.msra.mxu0 0.0
      %3820 = vmatprep.subr.mxu0 0.0
      %3821 = vmatpush1.msra.mxu0 0.0
      %3822 = vmatprep.subr.mxu0 0.0
      %3823 = vmatpush1.msra.mxu0 0.0
      %3824 = vmatprep.subr.mxu0 0.0
      %3825 = vmatpush1.msra.mxu0 0.0
      %3826 = vmatprep.subr.mxu0 0.0
      %3827 = vmatpush1.msra.mxu0 0.0
      %3828 = vmatprep.subr.mxu0 0.0
      %3829 = vmatpush1.msra.mxu0 0.0
      %3830 = vmatprep.subr.mxu0 0.0
      %3831 = vmatpush1.msra.mxu0 0.0
      %3832 = vmatprep.subr.mxu0 0.0
      %3833 = vmatpush1.msra.mxu0 0.0
      %3834 = vmatprep.subr.mxu0 0.0
      %3835 = vmatpush1.msra.mxu0 0.0
      %3836 = vmatprep.subr.mxu0 0.0
      %3837 = vmatpush1.msra.mxu0 0.0
      %3838 = vmatprep.subr.mxu0 0.0
      %3839 = vmatpush1.msra.mxu0 0.0
      %3840 = vmatprep.subr.mxu0 0.0
      %3841 = vmatpush1.msra.mxu0 0.0
      %3842 = vmatprep.subr.mxu0 0.0
      %3843 = vmatpush1.msra.mxu0 0.0
      %3844 = vmatprep.subr.mxu0 0.0
      %3845 = vmatpush1.msra.mxu0 0.0
      %3846 = vmatprep.subr.mxu0 0.0
      %3847 = vmatpush1.msra.mxu0 0.0
      %3848 = vmatprep.subr.mxu0 0.0
      %3849 = vmatpush1.msra.mxu0 0.0
      %3850 = vmatprep.subr.mxu0 0.0
      %3851 = vmatpush1.msra.mxu0 0.0
      %3852 = vmatprep.subr.mxu0 0.0
      %3853 = vmatpush1.msra.mxu0 0.0
      %3854 = vmatprep.subr.mxu0 0.0
      %3855 = vmatpush1.msra.mxu0 0.0
      %3856 = vmatprep.subr.mxu0 0.0
      %3857 = vmatpush1.msra.mxu0 0.0
      %3858 = vmatprep.subr.mxu0 0.0
      %3859 = vmatpush1.msra.mxu0 0.0
      %3860 = vmatprep.subr.mxu0 0.0
      %3861 = vmatpush1.msra.mxu0 0.0
      %3862 = vmatprep.subr.mxu0 0.0
      %3863 = vmatpush1.msra.mxu0 0.0
      %3864 = vmatprep.subr.mxu0 0.0
      %3865 = vmatpush1.msra.mxu0 0.0
      %3866 = vmatprep.subr.mxu0 0.0
      %3867 = vmatpush1.msra.mxu0 0.0
      %3868 = vmatprep.subr.mxu0 0.0
      %3869 = vmatpush1.msra.mxu0 0.0
      %3870 = vmatprep.subr.mxu0 0.0
      %3871 = vmatpush1.msra.mxu0 0.0
      %3872 = vmatprep.subr.mxu0 0.0
      %3873 = vmatpush1.msra.mxu0 0.0
      %3874 = vmatprep.subr.mxu0 0.0
      %3875 = vmatpush1.msra.mxu0 0.0
      %3876 = vmatprep.subr.mxu0 0.0
      %3877 = vmatpush1.msra.mxu0 0.0
      %3878 = vmatprep.mubr.f32.mxu0 0.0
      %3879 = vmatmul.mubr.f32.gmra.mrb[0].mxu0 %v3812
      %v3880 = vpop.f32.mrb[0].mxu0
      %v3881 = vadd.f32 %v3809, %v3880
      %v3882 = vpop.f32.mrb[0].mxu0
      %v3883 = vadd.f32 %v3809, %v3882
      %3884 = vdwg.mxu0
      %v3885 = vmax.f32 %v3881, 0.0
      %v3886 = vmax.f32 %v3883, 0.0
      %3887 = vrot.lane.b32.xlu0 %v3885, 17
      %v3888 = vpop.permute.xlu0 %3887
      %3889 = vrot.lane.b32.xlu0 %v3886, 17
      %v3890 = vpop.permute.xlu0 %3889
      %v3891 = vsel %vm991, %v3888, %v3890
      %v3892 = vsel %vm991, %v3890, %v3888
      %v3893 = vmul.f32 %v3892, %v2709
      %v3894 = vmul.f32 %v3891, %v2713
      %s3895 = scalar_lea.vmem %s16, 8
      %v3896 = vld [vmem:[%s3895] sm:$0xff]
      %3898 = vset.pattern.permute.xlu0 0
      %3899 = vperm.xlu0 %3898, %v3896
      %v3900 = vpop.permute.xlu0 %3899
      %v3902 = vmul.f32 %v3893, %v3900
      %v3903 = vmul.f32 %v3894, %v3900
      %3904 = vrot.lane.b32.xlu0 %v3885, 16
      %v3905 = vpop.permute.xlu0 %3904
      %3906 = vrot.lane.b32.xlu0 %v3886, 16
      %v3907 = vpop.permute.xlu0 %3906
      %v3908 = vsel %vm1021, %v3905, %v3907
      %v3909 = vsel %vm1021, %v3907, %v3905
      %v3910 = vmul.f32 %v3909, %v2731
      %v3911 = vmul.f32 %v3908, %v2735
      %3912 = vset.pattern.permute.xlu0 1
      %3913 = vperm.xlu0 %3912, %v3896
      %v3914 = vpop.permute.xlu0 %3913
      %v3916 = vmul.f32 %v3910, %v3914
      %v3917 = vmul.f32 %v3911, %v3914
      %v3918 = vadd.f32 %v3902, %v3916
      %v3919 = vadd.f32 %v3903, %v3917
      %3920 = vrot.lane.b32.xlu0 %v3885, 15
      %v3921 = vpop.permute.xlu0 %3920
      %3922 = vrot.lane.b32.xlu0 %v3886, 15
      %v3923 = vpop.permute.xlu0 %3922
      %v3924 = vsel %vm1051, %v3921, %v3923
      %v3925 = vsel %vm1051, %v3923, %v3921
      %v3926 = vmul.f32 %v3925, %v2753
      %v3927 = vmul.f32 %v3924, %v2757
      %3928 = vset.pattern.permute.xlu0 2
      %3929 = vperm.xlu0 %3928, %v3896
      %v3930 = vpop.permute.xlu0 %3929
      %v3932 = vmul.f32 %v3926, %v3930
      %v3933 = vmul.f32 %v3927, %v3930
      %v3934 = vadd.f32 %v3918, %v3932
      %v3935 = vadd.f32 %v3919, %v3933
      %3936 = vrot.lane.b32.xlu0 %v3885, 1
      %v3937 = vpop.permute.xlu0 %3936
      %3938 = vrot.lane.b32.xlu0 %v3886, 1
      %v3939 = vpop.permute.xlu0 %3938
      %v3940 = vsel %vm1141, %v3937, %v3939
      %v3941 = vsel %vm1141, %v3939, %v3937
      %v3942 = vmul.f32 %v3941, %v2831
      %v3943 = vmul.f32 %v3940, %v2835
      %3944 = vset.pattern.permute.xlu0 3
      %3945 = vperm.xlu0 %3944, %v3896
      %v3946 = vpop.permute.xlu0 %3945
      %v3948 = vmul.f32 %v3942, %v3946
      %v3949 = vmul.f32 %v3943, %v3946
      %v3950 = vadd.f32 %v3934, %v3948
      %v3951 = vadd.f32 %v3935, %v3949
      %3952 = vset.pattern.permute.xlu0 4
      %3953 = vperm.xlu0 %3952, %v3896
      %v3954 = vpop.permute.xlu0 %3953
      %v3956 = vmul.f32 %v3885, %v3954
      %v3957 = vmul.f32 %v3886, %v3954
      %v3958 = vadd.f32 %v3950, %v3956
      %v3959 = vadd.f32 %v3951, %v3957
      %3960 = vrot.lane.b32.xlu0 %v3885, 127
      %v3961 = vpop.permute.xlu0 %3960
      %3962 = vrot.lane.b32.xlu0 %v3886, 127
      %v3963 = vpop.permute.xlu0 %3962
      %v3964 = vsel %vm1179, %v3961, %v3963
      %v3965 = vsel %vm1179, %v3963, %v3961
      %v3966 = vmul.f32 %v3964, %v2861
      %v3967 = vmul.f32 %v3965, %v2865
      %3968 = vset.pattern.permute.xlu0 5
      %3969 = vperm.xlu0 %3968, %v3896
      %v3970 = vpop.permute.xlu0 %3969
      %v3972 = vmul.f32 %v3966, %v3970
      %v3973 = vmul.f32 %v3967, %v3970
      %v3974 = vadd.f32 %v3958, %v3972
      %v3975 = vadd.f32 %v3959, %v3973
      %3976 = vrot.lane.b32.xlu0 %v3885, 113
      %v3977 = vpop.permute.xlu0 %3976
      %3978 = vrot.lane.b32.xlu0 %v3886, 113
      %v3979 = vpop.permute.xlu0 %3978
      %v3980 = vsel %vm1269, %v3977, %v3979
      %v3981 = vsel %vm1269, %v3979, %v3977
      %v3982 = vmul.f32 %v3980, %v2939
      %v3983 = vmul.f32 %v3981, %v2943
      %3984 = vset.pattern.permute.xlu0 6
      %3985 = vperm.xlu0 %3984, %v3896
      %v3986 = vpop.permute.xlu0 %3985
      %v3988 = vmul.f32 %v3982, %v3986
      %v3989 = vmul.f32 %v3983, %v3986
      %v3990 = vadd.f32 %v3974, %v3988
      %v3991 = vadd.f32 %v3975, %v3989
      %3992 = vrot.lane.b32.xlu0 %v3885, 112
      %v3993 = vpop.permute.xlu0 %3992
      %3994 = vrot.lane.b32.xlu0 %v3886, 112
      %v3995 = vpop.permute.xlu0 %3994
      %v3996 = vsel %vm1299, %v3993, %v3995
      %v3997 = vsel %vm1299, %v3995, %v3993
      %v3998 = vmul.f32 %v3996, %v2961
      %v3999 = vmul.f32 %v3997, %v2965
      %4000 = vset.pattern.permute.xlu0 7
      %4001 = vperm.xlu0 %4000, %v3896
      %v4002 = vpop.permute.xlu0 %4001
      %v4004 = vmul.f32 %v3998, %v4002
      %v4005 = vmul.f32 %v3999, %v4002
      %v4006 = vadd.f32 %v3990, %v4004
      %v4007 = vadd.f32 %v3991, %v4005
      %4008 = vrot.lane.b32.xlu0 %v3885, 111
      %v4009 = vpop.permute.xlu0 %4008
      %4010 = vrot.lane.b32.xlu0 %v3886, 111
      %v4011 = vpop.permute.xlu0 %4010
      %v4012 = vsel %vm1329, %v4009, %v4011
      %v4013 = vsel %vm1329, %v4011, %v4009
      %v4014 = vmul.f32 %v4012, %v2983
      %v4015 = vmul.f32 %v4013, %v2987
      %4016 = vset.pattern.permute.xlu0 8
      %4017 = vperm.xlu0 %4016, %v3896
      %v4018 = vpop.permute.xlu0 %4017
      %v4020 = vmul.f32 %v4014, %v4018
      %v4021 = vmul.f32 %v4015, %v4018
      %v4022 = vadd.f32 %v4006, %v4020
      %v4023 = vadd.f32 %v4007, %v4021
      %s4024 = scalar_lea.vmem %s17, 8
      %v4025 = vld [vmem:[%s4024] sm:$0xff]
      %s4026 = scalar_lea.vmem %s18, 8
      %v4027 = vld [vmem:[%s4026] sm:$0xff]
      %4029 = vset.pattern.permute.xlu0 0
      %4030 = vperm.xlu0 %4029, %v4027
      %v4031 = vpop.permute.xlu0 %4030
      %v4034 = vsel %vm1542, %v4025, 0
      %4036 = vmatprep.subr.mxu0 %v4023
      %4037 = vmatpush1.msra.mxu0 %v4022
      %4038 = vmatprep.subr.mxu0 0.0
      %4039 = vmatpush1.msra.mxu0 0.0
      %4040 = vmatprep.subr.mxu0 0.0
      %4041 = vmatpush1.msra.mxu0 0.0
      %4042 = vmatprep.subr.mxu0 0.0
      %4043 = vmatpush1.msra.mxu0 0.0
      %4044 = vmatprep.subr.mxu0 0.0
      %4045 = vmatpush1.msra.mxu0 0.0
      %4046 = vmatprep.subr.mxu0 0.0
      %4047 = vmatpush1.msra.mxu0 0.0
      %4048 = vmatprep.subr.mxu0 0.0
      %4049 = vmatpush1.msra.mxu0 0.0
      %4050 = vmatprep.subr.mxu0 0.0
      %4051 = vmatpush1.msra.mxu0 0.0
      %4052 = vmatprep.subr.mxu0 0.0
      %4053 = vmatpush1.msra.mxu0 0.0
      %4054 = vmatprep.subr.mxu0 0.0
      %4055 = vmatpush1.msra.mxu0 0.0
      %4056 = vmatprep.subr.mxu0 0.0
      %4057 = vmatpush1.msra.mxu0 0.0
      %4058 = vmatprep.subr.mxu0 0.0
      %4059 = vmatpush1.msra.mxu0 0.0
      %4060 = vmatprep.subr.mxu0 0.0
      %4061 = vmatpush1.msra.mxu0 0.0
      %4062 = vmatprep.subr.mxu0 0.0
      %4063 = vmatpush1.msra.mxu0 0.0
      %4064 = vmatprep.subr.mxu0 0.0
      %4065 = vmatpush1.msra.mxu0 0.0
      %4066 = vmatprep.subr.mxu0 0.0
      %4067 = vmatpush1.msra.mxu0 0.0
      %4068 = vmatprep.subr.mxu0 0.0
      %4069 = vmatpush1.msra.mxu0 0.0
      %4070 = vmatprep.subr.mxu0 0.0
      %4071 = vmatpush1.msra.mxu0 0.0
      %4072 = vmatprep.subr.mxu0 0.0
      %4073 = vmatpush1.msra.mxu0 0.0
      %4074 = vmatprep.subr.mxu0 0.0
      %4075 = vmatpush1.msra.mxu0 0.0
      %4076 = vmatprep.subr.mxu0 0.0
      %4077 = vmatpush1.msra.mxu0 0.0
      %4078 = vmatprep.subr.mxu0 0.0
      %4079 = vmatpush1.msra.mxu0 0.0
      %4080 = vmatprep.subr.mxu0 0.0
      %4081 = vmatpush1.msra.mxu0 0.0
      %4082 = vmatprep.subr.mxu0 0.0
      %4083 = vmatpush1.msra.mxu0 0.0
      %4084 = vmatprep.subr.mxu0 0.0
      %4085 = vmatpush1.msra.mxu0 0.0
      %4086 = vmatprep.subr.mxu0 0.0
      %4087 = vmatpush1.msra.mxu0 0.0
      %4088 = vmatprep.subr.mxu0 0.0
      %4089 = vmatpush1.msra.mxu0 0.0
      %4090 = vmatprep.subr.mxu0 0.0
      %4091 = vmatpush1.msra.mxu0 0.0
      %4092 = vmatprep.subr.mxu0 0.0
      %4093 = vmatpush1.msra.mxu0 0.0
      %4094 = vmatprep.subr.mxu0 0.0
      %4095 = vmatpush1.msra.mxu0 0.0
      %4096 = vmatprep.subr.mxu0 0.0
      %4097 = vmatpush1.msra.mxu0 0.0
      %4098 = vmatprep.subr.mxu0 0.0
      %4099 = vmatpush1.msra.mxu0 0.0
      %4100 = vmatprep.mubr.f32.mxu0 0.0
      %4101 = vmatmul.mubr.f32.gmra.mrb[0].mxu0 %v4034
      %v4102 = vpop.f32.mrb[0].mxu0
      %v4103 = vadd.f32 %v4031, %v4102
      %v4104 = vpop.f32.mrb[0].mxu0
      %v4105 = vadd.f32 %v4031, %v4104
      %4106 = vdwg.mxu0
      %v4107 = vadd.f32 %v3725, %v4103
      %v4108 = vadd.f32 %v3727, %v4105
      %s4109 = scalar_lea.vmem %s622, 32
      %4110 = vst [vmem:[%s4109] sm:$0xff] %v4107
      %4111 = vst [vmem:[%s4109 + $0x8] sm:$0xff] %v4108
      %4112 = vrot.lane.b32.xlu0 %v709, 17
      %v4113 = vpop.permute.xlu0 %4112
      %4114 = vrot.lane.b32.xlu0 %v711, 17
      %v4115 = vpop.permute.xlu0 %4114
      %v4116 = vsel %vm991, %v4113, %v4115
      %v4117 = vsel %vm991, %v4115, %v4113
      %v4118 = vld [vmem:[%s994] ss:$8 sm:$0x3]
      %v4120 = vlaneseq
      %v4121 = vshrl.u32 %v4120, 7
      %v4122 = vsub.s32 0, %v4121
      %v4123 = vrot.slane %v4118, %v4122
      %v4124 = vlaneseq
      %v4125 = vshrl.u32 %v4124, 7
      %v4126 = vsub.s32 1, %v4125
      %v4127 = vrot.slane %v4118, %v4126
      %v4130 = vmul.f32 %v4117, %v4123
      %v4131 = vmul.f32 %v4116, %v4127
      %4132 = vrot.lane.b32.xlu0 %v709, 16
      %v4133 = vpop.permute.xlu0 %4132
      %4134 = vrot.lane.b32.xlu0 %v711, 16
      %v4135 = vpop.permute.xlu0 %4134
      %v4136 = vsel %vm1021, %v4133, %v4135
      %v4137 = vsel %vm1021, %v4135, %v4133
      %v4138 = vld [vmem:[%s1024] ss:$8 sm:$0x3]
      %v4140 = vlaneseq
      %v4141 = vshrl.u32 %v4140, 7
      %v4142 = vsub.s32 0, %v4141
      %v4143 = vrot.slane %v4138, %v4142
      %v4144 = vlaneseq
      %v4145 = vshrl.u32 %v4144, 7
      %v4146 = vsub.s32 1, %v4145
      %v4147 = vrot.slane %v4138, %v4146
      %v4150 = vmul.f32 %v4137, %v4143
      %v4151 = vmul.f32 %v4136, %v4147
      %v4152 = vadd.f32 %v4130, %v4150
      %v4153 = vadd.f32 %v4131, %v4151
      %4154 = vrot.lane.b32.xlu0 %v709, 15
      %v4155 = vpop.permute.xlu0 %4154
      %4156 = vrot.lane.b32.xlu0 %v711, 15
      %v4157 = vpop.permute.xlu0 %4156
      %v4158 = vsel %vm1051, %v4155, %v4157
      %v4159 = vsel %vm1051, %v4157, %v4155
      %v4160 = vld [vmem:[%s1054] ss:$8 sm:$0x3]
      %v4162 = vlaneseq
      %v4163 = vshrl.u32 %v4162, 7
      %v4164 = vsub.s32 0, %v4163
      %v4165 = vrot.slane %v4160, %v4164
      %v4166 = vlaneseq
      %v4167 = vshrl.u32 %v4166, 7
      %v4168 = vsub.s32 1, %v4167
      %v4169 = vrot.slane %v4160, %v4168
      %v4172 = vmul.f32 %v4159, %v4165
      %v4173 = vmul.f32 %v4158, %v4169
      %v4174 = vadd.f32 %v4152, %v4172
      %v4175 = vadd.f32 %v4153, %v4173
      %4176 = vrot.lane.b32.xlu0 %v709, 1
      %v4177 = vpop.permute.xlu0 %4176
      %4178 = vrot.lane.b32.xlu0 %v711, 1
      %v4179 = vpop.permute.xlu0 %4178
      %v4180 = vsel %vm1141, %v4177, %v4179
      %v4181 = vsel %vm1141, %v4179, %v4177
      %v4182 = vld [vmem:[%s1144] ss:$8 sm:$0x3]
      %v4184 = vlaneseq
      %v4185 = vshrl.u32 %v4184, 7
      %v4186 = vsub.s32 0, %v4185
      %v4187 = vrot.slane %v4182, %v4186
      %v4188 = vlaneseq
      %v4189 = vshrl.u32 %v4188, 7
      %v4190 = vsub.s32 1, %v4189
      %v4191 = vrot.slane %v4182, %v4190
      %v4194 = vmul.f32 %v4181, %v4187
      %v4195 = vmul.f32 %v4180, %v4191
      %v4196 = vadd.f32 %v4174, %v4194
      %v4197 = vadd.f32 %v4175, %v4195
      %v4198 = vadd.f32 %v4196, %v709
      %v4199 = vadd.f32 %v4197, %v711
      %4200 = vrot.lane.b32.xlu0 %v709, 127
      %v4201 = vpop.permute.xlu0 %4200
      %4202 = vrot.lane.b32.xlu0 %v711, 127
      %v4203 = vpop.permute.xlu0 %4202
      %v4204 = vsel %vm1179, %v4201, %v4203
      %v4205 = vsel %vm1179, %v4203, %v4201
      %v4206 = vld [vmem:[%s1182] ss:$8 sm:$0x3]
      %v4208 = vlaneseq
      %v4209 = vshrl.u32 %v4208, 7
      %v4210 = vsub.s32 0, %v4209
      %v4211 = vrot.slane %v4206, %v4210
      %v4212 = vlaneseq
      %v4213 = vshrl.u32 %v4212, 7
      %v4214 = vsub.s32 1, %v4213
      %v4215 = vrot.slane %v4206, %v4214
      %v4218 = vmul.f32 %v4204, %v4211
      %v4219 = vmul.f32 %v4205, %v4215
      %v4220 = vadd.f32 %v4198, %v4218
      %v4221 = vadd.f32 %v4199, %v4219
      %4222 = vrot.lane.b32.xlu0 %v709, 113
      %v4223 = vpop.permute.xlu0 %4222
      %4224 = vrot.lane.b32.xlu0 %v711, 113
      %v4225 = vpop.permute.xlu0 %4224
      %v4226 = vsel %vm1269, %v4223, %v4225
      %v4227 = vsel %vm1269, %v4225, %v4223
      %v4228 = vld [vmem:[%s1272] ss:$8 sm:$0x3]
      %v4230 = vlaneseq
      %v4231 = vshrl.u32 %v4230, 7
      %v4232 = vsub.s32 0, %v4231
      %v4233 = vrot.slane %v4228, %v4232
      %v4234 = vlaneseq
      %v4235 = vshrl.u32 %v4234, 7
      %v4236 = vsub.s32 1, %v4235
      %v4237 = vrot.slane %v4228, %v4236
      %v4240 = vmul.f32 %v4226, %v4233
      %v4241 = vmul.f32 %v4227, %v4237
      %v4242 = vadd.f32 %v4220, %v4240
      %v4243 = vadd.f32 %v4221, %v4241
      %4244 = vrot.lane.b32.xlu0 %v709, 112
      %v4245 = vpop.permute.xlu0 %4244
      %4246 = vrot.lane.b32.xlu0 %v711, 112
      %v4247 = vpop.permute.xlu0 %4246
      %v4248 = vsel %vm1299, %v4245, %v4247
      %v4249 = vsel %vm1299, %v4247, %v4245
      %v4250 = vld [vmem:[%s1302] ss:$8 sm:$0x3]
      %v4252 = vlaneseq
      %v4253 = vshrl.u32 %v4252, 7
      %v4254 = vsub.s32 0, %v4253
      %v4255 = vrot.slane %v4250, %v4254
      %v4256 = vlaneseq
      %v4257 = vshrl.u32 %v4256, 7
      %v4258 = vsub.s32 1, %v4257
      %v4259 = vrot.slane %v4250, %v4258
      %v4262 = vmul.f32 %v4248, %v4255
      %v4263 = vmul.f32 %v4249, %v4259
      %v4264 = vadd.f32 %v4242, %v4262
      %v4265 = vadd.f32 %v4243, %v4263
      %4266 = vrot.lane.b32.xlu0 %v709, 111
      %v4267 = vpop.permute.xlu0 %4266
      %4268 = vrot.lane.b32.xlu0 %v711, 111
      %v4269 = vpop.permute.xlu0 %4268
      %v4270 = vsel %vm1329, %v4267, %v4269
      %v4271 = vsel %vm1329, %v4269, %v4267
      %v4272 = vld [vmem:[%s1332] ss:$8 sm:$0x3]
      %v4274 = vlaneseq
      %v4275 = vshrl.u32 %v4274, 7
      %v4276 = vsub.s32 0, %v4275
      %v4277 = vrot.slane %v4272, %v4276
      %v4278 = vlaneseq
      %v4279 = vshrl.u32 %v4278, 7
      %v4280 = vsub.s32 1, %v4279
      %v4281 = vrot.slane %v4272, %v4280
      %v4284 = vmul.f32 %v4270, %v4277
      %v4285 = vmul.f32 %v4271, %v4281
      %v4286 = vadd.f32 %v4264, %v4284
      %v4287 = vadd.f32 %v4265, %v4285
      %s4288 = scalar_lea.vmem %s2, 49
      %v4289 = vld [vmem:[%s4288] ss:$8 sm:$0x3]
      %v4291 = vlaneseq
      %v4292 = vshrl.u32 %v4291, 7
      %v4293 = vsub.s32 0, %v4292
      %v4294 = vrot.slane %v4289, %v4293
      %v4295 = vlaneseq
      %v4296 = vshrl.u32 %v4295, 7
      %v4297 = vsub.s32 1, %v4296
      %v4298 = vrot.slane %v4289, %v4297
      %v4301 = vmul.f32 %v4286, %v4294
      %v4302 = vmul.f32 %v4287, %v4298
      %v4303 = vadd.f32 %v4301, %v798
      %v4304 = vadd.f32 %v4302, %v800
      %s4305 = scalar_lea.vmem %s622, 48
      %4306 = vst [vmem:[%s4305] sm:$0xff] %v4303
      %4307 = vst [vmem:[%s4305 + $0x8] sm:$0xff] %v4304
      %4308 = vrot.lane.b32.xlu0 %v798, 17
      %v4309 = vpop.permute.xlu0 %4308
      %4310 = vrot.lane.b32.xlu0 %v800, 17
      %v4311 = vpop.permute.xlu0 %4310
      %v4312 = vsel %vm991, %v4309, %v4311
      %v4313 = vsel %vm991, %v4311, %v4309
      %v4314 = vld [vmem:[%s994] ss:$8 sm:$0x3]
      %v4316 = vlaneseq
      %v4317 = vshrl.u32 %v4316, 7
      %v4318 = vsub.s32 0, %v4317
      %v4319 = vrot.slane %v4314, %v4318
      %v4320 = vlaneseq
      %v4321 = vshrl.u32 %v4320, 7
      %v4322 = vsub.s32 1, %v4321
      %v4323 = vrot.slane %v4314, %v4322
      %v4326 = vmul.f32 %v4313, %v4319
      %v4327 = vmul.f32 %v4312, %v4323
      %4328 = vrot.lane.b32.xlu0 %v798, 16
      %v4329 = vpop.permute.xlu0 %4328
      %4330 = vrot.lane.b32.xlu0 %v800, 16
      %v4331 = vpop.permute.xlu0 %4330
      %v4332 = vsel %vm1021, %v4329, %v4331
      %v4333 = vsel %vm1021, %v4331, %v4329
      %v4334 = vld [vmem:[%s1024] ss:$8 sm:$0x3]
      %v4336 = vlaneseq
      %v4337 = vshrl.u32 %v4336, 7
      %v4338 = vsub.s32 0, %v4337
      %v4339 = vrot.slane %v4334, %v4338
      %v4340 = vlaneseq
      %v4341 = vshrl.u32 %v4340, 7
      %v4342 = vsub.s32 1, %v4341
      %v4343 = vrot.slane %v4334, %v4342
      %v4346 = vmul.f32 %v4333, %v4339
      %v4347 = vmul.f32 %v4332, %v4343
      %v4348 = vadd.f32 %v4326, %v4346
      %v4349 = vadd.f32 %v4327, %v4347
      %4350 = vrot.lane.b32.xlu0 %v798, 15
      %v4351 = vpop.permute.xlu0 %4350
      %4352 = vrot.lane.b32.xlu0 %v800, 15
      %v4353 = vpop.permute.xlu0 %4352
      %v4354 = vsel %vm1051, %v4351, %v4353
      %v4355 = vsel %vm1051, %v4353, %v4351
      %v4356 = vld [vmem:[%s1054] ss:$8 sm:$0x3]
      %v4358 = vlaneseq
      %v4359 = vshrl.u32 %v4358, 7
      %v4360 = vsub.s32 0, %v4359
      %v4361 = vrot.slane %v4356, %v4360
      %v4362 = vlaneseq
      %v4363 = vshrl.u32 %v4362, 7
      %v4364 = vsub.s32 1, %v4363
      %v4365 = vrot.slane %v4356, %v4364
      %v4368 = vmul.f32 %v4355, %v4361
      %v4369 = vmul.f32 %v4354, %v4365
      %v4370 = vadd.f32 %v4348, %v4368
      %v4371 = vadd.f32 %v4349, %v4369
      %4372 = vrot.lane.b32.xlu0 %v798, 1
      %v4373 = vpop.permute.xlu0 %4372
      %4374 = vrot.lane.b32.xlu0 %v800, 1
      %v4375 = vpop.permute.xlu0 %4374
      %v4376 = vsel %vm1141, %v4373, %v4375
      %v4377 = vsel %vm1141, %v4375, %v4373
      %v4378 = vld [vmem:[%s1144] ss:$8 sm:$0x3]
      %v4380 = vlaneseq
      %v4381 = vshrl.u32 %v4380, 7
      %v4382 = vsub.s32 0, %v4381
      %v4383 = vrot.slane %v4378, %v4382
      %v4384 = vlaneseq
      %v4385 = vshrl.u32 %v4384, 7
      %v4386 = vsub.s32 1, %v4385
      %v4387 = vrot.slane %v4378, %v4386
      %v4390 = vmul.f32 %v4377, %v4383
      %v4391 = vmul.f32 %v4376, %v4387
      %v4392 = vadd.f32 %v4370, %v4390
      %v4393 = vadd.f32 %v4371, %v4391
      %v4394 = vadd.f32 %v4392, %v798
      %v4395 = vadd.f32 %v4393, %v800
      %4396 = vrot.lane.b32.xlu0 %v798, 127
      %v4397 = vpop.permute.xlu0 %4396
      %4398 = vrot.lane.b32.xlu0 %v800, 127
      %v4399 = vpop.permute.xlu0 %4398
      %v4400 = vsel %vm1179, %v4397, %v4399
      %v4401 = vsel %vm1179, %v4399, %v4397
      %v4402 = vld [vmem:[%s1182] ss:$8 sm:$0x3]
      %v4404 = vlaneseq
      %v4405 = vshrl.u32 %v4404, 7
      %v4406 = vsub.s32 0, %v4405
      %v4407 = vrot.slane %v4402, %v4406
      %v4408 = vlaneseq
      %v4409 = vshrl.u32 %v4408, 7
      %v4410 = vsub.s32 1, %v4409
      %v4411 = vrot.slane %v4402, %v4410
      %v4414 = vmul.f32 %v4400, %v4407
      %v4415 = vmul.f32 %v4401, %v4411
      %v4416 = vadd.f32 %v4394, %v4414
      %v4417 = vadd.f32 %v4395, %v4415
      %4418 = vrot.lane.b32.xlu0 %v798, 113
      %v4419 = vpop.permute.xlu0 %4418
      %4420 = vrot.lane.b32.xlu0 %v800, 113
      %v4421 = vpop.permute.xlu0 %4420
      %v4422 = vsel %vm1269, %v4419, %v4421
      %v4423 = vsel %vm1269, %v4421, %v4419
      %v4424 = vld [vmem:[%s1272] ss:$8 sm:$0x3]
      %v4426 = vlaneseq
      %v4427 = vshrl.u32 %v4426, 7
      %v4428 = vsub.s32 0, %v4427
      %v4429 = vrot.slane %v4424, %v4428
      %v4430 = vlaneseq
      %v4431 = vshrl.u32 %v4430, 7
      %v4432 = vsub.s32 1, %v4431
      %v4433 = vrot.slane %v4424, %v4432
      %v4436 = vmul.f32 %v4422, %v4429
      %v4437 = vmul.f32 %v4423, %v4433
      %v4438 = vadd.f32 %v4416, %v4436
      %v4439 = vadd.f32 %v4417, %v4437
      %4440 = vrot.lane.b32.xlu0 %v798, 112
      %v4441 = vpop.permute.xlu0 %4440
      %4442 = vrot.lane.b32.xlu0 %v800, 112
      %v4443 = vpop.permute.xlu0 %4442
      %v4444 = vsel %vm1299, %v4441, %v4443
      %v4445 = vsel %vm1299, %v4443, %v4441
      %v4446 = vld [vmem:[%s1302] ss:$8 sm:$0x3]
      %v4448 = vlaneseq
      %v4449 = vshrl.u32 %v4448, 7
      %v4450 = vsub.s32 0, %v4449
      %v4451 = vrot.slane %v4446, %v4450
      %v4452 = vlaneseq
      %v4453 = vshrl.u32 %v4452, 7
      %v4454 = vsub.s32 1, %v4453
      %v4455 = vrot.slane %v4446, %v4454
      %v4458 = vmul.f32 %v4444, %v4451
      %v4459 = vmul.f32 %v4445, %v4455
      %v4460 = vadd.f32 %v4438, %v4458
      %v4461 = vadd.f32 %v4439, %v4459
      %4462 = vrot.lane.b32.xlu0 %v798, 111
      %v4463 = vpop.permute.xlu0 %4462
      %4464 = vrot.lane.b32.xlu0 %v800, 111
      %v4465 = vpop.permute.xlu0 %4464
      %v4466 = vsel %vm1329, %v4463, %v4465
      %v4467 = vsel %vm1329, %v4465, %v4463
      %v4468 = vld [vmem:[%s1332] ss:$8 sm:$0x3]
      %v4470 = vlaneseq
      %v4471 = vshrl.u32 %v4470, 7
      %v4472 = vsub.s32 0, %v4471
      %v4473 = vrot.slane %v4468, %v4472
      %v4474 = vlaneseq
      %v4475 = vshrl.u32 %v4474, 7
      %v4476 = vsub.s32 1, %v4475
      %v4477 = vrot.slane %v4468, %v4476
      %v4480 = vmul.f32 %v4466, %v4473
      %v4481 = vmul.f32 %v4467, %v4477
      %v4482 = vadd.f32 %v4460, %v4480
      %v4483 = vadd.f32 %v4461, %v4481
      %v4484 = vld [vmem:[%s4288] ss:$8 sm:$0x3]
      %v4486 = vlaneseq
      %v4487 = vshrl.u32 %v4486, 7
      %v4488 = vsub.s32 0, %v4487
      %v4489 = vrot.slane %v4484, %v4488
      %v4490 = vlaneseq
      %v4491 = vshrl.u32 %v4490, 7
      %v4492 = vsub.s32 1, %v4491
      %v4493 = vrot.slane %v4484, %v4492
      %v4496 = vmul.f32 %v4482, %v4489
      %v4497 = vmul.f32 %v4483, %v4493
      %v4498 = vadd.f32 %v4496, %v4496
      %v4499 = vadd.f32 %v4497, %v4497
      %s4500 = scalar_lea.vmem %s622, 64
      %4501 = vst [vmem:[%s4500] sm:$0xff] %v4498
      %4502 = vst [vmem:[%s4500 + $0x8] sm:$0xff] %v4499
      %v4503 = vld [vmem:[%s994] ss:$8 sm:$0x3]
      %v4505 = vlaneseq
      %v4506 = vshrl.u32 %v4505, 7
      %v4507 = vsub.s32 0, %v4506
      %v4508 = vrot.slane %v4503, %v4507
      %v4509 = vlaneseq
      %v4510 = vshrl.u32 %v4509, 7
      %v4511 = vsub.s32 1, %v4510
      %v4512 = vrot.slane %v4503, %v4511
      %v4515 = vmul.f32 %v993, %v4508
      %v4516 = vmul.f32 %v992, %v4512
      %s4517 = scalar_lea.vmem %s13, 16
      %v4518 = vld [vmem:[%s4517] sm:$0xff]
      %4520 = vset.pattern.permute.xlu0 0
      %4521 = vperm.xlu0 %4520, %v4518
      %v4522 = vpop.permute.xlu0 %4521
      %v4524 = vmul.f32 %v4515, %v4522
      %v4525 = vmul.f32 %v4516, %v4522
      %v4526 = vld [vmem:[%s1024] ss:$8 sm:$0x3]
      %v4528 = vlaneseq
      %v4529 = vshrl.u32 %v4528, 7
      %v4530 = vsub.s32 0, %v4529
      %v4531 = vrot.slane %v4526, %v4530
      %v4532 = vlaneseq
      %v4533 = vshrl.u32 %v4532, 7
      %v4534 = vsub.s32 1, %v4533
      %v4535 = vrot.slane %v4526, %v4534
      %v4538 = vmul.f32 %v1023, %v4531
      %v4539 = vmul.f32 %v1022, %v4535
      %4540 = vset.pattern.permute.xlu0 1
      %4541 = vperm.xlu0 %4540, %v4518
      %v4542 = vpop.permute.xlu0 %4541
      %v4544 = vmul.f32 %v4538, %v4542
      %v4545 = vmul.f32 %v4539, %v4542
      %v4546 = vadd.f32 %v4524, %v4544
      %v4547 = vadd.f32 %v4525, %v4545
      %v4548 = vld [vmem:[%s1054] ss:$8 sm:$0x3]
      %v4550 = vlaneseq
      %v4551 = vshrl.u32 %v4550, 7
      %v4552 = vsub.s32 0, %v4551
      %v4553 = vrot.slane %v4548, %v4552
      %v4554 = vlaneseq
      %v4555 = vshrl.u32 %v4554, 7
      %v4556 = vsub.s32 1, %v4555
      %v4557 = vrot.slane %v4548, %v4556
      %v4560 = vmul.f32 %v1053, %v4553
      %v4561 = vmul.f32 %v1052, %v4557
      %4562 = vset.pattern.permute.xlu0 2
      %4563 = vperm.xlu0 %4562, %v4518
      %v4564 = vpop.permute.xlu0 %4563
      %v4566 = vmul.f32 %v4560, %v4564
      %v4567 = vmul.f32 %v4561, %v4564
      %v4568 = vadd.f32 %v4546, %v4566
      %v4569 = vadd.f32 %v4547, %v4567
      %v4570 = vld [vmem:[%s1144] ss:$8 sm:$0x3]
      %v4572 = vlaneseq
      %v4573 = vshrl.u32 %v4572, 7
      %v4574 = vsub.s32 0, %v4573
      %v4575 = vrot.slane %v4570, %v4574
      %v4576 = vlaneseq
      %v4577 = vshrl.u32 %v4576, 7
      %v4578 = vsub.s32 1, %v4577
      %v4579 = vrot.slane %v4570, %v4578
      %v4582 = vmul.f32 %v1143, %v4575
      %v4583 = vmul.f32 %v1142, %v4579
      %4584 = vset.pattern.permute.xlu0 3
      %4585 = vperm.xlu0 %4584, %v4518
      %v4586 = vpop.permute.xlu0 %4585
      %v4588 = vmul.f32 %v4582, %v4586
      %v4589 = vmul.f32 %v4583, %v4586
      %v4590 = vadd.f32 %v4568, %v4588
      %v4591 = vadd.f32 %v4569, %v4589
      %4592 = vset.pattern.permute.xlu0 4
      %4593 = vperm.xlu0 %4592, %v4518
      %v4594 = vpop.permute.xlu0 %4593
      %v4596 = vmul.f32 %v804, %v4594
      %v4597 = vmul.f32 %v805, %v4594
      %v4598 = vadd.f32 %v4590, %v4596
      %v4599 = vadd.f32 %v4591, %v4597
      %v4600 = vld [vmem:[%s1182] ss:$8 sm:$0x3]
      %v4602 = vlaneseq
      %v4603 = vshrl.u32 %v4602, 7
      %v4604 = vsub.s32 0, %v4603
      %v4605 = vrot.slane %v4600, %v4604
      %v4606 = vlaneseq
      %v4607 = vshrl.u32 %v4606, 7
      %v4608 = vsub.s32 1, %v4607
      %v4609 = vrot.slane %v4600, %v4608
      %v4612 = vmul.f32 %v1180, %v4605
      %v4613 = vmul.f32 %v1181, %v4609
      %4614 = vset.pattern.permute.xlu0 5
      %4615 = vperm.xlu0 %4614, %v4518
      %v4616 = vpop.permute.xlu0 %4615
      %v4618 = vmul.f32 %v4612, %v4616
      %v4619 = vmul.f32 %v4613, %v4616
      %v4620 = vadd.f32 %v4598, %v4618
      %v4621 = vadd.f32 %v4599, %v4619
      %v4622 = vld [vmem:[%s1272] ss:$8 sm:$0x3]
      %v4624 = vlaneseq
      %v4625 = vshrl.u32 %v4624, 7
      %v4626 = vsub.s32 0, %v4625
      %v4627 = vrot.slane %v4622, %v4626
      %v4628 = vlaneseq
      %v4629 = vshrl.u32 %v4628, 7
      %v4630 = vsub.s32 1, %v4629
      %v4631 = vrot.slane %v4622, %v4630
      %v4634 = vmul.f32 %v1270, %v4627
      %v4635 = vmul.f32 %v1271, %v4631
      %4636 = vset.pattern.permute.xlu0 6
      %4637 = vperm.xlu0 %4636, %v4518
      %v4638 = vpop.permute.xlu0 %4637
      %v4640 = vmul.f32 %v4634, %v4638
      %v4641 = vmul.f32 %v4635, %v4638
      %v4642 = vadd.f32 %v4620, %v4640
      %v4643 = vadd.f32 %v4621, %v4641
      %v4644 = vld [vmem:[%s1302] ss:$8 sm:$0x3]
      %v4646 = vlaneseq
      %v4647 = vshrl.u32 %v4646, 7
      %v4648 = vsub.s32 0, %v4647
      %v4649 = vrot.slane %v4644, %v4648
      %v4650 = vlaneseq
      %v4651 = vshrl.u32 %v4650, 7
      %v4652 = vsub.s32 1, %v4651
      %v4653 = vrot.slane %v4644, %v4652
      %v4656 = vmul.f32 %v1300, %v4649
      %v4657 = vmul.f32 %v1301, %v4653
      %4658 = vset.pattern.permute.xlu0 7
      %4659 = vperm.xlu0 %4658, %v4518
      %v4660 = vpop.permute.xlu0 %4659
      %v4662 = vmul.f32 %v4656, %v4660
      %v4663 = vmul.f32 %v4657, %v4660
      %v4664 = vadd.f32 %v4642, %v4662
      %v4665 = vadd.f32 %v4643, %v4663
      %v4666 = vld [vmem:[%s1332] ss:$8 sm:$0x3]
      %v4668 = vlaneseq
      %v4669 = vshrl.u32 %v4668, 7
      %v4670 = vsub.s32 0, %v4669
      %v4671 = vrot.slane %v4666, %v4670
      %v4672 = vlaneseq
      %v4673 = vshrl.u32 %v4672, 7
      %v4674 = vsub.s32 1, %v4673
      %v4675 = vrot.slane %v4666, %v4674
      %v4678 = vmul.f32 %v1330, %v4671
      %v4679 = vmul.f32 %v1331, %v4675
      %4680 = vset.pattern.permute.xlu0 8
      %4681 = vperm.xlu0 %4680, %v4518
      %v4682 = vpop.permute.xlu0 %4681
      %v4684 = vmul.f32 %v4678, %v4682
      %v4685 = vmul.f32 %v4679, %v4682
      %v4686 = vadd.f32 %v4664, %v4684
      %v4687 = vadd.f32 %v4665, %v4685
      %s4688 = scalar_lea.vmem %s14, 16
      %v4689 = vld [vmem:[%s4688] sm:$0xff]
      %s4690 = scalar_lea.vmem %s15, 16
      %v4691 = vld [vmem:[%s4690] sm:$0xff]
      %4693 = vset.pattern.permute.xlu0 0
      %4694 = vperm.xlu0 %4693, %v4691
      %v4695 = vpop.permute.xlu0 %4694
      %v4698 = vsel %vm1542, %v4689, 0
      %4700 = vmatprep.subr.mxu0 %v4687
      %4701 = vmatpush1.msra.mxu0 %v4686
      %4702 = vmatprep.subr.mxu0 0.0
      %4703 = vmatpush1.msra.mxu0 0.0
      %4704 = vmatprep.subr.mxu0 0.0
      %4705 = vmatpush1.msra.mxu0 0.0
      %4706 = vmatprep.subr.mxu0 0.0
      %4707 = vmatpush1.msra.mxu0 0.0
      %4708 = vmatprep.subr.mxu0 0.0
      %4709 = vmatpush1.msra.mxu0 0.0
      %4710 = vmatprep.subr.mxu0 0.0
      %4711 = vmatpush1.msra.mxu0 0.0
      %4712 = vmatprep.subr.mxu0 0.0
      %4713 = vmatpush1.msra.mxu0 0.0
      %4714 = vmatprep.subr.mxu0 0.0
      %4715 = vmatpush1.msra.mxu0 0.0
      %4716 = vmatprep.subr.mxu0 0.0
      %4717 = vmatpush1.msra.mxu0 0.0
      %4718 = vmatprep.subr.mxu0 0.0
      %4719 = vmatpush1.msra.mxu0 0.0
      %4720 = vmatprep.subr.mxu0 0.0
      %4721 = vmatpush1.msra.mxu0 0.0
      %4722 = vmatprep.subr.mxu0 0.0
      %4723 = vmatpush1.msra.mxu0 0.0
      %4724 = vmatprep.subr.mxu0 0.0
      %4725 = vmatpush1.msra.mxu0 0.0
      %4726 = vmatprep.subr.mxu0 0.0
      %4727 = vmatpush1.msra.mxu0 0.0
      %4728 = vmatprep.subr.mxu0 0.0
      %4729 = vmatpush1.msra.mxu0 0.0
      %4730 = vmatprep.subr.mxu0 0.0
      %4731 = vmatpush1.msra.mxu0 0.0
      %4732 = vmatprep.subr.mxu0 0.0
      %4733 = vmatpush1.msra.mxu0 0.0
      %4734 = vmatprep.subr.mxu0 0.0
      %4735 = vmatpush1.msra.mxu0 0.0
      %4736 = vmatprep.subr.mxu0 0.0
      %4737 = vmatpush1.msra.mxu0 0.0
      %4738 = vmatprep.subr.mxu0 0.0
      %4739 = vmatpush1.msra.mxu0 0.0
      %4740 = vmatprep.subr.mxu0 0.0
      %4741 = vmatpush1.msra.mxu0 0.0
      %4742 = vmatprep.subr.mxu0 0.0
      %4743 = vmatpush1.msra.mxu0 0.0
      %4744 = vmatprep.subr.mxu0 0.0
      %4745 = vmatpush1.msra.mxu0 0.0
      %4746 = vmatprep.subr.mxu0 0.0
      %4747 = vmatpush1.msra.mxu0 0.0
      %4748 = vmatprep.subr.mxu0 0.0
      %4749 = vmatpush1.msra.mxu0 0.0
      %4750 = vmatprep.subr.mxu0 0.0
      %4751 = vmatpush1.msra.mxu0 0.0
      %4752 = vmatprep.subr.mxu0 0.0
      %4753 = vmatpush1.msra.mxu0 0.0
      %4754 = vmatprep.subr.mxu0 0.0
      %4755 = vmatpush1.msra.mxu0 0.0
      %4756 = vmatprep.subr.mxu0 0.0
      %4757 = vmatpush1.msra.mxu0 0.0
      %4758 = vmatprep.subr.mxu0 0.0
      %4759 = vmatpush1.msra.mxu0 0.0
      %4760 = vmatprep.subr.mxu0 0.0
      %4761 = vmatpush1.msra.mxu0 0.0
      %4762 = vmatprep.subr.mxu0 0.0
      %4763 = vmatpush1.msra.mxu0 0.0
      %4764 = vmatprep.mubr.f32.mxu0 0.0
      %4765 = vmatmul.mubr.f32.gmra.mrb[0].mxu0 %v4698
      %v4766 = vpop.f32.mrb[0].mxu0
      %v4767 = vadd.f32 %v4695, %v4766
      %v4768 = vpop.f32.mrb[0].mxu0
      %v4769 = vadd.f32 %v4695, %v4768
      %4770 = vdwg.mxu0
      %v4771 = vmax.f32 %v4767, 0.0
      %v4772 = vmax.f32 %v4769, 0.0
      %4773 = vrot.lane.b32.xlu0 %v4771, 17
      %v4774 = vpop.permute.xlu0 %4773
      %4775 = vrot.lane.b32.xlu0 %v4772, 17
      %v4776 = vpop.permute.xlu0 %4775
      %v4777 = vsel %vm991, %v4774, %v4776
      %v4778 = vsel %vm991, %v4776, %v4774
      %v4779 = vmul.f32 %v4778, %v4508
      %v4780 = vmul.f32 %v4777, %v4512
      %s4781 = scalar_lea.vmem %s16, 16
      %v4782 = vld [vmem:[%s4781] sm:$0xff]
      %4784 = vset.pattern.permute.xlu0 0
      %4785 = vperm.xlu0 %4784, %v4782
      %v4786 = vpop.permute.xlu0 %4785
      %v4788 = vmul.f32 %v4779, %v4786
      %v4789 = vmul.f32 %v4780, %v4786
      %4790 = vrot.lane.b32.xlu0 %v4771, 16
      %v4791 = vpop.permute.xlu0 %4790
      %4792 = vrot.lane.b32.xlu0 %v4772, 16
      %v4793 = vpop.permute.xlu0 %4792
      %v4794 = vsel %vm1021, %v4791, %v4793
      %v4795 = vsel %vm1021, %v4793, %v4791
      %v4796 = vmul.f32 %v4795, %v4531
      %v4797 = vmul.f32 %v4794, %v4535
      %4798 = vset.pattern.permute.xlu0 1
      %4799 = vperm.xlu0 %4798, %v4782
      %v4800 = vpop.permute.xlu0 %4799
      %v4802 = vmul.f32 %v4796, %v4800
      %v4803 = vmul.f32 %v4797, %v4800
      %v4804 = vadd.f32 %v4788, %v4802
      %v4805 = vadd.f32 %v4789, %v4803
      %4806 = vrot.lane.b32.xlu0 %v4771, 15
      %v4807 = vpop.permute.xlu0 %4806
      %4808 = vrot.lane.b32.xlu0 %v4772, 15
      %v4809 = vpop.permute.xlu0 %4808
      %v4810 = vsel %vm1051, %v4807, %v4809
      %v4811 = vsel %vm1051, %v4809, %v4807
      %v4812 = vmul.f32 %v4811, %v4553
      %v4813 = vmul.f32 %v4810, %v4557
      %4814 = vset.pattern.permute.xlu0 2
      %4815 = vperm.xlu0 %4814, %v4782
      %v4816 = vpop.permute.xlu0 %4815
      %v4818 = vmul.f32 %v4812, %v4816
      %v4819 = vmul.f32 %v4813, %v4816
      %v4820 = vadd.f32 %v4804, %v4818
      %v4821 = vadd.f32 %v4805, %v4819
      %4822 = vrot.lane.b32.xlu0 %v4771, 1
      %v4823 = vpop.permute.xlu0 %4822
      %4824 = vrot.lane.b32.xlu0 %v4772, 1
      %v4825 = vpop.permute.xlu0 %4824
      %v4826 = vsel %vm1141, %v4823, %v4825
      %v4827 = vsel %vm1141, %v4825, %v4823
      %v4828 = vmul.f32 %v4827, %v4575
      %v4829 = vmul.f32 %v4826, %v4579
      %4830 = vset.pattern.permute.xlu0 3
      %4831 = vperm.xlu0 %4830, %v4782
      %v4832 = vpop.permute.xlu0 %4831
      %v4834 = vmul.f32 %v4828, %v4832
      %v4835 = vmul.f32 %v4829, %v4832
      %v4836 = vadd.f32 %v4820, %v4834
      %v4837 = vadd.f32 %v4821, %v4835
      %4838 = vset.pattern.permute.xlu0 4
      %4839 = vperm.xlu0 %4838, %v4782
      %v4840 = vpop.permute.xlu0 %4839
      %v4842 = vmul.f32 %v4771, %v4840
      %v4843 = vmul.f32 %v4772, %v4840
      %v4844 = vadd.f32 %v4836, %v4842
      %v4845 = vadd.f32 %v4837, %v4843
      %4846 = vrot.lane.b32.xlu0 %v4771, 127
      %v4847 = vpop.permute.xlu0 %4846
      %4848 = vrot.lane.b32.xlu0 %v4772, 127
      %v4849 = vpop.permute.xlu0 %4848
      %v4850 = vsel %vm1179, %v4847, %v4849
      %v4851 = vsel %vm1179, %v4849, %v4847
      %v4852 = vmul.f32 %v4850, %v4605
      %v4853 = vmul.f32 %v4851, %v4609
      %4854 = vset.pattern.permute.xlu0 5
      %4855 = vperm.xlu0 %4854, %v4782
      %v4856 = vpop.permute.xlu0 %4855
      %v4858 = vmul.f32 %v4852, %v4856
      %v4859 = vmul.f32 %v4853, %v4856
      %v4860 = vadd.f32 %v4844, %v4858
      %v4861 = vadd.f32 %v4845, %v4859
      %4862 = vrot.lane.b32.xlu0 %v4771, 113
      %v4863 = vpop.permute.xlu0 %4862
      %4864 = vrot.lane.b32.xlu0 %v4772, 113
      %v4865 = vpop.permute.xlu0 %4864
      %v4866 = vsel %vm1269, %v4863, %v4865
      %v4867 = vsel %vm1269, %v4865, %v4863
      %v4868 = vmul.f32 %v4866, %v4627
      %v4869 = vmul.f32 %v4867, %v4631
      %4870 = vset.pattern.permute.xlu0 6
      %4871 = vperm.xlu0 %4870, %v4782
      %v4872 = vpop.permute.xlu0 %4871
      %v4874 = vmul.f32 %v4868, %v4872
      %v4875 = vmul.f32 %v4869, %v4872
      %v4876 = vadd.f32 %v4860, %v4874
      %v4877 = vadd.f32 %v4861, %v4875
      %4878 = vrot.lane.b32.xlu0 %v4771, 112
      %v4879 = vpop.permute.xlu0 %4878
      %4880 = vrot.lane.b32.xlu0 %v4772, 112
      %v4881 = vpop.permute.xlu0 %4880
      %v4882 = vsel %vm1299, %v4879, %v4881
      %v4883 = vsel %vm1299, %v4881, %v4879
      %v4884 = vmul.f32 %v4882, %v4649
      %v4885 = vmul.f32 %v4883, %v4653
      %4886 = vset.pattern.permute.xlu0 7
      %4887 = vperm.xlu0 %4886, %v4782
      %v4888 = vpop.permute.xlu0 %4887
      %v4890 = vmul.f32 %v4884, %v4888
      %v4891 = vmul.f32 %v4885, %v4888
      %v4892 = vadd.f32 %v4876, %v4890
      %v4893 = vadd.f32 %v4877, %v4891
      %4894 = vrot.lane.b32.xlu0 %v4771, 111
      %v4895 = vpop.permute.xlu0 %4894
      %4896 = vrot.lane.b32.xlu0 %v4772, 111
      %v4897 = vpop.permute.xlu0 %4896
      %v4898 = vsel %vm1329, %v4895, %v4897
      %v4899 = vsel %vm1329, %v4897, %v4895
      %v4900 = vmul.f32 %v4898, %v4671
      %v4901 = vmul.f32 %v4899, %v4675
      %4902 = vset.pattern.permute.xlu0 8
      %4903 = vperm.xlu0 %4902, %v4782
      %v4904 = vpop.permute.xlu0 %4903
      %v4906 = vmul.f32 %v4900, %v4904
      %v4907 = vmul.f32 %v4901, %v4904
      %v4908 = vadd.f32 %v4892, %v4906
      %v4909 = vadd.f32 %v4893, %v4907
      %s4910 = scalar_lea.vmem %s17, 16
      %v4911 = vld [vmem:[%s4910] sm:$0xff]
      %s4912 = scalar_lea.vmem %s18, 16
      %v4913 = vld [vmem:[%s4912] sm:$0xff]
      %4915 = vset.pattern.permute.xlu0 0
      %4916 = vperm.xlu0 %4915, %v4913
      %v4917 = vpop.permute.xlu0 %4916
      %v4920 = vsel %vm1542, %v4911, 0
      %4922 = vmatprep.subr.mxu0 %v4909
      %4923 = vmatpush1.msra.mxu0 %v4908
      %4924 = vmatprep.subr.mxu0 0.0
      %4925 = vmatpush1.msra.mxu0 0.0
      %4926 = vmatprep.subr.mxu0 0.0
      %4927 = vmatpush1.msra.mxu0 0.0
      %4928 = vmatprep.subr.mxu0 0.0
      %4929 = vmatpush1.msra.mxu0 0.0
      %4930 = vmatprep.subr.mxu0 0.0
      %4931 = vmatpush1.msra.mxu0 0.0
      %4932 = vmatprep.subr.mxu0 0.0
      %4933 = vmatpush1.msra.mxu0 0.0
      %4934 = vmatprep.subr.mxu0 0.0
      %4935 = vmatpush1.msra.mxu0 0.0
      %4936 = vmatprep.subr.mxu0 0.0
      %4937 = vmatpush1.msra.mxu0 0.0
      %4938 = vmatprep.subr.mxu0 0.0
      %4939 = vmatpush1.msra.mxu0 0.0
      %4940 = vmatprep.subr.mxu0 0.0
      %4941 = vmatpush1.msra.mxu0 0.0
      %4942 = vmatprep.subr.mxu0 0.0
      %4943 = vmatpush1.msra.mxu0 0.0
      %4944 = vmatprep.subr.mxu0 0.0
      %4945 = vmatpush1.msra.mxu0 0.0
      %4946 = vmatprep.subr.mxu0 0.0
      %4947 = vmatpush1.msra.mxu0 0.0
      %4948 = vmatprep.subr.mxu0 0.0
      %4949 = vmatpush1.msra.mxu0 0.0
      %4950 = vmatprep.subr.mxu0 0.0
      %4951 = vmatpush1.msra.mxu0 0.0
      %4952 = vmatprep.subr.mxu0 0.0
      %4953 = vmatpush1.msra.mxu0 0.0
      %4954 = vmatprep.subr.mxu0 0.0
      %4955 = vmatpush1.msra.mxu0 0.0
      %4956 = vmatprep.subr.mxu0 0.0
      %4957 = vmatpush1.msra.mxu0 0.0
      %4958 = vmatprep.subr.mxu0 0.0
      %4959 = vmatpush1.msra.mxu0 0.0
      %4960 = vmatprep.subr.mxu0 0.0
      %4961 = vmatpush1.msra.mxu0 0.0
      %4962 = vmatprep.subr.mxu0 0.0
      %4963 = vmatpush1.msra.mxu0 0.0
      %4964 = vmatprep.subr.mxu0 0.0
      %4965 = vmatpush1.msra.mxu0 0.0
      %4966 = vmatprep.subr.mxu0 0.0
      %4967 = vmatpush1.msra.mxu0 0.0
      %4968 = vmatprep.subr.mxu0 0.0
      %4969 = vmatpush1.msra.mxu0 0.0
      %4970 = vmatprep.subr.mxu0 0.0
      %4971 = vmatpush1.msra.mxu0 0.0
      %4972 = vmatprep.subr.mxu0 0.0
      %4973 = vmatpush1.msra.mxu0 0.0
      %4974 = vmatprep.subr.mxu0 0.0
      %4975 = vmatpush1.msra.mxu0 0.0
      %4976 = vmatprep.subr.mxu0 0.0
      %4977 = vmatpush1.msra.mxu0 0.0
      %4978 = vmatprep.subr.mxu0 0.0
      %4979 = vmatpush1.msra.mxu0 0.0
      %4980 = vmatprep.subr.mxu0 0.0
      %4981 = vmatpush1.msra.mxu0 0.0
      %4982 = vmatprep.subr.mxu0 0.0
      %4983 = vmatpush1.msra.mxu0 0.0
      %4984 = vmatprep.subr.mxu0 0.0
      %4985 = vmatpush1.msra.mxu0 0.0
      %4986 = vmatprep.mubr.f32.mxu0 0.0
      %4987 = vmatmul.mubr.f32.gmra.mrb[0].mxu0 %v4920
      %v4988 = vpop.f32.mrb[0].mxu0
      %v4989 = vadd.f32 %v4917, %v4988
      %v4990 = vpop.f32.mrb[0].mxu0
      %v4991 = vadd.f32 %v4917, %v4990
      %4992 = vdwg.mxu0
      %v4993 = vadd.f32 %v4989, %v709
      %v4994 = vadd.f32 %v4991, %v711
      %s4995 = scalar_lea.vmem %s622, 80
      %4996 = vst [vmem:[%s4995] sm:$0xff] %v4993
      %4997 = vst [vmem:[%s4995 + $0x8] sm:$0xff] %v4994
      %p4998 = scmp.lt.s32.totalorder %s30, 1
      %s4999 = scalar_select %p4998, %s30, 1
      %s5000 = smul.addr %s4999, 12
      %s5001 = smul.addr %s5000, 8
      %s5002 = scalar_lea.vmem %s19, %s5001
      // Predicated region
      $region97: #{normal_cell.1} parent=95 // pred_check
        %p5003 = pneg %p457
      $region98: #{normal_cell.1} parent=95 // pred_check_branch
        %5005 = sbr.rel (%p5003) target = $region100
      $region99: #{normal_cell.1} parent=95 // pred_region
        _
      $region100: #{normal_cell.1} parent=95 // pred_fallthru
        _
    $region96: #{normal_cell.1} parent=5 // pred_fallthru
      _
    %p5006 = scmp.le.s32.totalorder 2, %s25
    // Predicated region
    $region101: #{normal_cell.1} parent=5 // pred_check
      %p5007 = pneg %p5006
    $region102: #{normal_cell.1} parent=5 // pred_check_branch
      %5009 = sbr.rel (%p5007) target = $region104
    $region103: #{normal_cell.1} parent=5 // pred_region
      %s5010 = ssub.s32 %s25, 2
      // Predicated region
      $region105: #{normal_cell.1} parent=103 // pred_check
        %p5011 = pneg %p463
      $region106: #{normal_cell.1} parent=103 // pred_check_branch
        %5013 = sbr.rel (%p5011) target = $region108
      $region107: #{normal_cell.1} parent=103 // pred_region
        %p5014 = scmp.lt.s32.totalorder %s31, 1
        %s5015 = scalar_select %p5014, %s31, 1
        %s5016 = smul.addr %s5015, 12
        %s5017 = smul.addr %s5016, 8
        %s5018 = scalar_lea.vmem %s19, %s5017
      $region108: #{normal_cell.1} parent=103 // pred_fallthru
        _
    $region104: #{normal_cell.1} parent=5 // pred_fallthru
      _
  $region6: #{normal_cell.1} parent=0 // loop_footer
    %s29 = sadd.s32 1, %s25
  $region7: #{normal_cell.1} parent=0 // loop_footer_branch
    %24 = sbr.rel target = $region3
  $region8: #{normal_cell.1} parent=0 // loop_exit
    _

</llo_original>
